<compile_context>
chip_gen: v6e
topology: v6e:2x2x1
jax: 0.10.0
libtpu: 0.0.40
codegen_flags: <defaults>
</compile_context>

<pallas_src>
import math

import numpy as np
import jax
import jax.numpy as jnp
from jax.experimental import pallas as pl
from jax.experimental.pallas import tpu as pltpu

EPS = 1e-5
K0_PAD = 32  # layer-0 GEMM depth: 3*3*3 = 27 zero-padded to 32


# ----------------------------------------------------------------------------
# Constant 0/1 selection matrices (built once in numpy; a few hundred KB total)
# ----------------------------------------------------------------------------
def _conv_taps_select(n, h, w, oh, ow, pad):
    """(9, n*h*w, n*oh*ow): tap k gathers the (i,j)-shifted window (zero padding
    included) of a channel-major activation via a plain right matmul."""
    s = np.zeros((9, n * h * w, n * oh * ow), np.float32)
    for i in range(3):
        for j in range(3):
            k = i * 3 + j
            for b in range(n):
                for r in range(oh):
                    for c in range(ow):
                        hh, ww = r + i - pad, c + j - pad
                        if 0 <= hh < h and 0 <= ww < w:
                            s[k, b * h * w + hh * w + ww,
                              b * oh * ow + r * ow + c] = 1.0
    return jnp.asarray(s, jnp.bfloat16)


def _pool_select(n, h, w):
    """(4, n*h*w, n*(h//2)*(w//2)): the four shifted row-selections whose
    elementwise max is MaxPool2d(2) (floor semantics)."""
    ph, pw = h // 2, w // 2
    s = np.zeros((4, n * h * w, n * ph * pw), np.float32)
    for dh in range(2):
        for dw in range(2):
            k = dh * 2 + dw
            for b in range(n):
                for r in range(ph):
                    for c in range(pw):
                        s[k, b * h * w + (2 * r + dh) * w + (2 * c + dw),
                          b * ph * pw + r * pw + c] = 1.0
    return jnp.asarray(s, jnp.bfloat16)


# ----------------------------------------------------------------------------
# Parameter init (mirrors the PyTorch module's init_layer / defaults)
# ----------------------------------------------------------------------------
def init_raw_params(key, depth=4):
    blocks = []
    for i in range(depth):
        cin, cout = (3 if i == 0 else 64), 64
        key, kw_, kb_ = jax.random.split(key, 3)
        n = 3 * 3 * cout
        w = jax.random.normal(kw_, (cout, cin, 3, 3), jnp.float32) * math.sqrt(2.0 / n)
        bound = 1.0 / math.sqrt(cin * 3 * 3)
        b = jax.random.uniform(kb_, (cout,), jnp.float32, -bound, bound)
        bn = dict(gamma=jnp.ones((cout,), jnp.float32),
                  beta=jnp.zeros((cout,), jnp.float32),
                  mean=jnp.zeros((cout,), jnp.float32),
                  var=jnp.ones((cout,), jnp.float32))
        blocks.append(dict(w=w, b=b, bn=bn))
    return blocks


# ----------------------------------------------------------------------------
# Build the fused forward pass
# ----------------------------------------------------------------------------
def build_convnet(raw_params, *, depth=4, flatten=True, batch=2, hw=(16, 16)):
    N = batch
    H, W = hw

    # static per-block config & spatial pipeline (matches ConvNetNopool)
    cfg = []
    h, w = H, W
    for i in range(depth):
        pad = 0 if i in (0, 1) else 1
        pool = i in (0, 1)
        oh, ow = h + 2 * pad - 2, w + 2 * pad - 2
        assert oh >= 1 and ow >= 1, "input too small for this depth"
        cfg.append(dict(idx=i, pad=pad, pool=pool, h=h, w=w, oh=oh, ow=ow))
        h, w = oh, ow
        if pool:
            h, w = h // 2, w // 2
            assert h >= 1 and w >= 1
    fh, fw = h, w
    mf = fh * fw  # per-image spatial size of the final feature map

    # ---- one-time prep: fold BN (+ conv bias) into bf16 GEMM weights ----
    def fold(p):
        wt, bc, bn = p['w'], p['b'], p['bn']
        scale = bn['gamma'] / jnp.sqrt(bn['var'] + EPS)
        w_f = wt * scale[:, None, None, None]
        b_f = ((bc - bn['mean']) * scale + bn['beta']).reshape(64, 1).astype(jnp.float32)
        return w_f, b_f

    cin0 = raw_params[0]['w'].shape[1]
    k0 = 9 * cin0

    operands = []
    w0_f, b0_f = fold(raw_params[0])
    w0_m = jnp.transpose(w0_f, (0, 2, 3, 1)).reshape(64, k0)          # (Cout, (i,j,ci))
    w0_m = jnp.pad(w0_m, ((0, 0), (0, K0_PAD - k0))).astype(jnp.bfloat16)
    operands += [w0_m, b0_f]
    for blk in cfg:
        i = blk['idx']
        if i > 0:
            w_f, b_f = fold(raw_params[i])
            s = _conv_taps_select(N, blk['h'], blk['w'], blk['oh'], blk['ow'], blk['pad'])
            w_t = jnp.transpose(w_f, (2, 3, 0, 1)).reshape(9, 64, 64).astype(jnp.bfloat16)
            operands += [s, w_t, b_f]
        if blk['pool']:
            operands += [_pool_select(N, blk['oh'], blk['ow'])]
    n_inputs = 1 + len(operands)  # + per-call layer-0 patches

    # ---- the single fused Pallas kernel ----
    def kernel(*refs):
        out_ref = refs[-1]
        it = iter(refs[:-1])
        a0, w0, b0 = next(it), next(it), next(it)

        # block 0: one MXU GEMM over the full 3x3xCin patch, channel-major output
        y = jnp.dot(w0[...], a0[...], preferred_element_type=jnp.float32)
        y = jnp.maximum(y + b0[...], 0.0).astype(jnp.bfloat16)        # (64, N*OH0*OW0)

        for blk in cfg:
            if blk['idx'] > 0:
                s, wk, b = next(it), next(it), next(it)
                acc = None
                for k in range(9):
                    # gather the (i,j)-shifted window (zero padding included)
                    g = jnp.dot(y, s[k],
                                preferred_element_type=jnp.float32).astype(jnp.bfloat16)
                    t = jnp.dot(wk[k], g, preferred_element_type=jnp.float32)
                    acc = t if acc is None else acc + t
                y = jnp.maximum(acc + b[...], 0.0).astype(jnp.bfloat16)
            if blk['pool']:
                sp = next(it)
                m = jnp.dot(y, sp[0], preferred_element_type=jnp.float32)
                for k in range(1, 4):
                    m = jnp.maximum(m, jnp.dot(y, sp[k],
                                               preferred_element_type=jnp.float32))
                y = m.astype(jnp.bfloat16)

        # channel-major per-image slab == PyTorch NCHW .view(N, -1) order
        for n in range(N):
            out_ref[n, :, :] = y[:, n * mf:(n + 1) * mf].astype(jnp.float32)

    vmem = pl.BlockSpec(memory_space=pltpu.MemorySpace.VMEM)
    fused_net = pl.pallas_call(
        kernel,
        out_shape=jax.ShapeDtypeStruct((N, 64, mf), jnp.float32),
        in_specs=[vmem] * n_inputs,
        out_specs=vmem,
    )

    # layer-0 im2col: one tiny XLA fusion producing (K0_PAD, N*OH0*OW0) bf16
    oh0, ow0, pad0 = cfg[0]['oh'], cfg[0]['ow'], cfg[0]['pad']

    def layer0_patches(x):  # x: (N, Cin, H, W) float32
        if pad0:
            x = jnp.pad(x, ((0, 0), (0, 0), (pad0, pad0), (pad0, pad0)))
        cols = [x[:, :, i:i + oh0, j:j + ow0] for i in range(3) for j in range(3)]
        a = jnp.stack(cols, axis=1)                                    # (N, 9, Cin, OH, OW)
        a = a.reshape(N, k0, oh0 * ow0)
        a = jnp.transpose(a, (1, 0, 2)).reshape(k0, N * oh0 * ow0)
        a = jnp.pad(a, ((0, K0_PAD - k0), (0, 0)))
        return a.astype(jnp.bfloat16)

    @jax.jit
    def forward(params_ops, x):
        a0 = layer0_patches(x)
        out = fused_net(a0, *params_ops)                               # (N, 64, fh*fw)
        return out.reshape(N, 64 * mf) if flatten else out.reshape(N, 64, fh, fw)

    return forward, tuple(operands)


# ----------------------------------------------------------------------------
# Pure-JAX reference (f32) for a loose correctness check
# ----------------------------------------------------------------------------
@jax.jit
def reference_forward(raw, x):
    y = x
    for i, blk in enumerate(raw):
        pad = 0 if i in (0, 1) else 1
        y = jax.lax.conv_general_dilated(
            y, blk['w'], (1, 1), ((pad, pad), (pad, pad)),
            dimension_numbers=('NCHW', 'OIHW', 'NCHW'))
        y = y + blk['b'].reshape(1, -1, 1, 1)
        bn = blk['bn']
        y = (y - bn['mean'].reshape(1, -1, 1, 1)) * (
            bn['gamma'].reshape(1, -1, 1, 1) /
            jnp.sqrt(bn['var'].reshape(1, -1, 1, 1) + EPS)) + bn['beta'].reshape(1, -1, 1, 1)
        y = jnp.maximum(y, 0.0)
        if i in (0, 1):
            y = jax.lax.reduce_window(y, -jnp.inf, jax.lax.max,
                                      (1, 1, 2, 2), (1, 1, 2, 2), 'VALID')
    return y.reshape(y.shape[0], -1)


if __name__ == "__main__":
    key = jax.random.PRNGKey(0)
    kp, kx = jax.random.split(key)

    depth, batch = 4, 2
    raw = init_raw_params(kp, depth=depth)
    forward, params = build_convnet(raw, depth=depth, flatten=True,
                                    batch=batch, hw=(16, 16))

    # 16x16 -> conv(p0) 14 -> pool 7 -> conv(p0) 5 -> pool 2 -> conv(p1) 2 -> conv(p1) 2
    x = jax.random.normal(kx, (batch, 3, 16, 16), jnp.float32)

    out = jax.block_until_ready(forward(params, x))
    assert out.shape == (batch, 64 * 2 * 2), out.shape
    assert bool(jnp.all(jnp.isfinite(out)))

    ref = jax.block_until_ready(reference_forward(raw, x))
    rel = float(jnp.linalg.norm(out - ref) / (jnp.linalg.norm(ref) + 1e-12))
    assert rel < 5e-2, f"relative L2 error too high: {rel}"

    print("KERNEL_OK")
</pallas_src>

<mosaic_0001>
module attributes {stable_mosaic.version = 11 : i64} {
  func.func @kernel(%arg0: memref<32x392xbf16, #tpu.memory_space<vmem>>, %arg1: memref<64x32xbf16, #tpu.memory_space<vmem>>, %arg2: memref<64x1xf32, #tpu.memory_space<vmem>>, %arg3: memref<4x392x98xbf16, #tpu.memory_space<vmem>>, %arg4: memref<9x98x50xbf16, #tpu.memory_space<vmem>>, %arg5: memref<9x64x64xbf16, #tpu.memory_space<vmem>>, %arg6: memref<64x1xf32, #tpu.memory_space<vmem>>, %arg7: memref<4x50x8xbf16, #tpu.memory_space<vmem>>, %arg8: memref<9x8x8xbf16, #tpu.memory_space<vmem>>, %arg9: memref<9x64x64xbf16, #tpu.memory_space<vmem>>, %arg10: memref<64x1xf32, #tpu.memory_space<vmem>>, %arg11: memref<9x8x8xbf16, #tpu.memory_space<vmem>>, %arg12: memref<9x64x64xbf16, #tpu.memory_space<vmem>>, %arg13: memref<64x1xf32, #tpu.memory_space<vmem>>, %arg14: memref<2x64x4xf32, #tpu.memory_space<vmem>>) attributes {dimension_semantics = [], scalar_prefetch = 0 : i64, scratch_operands = 0 : i64, tpu.core_type = #tpu.core_type<tc>} {
    %c0 = arith.constant 0 : index
    %c0_0 = arith.constant 0 : index
    %0 = vector.load %arg1[%c0, %c0_0] : memref<64x32xbf16, #tpu.memory_space<vmem>>, vector<64x32xbf16>
    %c0_1 = arith.constant 0 : index
    %c0_2 = arith.constant 0 : index
    %1 = vector.load %arg0[%c0_1, %c0_2] : memref<32x392xbf16, #tpu.memory_space<vmem>>, vector<32x392xbf16>
    %cst = arith.constant dense<0.000000e+00> : vector<64x392xf32>
    %2 = tpu.matmul %0, %1, %cst {dimension_numbers = #tpu.dot_dimension_numbers<[1], [0], [0], [1], [0, 0, 1, 1], [], []>} : vector<64x32xbf16>, vector<32x392xbf16>, vector<64x392xf32> -> vector<64x392xf32>
    %c0_3 = arith.constant 0 : index
    %c0_4 = arith.constant 0 : index
    %3 = vector.load %arg2[%c0_3, %c0_4] : memref<64x1xf32, #tpu.memory_space<vmem>>, vector<64x1xf32>
    %4 = vector.broadcast %3 : vector<64x1xf32> to vector<64x392xf32>
    %5 = arith.addf %2, %4 : vector<64x392xf32>
    %cst_5 = arith.constant 0.000000e+00 : f32
    %6 = vector.broadcast %cst_5 : f32 to vector<64x392xf32>
    %7 = arith.maximumf %5, %6 : vector<64x392xf32>
    %8 = arith.truncf %7 : vector<64x392xf32> to vector<64x392xbf16>
    %c0_6 = arith.constant 0 : index
    %c0_7 = arith.constant 0 : index
    %c0_8 = arith.constant 0 : index
    %9 = vector.load %arg3[%c0_6, %c0_7, %c0_8] : memref<4x392x98xbf16, #tpu.memory_space<vmem>>, vector<1x392x98xbf16>
    %10 = vector.shape_cast %9 : vector<1x392x98xbf16> to vector<392x98xbf16>
    %cst_9 = arith.constant dense<0.000000e+00> : vector<64x98xf32>
    %11 = tpu.matmul %8, %10, %cst_9 {dimension_numbers = #tpu.dot_dimension_numbers<[1], [0], [0], [1], [0, 0, 1, 1], [], []>} : vector<64x392xbf16>, vector<392x98xbf16>, vector<64x98xf32> -> vector<64x98xf32>
    %c1 = arith.constant 1 : index
    %c0_10 = arith.constant 0 : index
    %c0_11 = arith.constant 0 : index
    %12 = vector.load %arg3[%c1, %c0_10, %c0_11] : memref<4x392x98xbf16, #tpu.memory_space<vmem>>, vector<1x392x98xbf16>
    %13 = vector.shape_cast %12 : vector<1x392x98xbf16> to vector<392x98xbf16>
    %cst_12 = arith.constant dense<0.000000e+00> : vector<64x98xf32>
    %14 = tpu.matmul %8, %13, %cst_12 {dimension_numbers = #tpu.dot_dimension_numbers<[1], [0], [0], [1], [0, 0, 1, 1], [], []>} : vector<64x392xbf16>, vector<392x98xbf16>, vector<64x98xf32> -> vector<64x98xf32>
    %15 = arith.maximumf %11, %14 : vector<64x98xf32>
    %c2 = arith.constant 2 : index
    %c0_13 = arith.constant 0 : index
    %c0_14 = arith.constant 0 : index
    %16 = vector.load %arg3[%c2, %c0_13, %c0_14] : memref<4x392x98xbf16, #tpu.memory_space<vmem>>, vector<1x392x98xbf16>
    %17 = vector.shape_cast %16 : vector<1x392x98xbf16> to vector<392x98xbf16>
    %cst_15 = arith.constant dense<0.000000e+00> : vector<64x98xf32>
    %18 = tpu.matmul %8, %17, %cst_15 {dimension_numbers = #tpu.dot_dimension_numbers<[1], [0], [0], [1], [0, 0, 1, 1], [], []>} : vector<64x392xbf16>, vector<392x98xbf16>, vector<64x98xf32> -> vector<64x98xf32>
    %19 = arith.maximumf %15, %18 : vector<64x98xf32>
    %c3 = arith.constant 3 : index
    %c0_16 = arith.constant 0 : index
    %c0_17 = arith.constant 0 : index
    %20 = vector.load %arg3[%c3, %c0_16, %c0_17] : memref<4x392x98xbf16, #tpu.memory_space<vmem>>, vector<1x392x98xbf16>
    %21 = vector.shape_cast %20 : vector<1x392x98xbf16> to vector<392x98xbf16>
    %cst_18 = arith.constant dense<0.000000e+00> : vector<64x98xf32>
    %22 = tpu.matmul %8, %21, %cst_18 {dimension_numbers = #tpu.dot_dimension_numbers<[1], [0], [0], [1], [0, 0, 1, 1], [], []>} : vector<64x392xbf16>, vector<392x98xbf16>, vector<64x98xf32> -> vector<64x98xf32>
    %23 = arith.maximumf %19, %22 : vector<64x98xf32>
    %24 = arith.truncf %23 : vector<64x98xf32> to vector<64x98xbf16>
    %c0_19 = arith.constant 0 : index
    %c0_20 = arith.constant 0 : index
    %c0_21 = arith.constant 0 : index
    %25 = vector.load %arg4[%c0_19, %c0_20, %c0_21] : memref<9x98x50xbf16, #tpu.memory_space<vmem>>, vector<1x98x50xbf16>
    %26 = vector.shape_cast %25 : vector<1x98x50xbf16> to vector<98x50xbf16>
    %cst_22 = arith.constant dense<0.000000e+00> : vector<64x50xf32>
    %27 = tpu.matmul %24, %26, %cst_22 {dimension_numbers = #tpu.dot_dimension_numbers<[1], [0], [0], [1], [0, 0, 1, 1], [], []>} : vector<64x98xbf16>, vector<98x50xbf16>, vector<64x50xf32> -> vector<64x50xf32>
    %28 = arith.truncf %27 : vector<64x50xf32> to vector<64x50xbf16>
    %c0_23 = arith.constant 0 : index
    %c0_24 = arith.constant 0 : index
    %c0_25 = arith.constant 0 : index
    %29 = vector.load %arg5[%c0_23, %c0_24, %c0_25] : memref<9x64x64xbf16, #tpu.memory_space<vmem>>, vector<1x64x64xbf16>
    %30 = vector.shape_cast %29 : vector<1x64x64xbf16> to vector<64x64xbf16>
    %cst_26 = arith.constant dense<0.000000e+00> : vector<64x50xf32>
    %31 = tpu.matmul %30, %28, %cst_26 {dimension_numbers = #tpu.dot_dimension_numbers<[1], [0], [0], [1], [0, 0, 1, 1], [], []>} : vector<64x64xbf16>, vector<64x50xbf16>, vector<64x50xf32> -> vector<64x50xf32>
    %c1_27 = arith.constant 1 : index
    %c0_28 = arith.constant 0 : index
    %c0_29 = arith.constant 0 : index
    %32 = vector.load %arg4[%c1_27, %c0_28, %c0_29] : memref<9x98x50xbf16, #tpu.memory_space<vmem>>, vector<1x98x50xbf16>
    %33 = vector.shape_cast %32 : vector<1x98x50xbf16> to vector<98x50xbf16>
    %cst_30 = arith.constant dense<0.000000e+00> : vector<64x50xf32>
    %34 = tpu.matmul %24, %33, %cst_30 {dimension_numbers = #tpu.dot_dimension_numbers<[1], [0], [0], [1], [0, 0, 1, 1], [], []>} : vector<64x98xbf16>, vector<98x50xbf16>, vector<64x50xf32> -> vector<64x50xf32>
    %35 = arith.truncf %34 : vector<64x50xf32> to vector<64x50xbf16>
    %c1_31 = arith.constant 1 : index
    %c0_32 = arith.constant 0 : index
    %c0_33 = arith.constant 0 : index
    %36 = vector.load %arg5[%c1_31, %c0_32, %c0_33] : memref<9x64x64xbf16, #tpu.memory_space<vmem>>, vector<1x64x64xbf16>
    %37 = vector.shape_cast %36 : vector<1x64x64xbf16> to vector<64x64xbf16>
    %cst_34 = arith.constant dense<0.000000e+00> : vector<64x50xf32>
    %38 = tpu.matmul %37, %35, %cst_34 {dimension_numbers = #tpu.dot_dimension_numbers<[1], [0], [0], [1], [0, 0, 1, 1], [], []>} : vector<64x64xbf16>, vector<64x50xbf16>, vector<64x50xf32> -> vector<64x50xf32>
    %39 = arith.addf %31, %38 : vector<64x50xf32>
    %c2_35 = arith.constant 2 : index
    %c0_36 = arith.constant 0 : index
    %c0_37 = arith.constant 0 : index
    %40 = vector.load %arg4[%c2_35, %c0_36, %c0_37] : memref<9x98x50xbf16, #tpu.memory_space<vmem>>, vector<1x98x50xbf16>
    %41 = vector.shape_cast %40 : vector<1x98x50xbf16> to vector<98x50xbf16>
    %cst_38 = arith.constant dense<0.000000e+00> : vector<64x50xf32>
    %42 = tpu.matmul %24, %41, %cst_38 {dimension_numbers = #tpu.dot_dimension_numbers<[1], [0], [0], [1], [0, 0, 1, 1], [], []>} : vector<64x98xbf16>, vector<98x50xbf16>, vector<64x50xf32> -> vector<64x50xf32>
    %43 = arith.truncf %42 : vector<64x50xf32> to vector<64x50xbf16>
    %c2_39 = arith.constant 2 : index
    %c0_40 = arith.constant 0 : index
    %c0_41 = arith.constant 0 : index
    %44 = vector.load %arg5[%c2_39, %c0_40, %c0_41] : memref<9x64x64xbf16, #tpu.memory_space<vmem>>, vector<1x64x64xbf16>
    %45 = vector.shape_cast %44 : vector<1x64x64xbf16> to vector<64x64xbf16>
    %cst_42 = arith.constant dense<0.000000e+00> : vector<64x50xf32>
    %46 = tpu.matmul %45, %43, %cst_42 {dimension_numbers = #tpu.dot_dimension_numbers<[1], [0], [0], [1], [0, 0, 1, 1], [], []>} : vector<64x64xbf16>, vector<64x50xbf16>, vector<64x50xf32> -> vector<64x50xf32>
    %47 = arith.addf %39, %46 : vector<64x50xf32>
    %c3_43 = arith.constant 3 : index
    %c0_44 = arith.constant 0 : index
    %c0_45 = arith.constant 0 : index
    %48 = vector.load %arg4[%c3_43, %c0_44, %c0_45] : memref<9x98x50xbf16, #tpu.memory_space<vmem>>, vector<1x98x50xbf16>
    %49 = vector.shape_cast %48 : vector<1x98x50xbf16> to vector<98x50xbf16>
    %cst_46 = arith.constant dense<0.000000e+00> : vector<64x50xf32>
    %50 = tpu.matmul %24, %49, %cst_46 {dimension_numbers = #tpu.dot_dimension_numbers<[1], [0], [0], [1], [0, 0, 1, 1], [], []>} : vector<64x98xbf16>, vector<98x50xbf16>, vector<64x50xf32> -> vector<64x50xf32>
    %51 = arith.truncf %50 : vector<64x50xf32> to vector<64x50xbf16>
    %c3_47 = arith.constant 3 : index
    %c0_48 = arith.constant 0 : index
    %c0_49 = arith.constant 0 : index
    %52 = vector.load %arg5[%c3_47, %c0_48, %c0_49] : memref<9x64x64xbf16, #tpu.memory_space<vmem>>, vector<1x64x64xbf16>
    %53 = vector.shape_cast %52 : vector<1x64x64xbf16> to vector<64x64xbf16>
    %cst_50 = arith.constant dense<0.000000e+00> : vector<64x50xf32>
    %54 = tpu.matmul %53, %51, %cst_50 {dimension_numbers = #tpu.dot_dimension_numbers<[1], [0], [0], [1], [0, 0, 1, 1], [], []>} : vector<64x64xbf16>, vector<64x50xbf16>, vector<64x50xf32> -> vector<64x50xf32>
    %55 = arith.addf %47, %54 : vector<64x50xf32>
    %c4 = arith.constant 4 : index
    %c0_51 = arith.constant 0 : index
    %c0_52 = arith.constant 0 : index
    %56 = vector.load %arg4[%c4, %c0_51, %c0_52] : memref<9x98x50xbf16, #tpu.memory_space<vmem>>, vector<1x98x50xbf16>
    %57 = vector.shape_cast %56 : vector<1x98x50xbf16> to vector<98x50xbf16>
    %cst_53 = arith.constant dense<0.000000e+00> : vector<64x50xf32>
    %58 = tpu.matmul %24, %57, %cst_53 {dimension_numbers = #tpu.dot_dimension_numbers<[1], [0], [0], [1], [0, 0, 1, 1], [], []>} : vector<64x98xbf16>, vector<98x50xbf16>, vector<64x50xf32> -> vector<64x50xf32>
    %59 = arith.truncf %58 : vector<64x50xf32> to vector<64x50xbf16>
    %c4_54 = arith.constant 4 : index
    %c0_55 = arith.constant 0 : index
    %c0_56 = arith.constant 0 : index
    %60 = vector.load %arg5[%c4_54, %c0_55, %c0_56] : memref<9x64x64xbf16, #tpu.memory_space<vmem>>, vector<1x64x64xbf16>
    %61 = vector.shape_cast %60 : vector<1x64x64xbf16> to vector<64x64xbf16>
    %cst_57 = arith.constant dense<0.000000e+00> : vector<64x50xf32>
    %62 = tpu.matmul %61, %59, %cst_57 {dimension_numbers = #tpu.dot_dimension_numbers<[1], [0], [0], [1], [0, 0, 1, 1], [], []>} : vector<64x64xbf16>, vector<64x50xbf16>, vector<64x50xf32> -> vector<64x50xf32>
    %63 = arith.addf %55, %62 : vector<64x50xf32>
    %c5 = arith.constant 5 : index
    %c0_58 = arith.constant 0 : index
    %c0_59 = arith.constant 0 : index
    %64 = vector.load %arg4[%c5, %c0_58, %c0_59] : memref<9x98x50xbf16, #tpu.memory_space<vmem>>, vector<1x98x50xbf16>
    %65 = vector.shape_cast %64 : vector<1x98x50xbf16> to vector<98x50xbf16>
    %cst_60 = arith.constant dense<0.000000e+00> : vector<64x50xf32>
    %66 = tpu.matmul %24, %65, %cst_60 {dimension_numbers = #tpu.dot_dimension_numbers<[1], [0], [0], [1], [0, 0, 1, 1], [], []>} : vector<64x98xbf16>, vector<98x50xbf16>, vector<64x50xf32> -> vector<64x50xf32>
    %67 = arith.truncf %66 : vector<64x50xf32> to vector<64x50xbf16>
    %c5_61 = arith.constant 5 : index
    %c0_62 = arith.constant 0 : index
    %c0_63 = arith.constant 0 : index
    %68 = vector.load %arg5[%c5_61, %c0_62, %c0_63] : memref<9x64x64xbf16, #tpu.memory_space<vmem>>, vector<1x64x64xbf16>
    %69 = vector.shape_cast %68 : vector<1x64x64xbf16> to vector<64x64xbf16>
    %cst_64 = arith.constant dense<0.000000e+00> : vector<64x50xf32>
    %70 = tpu.matmul %69, %67, %cst_64 {dimension_numbers = #tpu.dot_dimension_numbers<[1], [0], [0], [1], [0, 0, 1, 1], [], []>} : vector<64x64xbf16>, vector<64x50xbf16>, vector<64x50xf32> -> vector<64x50xf32>
    %71 = arith.addf %63, %70 : vector<64x50xf32>
    %c6 = arith.constant 6 : index
    %c0_65 = arith.constant 0 : index
    %c0_66 = arith.constant 0 : index
    %72 = vector.load %arg4[%c6, %c0_65, %c0_66] : memref<9x98x50xbf16, #tpu.memory_space<vmem>>, vector<1x98x50xbf16>
    %73 = vector.shape_cast %72 : vector<1x98x50xbf16> to vector<98x50xbf16>
    %cst_67 = arith.constant dense<0.000000e+00> : vector<64x50xf32>
    %74 = tpu.matmul %24, %73, %cst_67 {dimension_numbers = #tpu.dot_dimension_numbers<[1], [0], [0], [1], [0, 0, 1, 1], [], []>} : vector<64x98xbf16>, vector<98x50xbf16>, vector<64x50xf32> -> vector<64x50xf32>
    %75 = arith.truncf %74 : vector<64x50xf32> to vector<64x50xbf16>
    %c6_68 = arith.constant 6 : index
    %c0_69 = arith.constant 0 : index
    %c0_70 = arith.constant 0 : index
    %76 = vector.load %arg5[%c6_68, %c0_69, %c0_70] : memref<9x64x64xbf16, #tpu.memory_space<vmem>>, vector<1x64x64xbf16>
    %77 = vector.shape_cast %76 : vector<1x64x64xbf16> to vector<64x64xbf16>
    %cst_71 = arith.constant dense<0.000000e+00> : vector<64x50xf32>
    %78 = tpu.matmul %77, %75, %cst_71 {dimension_numbers = #tpu.dot_dimension_numbers<[1], [0], [0], [1], [0, 0, 1, 1], [], []>} : vector<64x64xbf16>, vector<64x50xbf16>, vector<64x50xf32> -> vector<64x50xf32>
    %79 = arith.addf %71, %78 : vector<64x50xf32>
    %c7 = arith.constant 7 : index
    %c0_72 = arith.constant 0 : index
    %c0_73 = arith.constant 0 : index
    %80 = vector.load %arg4[%c7, %c0_72, %c0_73] : memref<9x98x50xbf16, #tpu.memory_space<vmem>>, vector<1x98x50xbf16>
    %81 = vector.shape_cast %80 : vector<1x98x50xbf16> to vector<98x50xbf16>
    %cst_74 = arith.constant dense<0.000000e+00> : vector<64x50xf32>
    %82 = tpu.matmul %24, %81, %cst_74 {dimension_numbers = #tpu.dot_dimension_numbers<[1], [0], [0], [1], [0, 0, 1, 1], [], []>} : vector<64x98xbf16>, vector<98x50xbf16>, vector<64x50xf32> -> vector<64x50xf32>
    %83 = arith.truncf %82 : vector<64x50xf32> to vector<64x50xbf16>
    %c7_75 = arith.constant 7 : index
    %c0_76 = arith.constant 0 : index
    %c0_77 = arith.constant 0 : index
    %84 = vector.load %arg5[%c7_75, %c0_76, %c0_77] : memref<9x64x64xbf16, #tpu.memory_space<vmem>>, vector<1x64x64xbf16>
    %85 = vector.shape_cast %84 : vector<1x64x64xbf16> to vector<64x64xbf16>
    %cst_78 = arith.constant dense<0.000000e+00> : vector<64x50xf32>
    %86 = tpu.matmul %85, %83, %cst_78 {dimension_numbers = #tpu.dot_dimension_numbers<[1], [0], [0], [1], [0, 0, 1, 1], [], []>} : vector<64x64xbf16>, vector<64x50xbf16>, vector<64x50xf32> -> vector<64x50xf32>
    %87 = arith.addf %79, %86 : vector<64x50xf32>
    %c8 = arith.constant 8 : index
    %c0_79 = arith.constant 0 : index
    %c0_80 = arith.constant 0 : index
    %88 = vector.load %arg4[%c8, %c0_79, %c0_80] : memref<9x98x50xbf16, #tpu.memory_space<vmem>>, vector<1x98x50xbf16>
    %89 = vector.shape_cast %88 : vector<1x98x50xbf16> to vector<98x50xbf16>
    %cst_81 = arith.constant dense<0.000000e+00> : vector<64x50xf32>
    %90 = tpu.matmul %24, %89, %cst_81 {dimension_numbers = #tpu.dot_dimension_numbers<[1], [0], [0], [1], [0, 0, 1, 1], [], []>} : vector<64x98xbf16>, vector<98x50xbf16>, vector<64x50xf32> -> vector<64x50xf32>
    %91 = arith.truncf %90 : vector<64x50xf32> to vector<64x50xbf16>
    %c8_82 = arith.constant 8 : index
    %c0_83 = arith.constant 0 : index
    %c0_84 = arith.constant 0 : index
    %92 = vector.load %arg5[%c8_82, %c0_83, %c0_84] : memref<9x64x64xbf16, #tpu.memory_space<vmem>>, vector<1x64x64xbf16>
    %93 = vector.shape_cast %92 : vector<1x64x64xbf16> to vector<64x64xbf16>
    %cst_85 = arith.constant dense<0.000000e+00> : vector<64x50xf32>
    %94 = tpu.matmul %93, %91, %cst_85 {dimension_numbers = #tpu.dot_dimension_numbers<[1], [0], [0], [1], [0, 0, 1, 1], [], []>} : vector<64x64xbf16>, vector<64x50xbf16>, vector<64x50xf32> -> vector<64x50xf32>
    %95 = arith.addf %87, %94 : vector<64x50xf32>
    %c0_86 = arith.constant 0 : index
    %c0_87 = arith.constant 0 : index
    %96 = vector.load %arg6[%c0_86, %c0_87] : memref<64x1xf32, #tpu.memory_space<vmem>>, vector<64x1xf32>
    %97 = vector.broadcast %96 : vector<64x1xf32> to vector<64x50xf32>
    %98 = arith.addf %95, %97 : vector<64x50xf32>
    %cst_88 = arith.constant 0.000000e+00 : f32
    %99 = vector.broadcast %cst_88 : f32 to vector<64x50xf32>
    %100 = arith.maximumf %98, %99 : vector<64x50xf32>
    %101 = arith.truncf %100 : vector<64x50xf32> to vector<64x50xbf16>
    %c0_89 = arith.constant 0 : index
    %c0_90 = arith.constant 0 : index
    %c0_91 = arith.constant 0 : index
    %102 = vector.load %arg7[%c0_89, %c0_90, %c0_91] : memref<4x50x8xbf16, #tpu.memory_space<vmem>>, vector<1x50x8xbf16>
    %103 = vector.shape_cast %102 : vector<1x50x8xbf16> to vector<50x8xbf16>
    %cst_92 = arith.constant dense<0.000000e+00> : vector<64x8xf32>
    %104 = tpu.matmul %101, %103, %cst_92 {dimension_numbers = #tpu.dot_dimension_numbers<[1], [0], [0], [1], [0, 0, 1, 1], [], []>} : vector<64x50xbf16>, vector<50x8xbf16>, vector<64x8xf32> -> vector<64x8xf32>
    %c1_93 = arith.constant 1 : index
    %c0_94 = arith.constant 0 : index
    %c0_95 = arith.constant 0 : index
    %105 = vector.load %arg7[%c1_93, %c0_94, %c0_95] : memref<4x50x8xbf16, #tpu.memory_space<vmem>>, vector<1x50x8xbf16>
    %106 = vector.shape_cast %105 : vector<1x50x8xbf16> to vector<50x8xbf16>
    %cst_96 = arith.constant dense<0.000000e+00> : vector<64x8xf32>
    %107 = tpu.matmul %101, %106, %cst_96 {dimension_numbers = #tpu.dot_dimension_numbers<[1], [0], [0], [1], [0, 0, 1, 1], [], []>} : vector<64x50xbf16>, vector<50x8xbf16>, vector<64x8xf32> -> vector<64x8xf32>
    %108 = arith.maximumf %104, %107 : vector<64x8xf32>
    %c2_97 = arith.constant 2 : index
    %c0_98 = arith.constant 0 : index
    %c0_99 = arith.constant 0 : index
    %109 = vector.load %arg7[%c2_97, %c0_98, %c0_99] : memref<4x50x8xbf16, #tpu.memory_space<vmem>>, vector<1x50x8xbf16>
    %110 = vector.shape_cast %109 : vector<1x50x8xbf16> to vector<50x8xbf16>
    %cst_100 = arith.constant dense<0.000000e+00> : vector<64x8xf32>
    %111 = tpu.matmul %101, %110, %cst_100 {dimension_numbers = #tpu.dot_dimension_numbers<[1], [0], [0], [1], [0, 0, 1, 1], [], []>} : vector<64x50xbf16>, vector<50x8xbf16>, vector<64x8xf32> -> vector<64x8xf32>
    %112 = arith.maximumf %108, %111 : vector<64x8xf32>
    %c3_101 = arith.constant 3 : index
    %c0_102 = arith.constant 0 : index
    %c0_103 = arith.constant 0 : index
    %113 = vector.load %arg7[%c3_101, %c0_102, %c0_103] : memref<4x50x8xbf16, #tpu.memory_space<vmem>>, vector<1x50x8xbf16>
    %114 = vector.shape_cast %113 : vector<1x50x8xbf16> to vector<50x8xbf16>
    %cst_104 = arith.constant dense<0.000000e+00> : vector<64x8xf32>
    %115 = tpu.matmul %101, %114, %cst_104 {dimension_numbers = #tpu.dot_dimension_numbers<[1], [0], [0], [1], [0, 0, 1, 1], [], []>} : vector<64x50xbf16>, vector<50x8xbf16>, vector<64x8xf32> -> vector<64x8xf32>
    %116 = arith.maximumf %112, %115 : vector<64x8xf32>
    %117 = arith.truncf %116 : vector<64x8xf32> to vector<64x8xbf16>
    %c0_105 = arith.constant 0 : index
    %c0_106 = arith.constant 0 : index
    %c0_107 = arith.constant 0 : index
    %118 = vector.load %arg8[%c0_105, %c0_106, %c0_107] : memref<9x8x8xbf16, #tpu.memory_space<vmem>>, vector<1x8x8xbf16>
    %119 = vector.shape_cast %118 : vector<1x8x8xbf16> to vector<8x8xbf16>
    %cst_108 = arith.constant dense<0.000000e+00> : vector<64x8xf32>
    %120 = tpu.matmul %117, %119, %cst_108 {dimension_numbers = #tpu.dot_dimension_numbers<[1], [0], [0], [1], [0, 0, 1, 1], [], []>} : vector<64x8xbf16>, vector<8x8xbf16>, vector<64x8xf32> -> vector<64x8xf32>
    %121 = arith.truncf %120 : vector<64x8xf32> to vector<64x8xbf16>
    %c0_109 = arith.constant 0 : index
    %c0_110 = arith.constant 0 : index
    %c0_111 = arith.constant 0 : index
    %122 = vector.load %arg9[%c0_109, %c0_110, %c0_111] : memref<9x64x64xbf16, #tpu.memory_space<vmem>>, vector<1x64x64xbf16>
    %123 = vector.shape_cast %122 : vector<1x64x64xbf16> to vector<64x64xbf16>
    %cst_112 = arith.constant dense<0.000000e+00> : vector<64x8xf32>
    %124 = tpu.matmul %123, %121, %cst_112 {dimension_numbers = #tpu.dot_dimension_numbers<[1], [0], [0], [1], [0, 0, 1, 1], [], []>} : vector<64x64xbf16>, vector<64x8xbf16>, vector<64x8xf32> -> vector<64x8xf32>
    %c1_113 = arith.constant 1 : index
    %c0_114 = arith.constant 0 : index
    %c0_115 = arith.constant 0 : index
    %125 = vector.load %arg8[%c1_113, %c0_114, %c0_115] : memref<9x8x8xbf16, #tpu.memory_space<vmem>>, vector<1x8x8xbf16>
    %126 = vector.shape_cast %125 : vector<1x8x8xbf16> to vector<8x8xbf16>
    %cst_116 = arith.constant dense<0.000000e+00> : vector<64x8xf32>
    %127 = tpu.matmul %117, %126, %cst_116 {dimension_numbers = #tpu.dot_dimension_numbers<[1], [0], [0], [1], [0, 0, 1, 1], [], []>} : vector<64x8xbf16>, vector<8x8xbf16>, vector<64x8xf32> -> vector<64x8xf32>
    %128 = arith.truncf %127 : vector<64x8xf32> to vector<64x8xbf16>
    %c1_117 = arith.constant 1 : index
    %c0_118 = arith.constant 0 : index
    %c0_119 = arith.constant 0 : index
    %129 = vector.load %arg9[%c1_117, %c0_118, %c0_119] : memref<9x64x64xbf16, #tpu.memory_space<vmem>>, vector<1x64x64xbf16>
    %130 = vector.shape_cast %129 : vector<1x64x64xbf16> to vector<64x64xbf16>
    %cst_120 = arith.constant dense<0.000000e+00> : vector<64x8xf32>
    %131 = tpu.matmul %130, %128, %cst_120 {dimension_numbers = #tpu.dot_dimension_numbers<[1], [0], [0], [1], [0, 0, 1, 1], [], []>} : vector<64x64xbf16>, vector<64x8xbf16>, vector<64x8xf32> -> vector<64x8xf32>
    %132 = arith.addf %124, %131 : vector<64x8xf32>
    %c2_121 = arith.constant 2 : index
    %c0_122 = arith.constant 0 : index
    %c0_123 = arith.constant 0 : index
    %133 = vector.load %arg8[%c2_121, %c0_122, %c0_123] : memref<9x8x8xbf16, #tpu.memory_space<vmem>>, vector<1x8x8xbf16>
    %134 = vector.shape_cast %133 : vector<1x8x8xbf16> to vector<8x8xbf16>
    %cst_124 = arith.constant dense<0.000000e+00> : vector<64x8xf32>
    %135 = tpu.matmul %117, %134, %cst_124 {dimension_numbers = #tpu.dot_dimension_numbers<[1], [0], [0], [1], [0, 0, 1, 1], [], []>} : vector<64x8xbf16>, vector<8x8xbf16>, vector<64x8xf32> -> vector<64x8xf32>
    %136 = arith.truncf %135 : vector<64x8xf32> to vector<64x8xbf16>
    %c2_125 = arith.constant 2 : index
    %c0_126 = arith.constant 0 : index
    %c0_127 = arith.constant 0 : index
    %137 = vector.load %arg9[%c2_125, %c0_126, %c0_127] : memref<9x64x64xbf16, #tpu.memory_space<vmem>>, vector<1x64x64xbf16>
    %138 = vector.shape_cast %137 : vector<1x64x64xbf16> to vector<64x64xbf16>
    %cst_128 = arith.constant dense<0.000000e+00> : vector<64x8xf32>
    %139 = tpu.matmul %138, %136, %cst_128 {dimension_numbers = #tpu.dot_dimension_numbers<[1], [0], [0], [1], [0, 0, 1, 1], [], []>} : vector<64x64xbf16>, vector<64x8xbf16>, vector<64x8xf32> -> vector<64x8xf32>
    %140 = arith.addf %132, %139 : vector<64x8xf32>
    %c3_129 = arith.constant 3 : index
    %c0_130 = arith.constant 0 : index
    %c0_131 = arith.constant 0 : index
    %141 = vector.load %arg8[%c3_129, %c0_130, %c0_131] : memref<9x8x8xbf16, #tpu.memory_space<vmem>>, vector<1x8x8xbf16>
    %142 = vector.shape_cast %141 : vector<1x8x8xbf16> to vector<8x8xbf16>
    %cst_132 = arith.constant dense<0.000000e+00> : vector<64x8xf32>
    %143 = tpu.matmul %117, %142, %cst_132 {dimension_numbers = #tpu.dot_dimension_numbers<[1], [0], [0], [1], [0, 0, 1, 1], [], []>} : vector<64x8xbf16>, vector<8x8xbf16>, vector<64x8xf32> -> vector<64x8xf32>
    %144 = arith.truncf %143 : vector<64x8xf32> to vector<64x8xbf16>
    %c3_133 = arith.constant 3 : index
    %c0_134 = arith.constant 0 : index
    %c0_135 = arith.constant 0 : index
    %145 = vector.load %arg9[%c3_133, %c0_134, %c0_135] : memref<9x64x64xbf16, #tpu.memory_space<vmem>>, vector<1x64x64xbf16>
    %146 = vector.shape_cast %145 : vector<1x64x64xbf16> to vector<64x64xbf16>
    %cst_136 = arith.constant dense<0.000000e+00> : vector<64x8xf32>
    %147 = tpu.matmul %146, %144, %cst_136 {dimension_numbers = #tpu.dot_dimension_numbers<[1], [0], [0], [1], [0, 0, 1, 1], [], []>} : vector<64x64xbf16>, vector<64x8xbf16>, vector<64x8xf32> -> vector<64x8xf32>
    %148 = arith.addf %140, %147 : vector<64x8xf32>
    %c4_137 = arith.constant 4 : index
    %c0_138 = arith.constant 0 : index
    %c0_139 = arith.constant 0 : index
    %149 = vector.load %arg8[%c4_137, %c0_138, %c0_139] : memref<9x8x8xbf16, #tpu.memory_space<vmem>>, vector<1x8x8xbf16>
    %150 = vector.shape_cast %149 : vector<1x8x8xbf16> to vector<8x8xbf16>
    %cst_140 = arith.constant dense<0.000000e+00> : vector<64x8xf32>
    %151 = tpu.matmul %117, %150, %cst_140 {dimension_numbers = #tpu.dot_dimension_numbers<[1], [0], [0], [1], [0, 0, 1, 1], [], []>} : vector<64x8xbf16>, vector<8x8xbf16>, vector<64x8xf32> -> vector<64x8xf32>
    %152 = arith.truncf %151 : vector<64x8xf32> to vector<64x8xbf16>
    %c4_141 = arith.constant 4 : index
    %c0_142 = arith.constant 0 : index
    %c0_143 = arith.constant 0 : index
    %153 = vector.load %arg9[%c4_141, %c0_142, %c0_143] : memref<9x64x64xbf16, #tpu.memory_space<vmem>>, vector<1x64x64xbf16>
    %154 = vector.shape_cast %153 : vector<1x64x64xbf16> to vector<64x64xbf16>
    %cst_144 = arith.constant dense<0.000000e+00> : vector<64x8xf32>
    %155 = tpu.matmul %154, %152, %cst_144 {dimension_numbers = #tpu.dot_dimension_numbers<[1], [0], [0], [1], [0, 0, 1, 1], [], []>} : vector<64x64xbf16>, vector<64x8xbf16>, vector<64x8xf32> -> vector<64x8xf32>
    %156 = arith.addf %148, %155 : vector<64x8xf32>
    %c5_145 = arith.constant 5 : index
    %c0_146 = arith.constant 0 : index
    %c0_147 = arith.constant 0 : index
    %157 = vector.load %arg8[%c5_145, %c0_146, %c0_147] : memref<9x8x8xbf16, #tpu.memory_space<vmem>>, vector<1x8x8xbf16>
    %158 = vector.shape_cast %157 : vector<1x8x8xbf16> to vector<8x8xbf16>
    %cst_148 = arith.constant dense<0.000000e+00> : vector<64x8xf32>
    %159 = tpu.matmul %117, %158, %cst_148 {dimension_numbers = #tpu.dot_dimension_numbers<[1], [0], [0], [1], [0, 0, 1, 1], [], []>} : vector<64x8xbf16>, vector<8x8xbf16>, vector<64x8xf32> -> vector<64x8xf32>
    %160 = arith.truncf %159 : vector<64x8xf32> to vector<64x8xbf16>
    %c5_149 = arith.constant 5 : index
    %c0_150 = arith.constant 0 : index
    %c0_151 = arith.constant 0 : index
    %161 = vector.load %arg9[%c5_149, %c0_150, %c0_151] : memref<9x64x64xbf16, #tpu.memory_space<vmem>>, vector<1x64x64xbf16>
    %162 = vector.shape_cast %161 : vector<1x64x64xbf16> to vector<64x64xbf16>
    %cst_152 = arith.constant dense<0.000000e+00> : vector<64x8xf32>
    %163 = tpu.matmul %162, %160, %cst_152 {dimension_numbers = #tpu.dot_dimension_numbers<[1], [0], [0], [1], [0, 0, 1, 1], [], []>} : vector<64x64xbf16>, vector<64x8xbf16>, vector<64x8xf32> -> vector<64x8xf32>
    %164 = arith.addf %156, %163 : vector<64x8xf32>
    %c6_153 = arith.constant 6 : index
    %c0_154 = arith.constant 0 : index
    %c0_155 = arith.constant 0 : index
    %165 = vector.load %arg8[%c6_153, %c0_154, %c0_155] : memref<9x8x8xbf16, #tpu.memory_space<vmem>>, vector<1x8x8xbf16>
    %166 = vector.shape_cast %165 : vector<1x8x8xbf16> to vector<8x8xbf16>
    %cst_156 = arith.constant dense<0.000000e+00> : vector<64x8xf32>
    %167 = tpu.matmul %117, %166, %cst_156 {dimension_numbers = #tpu.dot_dimension_numbers<[1], [0], [0], [1], [0, 0, 1, 1], [], []>} : vector<64x8xbf16>, vector<8x8xbf16>, vector<64x8xf32> -> vector<64x8xf32>
    %168 = arith.truncf %167 : vector<64x8xf32> to vector<64x8xbf16>
    %c6_157 = arith.constant 6 : index
    %c0_158 = arith.constant 0 : index
    %c0_159 = arith.constant 0 : index
    %169 = vector.load %arg9[%c6_157, %c0_158, %c0_159] : memref<9x64x64xbf16, #tpu.memory_space<vmem>>, vector<1x64x64xbf16>
    %170 = vector.shape_cast %169 : vector<1x64x64xbf16> to vector<64x64xbf16>
    %cst_160 = arith.constant dense<0.000000e+00> : vector<64x8xf32>
    %171 = tpu.matmul %170, %168, %cst_160 {dimension_numbers = #tpu.dot_dimension_numbers<[1], [0], [0], [1], [0, 0, 1, 1], [], []>} : vector<64x64xbf16>, vector<64x8xbf16>, vector<64x8xf32> -> vector<64x8xf32>
    %172 = arith.addf %164, %171 : vector<64x8xf32>
    %c7_161 = arith.constant 7 : index
    %c0_162 = arith.constant 0 : index
    %c0_163 = arith.constant 0 : index
    %173 = vector.load %arg8[%c7_161, %c0_162, %c0_163] : memref<9x8x8xbf16, #tpu.memory_space<vmem>>, vector<1x8x8xbf16>
    %174 = vector.shape_cast %173 : vector<1x8x8xbf16> to vector<8x8xbf16>
    %cst_164 = arith.constant dense<0.000000e+00> : vector<64x8xf32>
    %175 = tpu.matmul %117, %174, %cst_164 {dimension_numbers = #tpu.dot_dimension_numbers<[1], [0], [0], [1], [0, 0, 1, 1], [], []>} : vector<64x8xbf16>, vector<8x8xbf16>, vector<64x8xf32> -> vector<64x8xf32>
    %176 = arith.truncf %175 : vector<64x8xf32> to vector<64x8xbf16>
    %c7_165 = arith.constant 7 : index
    %c0_166 = arith.constant 0 : index
    %c0_167 = arith.constant 0 : index
    %177 = vector.load %arg9[%c7_165, %c0_166, %c0_167] : memref<9x64x64xbf16, #tpu.memory_space<vmem>>, vector<1x64x64xbf16>
    %178 = vector.shape_cast %177 : vector<1x64x64xbf16> to vector<64x64xbf16>
    %cst_168 = arith.constant dense<0.000000e+00> : vector<64x8xf32>
    %179 = tpu.matmul %178, %176, %cst_168 {dimension_numbers = #tpu.dot_dimension_numbers<[1], [0], [0], [1], [0, 0, 1, 1], [], []>} : vector<64x64xbf16>, vector<64x8xbf16>, vector<64x8xf32> -> vector<64x8xf32>
    %180 = arith.addf %172, %179 : vector<64x8xf32>
    %c8_169 = arith.constant 8 : index
    %c0_170 = arith.constant 0 : index
    %c0_171 = arith.constant 0 : index
    %181 = vector.load %arg8[%c8_169, %c0_170, %c0_171] : memref<9x8x8xbf16, #tpu.memory_space<vmem>>, vector<1x8x8xbf16>
    %182 = vector.shape_cast %181 : vector<1x8x8xbf16> to vector<8x8xbf16>
    %cst_172 = arith.constant dense<0.000000e+00> : vector<64x8xf32>
    %183 = tpu.matmul %117, %182, %cst_172 {dimension_numbers = #tpu.dot_dimension_numbers<[1], [0], [0], [1], [0, 0, 1, 1], [], []>} : vector<64x8xbf16>, vector<8x8xbf16>, vector<64x8xf32> -> vector<64x8xf32>
    %184 = arith.truncf %183 : vector<64x8xf32> to vector<64x8xbf16>
    %c8_173 = arith.constant 8 : index
    %c0_174 = arith.constant 0 : index
    %c0_175 = arith.constant 0 : index
    %185 = vector.load %arg9[%c8_173, %c0_174, %c0_175] : memref<9x64x64xbf16, #tpu.memory_space<vmem>>, vector<1x64x64xbf16>
    %186 = vector.shape_cast %185 : vector<1x64x64xbf16> to vector<64x64xbf16>
    %cst_176 = arith.constant dense<0.000000e+00> : vector<64x8xf32>
    %187 = tpu.matmul %186, %184, %cst_176 {dimension_numbers = #tpu.dot_dimension_numbers<[1], [0], [0], [1], [0, 0, 1, 1], [], []>} : vector<64x64xbf16>, vector<64x8xbf16>, vector<64x8xf32> -> vector<64x8xf32>
    %188 = arith.addf %180, %187 : vector<64x8xf32>
    %c0_177 = arith.constant 0 : index
    %c0_178 = arith.constant 0 : index
    %189 = vector.load %arg10[%c0_177, %c0_178] : memref<64x1xf32, #tpu.memory_space<vmem>>, vector<64x1xf32>
    %190 = vector.broadcast %189 : vector<64x1xf32> to vector<64x8xf32>
    %191 = arith.addf %188, %190 : vector<64x8xf32>
    %cst_179 = arith.constant 0.000000e+00 : f32
    %192 = vector.broadcast %cst_179 : f32 to vector<64x8xf32>
    %193 = arith.maximumf %191, %192 : vector<64x8xf32>
    %194 = arith.truncf %193 : vector<64x8xf32> to vector<64x8xbf16>
    %c0_180 = arith.constant 0 : index
    %c0_181 = arith.constant 0 : index
    %c0_182 = arith.constant 0 : index
    %195 = vector.load %arg11[%c0_180, %c0_181, %c0_182] : memref<9x8x8xbf16, #tpu.memory_space<vmem>>, vector<1x8x8xbf16>
    %196 = vector.shape_cast %195 : vector<1x8x8xbf16> to vector<8x8xbf16>
    %cst_183 = arith.constant dense<0.000000e+00> : vector<64x8xf32>
    %197 = tpu.matmul %194, %196, %cst_183 {dimension_numbers = #tpu.dot_dimension_numbers<[1], [0], [0], [1], [0, 0, 1, 1], [], []>} : vector<64x8xbf16>, vector<8x8xbf16>, vector<64x8xf32> -> vector<64x8xf32>
    %198 = arith.truncf %197 : vector<64x8xf32> to vector<64x8xbf16>
    %c0_184 = arith.constant 0 : index
    %c0_185 = arith.constant 0 : index
    %c0_186 = arith.constant 0 : index
    %199 = vector.load %arg12[%c0_184, %c0_185, %c0_186] : memref<9x64x64xbf16, #tpu.memory_space<vmem>>, vector<1x64x64xbf16>
    %200 = vector.shape_cast %199 : vector<1x64x64xbf16> to vector<64x64xbf16>
    %cst_187 = arith.constant dense<0.000000e+00> : vector<64x8xf32>
    %201 = tpu.matmul %200, %198, %cst_187 {dimension_numbers = #tpu.dot_dimension_numbers<[1], [0], [0], [1], [0, 0, 1, 1], [], []>} : vector<64x64xbf16>, vector<64x8xbf16>, vector<64x8xf32> -> vector<64x8xf32>
    %c1_188 = arith.constant 1 : index
    %c0_189 = arith.constant 0 : index
    %c0_190 = arith.constant 0 : index
    %202 = vector.load %arg11[%c1_188, %c0_189, %c0_190] : memref<9x8x8xbf16, #tpu.memory_space<vmem>>, vector<1x8x8xbf16>
    %203 = vector.shape_cast %202 : vector<1x8x8xbf16> to vector<8x8xbf16>
    %cst_191 = arith.constant dense<0.000000e+00> : vector<64x8xf32>
    %204 = tpu.matmul %194, %203, %cst_191 {dimension_numbers = #tpu.dot_dimension_numbers<[1], [0], [0], [1], [0, 0, 1, 1], [], []>} : vector<64x8xbf16>, vector<8x8xbf16>, vector<64x8xf32> -> vector<64x8xf32>
    %205 = arith.truncf %204 : vector<64x8xf32> to vector<64x8xbf16>
    %c1_192 = arith.constant 1 : index
    %c0_193 = arith.constant 0 : index
    %c0_194 = arith.constant 0 : index
    %206 = vector.load %arg12[%c1_192, %c0_193, %c0_194] : memref<9x64x64xbf16, #tpu.memory_space<vmem>>, vector<1x64x64xbf16>
    %207 = vector.shape_cast %206 : vector<1x64x64xbf16> to vector<64x64xbf16>
    %cst_195 = arith.constant dense<0.000000e+00> : vector<64x8xf32>
    %208 = tpu.matmul %207, %205, %cst_195 {dimension_numbers = #tpu.dot_dimension_numbers<[1], [0], [0], [1], [0, 0, 1, 1], [], []>} : vector<64x64xbf16>, vector<64x8xbf16>, vector<64x8xf32> -> vector<64x8xf32>
    %209 = arith.addf %201, %208 : vector<64x8xf32>
    %c2_196 = arith.constant 2 : index
    %c0_197 = arith.constant 0 : index
    %c0_198 = arith.constant 0 : index
    %210 = vector.load %arg11[%c2_196, %c0_197, %c0_198] : memref<9x8x8xbf16, #tpu.memory_space<vmem>>, vector<1x8x8xbf16>
    %211 = vector.shape_cast %210 : vector<1x8x8xbf16> to vector<8x8xbf16>
    %cst_199 = arith.constant dense<0.000000e+00> : vector<64x8xf32>
    %212 = tpu.matmul %194, %211, %cst_199 {dimension_numbers = #tpu.dot_dimension_numbers<[1], [0], [0], [1], [0, 0, 1, 1], [], []>} : vector<64x8xbf16>, vector<8x8xbf16>, vector<64x8xf32> -> vector<64x8xf32>
    %213 = arith.truncf %212 : vector<64x8xf32> to vector<64x8xbf16>
    %c2_200 = arith.constant 2 : index
    %c0_201 = arith.constant 0 : index
    %c0_202 = arith.constant 0 : index
    %214 = vector.load %arg12[%c2_200, %c0_201, %c0_202] : memref<9x64x64xbf16, #tpu.memory_space<vmem>>, vector<1x64x64xbf16>
    %215 = vector.shape_cast %214 : vector<1x64x64xbf16> to vector<64x64xbf16>
    %cst_203 = arith.constant dense<0.000000e+00> : vector<64x8xf32>
    %216 = tpu.matmul %215, %213, %cst_203 {dimension_numbers = #tpu.dot_dimension_numbers<[1], [0], [0], [1], [0, 0, 1, 1], [], []>} : vector<64x64xbf16>, vector<64x8xbf16>, vector<64x8xf32> -> vector<64x8xf32>
    %217 = arith.addf %209, %216 : vector<64x8xf32>
    %c3_204 = arith.constant 3 : index
    %c0_205 = arith.constant 0 : index
    %c0_206 = arith.constant 0 : index
    %218 = vector.load %arg11[%c3_204, %c0_205, %c0_206] : memref<9x8x8xbf16, #tpu.memory_space<vmem>>, vector<1x8x8xbf16>
    %219 = vector.shape_cast %218 : vector<1x8x8xbf16> to vector<8x8xbf16>
    %cst_207 = arith.constant dense<0.000000e+00> : vector<64x8xf32>
    %220 = tpu.matmul %194, %219, %cst_207 {dimension_numbers = #tpu.dot_dimension_numbers<[1], [0], [0], [1], [0, 0, 1, 1], [], []>} : vector<64x8xbf16>, vector<8x8xbf16>, vector<64x8xf32> -> vector<64x8xf32>
    %221 = arith.truncf %220 : vector<64x8xf32> to vector<64x8xbf16>
    %c3_208 = arith.constant 3 : index
    %c0_209 = arith.constant 0 : index
    %c0_210 = arith.constant 0 : index
    %222 = vector.load %arg12[%c3_208, %c0_209, %c0_210] : memref<9x64x64xbf16, #tpu.memory_space<vmem>>, vector<1x64x64xbf16>
    %223 = vector.shape_cast %222 : vector<1x64x64xbf16> to vector<64x64xbf16>
    %cst_211 = arith.constant dense<0.000000e+00> : vector<64x8xf32>
    %224 = tpu.matmul %223, %221, %cst_211 {dimension_numbers = #tpu.dot_dimension_numbers<[1], [0], [0], [1], [0, 0, 1, 1], [], []>} : vector<64x64xbf16>, vector<64x8xbf16>, vector<64x8xf32> -> vector<64x8xf32>
    %225 = arith.addf %217, %224 : vector<64x8xf32>
    %c4_212 = arith.constant 4 : index
    %c0_213 = arith.constant 0 : index
    %c0_214 = arith.constant 0 : index
    %226 = vector.load %arg11[%c4_212, %c0_213, %c0_214] : memref<9x8x8xbf16, #tpu.memory_space<vmem>>, vector<1x8x8xbf16>
    %227 = vector.shape_cast %226 : vector<1x8x8xbf16> to vector<8x8xbf16>
    %cst_215 = arith.constant dense<0.000000e+00> : vector<64x8xf32>
    %228 = tpu.matmul %194, %227, %cst_215 {dimension_numbers = #tpu.dot_dimension_numbers<[1], [0], [0], [1], [0, 0, 1, 1], [], []>} : vector<64x8xbf16>, vector<8x8xbf16>, vector<64x8xf32> -> vector<64x8xf32>
    %229 = arith.truncf %228 : vector<64x8xf32> to vector<64x8xbf16>
    %c4_216 = arith.constant 4 : index
    %c0_217 = arith.constant 0 : index
    %c0_218 = arith.constant 0 : index
    %230 = vector.load %arg12[%c4_216, %c0_217, %c0_218] : memref<9x64x64xbf16, #tpu.memory_space<vmem>>, vector<1x64x64xbf16>
    %231 = vector.shape_cast %230 : vector<1x64x64xbf16> to vector<64x64xbf16>
    %cst_219 = arith.constant dense<0.000000e+00> : vector<64x8xf32>
    %232 = tpu.matmul %231, %229, %cst_219 {dimension_numbers = #tpu.dot_dimension_numbers<[1], [0], [0], [1], [0, 0, 1, 1], [], []>} : vector<64x64xbf16>, vector<64x8xbf16>, vector<64x8xf32> -> vector<64x8xf32>
    %233 = arith.addf %225, %232 : vector<64x8xf32>
    %c5_220 = arith.constant 5 : index
    %c0_221 = arith.constant 0 : index
    %c0_222 = arith.constant 0 : index
    %234 = vector.load %arg11[%c5_220, %c0_221, %c0_222] : memref<9x8x8xbf16, #tpu.memory_space<vmem>>, vector<1x8x8xbf16>
    %235 = vector.shape_cast %234 : vector<1x8x8xbf16> to vector<8x8xbf16>
    %cst_223 = arith.constant dense<0.000000e+00> : vector<64x8xf32>
    %236 = tpu.matmul %194, %235, %cst_223 {dimension_numbers = #tpu.dot_dimension_numbers<[1], [0], [0], [1], [0, 0, 1, 1], [], []>} : vector<64x8xbf16>, vector<8x8xbf16>, vector<64x8xf32> -> vector<64x8xf32>
    %237 = arith.truncf %236 : vector<64x8xf32> to vector<64x8xbf16>
    %c5_224 = arith.constant 5 : index
    %c0_225 = arith.constant 0 : index
    %c0_226 = arith.constant 0 : index
    %238 = vector.load %arg12[%c5_224, %c0_225, %c0_226] : memref<9x64x64xbf16, #tpu.memory_space<vmem>>, vector<1x64x64xbf16>
    %239 = vector.shape_cast %238 : vector<1x64x64xbf16> to vector<64x64xbf16>
    %cst_227 = arith.constant dense<0.000000e+00> : vector<64x8xf32>
    %240 = tpu.matmul %239, %237, %cst_227 {dimension_numbers = #tpu.dot_dimension_numbers<[1], [0], [0], [1], [0, 0, 1, 1], [], []>} : vector<64x64xbf16>, vector<64x8xbf16>, vector<64x8xf32> -> vector<64x8xf32>
    %241 = arith.addf %233, %240 : vector<64x8xf32>
    %c6_228 = arith.constant 6 : index
    %c0_229 = arith.constant 0 : index
    %c0_230 = arith.constant 0 : index
    %242 = vector.load %arg11[%c6_228, %c0_229, %c0_230] : memref<9x8x8xbf16, #tpu.memory_space<vmem>>, vector<1x8x8xbf16>
    %243 = vector.shape_cast %242 : vector<1x8x8xbf16> to vector<8x8xbf16>
    %cst_231 = arith.constant dense<0.000000e+00> : vector<64x8xf32>
    %244 = tpu.matmul %194, %243, %cst_231 {dimension_numbers = #tpu.dot_dimension_numbers<[1], [0], [0], [1], [0, 0, 1, 1], [], []>} : vector<64x8xbf16>, vector<8x8xbf16>, vector<64x8xf32> -> vector<64x8xf32>
    %245 = arith.truncf %244 : vector<64x8xf32> to vector<64x8xbf16>
    %c6_232 = arith.constant 6 : index
    %c0_233 = arith.constant 0 : index
    %c0_234 = arith.constant 0 : index
    %246 = vector.load %arg12[%c6_232, %c0_233, %c0_234] : memref<9x64x64xbf16, #tpu.memory_space<vmem>>, vector<1x64x64xbf16>
    %247 = vector.shape_cast %246 : vector<1x64x64xbf16> to vector<64x64xbf16>
    %cst_235 = arith.constant dense<0.000000e+00> : vector<64x8xf32>
    %248 = tpu.matmul %247, %245, %cst_235 {dimension_numbers = #tpu.dot_dimension_numbers<[1], [0], [0], [1], [0, 0, 1, 1], [], []>} : vector<64x64xbf16>, vector<64x8xbf16>, vector<64x8xf32> -> vector<64x8xf32>
    %249 = arith.addf %241, %248 : vector<64x8xf32>
    %c7_236 = arith.constant 7 : index
    %c0_237 = arith.constant 0 : index
    %c0_238 = arith.constant 0 : index
    %250 = vector.load %arg11[%c7_236, %c0_237, %c0_238] : memref<9x8x8xbf16, #tpu.memory_space<vmem>>, vector<1x8x8xbf16>
    %251 = vector.shape_cast %250 : vector<1x8x8xbf16> to vector<8x8xbf16>
    %cst_239 = arith.constant dense<0.000000e+00> : vector<64x8xf32>
    %252 = tpu.matmul %194, %251, %cst_239 {dimension_numbers = #tpu.dot_dimension_numbers<[1], [0], [0], [1], [0, 0, 1, 1], [], []>} : vector<64x8xbf16>, vector<8x8xbf16>, vector<64x8xf32> -> vector<64x8xf32>
    %253 = arith.truncf %252 : vector<64x8xf32> to vector<64x8xbf16>
    %c7_240 = arith.constant 7 : index
    %c0_241 = arith.constant 0 : index
    %c0_242 = arith.constant 0 : index
    %254 = vector.load %arg12[%c7_240, %c0_241, %c0_242] : memref<9x64x64xbf16, #tpu.memory_space<vmem>>, vector<1x64x64xbf16>
    %255 = vector.shape_cast %254 : vector<1x64x64xbf16> to vector<64x64xbf16>
    %cst_243 = arith.constant dense<0.000000e+00> : vector<64x8xf32>
    %256 = tpu.matmul %255, %253, %cst_243 {dimension_numbers = #tpu.dot_dimension_numbers<[1], [0], [0], [1], [0, 0, 1, 1], [], []>} : vector<64x64xbf16>, vector<64x8xbf16>, vector<64x8xf32> -> vector<64x8xf32>
    %257 = arith.addf %249, %256 : vector<64x8xf32>
    %c8_244 = arith.constant 8 : index
    %c0_245 = arith.constant 0 : index
    %c0_246 = arith.constant 0 : index
    %258 = vector.load %arg11[%c8_244, %c0_245, %c0_246] : memref<9x8x8xbf16, #tpu.memory_space<vmem>>, vector<1x8x8xbf16>
    %259 = vector.shape_cast %258 : vector<1x8x8xbf16> to vector<8x8xbf16>
    %cst_247 = arith.constant dense<0.000000e+00> : vector<64x8xf32>
    %260 = tpu.matmul %194, %259, %cst_247 {dimension_numbers = #tpu.dot_dimension_numbers<[1], [0], [0], [1], [0, 0, 1, 1], [], []>} : vector<64x8xbf16>, vector<8x8xbf16>, vector<64x8xf32> -> vector<64x8xf32>
    %261 = arith.truncf %260 : vector<64x8xf32> to vector<64x8xbf16>
    %c8_248 = arith.constant 8 : index
    %c0_249 = arith.constant 0 : index
    %c0_250 = arith.constant 0 : index
    %262 = vector.load %arg12[%c8_248, %c0_249, %c0_250] : memref<9x64x64xbf16, #tpu.memory_space<vmem>>, vector<1x64x64xbf16>
    %263 = vector.shape_cast %262 : vector<1x64x64xbf16> to vector<64x64xbf16>
    %cst_251 = arith.constant dense<0.000000e+00> : vector<64x8xf32>
    %264 = tpu.matmul %263, %261, %cst_251 {dimension_numbers = #tpu.dot_dimension_numbers<[1], [0], [0], [1], [0, 0, 1, 1], [], []>} : vector<64x64xbf16>, vector<64x8xbf16>, vector<64x8xf32> -> vector<64x8xf32>
    %265 = arith.addf %257, %264 : vector<64x8xf32>
    %c0_252 = arith.constant 0 : index
    %c0_253 = arith.constant 0 : index
    %266 = vector.load %arg13[%c0_252, %c0_253] : memref<64x1xf32, #tpu.memory_space<vmem>>, vector<64x1xf32>
    %267 = vector.broadcast %266 : vector<64x1xf32> to vector<64x8xf32>
    %268 = arith.addf %265, %267 : vector<64x8xf32>
    %cst_254 = arith.constant 0.000000e+00 : f32
    %269 = vector.broadcast %cst_254 : f32 to vector<64x8xf32>
    %270 = arith.maximumf %268, %269 : vector<64x8xf32>
    %271 = arith.truncf %270 : vector<64x8xf32> to vector<64x8xbf16>
    %272 = vector.extract_strided_slice %271 {offsets = [0, 0], sizes = [64, 4], strides = [1, 1]} : vector<64x8xbf16> to vector<64x4xbf16>
    %273 = arith.extf %272 : vector<64x4xbf16> to vector<64x4xf32>
    %c0_255 = arith.constant 0 : index
    %c0_256 = arith.constant 0 : index
    %c0_257 = arith.constant 0 : index
    %274 = vector.load %arg14[%c0_255, %c0_256, %c0_257] : memref<2x64x4xf32, #tpu.memory_space<vmem>>, vector<1x64x4xf32>
    %275 = vector.shape_cast %274 : vector<1x64x4xf32> to vector<64x4xf32>
    %276 = vector.shape_cast %273 : vector<64x4xf32> to vector<1x64x4xf32>
    tpu.vector_store %arg14[%c0_255, %c0_256, %c0_257], %276 {strides = array<i32>} : memref<2x64x4xf32, #tpu.memory_space<vmem>>, vector<1x64x4xf32>,
    %277 = vector.extract_strided_slice %271 {offsets = [0, 4], sizes = [64, 4], strides = [1, 1]} : vector<64x8xbf16> to vector<64x4xbf16>
    %278 = arith.extf %277 : vector<64x4xbf16> to vector<64x4xf32>
    %c1_258 = arith.constant 1 : index
    %c0_259 = arith.constant 0 : index
    %c0_260 = arith.constant 0 : index
    %279 = vector.load %arg14[%c1_258, %c0_259, %c0_260] : memref<2x64x4xf32, #tpu.memory_space<vmem>>, vector<1x64x4xf32>
    %280 = vector.shape_cast %279 : vector<1x64x4xf32> to vector<64x4xf32>
    %281 = vector.shape_cast %278 : vector<64x4xf32> to vector<1x64x4xf32>
    tpu.vector_store %arg14[%c1_258, %c0_259, %c0_260], %281 {strides = array<i32>} : memref<2x64x4xf32, #tpu.memory_space<vmem>>, vector<1x64x4xf32>,
    return
  }
}

</mosaic_0001>

<llo_original>
// kernel: forward.1
$region0: #{forward.1}
  #allocation0 [shape = 'u32[]', space=smem, size = 0x4, offset = 0x4, fixed_abs, tag = 'smem constant byte address 0x4 - core index']
  #allocation1 [shape = 'u32[144,128]{1,0:T(1,128)}', space=vmem, size = 0x12000, scoped, tag = 'internal scratch']
  %s0 = inlined_call_operand.vmem [shape: bf16[32,392], index: 0, kind: input, shape index: {}]
  %s1 = inlined_call_operand.vmem [shape: bf16[64,32], index: 1, kind: input, shape index: {}]
  %s2 = inlined_call_operand.vmem [shape: f32[64,1], index: 2, kind: input, shape index: {}]
  %s3 = inlined_call_operand.vmem [shape: bf16[4,392,98], index: 3, kind: input, shape index: {}]
  %s4 = inlined_call_operand.vmem [shape: bf16[9,98,50], index: 4, kind: input, shape index: {}]
  %s5 = inlined_call_operand.vmem [shape: bf16[9,64,64], index: 5, kind: input, shape index: {}]
  %s6 = inlined_call_operand.vmem [shape: f32[64,1], index: 6, kind: input, shape index: {}]
  %s7 = inlined_call_operand.vmem [shape: bf16[4,50,8], index: 7, kind: input, shape index: {}]
  %s8 = inlined_call_operand.vmem [shape: bf16[9,8,8], index: 8, kind: input, shape index: {}]
  %s9 = inlined_call_operand.vmem [shape: bf16[9,64,64], index: 9, kind: input, shape index: {}]
  %s10 = inlined_call_operand.vmem [shape: f32[64,1], index: 10, kind: input, shape index: {}]
  %s11 = inlined_call_operand.vmem [shape: bf16[9,8,8], index: 11, kind: input, shape index: {}]
  %s12 = inlined_call_operand.vmem [shape: bf16[9,64,64], index: 12, kind: input, shape index: {}]
  %s13 = inlined_call_operand.vmem [shape: f32[64,1], index: 13, kind: input, shape index: {}]
  %s14 = inlined_call_operand.vmem [shape: f32[2,64,4], index: 14, kind: output, shape index: {}]
  %s15 = sld [smem:[#allocation0]]
  $region66: #{forward.1} parent=0
    _
  %s17 = ssub.s32 1, %s15
  %s18 = scalar_select 0, %s17, %s15
  // Predicated region
  $region2: #{forward.1} parent=0 // pred_check
    _
  $region3: #{forward.1} parent=0 // pred_check_branch
    %20 = sbr.rel (0) target = $region5
  $region4: #{forward.1} parent=0 // pred_region
    _
  $region5: #{forward.1} parent=0 // pred_fallthru
    _
  // Predicated region
  $region6: #{forward.1} parent=0 // pred_check
    _
  $region7: #{forward.1} parent=0 // pred_check_branch
    %22 = sbr.rel (0) target = $region9
  $region8: #{forward.1} parent=0 // pred_region
    _
  $region9: #{forward.1} parent=0 // pred_fallthru
    _
  // Predicated region
  $region10: #{forward.1} parent=0 // pred_check
    _
  $region11: #{forward.1} parent=0 // pred_check_branch
    %24 = sbr.rel (0) target = $region13
  $region12: #{forward.1} parent=0 // pred_region
    _
  $region13: #{forward.1} parent=0 // pred_fallthru
    _
  // Predicated region
  $region14: #{forward.1} parent=0 // pred_check
    _
  $region15: #{forward.1} parent=0 // pred_check_branch
    %26 = sbr.rel (0) target = $region17
  $region16: #{forward.1} parent=0 // pred_region
    _
  $region17: #{forward.1} parent=0 // pred_fallthru
    _
  // Predicated region
  $region18: #{forward.1} parent=0 // pred_check
    _
  $region19: #{forward.1} parent=0 // pred_check_branch
    %28 = sbr.rel (0) target = $region21
  $region20: #{forward.1} parent=0 // pred_region
    _
  $region21: #{forward.1} parent=0 // pred_fallthru
    _
  // Predicated region
  $region22: #{forward.1} parent=0 // pred_check
    _
  $region23: #{forward.1} parent=0 // pred_check_branch
    %30 = sbr.rel (0) target = $region25
  $region24: #{forward.1} parent=0 // pred_region
    _
  $region25: #{forward.1} parent=0 // pred_fallthru
    _
  // Predicated region
  $region26: #{forward.1} parent=0 // pred_check
    _
  $region27: #{forward.1} parent=0 // pred_check_branch
    %32 = sbr.rel (0) target = $region29
  $region28: #{forward.1} parent=0 // pred_region
    _
  $region29: #{forward.1} parent=0 // pred_fallthru
    _
  // Predicated region
  $region30: #{forward.1} parent=0 // pred_check
    _
  $region31: #{forward.1} parent=0 // pred_check_branch
    %34 = sbr.rel (0) target = $region33
  $region32: #{forward.1} parent=0 // pred_region
    _
  $region33: #{forward.1} parent=0 // pred_fallthru
    _
  // Predicated region
  $region34: #{forward.1} parent=0 // pred_check
    _
  $region35: #{forward.1} parent=0 // pred_check_branch
    %36 = sbr.rel (0) target = $region37
  $region36: #{forward.1} parent=0 // pred_region
    _
  $region37: #{forward.1} parent=0 // pred_fallthru
    _
  // Predicated region
  $region38: #{forward.1} parent=0 // pred_check
    _
  $region39: #{forward.1} parent=0 // pred_check_branch
    %38 = sbr.rel (0) target = $region41
  $region40: #{forward.1} parent=0 // pred_region
    _
  $region41: #{forward.1} parent=0 // pred_fallthru
    _
  // Predicated region
  $region42: #{forward.1} parent=0 // pred_check
    _
  $region43: #{forward.1} parent=0 // pred_check_branch
    %40 = sbr.rel (0) target = $region45
  $region44: #{forward.1} parent=0 // pred_region
    _
  $region45: #{forward.1} parent=0 // pred_fallthru
    _
  // Predicated region
  $region46: #{forward.1} parent=0 // pred_check
    _
  $region47: #{forward.1} parent=0 // pred_check_branch
    %42 = sbr.rel (0) target = $region49
  $region48: #{forward.1} parent=0 // pred_region
    _
  $region49: #{forward.1} parent=0 // pred_fallthru
    _
  // Predicated region
  $region50: #{forward.1} parent=0 // pred_check
    _
  $region51: #{forward.1} parent=0 // pred_check_branch
    %44 = sbr.rel (0) target = $region53
  $region52: #{forward.1} parent=0 // pred_region
    _
  $region53: #{forward.1} parent=0 // pred_fallthru
    _
  // Predicated region
  $region54: #{forward.1} parent=0 // pred_check
    _
  $region55: #{forward.1} parent=0 // pred_check_branch
    %46 = sbr.rel (0) target = $region57
  $region56: #{forward.1} parent=0 // pred_region
    _
  $region57: #{forward.1} parent=0 // pred_fallthru
    _
  %v48 = vld [vmem:[%s1] sm:$0xf]
  %v49 = vld [vmem:[%s1 + $0x4] sm:$0xf]
  %v50 = vld [vmem:[%s1 + $0x8] sm:$0xf]
  %v51 = vld [vmem:[%s1 + $0xc] sm:$0xf]
  %v52 = vld [vmem:[%s1 + $0x10] sm:$0xf]
  %v53 = vld [vmem:[%s1 + $0x14] sm:$0xf]
  %v54 = vld [vmem:[%s1 + $0x18] sm:$0xf]
  %v55 = vld [vmem:[%s1 + $0x1c] sm:$0xf]
  %v56 = vld [vmem:[%s0] sm:$0xff]
  %v57 = vld [vmem:[%s0 + $0x8] sm:$0xff]
  %v58 = vld [vmem:[%s0 + $0x10] sm:$0xff]
  %v59 = vld [vmem:[%s0 + $0x18] sm:$0xff]
  %v60 = vld [vmem:[%s0 + $0x20] sm:$0xff]
  %v61 = vld [vmem:[%s0 + $0x28] sm:$0xff]
  %v62 = vld [vmem:[%s0 + $0x30] sm:$0xff]
  %v63 = vld [vmem:[%s0 + $0x38] sm:$0xff]
  %v64 = vld [vmem:[%s2] sm:$0xff]
  %v65 = vld [vmem:[%s2 + $0x8] sm:$0xff]
  %v66 = vld [vmem:[%s2 + $0x10] sm:$0xff]
  %v67 = vld [vmem:[%s2 + $0x18] sm:$0xff]
  %v68 = vld [vmem:[%s2 + $0x20] sm:$0xff]
  %v69 = vld [vmem:[%s2 + $0x28] sm:$0xff]
  %v70 = vld [vmem:[%s2 + $0x30] sm:$0xff]
  %v71 = vld [vmem:[%s2 + $0x38] sm:$0xff]
  %73 = vset.pattern.permute.xlu0 0
  %74 = vperm.xlu0 %73, %v64
  %v75 = vpop.permute.xlu0 %74
  %78 = vset.pattern.permute.xlu0 0
  %79 = vperm.xlu0 %78, %v65
  %v80 = vpop.permute.xlu0 %79
  %83 = vset.pattern.permute.xlu0 0
  %84 = vperm.xlu0 %83, %v66
  %v85 = vpop.permute.xlu0 %84
  %88 = vset.pattern.permute.xlu0 0
  %89 = vperm.xlu0 %88, %v67
  %v90 = vpop.permute.xlu0 %89
  %93 = vset.pattern.permute.xlu0 0
  %94 = vperm.xlu0 %93, %v68
  %v95 = vpop.permute.xlu0 %94
  %98 = vset.pattern.permute.xlu0 0
  %99 = vperm.xlu0 %98, %v69
  %v100 = vpop.permute.xlu0 %99
  %103 = vset.pattern.permute.xlu0 0
  %104 = vperm.xlu0 %103, %v70
  %v105 = vpop.permute.xlu0 %104
  %108 = vset.pattern.permute.xlu0 0
  %109 = vperm.xlu0 %108, %v71
  %v110 = vpop.permute.xlu0 %109
  %v120 = vunpack.c.l.b16 %v48
  %v121 = vunpack.c.l.b16 %v49
  %v122 = vunpack.c.l.b16 %v50
  %v123 = vunpack.c.l.b16 %v51
  %v124 = vunpack.c.l.b16 %v52
  %v125 = vunpack.c.l.b16 %v53
  %v126 = vunpack.c.l.b16 %v54
  %v127 = vunpack.c.l.b16 %v55
  %v128 = vpack.c.b16 %v121, %v120
  %v129 = vpack.c.b16 %v123, %v122
  %v130 = vpack.c.b16 %v125, %v124
  %v131 = vpack.c.b16 %v127, %v126
  %v140 = vunpack.c.l.b16 %v56
  %v141 = vunpack.c.h.b16 %v56
  %v142 = vunpack.c.l.b16 %v57
  %v143 = vunpack.c.h.b16 %v57
  %v144 = vunpack.c.l.b16 %v58
  %v145 = vunpack.c.h.b16 %v58
  %v146 = vunpack.c.l.b16 %v59
  %v147 = vunpack.c.h.b16 %v59
  %v148 = vunpack.c.l.b16 %v60
  %v149 = vunpack.c.h.b16 %v60
  %v150 = vunpack.c.l.b16 %v61
  %v151 = vunpack.c.h.b16 %v61
  %v152 = vunpack.c.l.b16 %v62
  %v153 = vunpack.c.h.b16 %v62
  %v154 = vunpack.c.l.b16 %v63
  %v155 = vunpack.c.h.b16 %v63
  %v156 = vpack.c.b16 %v144, %v140
  %v157 = vpack.c.b16 %v145, %v141
  %v158 = vpack.c.b16 %v146, %v142
  %v159 = vpack.c.b16 %v147, %v143
  %v160 = vpack.c.b16 %v152, %v148
  %v161 = vpack.c.b16 %v153, %v149
  %v162 = vpack.c.b16 %v154, %v150
  %v163 = vpack.c.b16 %v155, %v151
  %vm172 = vcmask 261120
  %v174 = vsel %vm172, %v128, 0
  %v177 = vsel %vm172, %v129, 0
  %v180 = vsel %vm172, %v130, 0
  %v183 = vsel %vm172, %v131, 0
  %185 = vmatprep.subr.bf16.mxu0 0
  %186 = vmatpush1.bf16.msra.mxu0 0
  %187 = vmatprep.subr.bf16.mxu0 0
  %188 = vmatpush1.bf16.msra.mxu0 0
  %189 = vmatprep.subr.bf16.mxu0 0
  %190 = vmatpush1.bf16.msra.mxu0 0
  %191 = vmatprep.subr.bf16.mxu0 0
  %192 = vmatpush1.bf16.msra.mxu0 0
  %193 = vmatprep.subr.bf16.mxu0 0
  %194 = vmatpush1.bf16.msra.mxu0 0
  %195 = vmatprep.subr.bf16.mxu0 0
  %196 = vmatpush1.bf16.msra.mxu0 0
  %197 = vmatprep.subr.bf16.mxu0 %v161
  %198 = vmatpush1.bf16.msra.mxu0 %v160
  %199 = vmatprep.subr.bf16.mxu0 %v157
  %200 = vmatpush1.bf16.msra.mxu0 %v156
  %201 = vmatprep.subr.bf16.mxu0 0
  %202 = vmatpush2.bf16.msra.mxu0 0
  %203 = vmatprep.subr.bf16.mxu0 0
  %204 = vmatpush2.bf16.msra.mxu0 0
  %205 = vmatprep.subr.bf16.mxu0 0
  %206 = vmatpush2.bf16.msra.mxu0 0
  %207 = vmatprep.subr.bf16.mxu0 0
  %208 = vmatpush2.bf16.msra.mxu0 0
  %209 = vmatprep.subr.bf16.mxu0 0
  %210 = vmatpush2.bf16.msra.mxu0 0
  %211 = vmatprep.subr.bf16.mxu0 0
  %212 = vmatpush2.bf16.msra.mxu0 0
  %213 = vmatprep.subr.bf16.mxu0 0
  %214 = vmatpush2.bf16.msra.mxu0 0
  %215 = vmatprep.subr.bf16.mxu0 0
  %216 = vmatpush2.bf16.msra.mxu0 0
  %217 = vmatprep.mubr.bf16.mxu0 0
  %218 = vmatmul.mubr.bf16.gmra.mxu0 %v174
  %v219 = vpop.f32.mrf.mxu0
  %v220 = vadd.f32 %v75, %v219
  %v221 = vpop.f32.mrf.mxu0
  %v222 = vadd.f32 %v75, %v221
  %v223 = vpop.f32.mrf.mxu0
  %v224 = vadd.f32 %v80, %v223
  %v225 = vpop.f32.mrf.mxu0
  %v226 = vadd.f32 %v80, %v225
  %227 = vmatprep.mubr.bf16.mxu0 0
  %228 = vmatmul.mubr.bf16.gmra.mxu0 %v177
  %v229 = vpop.f32.mrf.mxu0
  %v230 = vadd.f32 %v85, %v229
  %v231 = vpop.f32.mrf.mxu0
  %v232 = vadd.f32 %v85, %v231
  %v233 = vpop.f32.mrf.mxu0
  %v234 = vadd.f32 %v90, %v233
  %v235 = vpop.f32.mrf.mxu0
  %v236 = vadd.f32 %v90, %v235
  %237 = vmatprep.mubr.bf16.mxu0 0
  %238 = vmatmul.mubr.bf16.gmra.mxu0 %v180
  %v239 = vpop.f32.mrf.mxu0
  %v240 = vadd.f32 %v95, %v239
  %v241 = vpop.f32.mrf.mxu0
  %v242 = vadd.f32 %v95, %v241
  %v243 = vpop.f32.mrf.mxu0
  %v244 = vadd.f32 %v100, %v243
  %v245 = vpop.f32.mrf.mxu0
  %v246 = vadd.f32 %v100, %v245
  %247 = vmatprep.mubr.bf16.mxu0 0
  %248 = vmatmul.mubr.bf16.gmra.mxu0 %v183
  %v249 = vpop.f32.mrf.mxu0
  %v250 = vadd.f32 %v105, %v249
  %v251 = vpop.f32.mrf.mxu0
  %v252 = vadd.f32 %v105, %v251
  %v253 = vpop.f32.mrf.mxu0
  %v254 = vadd.f32 %v110, %v253
  %v255 = vpop.f32.mrf.mxu0
  %v256 = vadd.f32 %v110, %v255
  %257 = vdwg.mxu0
  %258 = vmatprep.subr.bf16.mxu0 0
  %259 = vmatpush1.bf16.msra.mxu0 0
  %260 = vmatprep.subr.bf16.mxu0 0
  %261 = vmatpush1.bf16.msra.mxu0 0
  %262 = vmatprep.subr.bf16.mxu0 0
  %263 = vmatpush1.bf16.msra.mxu0 0
  %264 = vmatprep.subr.bf16.mxu0 0
  %265 = vmatpush1.bf16.msra.mxu0 0
  %266 = vmatprep.subr.bf16.mxu0 0
  %267 = vmatpush1.bf16.msra.mxu0 0
  %268 = vmatprep.subr.bf16.mxu0 0
  %269 = vmatpush1.bf16.msra.mxu0 0
  %270 = vmatprep.subr.bf16.mxu0 %v163
  %271 = vmatpush1.bf16.msra.mxu0 %v162
  %272 = vmatprep.subr.bf16.mxu0 %v159
  %273 = vmatpush1.bf16.msra.mxu0 %v158
  %274 = vmatprep.subr.bf16.mxu0 0
  %275 = vmatpush2.bf16.msra.mxu0 0
  %276 = vmatprep.subr.bf16.mxu0 0
  %277 = vmatpush2.bf16.msra.mxu0 0
  %278 = vmatprep.subr.bf16.mxu0 0
  %279 = vmatpush2.bf16.msra.mxu0 0
  %280 = vmatprep.subr.bf16.mxu0 0
  %281 = vmatpush2.bf16.msra.mxu0 0
  %282 = vmatprep.subr.bf16.mxu0 0
  %283 = vmatpush2.bf16.msra.mxu0 0
  %284 = vmatprep.subr.bf16.mxu0 0
  %285 = vmatpush2.bf16.msra.mxu0 0
  %286 = vmatprep.subr.bf16.mxu0 0
  %287 = vmatpush2.bf16.msra.mxu0 0
  %288 = vmatprep.subr.bf16.mxu0 0
  %289 = vmatpush2.bf16.msra.mxu0 0
  %290 = vmatprep.mubr.bf16.mxu0 0
  %291 = vmatmul.mubr.bf16.gmra.mxu0 %v174
  %v292 = vpop.f32.mrf.mxu0
  %v293 = vadd.f32 %v75, %v292
  %v294 = vpop.f32.mrf.mxu0
  %v295 = vadd.f32 %v75, %v294
  %v296 = vpop.f32.mrf.mxu0
  %v297 = vadd.f32 %v80, %v296
  %v298 = vpop.f32.mrf.mxu0
  %v299 = vadd.f32 %v80, %v298
  %300 = vmatprep.mubr.bf16.mxu0 0
  %301 = vmatmul.mubr.bf16.gmra.mxu0 %v177
  %v302 = vpop.f32.mrf.mxu0
  %v303 = vadd.f32 %v85, %v302
  %v304 = vpop.f32.mrf.mxu0
  %v305 = vadd.f32 %v85, %v304
  %v306 = vpop.f32.mrf.mxu0
  %v307 = vadd.f32 %v90, %v306
  %v308 = vpop.f32.mrf.mxu0
  %v309 = vadd.f32 %v90, %v308
  %310 = vmatprep.mubr.bf16.mxu0 0
  %311 = vmatmul.mubr.bf16.gmra.mxu0 %v180
  %v312 = vpop.f32.mrf.mxu0
  %v313 = vadd.f32 %v95, %v312
  %v314 = vpop.f32.mrf.mxu0
  %v315 = vadd.f32 %v95, %v314
  %v316 = vpop.f32.mrf.mxu0
  %v317 = vadd.f32 %v100, %v316
  %v318 = vpop.f32.mrf.mxu0
  %v319 = vadd.f32 %v100, %v318
  %320 = vmatprep.mubr.bf16.mxu0 0
  %321 = vmatmul.mubr.bf16.gmra.mxu0 %v183
  %v322 = vpop.f32.mrf.mxu0
  %v323 = vadd.f32 %v105, %v322
  %v324 = vpop.f32.mrf.mxu0
  %v325 = vadd.f32 %v105, %v324
  %v326 = vpop.f32.mrf.mxu0
  %v327 = vadd.f32 %v110, %v326
  %v328 = vpop.f32.mrf.mxu0
  %v329 = vadd.f32 %v110, %v328
  %330 = vdwg.mxu0
  %v331 = vmax.f32 %v220, 0.0
  %v332 = vmax.f32 %v222, 0.0
  %v333 = vmax.f32 %v293, 0.0
  %v334 = vmax.f32 %v295, 0.0
  %v335 = vmax.f32 %v224, 0.0
  %v336 = vmax.f32 %v226, 0.0
  %v337 = vmax.f32 %v297, 0.0
  %v338 = vmax.f32 %v299, 0.0
  %v339 = vmax.f32 %v230, 0.0
  %v340 = vmax.f32 %v232, 0.0
  %v341 = vmax.f32 %v303, 0.0
  %v342 = vmax.f32 %v305, 0.0
  %v343 = vmax.f32 %v234, 0.0
  %v344 = vmax.f32 %v236, 0.0
  %v345 = vmax.f32 %v307, 0.0
  %v346 = vmax.f32 %v309, 0.0
  %v347 = vmax.f32 %v240, 0.0
  %v348 = vmax.f32 %v242, 0.0
  %v349 = vmax.f32 %v313, 0.0
  %v350 = vmax.f32 %v315, 0.0
  %v351 = vmax.f32 %v244, 0.0
  %v352 = vmax.f32 %v246, 0.0
  %v353 = vmax.f32 %v317, 0.0
  %v354 = vmax.f32 %v319, 0.0
  %v355 = vmax.f32 %v250, 0.0
  %v356 = vmax.f32 %v252, 0.0
  %v357 = vmax.f32 %v323, 0.0
  %v358 = vmax.f32 %v325, 0.0
  %v359 = vmax.f32 %v254, 0.0
  %v360 = vmax.f32 %v256, 0.0
  %v361 = vmax.f32 %v327, 0.0
  %v362 = vmax.f32 %v329, 0.0
  %v363 = vpack.c.bf16 %v335, %v331
  %v364 = vpack.c.bf16 %v336, %v332
  %v365 = vpack.c.bf16 %v337, %v333
  %v366 = vpack.c.bf16 %v338, %v334
  %v367 = vpack.c.bf16 %v343, %v339
  %v368 = vpack.c.bf16 %v344, %v340
  %v369 = vpack.c.bf16 %v345, %v341
  %v370 = vpack.c.bf16 %v346, %v342
  %v371 = vpack.c.bf16 %v351, %v347
  %v372 = vpack.c.bf16 %v352, %v348
  %v373 = vpack.c.bf16 %v353, %v349
  %v374 = vpack.c.bf16 %v354, %v350
  %v375 = vpack.c.bf16 %v359, %v355
  %v376 = vpack.c.bf16 %v360, %v356
  %v377 = vpack.c.bf16 %v361, %v357
  %v378 = vpack.c.bf16 %v362, %v358
  %v379 = vld [vmem:[%s3] sm:$0xf]
  %v380 = vld [vmem:[%s3 + $0x4] sm:$0xf]
  %v381 = vld [vmem:[%s3 + $0x8] sm:$0xf]
  %v382 = vld [vmem:[%s3 + $0xc] sm:$0xf]
  %v383 = vld [vmem:[%s3 + $0x10] sm:$0xf]
  %v384 = vld [vmem:[%s3 + $0x14] sm:$0xf]
  %v385 = vld [vmem:[%s3 + $0x18] sm:$0xf]
  %v386 = vld [vmem:[%s3 + $0x1c] sm:$0xf]
  %v387 = vld [vmem:[%s3 + $0x20] sm:$0xf]
  %v388 = vld [vmem:[%s3 + $0x24] sm:$0xf]
  %v389 = vld [vmem:[%s3 + $0x28] sm:$0xf]
  %v390 = vld [vmem:[%s3 + $0x2c] sm:$0xf]
  %v391 = vld [vmem:[%s3 + $0x30] sm:$0xf]
  %v392 = vld [vmem:[%s3 + $0x34] sm:$0xf]
  %v393 = vld [vmem:[%s3 + $0x38] sm:$0xf]
  %v394 = vld [vmem:[%s3 + $0x3c] sm:$0xf]
  %v395 = vld [vmem:[%s3 + $0x40] sm:$0xf]
  %v396 = vld [vmem:[%s3 + $0x44] sm:$0xf]
  %v397 = vld [vmem:[%s3 + $0x48] sm:$0xf]
  %v398 = vld [vmem:[%s3 + $0x4c] sm:$0xf]
  %v399 = vld [vmem:[%s3 + $0x50] sm:$0xf]
  %v400 = vld [vmem:[%s3 + $0x54] sm:$0xf]
  %v401 = vld [vmem:[%s3 + $0x58] sm:$0xf]
  %v402 = vld [vmem:[%s3 + $0x5c] sm:$0xf]
  %v403 = vld [vmem:[%s3 + $0x60] sm:$0xf]
  %v404 = vld [vmem:[%s3 + $0x64] sm:$0xf]
  %v405 = vld [vmem:[%s3 + $0x68] sm:$0xf]
  %v406 = vld [vmem:[%s3 + $0x6c] sm:$0xf]
  %v407 = vld [vmem:[%s3 + $0x70] sm:$0xf]
  %v408 = vld [vmem:[%s3 + $0x74] sm:$0xf]
  %v409 = vld [vmem:[%s3 + $0x78] sm:$0xf]
  %v410 = vld [vmem:[%s3 + $0x7c] sm:$0xf]
  %v411 = vld [vmem:[%s3 + $0x80] sm:$0xf]
  %v412 = vld [vmem:[%s3 + $0x84] sm:$0xf]
  %v413 = vld [vmem:[%s3 + $0x88] sm:$0xf]
  %v414 = vld [vmem:[%s3 + $0x8c] sm:$0xf]
  %v415 = vld [vmem:[%s3 + $0x90] sm:$0xf]
  %v416 = vld [vmem:[%s3 + $0x94] sm:$0xf]
  %v417 = vld [vmem:[%s3 + $0x98] sm:$0xf]
  %v418 = vld [vmem:[%s3 + $0x9c] sm:$0xf]
  %v419 = vld [vmem:[%s3 + $0xa0] sm:$0xf]
  %v420 = vld [vmem:[%s3 + $0xa4] sm:$0xf]
  %v421 = vld [vmem:[%s3 + $0xa8] sm:$0xf]
  %v422 = vld [vmem:[%s3 + $0xac] sm:$0xf]
  %v423 = vld [vmem:[%s3 + $0xb0] sm:$0xf]
  %v424 = vld [vmem:[%s3 + $0xb4] sm:$0xf]
  %v425 = vld [vmem:[%s3 + $0xb8] sm:$0xf]
  %v426 = vld [vmem:[%s3 + $0xbc] sm:$0xf]
  %v427 = vld [vmem:[%s3 + $0xc0] sm:$0xf]
  %v477 = vunpack.c.l.b16 %v379
  %v478 = vunpack.c.l.b16 %v380
  %v479 = vunpack.c.l.b16 %v381
  %v480 = vunpack.c.l.b16 %v382
  %v481 = vunpack.c.l.b16 %v383
  %v482 = vunpack.c.l.b16 %v384
  %v483 = vunpack.c.l.b16 %v385
  %v484 = vunpack.c.l.b16 %v386
  %v485 = vunpack.c.l.b16 %v387
  %v486 = vunpack.c.l.b16 %v388
  %v487 = vunpack.c.l.b16 %v389
  %v488 = vunpack.c.l.b16 %v390
  %v489 = vunpack.c.l.b16 %v391
  %v490 = vunpack.c.l.b16 %v392
  %v491 = vunpack.c.l.b16 %v393
  %v492 = vunpack.c.l.b16 %v394
  %v493 = vunpack.c.l.b16 %v395
  %v494 = vunpack.c.l.b16 %v396
  %v495 = vunpack.c.l.b16 %v397
  %v496 = vunpack.c.l.b16 %v398
  %v497 = vunpack.c.l.b16 %v399
  %v498 = vunpack.c.l.b16 %v400
  %v499 = vunpack.c.l.b16 %v401
  %v500 = vunpack.c.l.b16 %v402
  %v501 = vunpack.c.l.b16 %v403
  %v502 = vunpack.c.l.b16 %v404
  %v503 = vunpack.c.l.b16 %v405
  %v504 = vunpack.c.l.b16 %v406
  %v505 = vunpack.c.l.b16 %v407
  %v506 = vunpack.c.l.b16 %v408
  %v507 = vunpack.c.l.b16 %v409
  %v508 = vunpack.c.l.b16 %v410
  %v509 = vunpack.c.l.b16 %v411
  %v510 = vunpack.c.l.b16 %v412
  %v511 = vunpack.c.l.b16 %v413
  %v512 = vunpack.c.l.b16 %v414
  %v513 = vunpack.c.l.b16 %v415
  %v514 = vunpack.c.l.b16 %v416
  %v515 = vunpack.c.l.b16 %v417
  %v516 = vunpack.c.l.b16 %v418
  %v517 = vunpack.c.l.b16 %v419
  %v518 = vunpack.c.l.b16 %v420
  %v519 = vunpack.c.l.b16 %v421
  %v520 = vunpack.c.l.b16 %v422
  %v521 = vunpack.c.l.b16 %v423
  %v522 = vunpack.c.l.b16 %v424
  %v523 = vunpack.c.l.b16 %v425
  %v524 = vunpack.c.l.b16 %v426
  %v525 = vunpack.c.l.b16 %v427
  %v526 = vpack.c.b16 %v478, %v477
  %v527 = vpack.c.b16 %v480, %v479
  %v528 = vpack.c.b16 %v482, %v481
  %v529 = vpack.c.b16 %v484, %v483
  %v530 = vpack.c.b16 %v486, %v485
  %v531 = vpack.c.b16 %v488, %v487
  %v532 = vpack.c.b16 %v490, %v489
  %v533 = vpack.c.b16 %v492, %v491
  %v534 = vpack.c.b16 %v494, %v493
  %v535 = vpack.c.b16 %v496, %v495
  %v536 = vpack.c.b16 %v498, %v497
  %v537 = vpack.c.b16 %v500, %v499
  %v538 = vpack.c.b16 %v502, %v501
  %v539 = vpack.c.b16 %v504, %v503
  %v540 = vpack.c.b16 %v506, %v505
  %v541 = vpack.c.b16 %v508, %v507
  %v542 = vpack.c.b16 %v510, %v509
  %v543 = vpack.c.b16 %v512, %v511
  %v544 = vpack.c.b16 %v514, %v513
  %v545 = vpack.c.b16 %v516, %v515
  %v546 = vpack.c.b16 %v518, %v517
  %v547 = vpack.c.b16 %v520, %v519
  %v548 = vpack.c.b16 %v522, %v521
  %v549 = vpack.c.b16 %v524, %v523
  %v550 = vpack.c.b16 %v525, %v525
  %vm575 = vcmask 64512
  %v577 = vsel %vm575, %v366, 0
  %v580 = vsel %vm575, %v370, 0
  %v583 = vsel %vm575, %v374, 0
  %v586 = vsel %vm575, %v378, 0
  %vm588 = vcmask 1043456
  %v590 = vsel %vm588, %v550, 0
  %592 = vmatprep.subr.bf16.mxu0 0
  %593 = vmatpush1.bf16.msra.mxu0 %v533
  %594 = vmatprep.subr.bf16.mxu0 0
  %595 = vmatpush1.bf16.msra.mxu0 %v532
  %596 = vmatprep.subr.bf16.mxu0 0
  %597 = vmatpush1.bf16.msra.mxu0 %v531
  %598 = vmatprep.subr.bf16.mxu0 0
  %599 = vmatpush1.bf16.msra.mxu0 %v530
  %600 = vmatprep.subr.bf16.mxu0 0
  %601 = vmatpush1.bf16.msra.mxu0 %v529
  %602 = vmatprep.subr.bf16.mxu0 0
  %603 = vmatpush1.bf16.msra.mxu0 %v528
  %604 = vmatprep.subr.bf16.mxu0 0
  %605 = vmatpush1.bf16.msra.mxu0 %v527
  %606 = vmatprep.subr.bf16.mxu0 0
  %607 = vmatpush1.bf16.msra.mxu0 %v526
  %608 = vmatprep.subr.bf16.mxu0 0
  %609 = vmatpush2.bf16.msra.mxu0 %v541
  %610 = vmatprep.subr.bf16.mxu0 0
  %611 = vmatpush2.bf16.msra.mxu0 %v540
  %612 = vmatprep.subr.bf16.mxu0 0
  %613 = vmatpush2.bf16.msra.mxu0 %v539
  %614 = vmatprep.subr.bf16.mxu0 0
  %615 = vmatpush2.bf16.msra.mxu0 %v538
  %616 = vmatprep.subr.bf16.mxu0 0
  %617 = vmatpush2.bf16.msra.mxu0 %v537
  %618 = vmatprep.subr.bf16.mxu0 0
  %619 = vmatpush2.bf16.msra.mxu0 %v536
  %620 = vmatprep.subr.bf16.mxu0 0
  %621 = vmatpush2.bf16.msra.mxu0 %v535
  %622 = vmatprep.subr.bf16.mxu0 0
  %623 = vmatpush2.bf16.msra.mxu0 %v534
  %624 = vmatprep.mubr.bf16.mxu0 %v364
  %625 = vmatmul.mubr.bf16.gmra.mxu0 %v363
  %v626 = vpop.f32.mrf.mxu0
  %v627 = vadd.f32 0.0, %v626
  %v628 = vpop.f32.mrf.mxu0
  %v629 = vpop.f32.mrf.mxu0
  %v630 = vadd.f32 0.0, %v629
  %v631 = vpop.f32.mrf.mxu0
  %632 = vmatprep.mubr.bf16.mxu0 %v368
  %633 = vmatmul.mubr.bf16.gmra.mxu0 %v367
  %v634 = vpop.f32.mrf.mxu0
  %v635 = vadd.f32 0.0, %v634
  %v636 = vpop.f32.mrf.mxu0
  %v637 = vpop.f32.mrf.mxu0
  %v638 = vadd.f32 0.0, %v637
  %v639 = vpop.f32.mrf.mxu0
  %640 = vmatprep.mubr.bf16.mxu0 %v372
  %641 = vmatmul.mubr.bf16.gmra.mxu0 %v371
  %v642 = vpop.f32.mrf.mxu0
  %v643 = vadd.f32 0.0, %v642
  %v644 = vpop.f32.mrf.mxu0
  %v645 = vpop.f32.mrf.mxu0
  %v646 = vadd.f32 0.0, %v645
  %v647 = vpop.f32.mrf.mxu0
  %648 = vmatprep.mubr.bf16.mxu0 %v376
  %649 = vmatmul.mubr.bf16.gmra.mxu0 %v375
  %v650 = vpop.f32.mrf.mxu0
  %v651 = vadd.f32 0.0, %v650
  %v652 = vpop.f32.mrf.mxu0
  %v653 = vpop.f32.mrf.mxu0
  %v654 = vadd.f32 0.0, %v653
  %v655 = vpop.f32.mrf.mxu0
  %656 = vdwg.mxu0
  %657 = vmatprep.subr.bf16.mxu0 0
  %658 = vmatpush1.bf16.msra.mxu0 %v549
  %659 = vmatprep.subr.bf16.mxu0 0
  %660 = vmatpush1.bf16.msra.mxu0 %v548
  %661 = vmatprep.subr.bf16.mxu0 0
  %662 = vmatpush1.bf16.msra.mxu0 %v547
  %663 = vmatprep.subr.bf16.mxu0 0
  %664 = vmatpush1.bf16.msra.mxu0 %v546
  %665 = vmatprep.subr.bf16.mxu0 0
  %666 = vmatpush1.bf16.msra.mxu0 %v545
  %667 = vmatprep.subr.bf16.mxu0 0
  %668 = vmatpush1.bf16.msra.mxu0 %v544
  %669 = vmatprep.subr.bf16.mxu0 0
  %670 = vmatpush1.bf16.msra.mxu0 %v543
  %671 = vmatprep.subr.bf16.mxu0 0
  %672 = vmatpush1.bf16.msra.mxu0 %v542
  %673 = vmatprep.subr.bf16.mxu0 0
  %674 = vmatpush2.bf16.msra.mxu0 0
  %675 = vmatprep.subr.bf16.mxu0 0
  %676 = vmatpush2.bf16.msra.mxu0 0
  %677 = vmatprep.subr.bf16.mxu0 0
  %678 = vmatpush2.bf16.msra.mxu0 0
  %679 = vmatprep.subr.bf16.mxu0 0
  %680 = vmatpush2.bf16.msra.mxu0 0
  %681 = vmatprep.subr.bf16.mxu0 0
  %682 = vmatpush2.bf16.msra.mxu0 0
  %683 = vmatprep.subr.bf16.mxu0 0
  %684 = vmatpush2.bf16.msra.mxu0 0
  %685 = vmatprep.subr.bf16.mxu0 0
  %686 = vmatpush2.bf16.msra.mxu0 0
  %687 = vmatprep.subr.bf16.mxu0 0
  %688 = vmatpush2.bf16.msra.mxu0 %v590
  %689 = vmatprep.mubr.bf16.mxu0 %v577
  %690 = vmatmul.mubr.bf16.gmra.mxu0 %v365
  %v691 = vpop.f32.mrf.mxu0
  %v692 = vadd.f32 %v627, %v691
  %v693 = vpop.f32.mrf.mxu0
  %v694 = vpop.f32.mrf.mxu0
  %v695 = vadd.f32 %v630, %v694
  %v696 = vpop.f32.mrf.mxu0
  %697 = vmatprep.mubr.bf16.mxu0 %v580
  %698 = vmatmul.mubr.bf16.gmra.mxu0 %v369
  %v699 = vpop.f32.mrf.mxu0
  %v700 = vadd.f32 %v635, %v699
  %v701 = vpop.f32.mrf.mxu0
  %v702 = vpop.f32.mrf.mxu0
  %v703 = vadd.f32 %v638, %v702
  %v704 = vpop.f32.mrf.mxu0
  %705 = vmatprep.mubr.bf16.mxu0 %v583
  %706 = vmatmul.mubr.bf16.gmra.mxu0 %v373
  %v707 = vpop.f32.mrf.mxu0
  %v708 = vadd.f32 %v643, %v707
  %v709 = vpop.f32.mrf.mxu0
  %v710 = vpop.f32.mrf.mxu0
  %v711 = vadd.f32 %v646, %v710
  %v712 = vpop.f32.mrf.mxu0
  %713 = vmatprep.mubr.bf16.mxu0 %v586
  %714 = vmatmul.mubr.bf16.gmra.mxu0 %v377
  %v715 = vpop.f32.mrf.mxu0
  %v716 = vadd.f32 %v651, %v715
  %v717 = vpop.f32.mrf.mxu0
  %v718 = vpop.f32.mrf.mxu0
  %v719 = vadd.f32 %v654, %v718
  %v720 = vpop.f32.mrf.mxu0
  %721 = vdwg.mxu0
  %s722 = scalar_lea.vmem %s3, 196
  %v723 = vld [vmem:[%s722] sm:$0xf]
  %v724 = vld [vmem:[%s722 + $0x4] sm:$0xf]
  %v725 = vld [vmem:[%s722 + $0x8] sm:$0xf]
  %v726 = vld [vmem:[%s722 + $0xc] sm:$0xf]
  %v727 = vld [vmem:[%s722 + $0x10] sm:$0xf]
  %v728 = vld [vmem:[%s722 + $0x14] sm:$0xf]
  %v729 = vld [vmem:[%s722 + $0x18] sm:$0xf]
  %v730 = vld [vmem:[%s722 + $0x1c] sm:$0xf]
  %v731 = vld [vmem:[%s722 + $0x20] sm:$0xf]
  %v732 = vld [vmem:[%s722 + $0x24] sm:$0xf]
  %v733 = vld [vmem:[%s722 + $0x28] sm:$0xf]
  %v734 = vld [vmem:[%s722 + $0x2c] sm:$0xf]
  %v735 = vld [vmem:[%s722 + $0x30] sm:$0xf]
  %v736 = vld [vmem:[%s722 + $0x34] sm:$0xf]
  %v737 = vld [vmem:[%s722 + $0x38] sm:$0xf]
  %v738 = vld [vmem:[%s722 + $0x3c] sm:$0xf]
  %v739 = vld [vmem:[%s722 + $0x40] sm:$0xf]
  %v740 = vld [vmem:[%s722 + $0x44] sm:$0xf]
  %v741 = vld [vmem:[%s722 + $0x48] sm:$0xf]
  %v742 = vld [vmem:[%s722 + $0x4c] sm:$0xf]
  %v743 = vld [vmem:[%s722 + $0x50] sm:$0xf]
  %v744 = vld [vmem:[%s722 + $0x54] sm:$0xf]
  %v745 = vld [vmem:[%s722 + $0x58] sm:$0xf]
  %v746 = vld [vmem:[%s722 + $0x5c] sm:$0xf]
  %v747 = vld [vmem:[%s722 + $0x60] sm:$0xf]
  %v748 = vld [vmem:[%s722 + $0x64] sm:$0xf]
  %v749 = vld [vmem:[%s722 + $0x68] sm:$0xf]
  %v750 = vld [vmem:[%s722 + $0x6c] sm:$0xf]
  %v751 = vld [vmem:[%s722 + $0x70] sm:$0xf]
  %v752 = vld [vmem:[%s722 + $0x74] sm:$0xf]
  %v753 = vld [vmem:[%s722 + $0x78] sm:$0xf]
  %v754 = vld [vmem:[%s722 + $0x7c] sm:$0xf]
  %v755 = vld [vmem:[%s722 + $0x80] sm:$0xf]
  %v756 = vld [vmem:[%s722 + $0x84] sm:$0xf]
  %v757 = vld [vmem:[%s722 + $0x88] sm:$0xf]
  %v758 = vld [vmem:[%s722 + $0x8c] sm:$0xf]
  %v759 = vld [vmem:[%s722 + $0x90] sm:$0xf]
  %v760 = vld [vmem:[%s722 + $0x94] sm:$0xf]
  %v761 = vld [vmem:[%s722 + $0x98] sm:$0xf]
  %v762 = vld [vmem:[%s722 + $0x9c] sm:$0xf]
  %v763 = vld [vmem:[%s722 + $0xa0] sm:$0xf]
  %v764 = vld [vmem:[%s722 + $0xa4] sm:$0xf]
  %v765 = vld [vmem:[%s722 + $0xa8] sm:$0xf]
  %v766 = vld [vmem:[%s722 + $0xac] sm:$0xf]
  %v767 = vld [vmem:[%s722 + $0xb0] sm:$0xf]
  %v768 = vld [vmem:[%s722 + $0xb4] sm:$0xf]
  %v769 = vld [vmem:[%s722 + $0xb8] sm:$0xf]
  %v770 = vld [vmem:[%s722 + $0xbc] sm:$0xf]
  %v771 = vld [vmem:[%s722 + $0xc0] sm:$0xf]
  %v821 = vunpack.c.l.b16 %v723
  %v822 = vunpack.c.l.b16 %v724
  %v823 = vunpack.c.l.b16 %v725
  %v824 = vunpack.c.l.b16 %v726
  %v825 = vunpack.c.l.b16 %v727
  %v826 = vunpack.c.l.b16 %v728
  %v827 = vunpack.c.l.b16 %v729
  %v828 = vunpack.c.l.b16 %v730
  %v829 = vunpack.c.l.b16 %v731
  %v830 = vunpack.c.l.b16 %v732
  %v831 = vunpack.c.l.b16 %v733
  %v832 = vunpack.c.l.b16 %v734
  %v833 = vunpack.c.l.b16 %v735
  %v834 = vunpack.c.l.b16 %v736
  %v835 = vunpack.c.l.b16 %v737
  %v836 = vunpack.c.l.b16 %v738
  %v837 = vunpack.c.l.b16 %v739
  %v838 = vunpack.c.l.b16 %v740
  %v839 = vunpack.c.l.b16 %v741
  %v840 = vunpack.c.l.b16 %v742
  %v841 = vunpack.c.l.b16 %v743
  %v842 = vunpack.c.l.b16 %v744
  %v843 = vunpack.c.l.b16 %v745
  %v844 = vunpack.c.l.b16 %v746
  %v845 = vunpack.c.l.b16 %v747
  %v846 = vunpack.c.l.b16 %v748
  %v847 = vunpack.c.l.b16 %v749
  %v848 = vunpack.c.l.b16 %v750
  %v849 = vunpack.c.l.b16 %v751
  %v850 = vunpack.c.l.b16 %v752
  %v851 = vunpack.c.l.b16 %v753
  %v852 = vunpack.c.l.b16 %v754
  %v853 = vunpack.c.l.b16 %v755
  %v854 = vunpack.c.l.b16 %v756
  %v855 = vunpack.c.l.b16 %v757
  %v856 = vunpack.c.l.b16 %v758
  %v857 = vunpack.c.l.b16 %v759
  %v858 = vunpack.c.l.b16 %v760
  %v859 = vunpack.c.l.b16 %v761
  %v860 = vunpack.c.l.b16 %v762
  %v861 = vunpack.c.l.b16 %v763
  %v862 = vunpack.c.l.b16 %v764
  %v863 = vunpack.c.l.b16 %v765
  %v864 = vunpack.c.l.b16 %v766
  %v865 = vunpack.c.l.b16 %v767
  %v866 = vunpack.c.l.b16 %v768
  %v867 = vunpack.c.l.b16 %v769
  %v868 = vunpack.c.l.b16 %v770
  %v869 = vunpack.c.l.b16 %v771
  %v870 = vpack.c.b16 %v822, %v821
  %v871 = vpack.c.b16 %v824, %v823
  %v872 = vpack.c.b16 %v826, %v825
  %v873 = vpack.c.b16 %v828, %v827
  %v874 = vpack.c.b16 %v830, %v829
  %v875 = vpack.c.b16 %v832, %v831
  %v876 = vpack.c.b16 %v834, %v833
  %v877 = vpack.c.b16 %v836, %v835
  %v878 = vpack.c.b16 %v838, %v837
  %v879 = vpack.c.b16 %v840, %v839
  %v880 = vpack.c.b16 %v842, %v841
  %v881 = vpack.c.b16 %v844, %v843
  %v882 = vpack.c.b16 %v846, %v845
  %v883 = vpack.c.b16 %v848, %v847
  %v884 = vpack.c.b16 %v850, %v849
  %v885 = vpack.c.b16 %v852, %v851
  %v886 = vpack.c.b16 %v854, %v853
  %v887 = vpack.c.b16 %v856, %v855
  %v888 = vpack.c.b16 %v858, %v857
  %v889 = vpack.c.b16 %v860, %v859
  %v890 = vpack.c.b16 %v862, %v861
  %v891 = vpack.c.b16 %v864, %v863
  %v892 = vpack.c.b16 %v866, %v865
  %v893 = vpack.c.b16 %v868, %v867
  %v894 = vpack.c.b16 %v869, %v869
  %v920 = vsel %vm588, %v894, 0
  %922 = vmatprep.subr.bf16.mxu0 0
  %923 = vmatpush1.bf16.msra.mxu0 %v877
  %924 = vmatprep.subr.bf16.mxu0 0
  %925 = vmatpush1.bf16.msra.mxu0 %v876
  %926 = vmatprep.subr.bf16.mxu0 0
  %927 = vmatpush1.bf16.msra.mxu0 %v875
  %928 = vmatprep.subr.bf16.mxu0 0
  %929 = vmatpush1.bf16.msra.mxu0 %v874
  %930 = vmatprep.subr.bf16.mxu0 0
  %931 = vmatpush1.bf16.msra.mxu0 %v873
  %932 = vmatprep.subr.bf16.mxu0 0
  %933 = vmatpush1.bf16.msra.mxu0 %v872
  %934 = vmatprep.subr.bf16.mxu0 0
  %935 = vmatpush1.bf16.msra.mxu0 %v871
  %936 = vmatprep.subr.bf16.mxu0 0
  %937 = vmatpush1.bf16.msra.mxu0 %v870
  %938 = vmatprep.subr.bf16.mxu0 0
  %939 = vmatpush2.bf16.msra.mxu0 %v885
  %940 = vmatprep.subr.bf16.mxu0 0
  %941 = vmatpush2.bf16.msra.mxu0 %v884
  %942 = vmatprep.subr.bf16.mxu0 0
  %943 = vmatpush2.bf16.msra.mxu0 %v883
  %944 = vmatprep.subr.bf16.mxu0 0
  %945 = vmatpush2.bf16.msra.mxu0 %v882
  %946 = vmatprep.subr.bf16.mxu0 0
  %947 = vmatpush2.bf16.msra.mxu0 %v881
  %948 = vmatprep.subr.bf16.mxu0 0
  %949 = vmatpush2.bf16.msra.mxu0 %v880
  %950 = vmatprep.subr.bf16.mxu0 0
  %951 = vmatpush2.bf16.msra.mxu0 %v879
  %952 = vmatprep.subr.bf16.mxu0 0
  %953 = vmatpush2.bf16.msra.mxu0 %v878
  %954 = vmatprep.mubr.bf16.mxu0 %v364
  %955 = vmatmul.mubr.bf16.gmra.mxu0 %v363
  %v956 = vpop.f32.mrf.mxu0
  %v957 = vadd.f32 0.0, %v956
  %v958 = vpop.f32.mrf.mxu0
  %v959 = vpop.f32.mrf.mxu0
  %v960 = vadd.f32 0.0, %v959
  %v961 = vpop.f32.mrf.mxu0
  %962 = vmatprep.mubr.bf16.mxu0 %v368
  %963 = vmatmul.mubr.bf16.gmra.mxu0 %v367
  %v964 = vpop.f32.mrf.mxu0
  %v965 = vadd.f32 0.0, %v964
  %v966 = vpop.f32.mrf.mxu0
  %v967 = vpop.f32.mrf.mxu0
  %v968 = vadd.f32 0.0, %v967
  %v969 = vpop.f32.mrf.mxu0
  %970 = vmatprep.mubr.bf16.mxu0 %v372
  %971 = vmatmul.mubr.bf16.gmra.mxu0 %v371
  %v972 = vpop.f32.mrf.mxu0
  %v973 = vadd.f32 0.0, %v972
  %v974 = vpop.f32.mrf.mxu0
  %v975 = vpop.f32.mrf.mxu0
  %v976 = vadd.f32 0.0, %v975
  %v977 = vpop.f32.mrf.mxu0
  %978 = vmatprep.mubr.bf16.mxu0 %v376
  %979 = vmatmul.mubr.bf16.gmra.mxu0 %v375
  %v980 = vpop.f32.mrf.mxu0
  %v981 = vadd.f32 0.0, %v980
  %v982 = vpop.f32.mrf.mxu0
  %v983 = vpop.f32.mrf.mxu0
  %v984 = vadd.f32 0.0, %v983
  %v985 = vpop.f32.mrf.mxu0
  %986 = vdwg.mxu0
  %987 = vmatprep.subr.bf16.mxu0 0
  %988 = vmatpush1.bf16.msra.mxu0 %v893
  %989 = vmatprep.subr.bf16.mxu0 0
  %990 = vmatpush1.bf16.msra.mxu0 %v892
  %991 = vmatprep.subr.bf16.mxu0 0
  %992 = vmatpush1.bf16.msra.mxu0 %v891
  %993 = vmatprep.subr.bf16.mxu0 0
  %994 = vmatpush1.bf16.msra.mxu0 %v890
  %995 = vmatprep.subr.bf16.mxu0 0
  %996 = vmatpush1.bf16.msra.mxu0 %v889
  %997 = vmatprep.subr.bf16.mxu0 0
  %998 = vmatpush1.bf16.msra.mxu0 %v888
  %999 = vmatprep.subr.bf16.mxu0 0
  %1000 = vmatpush1.bf16.msra.mxu0 %v887
  %1001 = vmatprep.subr.bf16.mxu0 0
  %1002 = vmatpush1.bf16.msra.mxu0 %v886
  %1003 = vmatprep.subr.bf16.mxu0 0
  %1004 = vmatpush2.bf16.msra.mxu0 0
  %1005 = vmatprep.subr.bf16.mxu0 0
  %1006 = vmatpush2.bf16.msra.mxu0 0
  %1007 = vmatprep.subr.bf16.mxu0 0
  %1008 = vmatpush2.bf16.msra.mxu0 0
  %1009 = vmatprep.subr.bf16.mxu0 0
  %1010 = vmatpush2.bf16.msra.mxu0 0
  %1011 = vmatprep.subr.bf16.mxu0 0
  %1012 = vmatpush2.bf16.msra.mxu0 0
  %1013 = vmatprep.subr.bf16.mxu0 0
  %1014 = vmatpush2.bf16.msra.mxu0 0
  %1015 = vmatprep.subr.bf16.mxu0 0
  %1016 = vmatpush2.bf16.msra.mxu0 0
  %1017 = vmatprep.subr.bf16.mxu0 0
  %1018 = vmatpush2.bf16.msra.mxu0 %v920
  %1019 = vmatprep.mubr.bf16.mxu0 %v577
  %1020 = vmatmul.mubr.bf16.gmra.mxu0 %v365
  %v1021 = vpop.f32.mrf.mxu0
  %v1022 = vadd.f32 %v957, %v1021
  %v1023 = vpop.f32.mrf.mxu0
  %v1024 = vpop.f32.mrf.mxu0
  %v1025 = vadd.f32 %v960, %v1024
  %v1026 = vpop.f32.mrf.mxu0
  %1027 = vmatprep.mubr.bf16.mxu0 %v580
  %1028 = vmatmul.mubr.bf16.gmra.mxu0 %v369
  %v1029 = vpop.f32.mrf.mxu0
  %v1030 = vadd.f32 %v965, %v1029
  %v1031 = vpop.f32.mrf.mxu0
  %v1032 = vpop.f32.mrf.mxu0
  %v1033 = vadd.f32 %v968, %v1032
  %v1034 = vpop.f32.mrf.mxu0
  %1035 = vmatprep.mubr.bf16.mxu0 %v583
  %1036 = vmatmul.mubr.bf16.gmra.mxu0 %v373
  %v1037 = vpop.f32.mrf.mxu0
  %v1038 = vadd.f32 %v973, %v1037
  %v1039 = vpop.f32.mrf.mxu0
  %v1040 = vpop.f32.mrf.mxu0
  %v1041 = vadd.f32 %v976, %v1040
  %v1042 = vpop.f32.mrf.mxu0
  %1043 = vmatprep.mubr.bf16.mxu0 %v586
  %1044 = vmatmul.mubr.bf16.gmra.mxu0 %v377
  %v1045 = vpop.f32.mrf.mxu0
  %v1046 = vadd.f32 %v981, %v1045
  %v1047 = vpop.f32.mrf.mxu0
  %v1048 = vpop.f32.mrf.mxu0
  %v1049 = vadd.f32 %v984, %v1048
  %v1050 = vpop.f32.mrf.mxu0
  %1051 = vdwg.mxu0
  %v1052 = vmax.f32 %v692, %v1022
  %v1053 = vmax.f32 %v695, %v1025
  %v1054 = vmax.f32 %v700, %v1030
  %v1055 = vmax.f32 %v703, %v1033
  %v1056 = vmax.f32 %v708, %v1038
  %v1057 = vmax.f32 %v711, %v1041
  %v1058 = vmax.f32 %v716, %v1046
  %v1059 = vmax.f32 %v719, %v1049
  %s1060 = scalar_lea.vmem %s3, 392
  %v1061 = vld [vmem:[%s1060] sm:$0xf]
  %v1062 = vld [vmem:[%s1060 + $0x4] sm:$0xf]
  %v1063 = vld [vmem:[%s1060 + $0x8] sm:$0xf]
  %v1064 = vld [vmem:[%s1060 + $0xc] sm:$0xf]
  %v1065 = vld [vmem:[%s1060 + $0x10] sm:$0xf]
  %v1066 = vld [vmem:[%s1060 + $0x14] sm:$0xf]
  %v1067 = vld [vmem:[%s1060 + $0x18] sm:$0xf]
  %v1068 = vld [vmem:[%s1060 + $0x1c] sm:$0xf]
  %v1069 = vld [vmem:[%s1060 + $0x20] sm:$0xf]
  %v1070 = vld [vmem:[%s1060 + $0x24] sm:$0xf]
  %v1071 = vld [vmem:[%s1060 + $0x28] sm:$0xf]
  %v1072 = vld [vmem:[%s1060 + $0x2c] sm:$0xf]
  %v1073 = vld [vmem:[%s1060 + $0x30] sm:$0xf]
  %v1074 = vld [vmem:[%s1060 + $0x34] sm:$0xf]
  %v1075 = vld [vmem:[%s1060 + $0x38] sm:$0xf]
  %v1076 = vld [vmem:[%s1060 + $0x3c] sm:$0xf]
  %v1077 = vld [vmem:[%s1060 + $0x40] sm:$0xf]
  %v1078 = vld [vmem:[%s1060 + $0x44] sm:$0xf]
  %v1079 = vld [vmem:[%s1060 + $0x48] sm:$0xf]
  %v1080 = vld [vmem:[%s1060 + $0x4c] sm:$0xf]
  %v1081 = vld [vmem:[%s1060 + $0x50] sm:$0xf]
  %v1082 = vld [vmem:[%s1060 + $0x54] sm:$0xf]
  %v1083 = vld [vmem:[%s1060 + $0x58] sm:$0xf]
  %v1084 = vld [vmem:[%s1060 + $0x5c] sm:$0xf]
  %v1085 = vld [vmem:[%s1060 + $0x60] sm:$0xf]
  %v1086 = vld [vmem:[%s1060 + $0x64] sm:$0xf]
  %v1087 = vld [vmem:[%s1060 + $0x68] sm:$0xf]
  %v1088 = vld [vmem:[%s1060 + $0x6c] sm:$0xf]
  %v1089 = vld [vmem:[%s1060 + $0x70] sm:$0xf]
  %v1090 = vld [vmem:[%s1060 + $0x74] sm:$0xf]
  %v1091 = vld [vmem:[%s1060 + $0x78] sm:$0xf]
  %v1092 = vld [vmem:[%s1060 + $0x7c] sm:$0xf]
  %v1093 = vld [vmem:[%s1060 + $0x80] sm:$0xf]
  %v1094 = vld [vmem:[%s1060 + $0x84] sm:$0xf]
  %v1095 = vld [vmem:[%s1060 + $0x88] sm:$0xf]
  %v1096 = vld [vmem:[%s1060 + $0x8c] sm:$0xf]
  %v1097 = vld [vmem:[%s1060 + $0x90] sm:$0xf]
  %v1098 = vld [vmem:[%s1060 + $0x94] sm:$0xf]
  %v1099 = vld [vmem:[%s1060 + $0x98] sm:$0xf]
  %v1100 = vld [vmem:[%s1060 + $0x9c] sm:$0xf]
  %v1101 = vld [vmem:[%s1060 + $0xa0] sm:$0xf]
  %v1102 = vld [vmem:[%s1060 + $0xa4] sm:$0xf]
  %v1103 = vld [vmem:[%s1060 + $0xa8] sm:$0xf]
  %v1104 = vld [vmem:[%s1060 + $0xac] sm:$0xf]
  %v1105 = vld [vmem:[%s1060 + $0xb0] sm:$0xf]
  %v1106 = vld [vmem:[%s1060 + $0xb4] sm:$0xf]
  %v1107 = vld [vmem:[%s1060 + $0xb8] sm:$0xf]
  %v1108 = vld [vmem:[%s1060 + $0xbc] sm:$0xf]
  %v1109 = vld [vmem:[%s1060 + $0xc0] sm:$0xf]
  %v1159 = vunpack.c.l.b16 %v1061
  %v1160 = vunpack.c.l.b16 %v1062
  %v1161 = vunpack.c.l.b16 %v1063
  %v1162 = vunpack.c.l.b16 %v1064
  %v1163 = vunpack.c.l.b16 %v1065
  %v1164 = vunpack.c.l.b16 %v1066
  %v1165 = vunpack.c.l.b16 %v1067
  %v1166 = vunpack.c.l.b16 %v1068
  %v1167 = vunpack.c.l.b16 %v1069
  %v1168 = vunpack.c.l.b16 %v1070
  %v1169 = vunpack.c.l.b16 %v1071
  %v1170 = vunpack.c.l.b16 %v1072
  %v1171 = vunpack.c.l.b16 %v1073
  %v1172 = vunpack.c.l.b16 %v1074
  %v1173 = vunpack.c.l.b16 %v1075
  %v1174 = vunpack.c.l.b16 %v1076
  %v1175 = vunpack.c.l.b16 %v1077
  %v1176 = vunpack.c.l.b16 %v1078
  %v1177 = vunpack.c.l.b16 %v1079
  %v1178 = vunpack.c.l.b16 %v1080
  %v1179 = vunpack.c.l.b16 %v1081
  %v1180 = vunpack.c.l.b16 %v1082
  %v1181 = vunpack.c.l.b16 %v1083
  %v1182 = vunpack.c.l.b16 %v1084
  %v1183 = vunpack.c.l.b16 %v1085
  %v1184 = vunpack.c.l.b16 %v1086
  %v1185 = vunpack.c.l.b16 %v1087
  %v1186 = vunpack.c.l.b16 %v1088
  %v1187 = vunpack.c.l.b16 %v1089
  %v1188 = vunpack.c.l.b16 %v1090
  %v1189 = vunpack.c.l.b16 %v1091
  %v1190 = vunpack.c.l.b16 %v1092
  %v1191 = vunpack.c.l.b16 %v1093
  %v1192 = vunpack.c.l.b16 %v1094
  %v1193 = vunpack.c.l.b16 %v1095
  %v1194 = vunpack.c.l.b16 %v1096
  %v1195 = vunpack.c.l.b16 %v1097
  %v1196 = vunpack.c.l.b16 %v1098
  %v1197 = vunpack.c.l.b16 %v1099
  %v1198 = vunpack.c.l.b16 %v1100
  %v1199 = vunpack.c.l.b16 %v1101
  %v1200 = vunpack.c.l.b16 %v1102
  %v1201 = vunpack.c.l.b16 %v1103
  %v1202 = vunpack.c.l.b16 %v1104
  %v1203 = vunpack.c.l.b16 %v1105
  %v1204 = vunpack.c.l.b16 %v1106
  %v1205 = vunpack.c.l.b16 %v1107
  %v1206 = vunpack.c.l.b16 %v1108
  %v1207 = vunpack.c.l.b16 %v1109
  %v1208 = vpack.c.b16 %v1160, %v1159
  %v1209 = vpack.c.b16 %v1162, %v1161
  %v1210 = vpack.c.b16 %v1164, %v1163
  %v1211 = vpack.c.b16 %v1166, %v1165
  %v1212 = vpack.c.b16 %v1168, %v1167
  %v1213 = vpack.c.b16 %v1170, %v1169
  %v1214 = vpack.c.b16 %v1172, %v1171
  %v1215 = vpack.c.b16 %v1174, %v1173
  %v1216 = vpack.c.b16 %v1176, %v1175
  %v1217 = vpack.c.b16 %v1178, %v1177
  %v1218 = vpack.c.b16 %v1180, %v1179
  %v1219 = vpack.c.b16 %v1182, %v1181
  %v1220 = vpack.c.b16 %v1184, %v1183
  %v1221 = vpack.c.b16 %v1186, %v1185
  %v1222 = vpack.c.b16 %v1188, %v1187
  %v1223 = vpack.c.b16 %v1190, %v1189
  %v1224 = vpack.c.b16 %v1192, %v1191
  %v1225 = vpack.c.b16 %v1194, %v1193
  %v1226 = vpack.c.b16 %v1196, %v1195
  %v1227 = vpack.c.b16 %v1198, %v1197
  %v1228 = vpack.c.b16 %v1200, %v1199
  %v1229 = vpack.c.b16 %v1202, %v1201
  %v1230 = vpack.c.b16 %v1204, %v1203
  %v1231 = vpack.c.b16 %v1206, %v1205
  %v1232 = vpack.c.b16 %v1207, %v1207
  %v1258 = vsel %vm588, %v1232, 0
  %1260 = vmatprep.subr.bf16.mxu0 0
  %1261 = vmatpush1.bf16.msra.mxu0 %v1215
  %1262 = vmatprep.subr.bf16.mxu0 0
  %1263 = vmatpush1.bf16.msra.mxu0 %v1214
  %1264 = vmatprep.subr.bf16.mxu0 0
  %1265 = vmatpush1.bf16.msra.mxu0 %v1213
  %1266 = vmatprep.subr.bf16.mxu0 0
  %1267 = vmatpush1.bf16.msra.mxu0 %v1212
  %1268 = vmatprep.subr.bf16.mxu0 0
  %1269 = vmatpush1.bf16.msra.mxu0 %v1211
  %1270 = vmatprep.subr.bf16.mxu0 0
  %1271 = vmatpush1.bf16.msra.mxu0 %v1210
  %1272 = vmatprep.subr.bf16.mxu0 0
  %1273 = vmatpush1.bf16.msra.mxu0 %v1209
  %1274 = vmatprep.subr.bf16.mxu0 0
  %1275 = vmatpush1.bf16.msra.mxu0 %v1208
  %1276 = vmatprep.subr.bf16.mxu0 0
  %1277 = vmatpush2.bf16.msra.mxu0 %v1223
  %1278 = vmatprep.subr.bf16.mxu0 0
  %1279 = vmatpush2.bf16.msra.mxu0 %v1222
  %1280 = vmatprep.subr.bf16.mxu0 0
  %1281 = vmatpush2.bf16.msra.mxu0 %v1221
  %1282 = vmatprep.subr.bf16.mxu0 0
  %1283 = vmatpush2.bf16.msra.mxu0 %v1220
  %1284 = vmatprep.subr.bf16.mxu0 0
  %1285 = vmatpush2.bf16.msra.mxu0 %v1219
  %1286 = vmatprep.subr.bf16.mxu0 0
  %1287 = vmatpush2.bf16.msra.mxu0 %v1218
  %1288 = vmatprep.subr.bf16.mxu0 0
  %1289 = vmatpush2.bf16.msra.mxu0 %v1217
  %1290 = vmatprep.subr.bf16.mxu0 0
  %1291 = vmatpush2.bf16.msra.mxu0 %v1216
  %1292 = vmatprep.mubr.bf16.mxu0 %v364
  %1293 = vmatmul.mubr.bf16.gmra.mxu0 %v363
  %v1294 = vpop.f32.mrf.mxu0
  %v1295 = vadd.f32 0.0, %v1294
  %v1296 = vpop.f32.mrf.mxu0
  %v1297 = vpop.f32.mrf.mxu0
  %v1298 = vadd.f32 0.0, %v1297
  %v1299 = vpop.f32.mrf.mxu0
  %1300 = vmatprep.mubr.bf16.mxu0 %v368
  %1301 = vmatmul.mubr.bf16.gmra.mxu0 %v367
  %v1302 = vpop.f32.mrf.mxu0
  %v1303 = vadd.f32 0.0, %v1302
  %v1304 = vpop.f32.mrf.mxu0
  %v1305 = vpop.f32.mrf.mxu0
  %v1306 = vadd.f32 0.0, %v1305
  %v1307 = vpop.f32.mrf.mxu0
  %1308 = vmatprep.mubr.bf16.mxu0 %v372
  %1309 = vmatmul.mubr.bf16.gmra.mxu0 %v371
  %v1310 = vpop.f32.mrf.mxu0
  %v1311 = vadd.f32 0.0, %v1310
  %v1312 = vpop.f32.mrf.mxu0
  %v1313 = vpop.f32.mrf.mxu0
  %v1314 = vadd.f32 0.0, %v1313
  %v1315 = vpop.f32.mrf.mxu0
  %1316 = vmatprep.mubr.bf16.mxu0 %v376
  %1317 = vmatmul.mubr.bf16.gmra.mxu0 %v375
  %v1318 = vpop.f32.mrf.mxu0
  %v1319 = vadd.f32 0.0, %v1318
  %v1320 = vpop.f32.mrf.mxu0
  %v1321 = vpop.f32.mrf.mxu0
  %v1322 = vadd.f32 0.0, %v1321
  %v1323 = vpop.f32.mrf.mxu0
  %1324 = vdwg.mxu0
  %1325 = vmatprep.subr.bf16.mxu0 0
  %1326 = vmatpush1.bf16.msra.mxu0 %v1231
  %1327 = vmatprep.subr.bf16.mxu0 0
  %1328 = vmatpush1.bf16.msra.mxu0 %v1230
  %1329 = vmatprep.subr.bf16.mxu0 0
  %1330 = vmatpush1.bf16.msra.mxu0 %v1229
  %1331 = vmatprep.subr.bf16.mxu0 0
  %1332 = vmatpush1.bf16.msra.mxu0 %v1228
  %1333 = vmatprep.subr.bf16.mxu0 0
  %1334 = vmatpush1.bf16.msra.mxu0 %v1227
  %1335 = vmatprep.subr.bf16.mxu0 0
  %1336 = vmatpush1.bf16.msra.mxu0 %v1226
  %1337 = vmatprep.subr.bf16.mxu0 0
  %1338 = vmatpush1.bf16.msra.mxu0 %v1225
  %1339 = vmatprep.subr.bf16.mxu0 0
  %1340 = vmatpush1.bf16.msra.mxu0 %v1224
  %1341 = vmatprep.subr.bf16.mxu0 0
  %1342 = vmatpush2.bf16.msra.mxu0 0
  %1343 = vmatprep.subr.bf16.mxu0 0
  %1344 = vmatpush2.bf16.msra.mxu0 0
  %1345 = vmatprep.subr.bf16.mxu0 0
  %1346 = vmatpush2.bf16.msra.mxu0 0
  %1347 = vmatprep.subr.bf16.mxu0 0
  %1348 = vmatpush2.bf16.msra.mxu0 0
  %1349 = vmatprep.subr.bf16.mxu0 0
  %1350 = vmatpush2.bf16.msra.mxu0 0
  %1351 = vmatprep.subr.bf16.mxu0 0
  %1352 = vmatpush2.bf16.msra.mxu0 0
  %1353 = vmatprep.subr.bf16.mxu0 0
  %1354 = vmatpush2.bf16.msra.mxu0 0
  %1355 = vmatprep.subr.bf16.mxu0 0
  %1356 = vmatpush2.bf16.msra.mxu0 %v1258
  %1357 = vmatprep.mubr.bf16.mxu0 %v577
  %1358 = vmatmul.mubr.bf16.gmra.mxu0 %v365
  %v1359 = vpop.f32.mrf.mxu0
  %v1360 = vadd.f32 %v1295, %v1359
  %v1361 = vpop.f32.mrf.mxu0
  %v1362 = vpop.f32.mrf.mxu0
  %v1363 = vadd.f32 %v1298, %v1362
  %v1364 = vpop.f32.mrf.mxu0
  %1365 = vmatprep.mubr.bf16.mxu0 %v580
  %1366 = vmatmul.mubr.bf16.gmra.mxu0 %v369
  %v1367 = vpop.f32.mrf.mxu0
  %v1368 = vadd.f32 %v1303, %v1367
  %v1369 = vpop.f32.mrf.mxu0
  %v1370 = vpop.f32.mrf.mxu0
  %v1371 = vadd.f32 %v1306, %v1370
  %v1372 = vpop.f32.mrf.mxu0
  %1373 = vmatprep.mubr.bf16.mxu0 %v583
  %1374 = vmatmul.mubr.bf16.gmra.mxu0 %v373
  %v1375 = vpop.f32.mrf.mxu0
  %v1376 = vadd.f32 %v1311, %v1375
  %v1377 = vpop.f32.mrf.mxu0
  %v1378 = vpop.f32.mrf.mxu0
  %v1379 = vadd.f32 %v1314, %v1378
  %v1380 = vpop.f32.mrf.mxu0
  %1381 = vmatprep.mubr.bf16.mxu0 %v586
  %1382 = vmatmul.mubr.bf16.gmra.mxu0 %v377
  %v1383 = vpop.f32.mrf.mxu0
  %v1384 = vadd.f32 %v1319, %v1383
  %v1385 = vpop.f32.mrf.mxu0
  %v1386 = vpop.f32.mrf.mxu0
  %v1387 = vadd.f32 %v1322, %v1386
  %v1388 = vpop.f32.mrf.mxu0
  %1389 = vdwg.mxu0
  %v1390 = vmax.f32 %v1052, %v1360
  %v1391 = vmax.f32 %v1053, %v1363
  %v1392 = vmax.f32 %v1054, %v1368
  %v1393 = vmax.f32 %v1055, %v1371
  %v1394 = vmax.f32 %v1056, %v1376
  %v1395 = vmax.f32 %v1057, %v1379
  %v1396 = vmax.f32 %v1058, %v1384
  %v1397 = vmax.f32 %v1059, %v1387
  %s1398 = scalar_lea.vmem %s3, 588
  %v1399 = vld [vmem:[%s1398] sm:$0xf]
  %v1400 = vld [vmem:[%s1398 + $0x4] sm:$0xf]
  %v1401 = vld [vmem:[%s1398 + $0x8] sm:$0xf]
  %v1402 = vld [vmem:[%s1398 + $0xc] sm:$0xf]
  %v1403 = vld [vmem:[%s1398 + $0x10] sm:$0xf]
  %v1404 = vld [vmem:[%s1398 + $0x14] sm:$0xf]
  %v1405 = vld [vmem:[%s1398 + $0x18] sm:$0xf]
  %v1406 = vld [vmem:[%s1398 + $0x1c] sm:$0xf]
  %v1407 = vld [vmem:[%s1398 + $0x20] sm:$0xf]
  %v1408 = vld [vmem:[%s1398 + $0x24] sm:$0xf]
  %v1409 = vld [vmem:[%s1398 + $0x28] sm:$0xf]
  %v1410 = vld [vmem:[%s1398 + $0x2c] sm:$0xf]
  %v1411 = vld [vmem:[%s1398 + $0x30] sm:$0xf]
  %v1412 = vld [vmem:[%s1398 + $0x34] sm:$0xf]
  %v1413 = vld [vmem:[%s1398 + $0x38] sm:$0xf]
  %v1414 = vld [vmem:[%s1398 + $0x3c] sm:$0xf]
  %v1415 = vld [vmem:[%s1398 + $0x40] sm:$0xf]
  %v1416 = vld [vmem:[%s1398 + $0x44] sm:$0xf]
  %v1417 = vld [vmem:[%s1398 + $0x48] sm:$0xf]
  %v1418 = vld [vmem:[%s1398 + $0x4c] sm:$0xf]
  %v1419 = vld [vmem:[%s1398 + $0x50] sm:$0xf]
  %v1420 = vld [vmem:[%s1398 + $0x54] sm:$0xf]
  %v1421 = vld [vmem:[%s1398 + $0x58] sm:$0xf]
  %v1422 = vld [vmem:[%s1398 + $0x5c] sm:$0xf]
  %v1423 = vld [vmem:[%s1398 + $0x60] sm:$0xf]
  %v1424 = vld [vmem:[%s1398 + $0x64] sm:$0xf]
  %v1425 = vld [vmem:[%s1398 + $0x68] sm:$0xf]
  %v1426 = vld [vmem:[%s1398 + $0x6c] sm:$0xf]
  %v1427 = vld [vmem:[%s1398 + $0x70] sm:$0xf]
  %v1428 = vld [vmem:[%s1398 + $0x74] sm:$0xf]
  %v1429 = vld [vmem:[%s1398 + $0x78] sm:$0xf]
  %v1430 = vld [vmem:[%s1398 + $0x7c] sm:$0xf]
  %v1431 = vld [vmem:[%s1398 + $0x80] sm:$0xf]
  %v1432 = vld [vmem:[%s1398 + $0x84] sm:$0xf]
  %v1433 = vld [vmem:[%s1398 + $0x88] sm:$0xf]
  %v1434 = vld [vmem:[%s1398 + $0x8c] sm:$0xf]
  %v1435 = vld [vmem:[%s1398 + $0x90] sm:$0xf]
  %v1436 = vld [vmem:[%s1398 + $0x94] sm:$0xf]
  %v1437 = vld [vmem:[%s1398 + $0x98] sm:$0xf]
  %v1438 = vld [vmem:[%s1398 + $0x9c] sm:$0xf]
  %v1439 = vld [vmem:[%s1398 + $0xa0] sm:$0xf]
  %v1440 = vld [vmem:[%s1398 + $0xa4] sm:$0xf]
  %v1441 = vld [vmem:[%s1398 + $0xa8] sm:$0xf]
  %v1442 = vld [vmem:[%s1398 + $0xac] sm:$0xf]
  %v1443 = vld [vmem:[%s1398 + $0xb0] sm:$0xf]
  %v1444 = vld [vmem:[%s1398 + $0xb4] sm:$0xf]
  %v1445 = vld [vmem:[%s1398 + $0xb8] sm:$0xf]
  %v1446 = vld [vmem:[%s1398 + $0xbc] sm:$0xf]
  %v1447 = vld [vmem:[%s1398 + $0xc0] sm:$0xf]
  %v1497 = vunpack.c.l.b16 %v1399
  %v1498 = vunpack.c.l.b16 %v1400
  %v1499 = vunpack.c.l.b16 %v1401
  %v1500 = vunpack.c.l.b16 %v1402
  %v1501 = vunpack.c.l.b16 %v1403
  %v1502 = vunpack.c.l.b16 %v1404
  %v1503 = vunpack.c.l.b16 %v1405
  %v1504 = vunpack.c.l.b16 %v1406
  %v1505 = vunpack.c.l.b16 %v1407
  %v1506 = vunpack.c.l.b16 %v1408
  %v1507 = vunpack.c.l.b16 %v1409
  %v1508 = vunpack.c.l.b16 %v1410
  %v1509 = vunpack.c.l.b16 %v1411
  %v1510 = vunpack.c.l.b16 %v1412
  %v1511 = vunpack.c.l.b16 %v1413
  %v1512 = vunpack.c.l.b16 %v1414
  %v1513 = vunpack.c.l.b16 %v1415
  %v1514 = vunpack.c.l.b16 %v1416
  %v1515 = vunpack.c.l.b16 %v1417
  %v1516 = vunpack.c.l.b16 %v1418
  %v1517 = vunpack.c.l.b16 %v1419
  %v1518 = vunpack.c.l.b16 %v1420
  %v1519 = vunpack.c.l.b16 %v1421
  %v1520 = vunpack.c.l.b16 %v1422
  %v1521 = vunpack.c.l.b16 %v1423
  %v1522 = vunpack.c.l.b16 %v1424
  %v1523 = vunpack.c.l.b16 %v1425
  %v1524 = vunpack.c.l.b16 %v1426
  %v1525 = vunpack.c.l.b16 %v1427
  %v1526 = vunpack.c.l.b16 %v1428
  %v1527 = vunpack.c.l.b16 %v1429
  %v1528 = vunpack.c.l.b16 %v1430
  %v1529 = vunpack.c.l.b16 %v1431
  %v1530 = vunpack.c.l.b16 %v1432
  %v1531 = vunpack.c.l.b16 %v1433
  %v1532 = vunpack.c.l.b16 %v1434
  %v1533 = vunpack.c.l.b16 %v1435
  %v1534 = vunpack.c.l.b16 %v1436
  %v1535 = vunpack.c.l.b16 %v1437
  %v1536 = vunpack.c.l.b16 %v1438
  %v1537 = vunpack.c.l.b16 %v1439
  %v1538 = vunpack.c.l.b16 %v1440
  %v1539 = vunpack.c.l.b16 %v1441
  %v1540 = vunpack.c.l.b16 %v1442
  %v1541 = vunpack.c.l.b16 %v1443
  %v1542 = vunpack.c.l.b16 %v1444
  %v1543 = vunpack.c.l.b16 %v1445
  %v1544 = vunpack.c.l.b16 %v1446
  %v1545 = vunpack.c.l.b16 %v1447
  %v1546 = vpack.c.b16 %v1498, %v1497
  %v1547 = vpack.c.b16 %v1500, %v1499
  %v1548 = vpack.c.b16 %v1502, %v1501
  %v1549 = vpack.c.b16 %v1504, %v1503
  %v1550 = vpack.c.b16 %v1506, %v1505
  %v1551 = vpack.c.b16 %v1508, %v1507
  %v1552 = vpack.c.b16 %v1510, %v1509
  %v1553 = vpack.c.b16 %v1512, %v1511
  %v1554 = vpack.c.b16 %v1514, %v1513
  %v1555 = vpack.c.b16 %v1516, %v1515
  %v1556 = vpack.c.b16 %v1518, %v1517
  %v1557 = vpack.c.b16 %v1520, %v1519
  %v1558 = vpack.c.b16 %v1522, %v1521
  %v1559 = vpack.c.b16 %v1524, %v1523
  %v1560 = vpack.c.b16 %v1526, %v1525
  %v1561 = vpack.c.b16 %v1528, %v1527
  %v1562 = vpack.c.b16 %v1530, %v1529
  %v1563 = vpack.c.b16 %v1532, %v1531
  %v1564 = vpack.c.b16 %v1534, %v1533
  %v1565 = vpack.c.b16 %v1536, %v1535
  %v1566 = vpack.c.b16 %v1538, %v1537
  %v1567 = vpack.c.b16 %v1540, %v1539
  %v1568 = vpack.c.b16 %v1542, %v1541
  %v1569 = vpack.c.b16 %v1544, %v1543
  %v1570 = vpack.c.b16 %v1545, %v1545
  %v1596 = vsel %vm588, %v1570, 0
  %1598 = vmatprep.subr.bf16.mxu0 0
  %1599 = vmatpush1.bf16.msra.mxu0 %v1553
  %1600 = vmatprep.subr.bf16.mxu0 0
  %1601 = vmatpush1.bf16.msra.mxu0 %v1552
  %1602 = vmatprep.subr.bf16.mxu0 0
  %1603 = vmatpush1.bf16.msra.mxu0 %v1551
  %1604 = vmatprep.subr.bf16.mxu0 0
  %1605 = vmatpush1.bf16.msra.mxu0 %v1550
  %1606 = vmatprep.subr.bf16.mxu0 0
  %1607 = vmatpush1.bf16.msra.mxu0 %v1549
  %1608 = vmatprep.subr.bf16.mxu0 0
  %1609 = vmatpush1.bf16.msra.mxu0 %v1548
  %1610 = vmatprep.subr.bf16.mxu0 0
  %1611 = vmatpush1.bf16.msra.mxu0 %v1547
  %1612 = vmatprep.subr.bf16.mxu0 0
  %1613 = vmatpush1.bf16.msra.mxu0 %v1546
  %1614 = vmatprep.subr.bf16.mxu0 0
  %1615 = vmatpush2.bf16.msra.mxu0 %v1561
  %1616 = vmatprep.subr.bf16.mxu0 0
  %1617 = vmatpush2.bf16.msra.mxu0 %v1560
  %1618 = vmatprep.subr.bf16.mxu0 0
  %1619 = vmatpush2.bf16.msra.mxu0 %v1559
  %1620 = vmatprep.subr.bf16.mxu0 0
  %1621 = vmatpush2.bf16.msra.mxu0 %v1558
  %1622 = vmatprep.subr.bf16.mxu0 0
  %1623 = vmatpush2.bf16.msra.mxu0 %v1557
  %1624 = vmatprep.subr.bf16.mxu0 0
  %1625 = vmatpush2.bf16.msra.mxu0 %v1556
  %1626 = vmatprep.subr.bf16.mxu0 0
  %1627 = vmatpush2.bf16.msra.mxu0 %v1555
  %1628 = vmatprep.subr.bf16.mxu0 0
  %1629 = vmatpush2.bf16.msra.mxu0 %v1554
  %1630 = vmatprep.mubr.bf16.mxu0 %v364
  %1631 = vmatmul.mubr.bf16.gmra.mxu0 %v363
  %v1632 = vpop.f32.mrf.mxu0
  %v1633 = vadd.f32 0.0, %v1632
  %v1634 = vpop.f32.mrf.mxu0
  %v1635 = vpop.f32.mrf.mxu0
  %v1636 = vadd.f32 0.0, %v1635
  %v1637 = vpop.f32.mrf.mxu0
  %1638 = vmatprep.mubr.bf16.mxu0 %v368
  %1639 = vmatmul.mubr.bf16.gmra.mxu0 %v367
  %v1640 = vpop.f32.mrf.mxu0
  %v1641 = vadd.f32 0.0, %v1640
  %v1642 = vpop.f32.mrf.mxu0
  %v1643 = vpop.f32.mrf.mxu0
  %v1644 = vadd.f32 0.0, %v1643
  %v1645 = vpop.f32.mrf.mxu0
  %1646 = vmatprep.mubr.bf16.mxu0 %v372
  %1647 = vmatmul.mubr.bf16.gmra.mxu0 %v371
  %v1648 = vpop.f32.mrf.mxu0
  %v1649 = vadd.f32 0.0, %v1648
  %v1650 = vpop.f32.mrf.mxu0
  %v1651 = vpop.f32.mrf.mxu0
  %v1652 = vadd.f32 0.0, %v1651
  %v1653 = vpop.f32.mrf.mxu0
  %1654 = vmatprep.mubr.bf16.mxu0 %v376
  %1655 = vmatmul.mubr.bf16.gmra.mxu0 %v375
  %v1656 = vpop.f32.mrf.mxu0
  %v1657 = vadd.f32 0.0, %v1656
  %v1658 = vpop.f32.mrf.mxu0
  %v1659 = vpop.f32.mrf.mxu0
  %v1660 = vadd.f32 0.0, %v1659
  %v1661 = vpop.f32.mrf.mxu0
  %1662 = vdwg.mxu0
  %1663 = vmatprep.subr.bf16.mxu0 0
  %1664 = vmatpush1.bf16.msra.mxu0 %v1569
  %1665 = vmatprep.subr.bf16.mxu0 0
  %1666 = vmatpush1.bf16.msra.mxu0 %v1568
  %1667 = vmatprep.subr.bf16.mxu0 0
  %1668 = vmatpush1.bf16.msra.mxu0 %v1567
  %1669 = vmatprep.subr.bf16.mxu0 0
  %1670 = vmatpush1.bf16.msra.mxu0 %v1566
  %1671 = vmatprep.subr.bf16.mxu0 0
  %1672 = vmatpush1.bf16.msra.mxu0 %v1565
  %1673 = vmatprep.subr.bf16.mxu0 0
  %1674 = vmatpush1.bf16.msra.mxu0 %v1564
  %1675 = vmatprep.subr.bf16.mxu0 0
  %1676 = vmatpush1.bf16.msra.mxu0 %v1563
  %1677 = vmatprep.subr.bf16.mxu0 0
  %1678 = vmatpush1.bf16.msra.mxu0 %v1562
  %1679 = vmatprep.subr.bf16.mxu0 0
  %1680 = vmatpush2.bf16.msra.mxu0 0
  %1681 = vmatprep.subr.bf16.mxu0 0
  %1682 = vmatpush2.bf16.msra.mxu0 0
  %1683 = vmatprep.subr.bf16.mxu0 0
  %1684 = vmatpush2.bf16.msra.mxu0 0
  %1685 = vmatprep.subr.bf16.mxu0 0
  %1686 = vmatpush2.bf16.msra.mxu0 0
  %1687 = vmatprep.subr.bf16.mxu0 0
  %1688 = vmatpush2.bf16.msra.mxu0 0
  %1689 = vmatprep.subr.bf16.mxu0 0
  %1690 = vmatpush2.bf16.msra.mxu0 0
  %1691 = vmatprep.subr.bf16.mxu0 0
  %1692 = vmatpush2.bf16.msra.mxu0 0
  %1693 = vmatprep.subr.bf16.mxu0 0
  %1694 = vmatpush2.bf16.msra.mxu0 %v1596
  %1695 = vmatprep.mubr.bf16.mxu0 %v577
  %1696 = vmatmul.mubr.bf16.gmra.mxu0 %v365
  %v1697 = vpop.f32.mrf.mxu0
  %v1698 = vadd.f32 %v1633, %v1697
  %v1699 = vpop.f32.mrf.mxu0
  %v1700 = vpop.f32.mrf.mxu0
  %v1701 = vadd.f32 %v1636, %v1700
  %v1702 = vpop.f32.mrf.mxu0
  %1703 = vmatprep.mubr.bf16.mxu0 %v580
  %1704 = vmatmul.mubr.bf16.gmra.mxu0 %v369
  %v1705 = vpop.f32.mrf.mxu0
  %v1706 = vadd.f32 %v1641, %v1705
  %v1707 = vpop.f32.mrf.mxu0
  %v1708 = vpop.f32.mrf.mxu0
  %v1709 = vadd.f32 %v1644, %v1708
  %v1710 = vpop.f32.mrf.mxu0
  %1711 = vmatprep.mubr.bf16.mxu0 %v583
  %1712 = vmatmul.mubr.bf16.gmra.mxu0 %v373
  %v1713 = vpop.f32.mrf.mxu0
  %v1714 = vadd.f32 %v1649, %v1713
  %v1715 = vpop.f32.mrf.mxu0
  %v1716 = vpop.f32.mrf.mxu0
  %v1717 = vadd.f32 %v1652, %v1716
  %v1718 = vpop.f32.mrf.mxu0
  %1719 = vmatprep.mubr.bf16.mxu0 %v586
  %1720 = vmatmul.mubr.bf16.gmra.mxu0 %v377
  %v1721 = vpop.f32.mrf.mxu0
  %v1722 = vadd.f32 %v1657, %v1721
  %v1723 = vpop.f32.mrf.mxu0
  %v1724 = vpop.f32.mrf.mxu0
  %v1725 = vadd.f32 %v1660, %v1724
  %v1726 = vpop.f32.mrf.mxu0
  %1727 = vdwg.mxu0
  %v1728 = vmax.f32 %v1390, %v1698
  %v1729 = vmax.f32 %v1391, %v1701
  %v1730 = vmax.f32 %v1392, %v1706
  %v1731 = vmax.f32 %v1393, %v1709
  %v1732 = vmax.f32 %v1394, %v1714
  %v1733 = vmax.f32 %v1395, %v1717
  %v1734 = vmax.f32 %v1396, %v1722
  %v1735 = vmax.f32 %v1397, %v1725
  %v1736 = vpack.c.bf16 %v1729, %v1728
  %v1737 = vpack.c.bf16 %v1731, %v1730
  %v1738 = vpack.c.bf16 %v1733, %v1732
  %v1739 = vpack.c.bf16 %v1735, %v1734
  %v1740 = vld [vmem:[%s4] sm:$0xf]
  %v1741 = vld [vmem:[%s4 + $0x4] sm:$0xf]
  %v1742 = vld [vmem:[%s4 + $0x8] sm:$0xf]
  %v1743 = vld [vmem:[%s4 + $0xc] sm:$0xf]
  %v1744 = vld [vmem:[%s4 + $0x10] sm:$0xf]
  %v1745 = vld [vmem:[%s4 + $0x14] sm:$0xf]
  %v1746 = vld [vmem:[%s4 + $0x18] sm:$0xf]
  %v1747 = vld [vmem:[%s4 + $0x1c] sm:$0xf]
  %v1748 = vld [vmem:[%s4 + $0x20] sm:$0xf]
  %v1749 = vld [vmem:[%s4 + $0x24] sm:$0xf]
  %v1750 = vld [vmem:[%s4 + $0x28] sm:$0xf]
  %v1751 = vld [vmem:[%s4 + $0x2c] sm:$0xf]
  %v1752 = vld [vmem:[%s4 + $0x30] sm:$0x1]
  %v1766 = vunpack.c.l.b16 %v1740
  %v1767 = vunpack.c.l.b16 %v1741
  %v1768 = vunpack.c.l.b16 %v1742
  %v1769 = vunpack.c.l.b16 %v1743
  %v1770 = vunpack.c.l.b16 %v1744
  %v1771 = vunpack.c.l.b16 %v1745
  %v1772 = vunpack.c.l.b16 %v1746
  %v1773 = vunpack.c.l.b16 %v1747
  %v1774 = vunpack.c.l.b16 %v1748
  %v1775 = vunpack.c.l.b16 %v1749
  %v1776 = vunpack.c.l.b16 %v1750
  %v1777 = vunpack.c.l.b16 %v1751
  %v1778 = vunpack.c.l.b16 %v1752
  %v1779 = vpack.c.b16 %v1767, %v1766
  %v1780 = vpack.c.b16 %v1769, %v1768
  %v1781 = vpack.c.b16 %v1771, %v1770
  %v1782 = vpack.c.b16 %v1773, %v1772
  %v1783 = vpack.c.b16 %v1775, %v1774
  %v1784 = vpack.c.b16 %v1777, %v1776
  %v1785 = vpack.c.b16 %v1778, %v1778
  %vm1792 = vcmask 801792
  %v1794 = vsel %vm1792, %v1736, 0
  %v1797 = vsel %vm1792, %v1737, 0
  %v1800 = vsel %vm1792, %v1738, 0
  %v1803 = vsel %vm1792, %v1739, 0
  %vm1805 = vcmask 1040384
  %v1807 = vsel %vm1805, %v1785, 0
  %1809 = vmatprep.subr.bf16.mxu0 0
  %1810 = vmatpush1.bf16.msra.mxu0 0
  %1811 = vmatprep.subr.bf16.mxu0 0
  %1812 = vmatpush1.bf16.msra.mxu0 %v1807
  %1813 = vmatprep.subr.bf16.mxu0 0
  %1814 = vmatpush1.bf16.msra.mxu0 %v1784
  %1815 = vmatprep.subr.bf16.mxu0 0
  %1816 = vmatpush1.bf16.msra.mxu0 %v1783
  %1817 = vmatprep.subr.bf16.mxu0 0
  %1818 = vmatpush1.bf16.msra.mxu0 %v1782
  %1819 = vmatprep.subr.bf16.mxu0 0
  %1820 = vmatpush1.bf16.msra.mxu0 %v1781
  %1821 = vmatprep.subr.bf16.mxu0 0
  %1822 = vmatpush1.bf16.msra.mxu0 %v1780
  %1823 = vmatprep.subr.bf16.mxu0 0
  %1824 = vmatpush1.bf16.msra.mxu0 %v1779
  %1825 = vmatprep.subr.bf16.mxu0 0
  %1826 = vmatpush2.bf16.msra.mxu0 0
  %1827 = vmatprep.subr.bf16.mxu0 0
  %1828 = vmatpush2.bf16.msra.mxu0 0
  %1829 = vmatprep.subr.bf16.mxu0 0
  %1830 = vmatpush2.bf16.msra.mxu0 0
  %1831 = vmatprep.subr.bf16.mxu0 0
  %1832 = vmatpush2.bf16.msra.mxu0 0
  %1833 = vmatprep.subr.bf16.mxu0 0
  %1834 = vmatpush2.bf16.msra.mxu0 0
  %1835 = vmatprep.subr.bf16.mxu0 0
  %1836 = vmatpush2.bf16.msra.mxu0 0
  %1837 = vmatprep.subr.bf16.mxu0 0
  %1838 = vmatpush2.bf16.msra.mxu0 0
  %1839 = vmatprep.subr.bf16.mxu0 0
  %1840 = vmatpush2.bf16.msra.mxu0 0
  %1841 = vmatprep.mubr.bf16.mxu0 0
  %1842 = vmatmul.mubr.bf16.gmra.mxu0 %v1794
  %v1843 = vpop.f32.mrf.mxu0
  %v1844 = vadd.f32 0.0, %v1843
  %v1845 = vpop.f32.mrf.mxu0
  %v1846 = vpop.f32.mrf.mxu0
  %v1847 = vadd.f32 0.0, %v1846
  %v1848 = vpop.f32.mrf.mxu0
  %1849 = vmatprep.mubr.bf16.mxu0 0
  %1850 = vmatmul.mubr.bf16.gmra.mxu0 %v1797
  %v1851 = vpop.f32.mrf.mxu0
  %v1852 = vadd.f32 0.0, %v1851
  %v1853 = vpop.f32.mrf.mxu0
  %v1854 = vpop.f32.mrf.mxu0
  %v1855 = vadd.f32 0.0, %v1854
  %v1856 = vpop.f32.mrf.mxu0
  %1857 = vmatprep.mubr.bf16.mxu0 0
  %1858 = vmatmul.mubr.bf16.gmra.mxu0 %v1800
  %v1859 = vpop.f32.mrf.mxu0
  %v1860 = vadd.f32 0.0, %v1859
  %v1861 = vpop.f32.mrf.mxu0
  %v1862 = vpop.f32.mrf.mxu0
  %v1863 = vadd.f32 0.0, %v1862
  %v1864 = vpop.f32.mrf.mxu0
  %1865 = vmatprep.mubr.bf16.mxu0 0
  %1866 = vmatmul.mubr.bf16.gmra.mxu0 %v1803
  %v1867 = vpop.f32.mrf.mxu0
  %v1868 = vadd.f32 0.0, %v1867
  %v1869 = vpop.f32.mrf.mxu0
  %v1870 = vpop.f32.mrf.mxu0
  %v1871 = vadd.f32 0.0, %v1870
  %v1872 = vpop.f32.mrf.mxu0
  %1873 = vdwg.mxu0
  %v1874 = vpack.c.bf16 %v1847, %v1844
  %v1875 = vpack.c.bf16 %v1855, %v1852
  %v1876 = vpack.c.bf16 %v1863, %v1860
  %v1877 = vpack.c.bf16 %v1871, %v1868
  %v1878 = vld [vmem:[%s5] sm:$0xf]
  %v1879 = vld [vmem:[%s5 + $0x4] sm:$0xf]
  %v1880 = vld [vmem:[%s5 + $0x8] sm:$0xf]
  %v1881 = vld [vmem:[%s5 + $0xc] sm:$0xf]
  %v1882 = vld [vmem:[%s5 + $0x10] sm:$0xf]
  %v1883 = vld [vmem:[%s5 + $0x14] sm:$0xf]
  %v1884 = vld [vmem:[%s5 + $0x18] sm:$0xf]
  %v1885 = vld [vmem:[%s5 + $0x1c] sm:$0xf]
  %s1886 = scalar_lea.vmem %s4, 52
  %v1887 = vld [vmem:[%s1886] sm:$0xf]
  %v1888 = vld [vmem:[%s1886 + $0x4] sm:$0xf]
  %v1889 = vld [vmem:[%s1886 + $0x8] sm:$0xf]
  %v1890 = vld [vmem:[%s1886 + $0xc] sm:$0xf]
  %v1891 = vld [vmem:[%s1886 + $0x10] sm:$0xf]
  %v1892 = vld [vmem:[%s1886 + $0x14] sm:$0xf]
  %v1893 = vld [vmem:[%s1886 + $0x18] sm:$0xf]
  %v1894 = vld [vmem:[%s1886 + $0x1c] sm:$0xf]
  %v1895 = vld [vmem:[%s1886 + $0x20] sm:$0xf]
  %v1896 = vld [vmem:[%s1886 + $0x24] sm:$0xf]
  %v1897 = vld [vmem:[%s1886 + $0x28] sm:$0xf]
  %v1898 = vld [vmem:[%s1886 + $0x2c] sm:$0xf]
  %v1899 = vld [vmem:[%s1886 + $0x30] sm:$0x1]
  %v1913 = vunpack.c.l.b16 %v1887
  %v1914 = vunpack.c.l.b16 %v1888
  %v1915 = vunpack.c.l.b16 %v1889
  %v1916 = vunpack.c.l.b16 %v1890
  %v1917 = vunpack.c.l.b16 %v1891
  %v1918 = vunpack.c.l.b16 %v1892
  %v1919 = vunpack.c.l.b16 %v1893
  %v1920 = vunpack.c.l.b16 %v1894
  %v1921 = vunpack.c.l.b16 %v1895
  %v1922 = vunpack.c.l.b16 %v1896
  %v1923 = vunpack.c.l.b16 %v1897
  %v1924 = vunpack.c.l.b16 %v1898
  %v1925 = vunpack.c.l.b16 %v1899
  %v1926 = vpack.c.b16 %v1914, %v1913
  %v1927 = vpack.c.b16 %v1916, %v1915
  %v1928 = vpack.c.b16 %v1918, %v1917
  %v1929 = vpack.c.b16 %v1920, %v1919
  %v1930 = vpack.c.b16 %v1922, %v1921
  %v1931 = vpack.c.b16 %v1924, %v1923
  %v1932 = vpack.c.b16 %v1925, %v1925
  %v1940 = vsel %vm1805, %v1932, 0
  %1942 = vmatprep.subr.bf16.mxu0 0
  %1943 = vmatpush1.bf16.msra.mxu0 0
  %1944 = vmatprep.subr.bf16.mxu0 0
  %1945 = vmatpush1.bf16.msra.mxu0 %v1940
  %1946 = vmatprep.subr.bf16.mxu0 0
  %1947 = vmatpush1.bf16.msra.mxu0 %v1931
  %1948 = vmatprep.subr.bf16.mxu0 0
  %1949 = vmatpush1.bf16.msra.mxu0 %v1930
  %1950 = vmatprep.subr.bf16.mxu0 0
  %1951 = vmatpush1.bf16.msra.mxu0 %v1929
  %1952 = vmatprep.subr.bf16.mxu0 0
  %1953 = vmatpush1.bf16.msra.mxu0 %v1928
  %1954 = vmatprep.subr.bf16.mxu0 0
  %1955 = vmatpush1.bf16.msra.mxu0 %v1927
  %1956 = vmatprep.subr.bf16.mxu0 0
  %1957 = vmatpush1.bf16.msra.mxu0 %v1926
  %1958 = vmatprep.subr.bf16.mxu0 0
  %1959 = vmatpush2.bf16.msra.mxu0 0
  %1960 = vmatprep.subr.bf16.mxu0 0
  %1961 = vmatpush2.bf16.msra.mxu0 0
  %1962 = vmatprep.subr.bf16.mxu0 0
  %1963 = vmatpush2.bf16.msra.mxu0 0
  %1964 = vmatprep.subr.bf16.mxu0 0
  %1965 = vmatpush2.bf16.msra.mxu0 0
  %1966 = vmatprep.subr.bf16.mxu0 0
  %1967 = vmatpush2.bf16.msra.mxu0 0
  %1968 = vmatprep.subr.bf16.mxu0 0
  %1969 = vmatpush2.bf16.msra.mxu0 0
  %1970 = vmatprep.subr.bf16.mxu0 0
  %1971 = vmatpush2.bf16.msra.mxu0 0
  %1972 = vmatprep.subr.bf16.mxu0 0
  %1973 = vmatpush2.bf16.msra.mxu0 0
  %1974 = vmatprep.mubr.bf16.mxu0 0
  %1975 = vmatmul.mubr.bf16.gmra.mxu0 %v1794
  %v1976 = vpop.f32.mrf.mxu0
  %v1977 = vadd.f32 0.0, %v1976
  %v1978 = vpop.f32.mrf.mxu0
  %v1979 = vpop.f32.mrf.mxu0
  %v1980 = vadd.f32 0.0, %v1979
  %v1981 = vpop.f32.mrf.mxu0
  %1982 = vmatprep.mubr.bf16.mxu0 0
  %1983 = vmatmul.mubr.bf16.gmra.mxu0 %v1797
  %v1984 = vpop.f32.mrf.mxu0
  %v1985 = vadd.f32 0.0, %v1984
  %v1986 = vpop.f32.mrf.mxu0
  %v1987 = vpop.f32.mrf.mxu0
  %v1988 = vadd.f32 0.0, %v1987
  %v1989 = vpop.f32.mrf.mxu0
  %1990 = vmatprep.mubr.bf16.mxu0 0
  %1991 = vmatmul.mubr.bf16.gmra.mxu0 %v1800
  %v1992 = vpop.f32.mrf.mxu0
  %v1993 = vadd.f32 0.0, %v1992
  %v1994 = vpop.f32.mrf.mxu0
  %v1995 = vpop.f32.mrf.mxu0
  %v1996 = vadd.f32 0.0, %v1995
  %v1997 = vpop.f32.mrf.mxu0
  %1998 = vmatprep.mubr.bf16.mxu0 0
  %1999 = vmatmul.mubr.bf16.gmra.mxu0 %v1803
  %v2000 = vpop.f32.mrf.mxu0
  %v2001 = vadd.f32 0.0, %v2000
  %v2002 = vpop.f32.mrf.mxu0
  %v2003 = vpop.f32.mrf.mxu0
  %v2004 = vadd.f32 0.0, %v2003
  %v2005 = vpop.f32.mrf.mxu0
  %2006 = vdwg.mxu0
  %v2007 = vpack.c.bf16 %v1980, %v1977
  %v2008 = vpack.c.bf16 %v1988, %v1985
  %v2009 = vpack.c.bf16 %v1996, %v1993
  %v2010 = vpack.c.bf16 %v2004, %v2001
  %s2011 = scalar_lea.vmem %s5, 32
  %v2012 = vld [vmem:[%s2011] sm:$0xf]
  %v2013 = vld [vmem:[%s2011 + $0x4] sm:$0xf]
  %v2014 = vld [vmem:[%s2011 + $0x8] sm:$0xf]
  %v2015 = vld [vmem:[%s2011 + $0xc] sm:$0xf]
  %v2016 = vld [vmem:[%s2011 + $0x10] sm:$0xf]
  %v2017 = vld [vmem:[%s2011 + $0x14] sm:$0xf]
  %v2018 = vld [vmem:[%s2011 + $0x18] sm:$0xf]
  %v2019 = vld [vmem:[%s2011 + $0x1c] sm:$0xf]
  %v2028 = vunpack.c.l.b16 %v2012
  %v2029 = vunpack.c.l.b16 %v2013
  %v2030 = vunpack.c.l.b16 %v2014
  %v2031 = vunpack.c.l.b16 %v2015
  %v2032 = vunpack.c.l.b16 %v2016
  %v2033 = vunpack.c.l.b16 %v2017
  %v2034 = vunpack.c.l.b16 %v2018
  %v2035 = vunpack.c.l.b16 %v2019
  %v2036 = vpack.c.b16 %v2029, %v2028
  %v2037 = vpack.c.b16 %v2031, %v2030
  %v2038 = vpack.c.b16 %v2033, %v2032
  %v2039 = vpack.c.b16 %v2035, %v2034
  %vm2040 = vcmask 523264
  %v2042 = vsel %vm2040, %v2036, 0
  %v2045 = vsel %vm2040, %v2037, 0
  %v2048 = vsel %vm2040, %v2038, 0
  %v2051 = vsel %vm2040, %v2039, 0
  %2053 = vmatprep.subr.bf16.mxu0 0
  %2054 = vmatpush1.bf16.msra.mxu0 0
  %2055 = vmatprep.subr.bf16.mxu0 0
  %2056 = vmatpush1.bf16.msra.mxu0 0
  %2057 = vmatprep.subr.bf16.mxu0 0
  %2058 = vmatpush1.bf16.msra.mxu0 0
  %2059 = vmatprep.subr.bf16.mxu0 0
  %2060 = vmatpush1.bf16.msra.mxu0 0
  %2061 = vmatprep.subr.bf16.mxu0 0
  %2062 = vmatpush1.bf16.msra.mxu0 %v2010
  %2063 = vmatprep.subr.bf16.mxu0 0
  %2064 = vmatpush1.bf16.msra.mxu0 %v2009
  %2065 = vmatprep.subr.bf16.mxu0 0
  %2066 = vmatpush1.bf16.msra.mxu0 %v2008
  %2067 = vmatprep.subr.bf16.mxu0 0
  %2068 = vmatpush1.bf16.msra.mxu0 %v2007
  %2069 = vmatprep.subr.bf16.mxu0 0
  %2070 = vmatpush2.bf16.msra.mxu0 0
  %2071 = vmatprep.subr.bf16.mxu0 0
  %2072 = vmatpush2.bf16.msra.mxu0 0
  %2073 = vmatprep.subr.bf16.mxu0 0
  %2074 = vmatpush2.bf16.msra.mxu0 0
  %2075 = vmatprep.subr.bf16.mxu0 0
  %2076 = vmatpush2.bf16.msra.mxu0 0
  %2077 = vmatprep.subr.bf16.mxu0 0
  %2078 = vmatpush2.bf16.msra.mxu0 0
  %2079 = vmatprep.subr.bf16.mxu0 0
  %2080 = vmatpush2.bf16.msra.mxu0 0
  %2081 = vmatprep.subr.bf16.mxu0 0
  %2082 = vmatpush2.bf16.msra.mxu0 0
  %2083 = vmatprep.subr.bf16.mxu0 0
  %2084 = vmatpush2.bf16.msra.mxu0 0
  %2085 = vmatprep.mubr.bf16.mxu0 0
  %2086 = vmatmul.mubr.bf16.gmra.mxu0 %v2042
  %v2087 = vpop.f32.mrf.mxu0
  %v2088 = vadd.f32 0.0, %v2087
  %v2089 = vpop.f32.mrf.mxu0
  %v2090 = vpop.f32.mrf.mxu0
  %v2091 = vadd.f32 0.0, %v2090
  %v2092 = vpop.f32.mrf.mxu0
  %2093 = vmatprep.mubr.bf16.mxu0 0
  %2094 = vmatmul.mubr.bf16.gmra.mxu0 %v2045
  %v2095 = vpop.f32.mrf.mxu0
  %v2096 = vadd.f32 0.0, %v2095
  %v2097 = vpop.f32.mrf.mxu0
  %v2098 = vpop.f32.mrf.mxu0
  %v2099 = vadd.f32 0.0, %v2098
  %v2100 = vpop.f32.mrf.mxu0
  %2101 = vmatprep.mubr.bf16.mxu0 0
  %2102 = vmatmul.mubr.bf16.gmra.mxu0 %v2048
  %v2103 = vpop.f32.mrf.mxu0
  %v2104 = vadd.f32 0.0, %v2103
  %v2105 = vpop.f32.mrf.mxu0
  %v2106 = vpop.f32.mrf.mxu0
  %v2107 = vadd.f32 0.0, %v2106
  %v2108 = vpop.f32.mrf.mxu0
  %2109 = vmatprep.mubr.bf16.mxu0 0
  %2110 = vmatmul.mubr.bf16.gmra.mxu0 %v2051
  %v2111 = vpop.f32.mrf.mxu0
  %v2112 = vadd.f32 0.0, %v2111
  %v2113 = vpop.f32.mrf.mxu0
  %v2114 = vpop.f32.mrf.mxu0
  %v2115 = vadd.f32 0.0, %v2114
  %v2116 = vpop.f32.mrf.mxu0
  %2117 = vdwg.mxu0
  %v2126 = vunpack.c.l.b16 %v1878
  %v2127 = vunpack.c.l.b16 %v1879
  %v2128 = vunpack.c.l.b16 %v1880
  %v2129 = vunpack.c.l.b16 %v1881
  %v2130 = vunpack.c.l.b16 %v1882
  %v2131 = vunpack.c.l.b16 %v1883
  %v2132 = vunpack.c.l.b16 %v1884
  %v2133 = vunpack.c.l.b16 %v1885
  %v2134 = vpack.c.b16 %v2127, %v2126
  %v2135 = vpack.c.b16 %v2129, %v2128
  %v2136 = vpack.c.b16 %v2131, %v2130
  %v2137 = vpack.c.b16 %v2133, %v2132
  %v2139 = vsel %vm2040, %v2134, 0
  %v2142 = vsel %vm2040, %v2135, 0
  %v2145 = vsel %vm2040, %v2136, 0
  %v2148 = vsel %vm2040, %v2137, 0
  %2150 = vmatprep.subr.bf16.mxu0 0
  %2151 = vmatpush1.bf16.msra.mxu0 0
  %2152 = vmatprep.subr.bf16.mxu0 0
  %2153 = vmatpush1.bf16.msra.mxu0 0
  %2154 = vmatprep.subr.bf16.mxu0 0
  %2155 = vmatpush1.bf16.msra.mxu0 0
  %2156 = vmatprep.subr.bf16.mxu0 0
  %2157 = vmatpush1.bf16.msra.mxu0 0
  %2158 = vmatprep.subr.bf16.mxu0 0
  %2159 = vmatpush1.bf16.msra.mxu0 %v1877
  %2160 = vmatprep.subr.bf16.mxu0 0
  %2161 = vmatpush1.bf16.msra.mxu0 %v1876
  %2162 = vmatprep.subr.bf16.mxu0 0
  %2163 = vmatpush1.bf16.msra.mxu0 %v1875
  %2164 = vmatprep.subr.bf16.mxu0 0
  %2165 = vmatpush1.bf16.msra.mxu0 %v1874
  %2166 = vmatprep.subr.bf16.mxu0 0
  %2167 = vmatpush2.bf16.msra.mxu0 0
  %2168 = vmatprep.subr.bf16.mxu0 0
  %2169 = vmatpush2.bf16.msra.mxu0 0
  %2170 = vmatprep.subr.bf16.mxu0 0
  %2171 = vmatpush2.bf16.msra.mxu0 0
  %2172 = vmatprep.subr.bf16.mxu0 0
  %2173 = vmatpush2.bf16.msra.mxu0 0
  %2174 = vmatprep.subr.bf16.mxu0 0
  %2175 = vmatpush2.bf16.msra.mxu0 0
  %2176 = vmatprep.subr.bf16.mxu0 0
  %2177 = vmatpush2.bf16.msra.mxu0 0
  %2178 = vmatprep.subr.bf16.mxu0 0
  %2179 = vmatpush2.bf16.msra.mxu0 0
  %2180 = vmatprep.subr.bf16.mxu0 0
  %2181 = vmatpush2.bf16.msra.mxu0 0
  %2182 = vmatprep.mubr.bf16.mxu0 0
  %2183 = vmatmul.mubr.bf16.gmra.mxu0 %v2139
  %v2184 = vpop.f32.mrf.mxu0
  %v2185 = vadd.f32 %v2088, %v2184
  %v2186 = vpop.f32.mrf.mxu0
  %v2187 = vpop.f32.mrf.mxu0
  %v2188 = vadd.f32 %v2091, %v2187
  %v2189 = vpop.f32.mrf.mxu0
  %2190 = vmatprep.mubr.bf16.mxu0 0
  %2191 = vmatmul.mubr.bf16.gmra.mxu0 %v2142
  %v2192 = vpop.f32.mrf.mxu0
  %v2193 = vadd.f32 %v2096, %v2192
  %v2194 = vpop.f32.mrf.mxu0
  %v2195 = vpop.f32.mrf.mxu0
  %v2196 = vadd.f32 %v2099, %v2195
  %v2197 = vpop.f32.mrf.mxu0
  %2198 = vmatprep.mubr.bf16.mxu0 0
  %2199 = vmatmul.mubr.bf16.gmra.mxu0 %v2145
  %v2200 = vpop.f32.mrf.mxu0
  %v2201 = vadd.f32 %v2104, %v2200
  %v2202 = vpop.f32.mrf.mxu0
  %v2203 = vpop.f32.mrf.mxu0
  %v2204 = vadd.f32 %v2107, %v2203
  %v2205 = vpop.f32.mrf.mxu0
  %2206 = vmatprep.mubr.bf16.mxu0 0
  %2207 = vmatmul.mubr.bf16.gmra.mxu0 %v2148
  %v2208 = vpop.f32.mrf.mxu0
  %v2209 = vadd.f32 %v2112, %v2208
  %v2210 = vpop.f32.mrf.mxu0
  %v2211 = vpop.f32.mrf.mxu0
  %v2212 = vadd.f32 %v2115, %v2211
  %v2213 = vpop.f32.mrf.mxu0
  %2214 = vdwg.mxu0
  %s2215 = scalar_lea.vmem %s4, 104
  %v2216 = vld [vmem:[%s2215] sm:$0xf]
  %v2217 = vld [vmem:[%s2215 + $0x4] sm:$0xf]
  %v2218 = vld [vmem:[%s2215 + $0x8] sm:$0xf]
  %v2219 = vld [vmem:[%s2215 + $0xc] sm:$0xf]
  %v2220 = vld [vmem:[%s2215 + $0x10] sm:$0xf]
  %v2221 = vld [vmem:[%s2215 + $0x14] sm:$0xf]
  %v2222 = vld [vmem:[%s2215 + $0x18] sm:$0xf]
  %v2223 = vld [vmem:[%s2215 + $0x1c] sm:$0xf]
  %v2224 = vld [vmem:[%s2215 + $0x20] sm:$0xf]
  %v2225 = vld [vmem:[%s2215 + $0x24] sm:$0xf]
  %v2226 = vld [vmem:[%s2215 + $0x28] sm:$0xf]
  %v2227 = vld [vmem:[%s2215 + $0x2c] sm:$0xf]
  %v2228 = vld [vmem:[%s2215 + $0x30] sm:$0x1]
  %v2242 = vunpack.c.l.b16 %v2216
  %v2243 = vunpack.c.l.b16 %v2217
  %v2244 = vunpack.c.l.b16 %v2218
  %v2245 = vunpack.c.l.b16 %v2219
  %v2246 = vunpack.c.l.b16 %v2220
  %v2247 = vunpack.c.l.b16 %v2221
  %v2248 = vunpack.c.l.b16 %v2222
  %v2249 = vunpack.c.l.b16 %v2223
  %v2250 = vunpack.c.l.b16 %v2224
  %v2251 = vunpack.c.l.b16 %v2225
  %v2252 = vunpack.c.l.b16 %v2226
  %v2253 = vunpack.c.l.b16 %v2227
  %v2254 = vunpack.c.l.b16 %v2228
  %v2255 = vpack.c.b16 %v2243, %v2242
  %v2256 = vpack.c.b16 %v2245, %v2244
  %v2257 = vpack.c.b16 %v2247, %v2246
  %v2258 = vpack.c.b16 %v2249, %v2248
  %v2259 = vpack.c.b16 %v2251, %v2250
  %v2260 = vpack.c.b16 %v2253, %v2252
  %v2261 = vpack.c.b16 %v2254, %v2254
  %v2269 = vsel %vm1805, %v2261, 0
  %2271 = vmatprep.subr.bf16.mxu0 0
  %2272 = vmatpush1.bf16.msra.mxu0 0
  %2273 = vmatprep.subr.bf16.mxu0 0
  %2274 = vmatpush1.bf16.msra.mxu0 %v2269
  %2275 = vmatprep.subr.bf16.mxu0 0
  %2276 = vmatpush1.bf16.msra.mxu0 %v2260
  %2277 = vmatprep.subr.bf16.mxu0 0
  %2278 = vmatpush1.bf16.msra.mxu0 %v2259
  %2279 = vmatprep.subr.bf16.mxu0 0
  %2280 = vmatpush1.bf16.msra.mxu0 %v2258
  %2281 = vmatprep.subr.bf16.mxu0 0
  %2282 = vmatpush1.bf16.msra.mxu0 %v2257
  %2283 = vmatprep.subr.bf16.mxu0 0
  %2284 = vmatpush1.bf16.msra.mxu0 %v2256
  %2285 = vmatprep.subr.bf16.mxu0 0
  %2286 = vmatpush1.bf16.msra.mxu0 %v2255
  %2287 = vmatprep.subr.bf16.mxu0 0
  %2288 = vmatpush2.bf16.msra.mxu0 0
  %2289 = vmatprep.subr.bf16.mxu0 0
  %2290 = vmatpush2.bf16.msra.mxu0 0
  %2291 = vmatprep.subr.bf16.mxu0 0
  %2292 = vmatpush2.bf16.msra.mxu0 0
  %2293 = vmatprep.subr.bf16.mxu0 0
  %2294 = vmatpush2.bf16.msra.mxu0 0
  %2295 = vmatprep.subr.bf16.mxu0 0
  %2296 = vmatpush2.bf16.msra.mxu0 0
  %2297 = vmatprep.subr.bf16.mxu0 0
  %2298 = vmatpush2.bf16.msra.mxu0 0
  %2299 = vmatprep.subr.bf16.mxu0 0
  %2300 = vmatpush2.bf16.msra.mxu0 0
  %2301 = vmatprep.subr.bf16.mxu0 0
  %2302 = vmatpush2.bf16.msra.mxu0 0
  %2303 = vmatprep.mubr.bf16.mxu0 0
  %2304 = vmatmul.mubr.bf16.gmra.mxu0 %v1794
  %v2305 = vpop.f32.mrf.mxu0
  %v2306 = vadd.f32 0.0, %v2305
  %v2307 = vpop.f32.mrf.mxu0
  %v2308 = vpop.f32.mrf.mxu0
  %v2309 = vadd.f32 0.0, %v2308
  %v2310 = vpop.f32.mrf.mxu0
  %2311 = vmatprep.mubr.bf16.mxu0 0
  %2312 = vmatmul.mubr.bf16.gmra.mxu0 %v1797
  %v2313 = vpop.f32.mrf.mxu0
  %v2314 = vadd.f32 0.0, %v2313
  %v2315 = vpop.f32.mrf.mxu0
  %v2316 = vpop.f32.mrf.mxu0
  %v2317 = vadd.f32 0.0, %v2316
  %v2318 = vpop.f32.mrf.mxu0
  %2319 = vmatprep.mubr.bf16.mxu0 0
  %2320 = vmatmul.mubr.bf16.gmra.mxu0 %v1800
  %v2321 = vpop.f32.mrf.mxu0
  %v2322 = vadd.f32 0.0, %v2321
  %v2323 = vpop.f32.mrf.mxu0
  %v2324 = vpop.f32.mrf.mxu0
  %v2325 = vadd.f32 0.0, %v2324
  %v2326 = vpop.f32.mrf.mxu0
  %2327 = vmatprep.mubr.bf16.mxu0 0
  %2328 = vmatmul.mubr.bf16.gmra.mxu0 %v1803
  %v2329 = vpop.f32.mrf.mxu0
  %v2330 = vadd.f32 0.0, %v2329
  %v2331 = vpop.f32.mrf.mxu0
  %v2332 = vpop.f32.mrf.mxu0
  %v2333 = vadd.f32 0.0, %v2332
  %v2334 = vpop.f32.mrf.mxu0
  %2335 = vdwg.mxu0
  %v2336 = vpack.c.bf16 %v2309, %v2306
  %v2337 = vpack.c.bf16 %v2317, %v2314
  %v2338 = vpack.c.bf16 %v2325, %v2322
  %v2339 = vpack.c.bf16 %v2333, %v2330
  %s2340 = scalar_lea.vmem %s5, 64
  %v2341 = vld [vmem:[%s2340] sm:$0xf]
  %v2342 = vld [vmem:[%s2340 + $0x4] sm:$0xf]
  %v2343 = vld [vmem:[%s2340 + $0x8] sm:$0xf]
  %v2344 = vld [vmem:[%s2340 + $0xc] sm:$0xf]
  %v2345 = vld [vmem:[%s2340 + $0x10] sm:$0xf]
  %v2346 = vld [vmem:[%s2340 + $0x14] sm:$0xf]
  %v2347 = vld [vmem:[%s2340 + $0x18] sm:$0xf]
  %v2348 = vld [vmem:[%s2340 + $0x1c] sm:$0xf]
  %v2357 = vunpack.c.l.b16 %v2341
  %v2358 = vunpack.c.l.b16 %v2342
  %v2359 = vunpack.c.l.b16 %v2343
  %v2360 = vunpack.c.l.b16 %v2344
  %v2361 = vunpack.c.l.b16 %v2345
  %v2362 = vunpack.c.l.b16 %v2346
  %v2363 = vunpack.c.l.b16 %v2347
  %v2364 = vunpack.c.l.b16 %v2348
  %v2365 = vpack.c.b16 %v2358, %v2357
  %v2366 = vpack.c.b16 %v2360, %v2359
  %v2367 = vpack.c.b16 %v2362, %v2361
  %v2368 = vpack.c.b16 %v2364, %v2363
  %v2370 = vsel %vm2040, %v2365, 0
  %v2373 = vsel %vm2040, %v2366, 0
  %v2376 = vsel %vm2040, %v2367, 0
  %v2379 = vsel %vm2040, %v2368, 0
  %2381 = vmatprep.subr.bf16.mxu0 0
  %2382 = vmatpush1.bf16.msra.mxu0 0
  %2383 = vmatprep.subr.bf16.mxu0 0
  %2384 = vmatpush1.bf16.msra.mxu0 0
  %2385 = vmatprep.subr.bf16.mxu0 0
  %2386 = vmatpush1.bf16.msra.mxu0 0
  %2387 = vmatprep.subr.bf16.mxu0 0
  %2388 = vmatpush1.bf16.msra.mxu0 0
  %2389 = vmatprep.subr.bf16.mxu0 0
  %2390 = vmatpush1.bf16.msra.mxu0 %v2339
  %2391 = vmatprep.subr.bf16.mxu0 0
  %2392 = vmatpush1.bf16.msra.mxu0 %v2338
  %2393 = vmatprep.subr.bf16.mxu0 0
  %2394 = vmatpush1.bf16.msra.mxu0 %v2337
  %2395 = vmatprep.subr.bf16.mxu0 0
  %2396 = vmatpush1.bf16.msra.mxu0 %v2336
  %2397 = vmatprep.subr.bf16.mxu0 0
  %2398 = vmatpush2.bf16.msra.mxu0 0
  %2399 = vmatprep.subr.bf16.mxu0 0
  %2400 = vmatpush2.bf16.msra.mxu0 0
  %2401 = vmatprep.subr.bf16.mxu0 0
  %2402 = vmatpush2.bf16.msra.mxu0 0
  %2403 = vmatprep.subr.bf16.mxu0 0
  %2404 = vmatpush2.bf16.msra.mxu0 0
  %2405 = vmatprep.subr.bf16.mxu0 0
  %2406 = vmatpush2.bf16.msra.mxu0 0
  %2407 = vmatprep.subr.bf16.mxu0 0
  %2408 = vmatpush2.bf16.msra.mxu0 0
  %2409 = vmatprep.subr.bf16.mxu0 0
  %2410 = vmatpush2.bf16.msra.mxu0 0
  %2411 = vmatprep.subr.bf16.mxu0 0
  %2412 = vmatpush2.bf16.msra.mxu0 0
  %2413 = vmatprep.mubr.bf16.mxu0 0
  %2414 = vmatmul.mubr.bf16.gmra.mxu0 %v2370
  %v2415 = vpop.f32.mrf.mxu0
  %v2416 = vadd.f32 0.0, %v2415
  %v2417 = vpop.f32.mrf.mxu0
  %v2418 = vpop.f32.mrf.mxu0
  %v2419 = vadd.f32 0.0, %v2418
  %v2420 = vpop.f32.mrf.mxu0
  %2421 = vmatprep.mubr.bf16.mxu0 0
  %2422 = vmatmul.mubr.bf16.gmra.mxu0 %v2373
  %v2423 = vpop.f32.mrf.mxu0
  %v2424 = vadd.f32 0.0, %v2423
  %v2425 = vpop.f32.mrf.mxu0
  %v2426 = vpop.f32.mrf.mxu0
  %v2427 = vadd.f32 0.0, %v2426
  %v2428 = vpop.f32.mrf.mxu0
  %2429 = vmatprep.mubr.bf16.mxu0 0
  %2430 = vmatmul.mubr.bf16.gmra.mxu0 %v2376
  %v2431 = vpop.f32.mrf.mxu0
  %v2432 = vadd.f32 0.0, %v2431
  %v2433 = vpop.f32.mrf.mxu0
  %v2434 = vpop.f32.mrf.mxu0
  %v2435 = vadd.f32 0.0, %v2434
  %v2436 = vpop.f32.mrf.mxu0
  %2437 = vmatprep.mubr.bf16.mxu0 0
  %2438 = vmatmul.mubr.bf16.gmra.mxu0 %v2379
  %v2439 = vpop.f32.mrf.mxu0
  %v2440 = vadd.f32 0.0, %v2439
  %v2441 = vpop.f32.mrf.mxu0
  %v2442 = vpop.f32.mrf.mxu0
  %v2443 = vadd.f32 0.0, %v2442
  %v2444 = vpop.f32.mrf.mxu0
  %2445 = vdwg.mxu0
  %v2446 = vadd.f32 %v2185, %v2416
  %v2447 = vadd.f32 %v2188, %v2419
  %v2448 = vadd.f32 %v2193, %v2424
  %v2449 = vadd.f32 %v2196, %v2427
  %v2450 = vadd.f32 %v2201, %v2432
  %v2451 = vadd.f32 %v2204, %v2435
  %v2452 = vadd.f32 %v2209, %v2440
  %v2453 = vadd.f32 %v2212, %v2443
  %s2454 = scalar_lea.vmem %s4, 156
  %v2455 = vld [vmem:[%s2454] sm:$0xf]
  %v2456 = vld [vmem:[%s2454 + $0x4] sm:$0xf]
  %v2457 = vld [vmem:[%s2454 + $0x8] sm:$0xf]
  %v2458 = vld [vmem:[%s2454 + $0xc] sm:$0xf]
  %v2459 = vld [vmem:[%s2454 + $0x10] sm:$0xf]
  %v2460 = vld [vmem:[%s2454 + $0x14] sm:$0xf]
  %v2461 = vld [vmem:[%s2454 + $0x18] sm:$0xf]
  %v2462 = vld [vmem:[%s2454 + $0x1c] sm:$0xf]
  %v2463 = vld [vmem:[%s2454 + $0x20] sm:$0xf]
  %v2464 = vld [vmem:[%s2454 + $0x24] sm:$0xf]
  %v2465 = vld [vmem:[%s2454 + $0x28] sm:$0xf]
  %v2466 = vld [vmem:[%s2454 + $0x2c] sm:$0xf]
  %v2467 = vld [vmem:[%s2454 + $0x30] sm:$0x1]
  %v2481 = vunpack.c.l.b16 %v2455
  %v2482 = vunpack.c.l.b16 %v2456
  %v2483 = vunpack.c.l.b16 %v2457
  %v2484 = vunpack.c.l.b16 %v2458
  %v2485 = vunpack.c.l.b16 %v2459
  %v2486 = vunpack.c.l.b16 %v2460
  %v2487 = vunpack.c.l.b16 %v2461
  %v2488 = vunpack.c.l.b16 %v2462
  %v2489 = vunpack.c.l.b16 %v2463
  %v2490 = vunpack.c.l.b16 %v2464
  %v2491 = vunpack.c.l.b16 %v2465
  %v2492 = vunpack.c.l.b16 %v2466
  %v2493 = vunpack.c.l.b16 %v2467
  %v2494 = vpack.c.b16 %v2482, %v2481
  %v2495 = vpack.c.b16 %v2484, %v2483
  %v2496 = vpack.c.b16 %v2486, %v2485
  %v2497 = vpack.c.b16 %v2488, %v2487
  %v2498 = vpack.c.b16 %v2490, %v2489
  %v2499 = vpack.c.b16 %v2492, %v2491
  %v2500 = vpack.c.b16 %v2493, %v2493
  %v2508 = vsel %vm1805, %v2500, 0
  %2510 = vmatprep.subr.bf16.mxu0 0
  %2511 = vmatpush1.bf16.msra.mxu0 0
  %2512 = vmatprep.subr.bf16.mxu0 0
  %2513 = vmatpush1.bf16.msra.mxu0 %v2508
  %2514 = vmatprep.subr.bf16.mxu0 0
  %2515 = vmatpush1.bf16.msra.mxu0 %v2499
  %2516 = vmatprep.subr.bf16.mxu0 0
  %2517 = vmatpush1.bf16.msra.mxu0 %v2498
  %2518 = vmatprep.subr.bf16.mxu0 0
  %2519 = vmatpush1.bf16.msra.mxu0 %v2497
  %2520 = vmatprep.subr.bf16.mxu0 0
  %2521 = vmatpush1.bf16.msra.mxu0 %v2496
  %2522 = vmatprep.subr.bf16.mxu0 0
  %2523 = vmatpush1.bf16.msra.mxu0 %v2495
  %2524 = vmatprep.subr.bf16.mxu0 0
  %2525 = vmatpush1.bf16.msra.mxu0 %v2494
  %2526 = vmatprep.subr.bf16.mxu0 0
  %2527 = vmatpush2.bf16.msra.mxu0 0
  %2528 = vmatprep.subr.bf16.mxu0 0
  %2529 = vmatpush2.bf16.msra.mxu0 0
  %2530 = vmatprep.subr.bf16.mxu0 0
  %2531 = vmatpush2.bf16.msra.mxu0 0
  %2532 = vmatprep.subr.bf16.mxu0 0
  %2533 = vmatpush2.bf16.msra.mxu0 0
  %2534 = vmatprep.subr.bf16.mxu0 0
  %2535 = vmatpush2.bf16.msra.mxu0 0
  %2536 = vmatprep.subr.bf16.mxu0 0
  %2537 = vmatpush2.bf16.msra.mxu0 0
  %2538 = vmatprep.subr.bf16.mxu0 0
  %2539 = vmatpush2.bf16.msra.mxu0 0
  %2540 = vmatprep.subr.bf16.mxu0 0
  %2541 = vmatpush2.bf16.msra.mxu0 0
  %2542 = vmatprep.mubr.bf16.mxu0 0
  %2543 = vmatmul.mubr.bf16.gmra.mxu0 %v1794
  %v2544 = vpop.f32.mrf.mxu0
  %v2545 = vadd.f32 0.0, %v2544
  %v2546 = vpop.f32.mrf.mxu0
  %v2547 = vpop.f32.mrf.mxu0
  %v2548 = vadd.f32 0.0, %v2547
  %v2549 = vpop.f32.mrf.mxu0
  %2550 = vmatprep.mubr.bf16.mxu0 0
  %2551 = vmatmul.mubr.bf16.gmra.mxu0 %v1797
  %v2552 = vpop.f32.mrf.mxu0
  %v2553 = vadd.f32 0.0, %v2552
  %v2554 = vpop.f32.mrf.mxu0
  %v2555 = vpop.f32.mrf.mxu0
  %v2556 = vadd.f32 0.0, %v2555
  %v2557 = vpop.f32.mrf.mxu0
  %2558 = vmatprep.mubr.bf16.mxu0 0
  %2559 = vmatmul.mubr.bf16.gmra.mxu0 %v1800
  %v2560 = vpop.f32.mrf.mxu0
  %v2561 = vadd.f32 0.0, %v2560
  %v2562 = vpop.f32.mrf.mxu0
  %v2563 = vpop.f32.mrf.mxu0
  %v2564 = vadd.f32 0.0, %v2563
  %v2565 = vpop.f32.mrf.mxu0
  %2566 = vmatprep.mubr.bf16.mxu0 0
  %2567 = vmatmul.mubr.bf16.gmra.mxu0 %v1803
  %v2568 = vpop.f32.mrf.mxu0
  %v2569 = vadd.f32 0.0, %v2568
  %v2570 = vpop.f32.mrf.mxu0
  %v2571 = vpop.f32.mrf.mxu0
  %v2572 = vadd.f32 0.0, %v2571
  %v2573 = vpop.f32.mrf.mxu0
  %2574 = vdwg.mxu0
  %v2575 = vpack.c.bf16 %v2548, %v2545
  %v2576 = vpack.c.bf16 %v2556, %v2553
  %v2577 = vpack.c.bf16 %v2564, %v2561
  %v2578 = vpack.c.bf16 %v2572, %v2569
  %s2579 = scalar_lea.vmem %s5, 96
  %v2580 = vld [vmem:[%s2579] sm:$0xf]
  %v2581 = vld [vmem:[%s2579 + $0x4] sm:$0xf]
  %v2582 = vld [vmem:[%s2579 + $0x8] sm:$0xf]
  %v2583 = vld [vmem:[%s2579 + $0xc] sm:$0xf]
  %v2584 = vld [vmem:[%s2579 + $0x10] sm:$0xf]
  %v2585 = vld [vmem:[%s2579 + $0x14] sm:$0xf]
  %v2586 = vld [vmem:[%s2579 + $0x18] sm:$0xf]
  %v2587 = vld [vmem:[%s2579 + $0x1c] sm:$0xf]
  %v2596 = vunpack.c.l.b16 %v2580
  %v2597 = vunpack.c.l.b16 %v2581
  %v2598 = vunpack.c.l.b16 %v2582
  %v2599 = vunpack.c.l.b16 %v2583
  %v2600 = vunpack.c.l.b16 %v2584
  %v2601 = vunpack.c.l.b16 %v2585
  %v2602 = vunpack.c.l.b16 %v2586
  %v2603 = vunpack.c.l.b16 %v2587
  %v2604 = vpack.c.b16 %v2597, %v2596
  %v2605 = vpack.c.b16 %v2599, %v2598
  %v2606 = vpack.c.b16 %v2601, %v2600
  %v2607 = vpack.c.b16 %v2603, %v2602
  %v2609 = vsel %vm2040, %v2604, 0
  %v2612 = vsel %vm2040, %v2605, 0
  %v2615 = vsel %vm2040, %v2606, 0
  %v2618 = vsel %vm2040, %v2607, 0
  %2620 = vmatprep.subr.bf16.mxu0 0
  %2621 = vmatpush1.bf16.msra.mxu0 0
  %2622 = vmatprep.subr.bf16.mxu0 0
  %2623 = vmatpush1.bf16.msra.mxu0 0
  %2624 = vmatprep.subr.bf16.mxu0 0
  %2625 = vmatpush1.bf16.msra.mxu0 0
  %2626 = vmatprep.subr.bf16.mxu0 0
  %2627 = vmatpush1.bf16.msra.mxu0 0
  %2628 = vmatprep.subr.bf16.mxu0 0
  %2629 = vmatpush1.bf16.msra.mxu0 %v2578
  %2630 = vmatprep.subr.bf16.mxu0 0
  %2631 = vmatpush1.bf16.msra.mxu0 %v2577
  %2632 = vmatprep.subr.bf16.mxu0 0
  %2633 = vmatpush1.bf16.msra.mxu0 %v2576
  %2634 = vmatprep.subr.bf16.mxu0 0
  %2635 = vmatpush1.bf16.msra.mxu0 %v2575
  %2636 = vmatprep.subr.bf16.mxu0 0
  %2637 = vmatpush2.bf16.msra.mxu0 0
  %2638 = vmatprep.subr.bf16.mxu0 0
  %2639 = vmatpush2.bf16.msra.mxu0 0
  %2640 = vmatprep.subr.bf16.mxu0 0
  %2641 = vmatpush2.bf16.msra.mxu0 0
  %2642 = vmatprep.subr.bf16.mxu0 0
  %2643 = vmatpush2.bf16.msra.mxu0 0
  %2644 = vmatprep.subr.bf16.mxu0 0
  %2645 = vmatpush2.bf16.msra.mxu0 0
  %2646 = vmatprep.subr.bf16.mxu0 0
  %2647 = vmatpush2.bf16.msra.mxu0 0
  %2648 = vmatprep.subr.bf16.mxu0 0
  %2649 = vmatpush2.bf16.msra.mxu0 0
  %2650 = vmatprep.subr.bf16.mxu0 0
  %2651 = vmatpush2.bf16.msra.mxu0 0
  %2652 = vmatprep.mubr.bf16.mxu0 0
  %2653 = vmatmul.mubr.bf16.gmra.mxu0 %v2609
  %v2654 = vpop.f32.mrf.mxu0
  %v2655 = vadd.f32 0.0, %v2654
  %v2656 = vpop.f32.mrf.mxu0
  %v2657 = vpop.f32.mrf.mxu0
  %v2658 = vadd.f32 0.0, %v2657
  %v2659 = vpop.f32.mrf.mxu0
  %2660 = vmatprep.mubr.bf16.mxu0 0
  %2661 = vmatmul.mubr.bf16.gmra.mxu0 %v2612
  %v2662 = vpop.f32.mrf.mxu0
  %v2663 = vadd.f32 0.0, %v2662
  %v2664 = vpop.f32.mrf.mxu0
  %v2665 = vpop.f32.mrf.mxu0
  %v2666 = vadd.f32 0.0, %v2665
  %v2667 = vpop.f32.mrf.mxu0
  %2668 = vmatprep.mubr.bf16.mxu0 0
  %2669 = vmatmul.mubr.bf16.gmra.mxu0 %v2615
  %v2670 = vpop.f32.mrf.mxu0
  %v2671 = vadd.f32 0.0, %v2670
  %v2672 = vpop.f32.mrf.mxu0
  %v2673 = vpop.f32.mrf.mxu0
  %v2674 = vadd.f32 0.0, %v2673
  %v2675 = vpop.f32.mrf.mxu0
  %2676 = vmatprep.mubr.bf16.mxu0 0
  %2677 = vmatmul.mubr.bf16.gmra.mxu0 %v2618
  %v2678 = vpop.f32.mrf.mxu0
  %v2679 = vadd.f32 0.0, %v2678
  %v2680 = vpop.f32.mrf.mxu0
  %v2681 = vpop.f32.mrf.mxu0
  %v2682 = vadd.f32 0.0, %v2681
  %v2683 = vpop.f32.mrf.mxu0
  %2684 = vdwg.mxu0
  %v2685 = vadd.f32 %v2446, %v2655
  %v2686 = vadd.f32 %v2447, %v2658
  %v2687 = vadd.f32 %v2448, %v2663
  %v2688 = vadd.f32 %v2449, %v2666
  %v2689 = vadd.f32 %v2450, %v2671
  %v2690 = vadd.f32 %v2451, %v2674
  %v2691 = vadd.f32 %v2452, %v2679
  %v2692 = vadd.f32 %v2453, %v2682
  %s2693 = scalar_lea.vmem %s4, 208
  %v2694 = vld [vmem:[%s2693] sm:$0xf]
  %v2695 = vld [vmem:[%s2693 + $0x4] sm:$0xf]
  %v2696 = vld [vmem:[%s2693 + $0x8] sm:$0xf]
  %v2697 = vld [vmem:[%s2693 + $0xc] sm:$0xf]
  %v2698 = vld [vmem:[%s2693 + $0x10] sm:$0xf]
  %v2699 = vld [vmem:[%s2693 + $0x14] sm:$0xf]
  %v2700 = vld [vmem:[%s2693 + $0x18] sm:$0xf]
  %v2701 = vld [vmem:[%s2693 + $0x1c] sm:$0xf]
  %v2702 = vld [vmem:[%s2693 + $0x20] sm:$0xf]
  %v2703 = vld [vmem:[%s2693 + $0x24] sm:$0xf]
  %v2704 = vld [vmem:[%s2693 + $0x28] sm:$0xf]
  %v2705 = vld [vmem:[%s2693 + $0x2c] sm:$0xf]
  %v2706 = vld [vmem:[%s2693 + $0x30] sm:$0x1]
  %v2720 = vunpack.c.l.b16 %v2694
  %v2721 = vunpack.c.l.b16 %v2695
  %v2722 = vunpack.c.l.b16 %v2696
  %v2723 = vunpack.c.l.b16 %v2697
  %v2724 = vunpack.c.l.b16 %v2698
  %v2725 = vunpack.c.l.b16 %v2699
  %v2726 = vunpack.c.l.b16 %v2700
  %v2727 = vunpack.c.l.b16 %v2701
  %v2728 = vunpack.c.l.b16 %v2702
  %v2729 = vunpack.c.l.b16 %v2703
  %v2730 = vunpack.c.l.b16 %v2704
  %v2731 = vunpack.c.l.b16 %v2705
  %v2732 = vunpack.c.l.b16 %v2706
  %v2733 = vpack.c.b16 %v2721, %v2720
  %v2734 = vpack.c.b16 %v2723, %v2722
  %v2735 = vpack.c.b16 %v2725, %v2724
  %v2736 = vpack.c.b16 %v2727, %v2726
  %v2737 = vpack.c.b16 %v2729, %v2728
  %v2738 = vpack.c.b16 %v2731, %v2730
  %v2739 = vpack.c.b16 %v2732, %v2732
  %v2747 = vsel %vm1805, %v2739, 0
  %2749 = vmatprep.subr.bf16.mxu0 0
  %2750 = vmatpush1.bf16.msra.mxu0 0
  %2751 = vmatprep.subr.bf16.mxu0 0
  %2752 = vmatpush1.bf16.msra.mxu0 %v2747
  %2753 = vmatprep.subr.bf16.mxu0 0
  %2754 = vmatpush1.bf16.msra.mxu0 %v2738
  %2755 = vmatprep.subr.bf16.mxu0 0
  %2756 = vmatpush1.bf16.msra.mxu0 %v2737
  %2757 = vmatprep.subr.bf16.mxu0 0
  %2758 = vmatpush1.bf16.msra.mxu0 %v2736
  %2759 = vmatprep.subr.bf16.mxu0 0
  %2760 = vmatpush1.bf16.msra.mxu0 %v2735
  %2761 = vmatprep.subr.bf16.mxu0 0
  %2762 = vmatpush1.bf16.msra.mxu0 %v2734
  %2763 = vmatprep.subr.bf16.mxu0 0
  %2764 = vmatpush1.bf16.msra.mxu0 %v2733
  %2765 = vmatprep.subr.bf16.mxu0 0
  %2766 = vmatpush2.bf16.msra.mxu0 0
  %2767 = vmatprep.subr.bf16.mxu0 0
  %2768 = vmatpush2.bf16.msra.mxu0 0
  %2769 = vmatprep.subr.bf16.mxu0 0
  %2770 = vmatpush2.bf16.msra.mxu0 0
  %2771 = vmatprep.subr.bf16.mxu0 0
  %2772 = vmatpush2.bf16.msra.mxu0 0
  %2773 = vmatprep.subr.bf16.mxu0 0
  %2774 = vmatpush2.bf16.msra.mxu0 0
  %2775 = vmatprep.subr.bf16.mxu0 0
  %2776 = vmatpush2.bf16.msra.mxu0 0
  %2777 = vmatprep.subr.bf16.mxu0 0
  %2778 = vmatpush2.bf16.msra.mxu0 0
  %2779 = vmatprep.subr.bf16.mxu0 0
  %2780 = vmatpush2.bf16.msra.mxu0 0
  %2781 = vmatprep.mubr.bf16.mxu0 0
  %2782 = vmatmul.mubr.bf16.gmra.mxu0 %v1794
  %v2783 = vpop.f32.mrf.mxu0
  %v2784 = vadd.f32 0.0, %v2783
  %v2785 = vpop.f32.mrf.mxu0
  %v2786 = vpop.f32.mrf.mxu0
  %v2787 = vadd.f32 0.0, %v2786
  %v2788 = vpop.f32.mrf.mxu0
  %2789 = vmatprep.mubr.bf16.mxu0 0
  %2790 = vmatmul.mubr.bf16.gmra.mxu0 %v1797
  %v2791 = vpop.f32.mrf.mxu0
  %v2792 = vadd.f32 0.0, %v2791
  %v2793 = vpop.f32.mrf.mxu0
  %v2794 = vpop.f32.mrf.mxu0
  %v2795 = vadd.f32 0.0, %v2794
  %v2796 = vpop.f32.mrf.mxu0
  %2797 = vmatprep.mubr.bf16.mxu0 0
  %2798 = vmatmul.mubr.bf16.gmra.mxu0 %v1800
  %v2799 = vpop.f32.mrf.mxu0
  %v2800 = vadd.f32 0.0, %v2799
  %v2801 = vpop.f32.mrf.mxu0
  %v2802 = vpop.f32.mrf.mxu0
  %v2803 = vadd.f32 0.0, %v2802
  %v2804 = vpop.f32.mrf.mxu0
  %2805 = vmatprep.mubr.bf16.mxu0 0
  %2806 = vmatmul.mubr.bf16.gmra.mxu0 %v1803
  %v2807 = vpop.f32.mrf.mxu0
  %v2808 = vadd.f32 0.0, %v2807
  %v2809 = vpop.f32.mrf.mxu0
  %v2810 = vpop.f32.mrf.mxu0
  %v2811 = vadd.f32 0.0, %v2810
  %v2812 = vpop.f32.mrf.mxu0
  %2813 = vdwg.mxu0
  %v2814 = vpack.c.bf16 %v2787, %v2784
  %v2815 = vpack.c.bf16 %v2795, %v2792
  %v2816 = vpack.c.bf16 %v2803, %v2800
  %v2817 = vpack.c.bf16 %v2811, %v2808
  %s2818 = scalar_lea.vmem %s5, 128
  %v2819 = vld [vmem:[%s2818] sm:$0xf]
  %v2820 = vld [vmem:[%s2818 + $0x4] sm:$0xf]
  %v2821 = vld [vmem:[%s2818 + $0x8] sm:$0xf]
  %v2822 = vld [vmem:[%s2818 + $0xc] sm:$0xf]
  %v2823 = vld [vmem:[%s2818 + $0x10] sm:$0xf]
  %v2824 = vld [vmem:[%s2818 + $0x14] sm:$0xf]
  %v2825 = vld [vmem:[%s2818 + $0x18] sm:$0xf]
  %v2826 = vld [vmem:[%s2818 + $0x1c] sm:$0xf]
  %v2835 = vunpack.c.l.b16 %v2819
  %v2836 = vunpack.c.l.b16 %v2820
  %v2837 = vunpack.c.l.b16 %v2821
  %v2838 = vunpack.c.l.b16 %v2822
  %v2839 = vunpack.c.l.b16 %v2823
  %v2840 = vunpack.c.l.b16 %v2824
  %v2841 = vunpack.c.l.b16 %v2825
  %v2842 = vunpack.c.l.b16 %v2826
  %v2843 = vpack.c.b16 %v2836, %v2835
  %v2844 = vpack.c.b16 %v2838, %v2837
  %v2845 = vpack.c.b16 %v2840, %v2839
  %v2846 = vpack.c.b16 %v2842, %v2841
  %v2848 = vsel %vm2040, %v2843, 0
  %v2851 = vsel %vm2040, %v2844, 0
  %v2854 = vsel %vm2040, %v2845, 0
  %v2857 = vsel %vm2040, %v2846, 0
  %2859 = vmatprep.subr.bf16.mxu0 0
  %2860 = vmatpush1.bf16.msra.mxu0 0
  %2861 = vmatprep.subr.bf16.mxu0 0
  %2862 = vmatpush1.bf16.msra.mxu0 0
  %2863 = vmatprep.subr.bf16.mxu0 0
  %2864 = vmatpush1.bf16.msra.mxu0 0
  %2865 = vmatprep.subr.bf16.mxu0 0
  %2866 = vmatpush1.bf16.msra.mxu0 0
  %2867 = vmatprep.subr.bf16.mxu0 0
  %2868 = vmatpush1.bf16.msra.mxu0 %v2817
  %2869 = vmatprep.subr.bf16.mxu0 0
  %2870 = vmatpush1.bf16.msra.mxu0 %v2816
  %2871 = vmatprep.subr.bf16.mxu0 0
  %2872 = vmatpush1.bf16.msra.mxu0 %v2815
  %2873 = vmatprep.subr.bf16.mxu0 0
  %2874 = vmatpush1.bf16.msra.mxu0 %v2814
  %2875 = vmatprep.subr.bf16.mxu0 0
  %2876 = vmatpush2.bf16.msra.mxu0 0
  %2877 = vmatprep.subr.bf16.mxu0 0
  %2878 = vmatpush2.bf16.msra.mxu0 0
  %2879 = vmatprep.subr.bf16.mxu0 0
  %2880 = vmatpush2.bf16.msra.mxu0 0
  %2881 = vmatprep.subr.bf16.mxu0 0
  %2882 = vmatpush2.bf16.msra.mxu0 0
  %2883 = vmatprep.subr.bf16.mxu0 0
  %2884 = vmatpush2.bf16.msra.mxu0 0
  %2885 = vmatprep.subr.bf16.mxu0 0
  %2886 = vmatpush2.bf16.msra.mxu0 0
  %2887 = vmatprep.subr.bf16.mxu0 0
  %2888 = vmatpush2.bf16.msra.mxu0 0
  %2889 = vmatprep.subr.bf16.mxu0 0
  %2890 = vmatpush2.bf16.msra.mxu0 0
  %2891 = vmatprep.mubr.bf16.mxu0 0
  %2892 = vmatmul.mubr.bf16.gmra.mxu0 %v2848
  %v2893 = vpop.f32.mrf.mxu0
  %v2894 = vadd.f32 0.0, %v2893
  %v2895 = vpop.f32.mrf.mxu0
  %v2896 = vpop.f32.mrf.mxu0
  %v2897 = vadd.f32 0.0, %v2896
  %v2898 = vpop.f32.mrf.mxu0
  %2899 = vmatprep.mubr.bf16.mxu0 0
  %2900 = vmatmul.mubr.bf16.gmra.mxu0 %v2851
  %v2901 = vpop.f32.mrf.mxu0
  %v2902 = vadd.f32 0.0, %v2901
  %v2903 = vpop.f32.mrf.mxu0
  %v2904 = vpop.f32.mrf.mxu0
  %v2905 = vadd.f32 0.0, %v2904
  %v2906 = vpop.f32.mrf.mxu0
  %2907 = vmatprep.mubr.bf16.mxu0 0
  %2908 = vmatmul.mubr.bf16.gmra.mxu0 %v2854
  %v2909 = vpop.f32.mrf.mxu0
  %v2910 = vadd.f32 0.0, %v2909
  %v2911 = vpop.f32.mrf.mxu0
  %v2912 = vpop.f32.mrf.mxu0
  %v2913 = vadd.f32 0.0, %v2912
  %v2914 = vpop.f32.mrf.mxu0
  %2915 = vmatprep.mubr.bf16.mxu0 0
  %2916 = vmatmul.mubr.bf16.gmra.mxu0 %v2857
  %v2917 = vpop.f32.mrf.mxu0
  %v2918 = vadd.f32 0.0, %v2917
  %v2919 = vpop.f32.mrf.mxu0
  %v2920 = vpop.f32.mrf.mxu0
  %v2921 = vadd.f32 0.0, %v2920
  %v2922 = vpop.f32.mrf.mxu0
  %2923 = vdwg.mxu0
  %v2924 = vadd.f32 %v2685, %v2894
  %v2925 = vadd.f32 %v2686, %v2897
  %v2926 = vadd.f32 %v2687, %v2902
  %v2927 = vadd.f32 %v2688, %v2905
  %v2928 = vadd.f32 %v2689, %v2910
  %v2929 = vadd.f32 %v2690, %v2913
  %v2930 = vadd.f32 %v2691, %v2918
  %v2931 = vadd.f32 %v2692, %v2921
  %s2932 = scalar_lea.vmem %s4, 260
  %v2933 = vld [vmem:[%s2932] sm:$0xf]
  %v2934 = vld [vmem:[%s2932 + $0x4] sm:$0xf]
  %v2935 = vld [vmem:[%s2932 + $0x8] sm:$0xf]
  %v2936 = vld [vmem:[%s2932 + $0xc] sm:$0xf]
  %v2937 = vld [vmem:[%s2932 + $0x10] sm:$0xf]
  %v2938 = vld [vmem:[%s2932 + $0x14] sm:$0xf]
  %v2939 = vld [vmem:[%s2932 + $0x18] sm:$0xf]
  %v2940 = vld [vmem:[%s2932 + $0x1c] sm:$0xf]
  %v2941 = vld [vmem:[%s2932 + $0x20] sm:$0xf]
  %v2942 = vld [vmem:[%s2932 + $0x24] sm:$0xf]
  %v2943 = vld [vmem:[%s2932 + $0x28] sm:$0xf]
  %v2944 = vld [vmem:[%s2932 + $0x2c] sm:$0xf]
  %v2945 = vld [vmem:[%s2932 + $0x30] sm:$0x1]
  %v2959 = vunpack.c.l.b16 %v2933
  %v2960 = vunpack.c.l.b16 %v2934
  %v2961 = vunpack.c.l.b16 %v2935
  %v2962 = vunpack.c.l.b16 %v2936
  %v2963 = vunpack.c.l.b16 %v2937
  %v2964 = vunpack.c.l.b16 %v2938
  %v2965 = vunpack.c.l.b16 %v2939
  %v2966 = vunpack.c.l.b16 %v2940
  %v2967 = vunpack.c.l.b16 %v2941
  %v2968 = vunpack.c.l.b16 %v2942
  %v2969 = vunpack.c.l.b16 %v2943
  %v2970 = vunpack.c.l.b16 %v2944
  %v2971 = vunpack.c.l.b16 %v2945
  %v2972 = vpack.c.b16 %v2960, %v2959
  %v2973 = vpack.c.b16 %v2962, %v2961
  %v2974 = vpack.c.b16 %v2964, %v2963
  %v2975 = vpack.c.b16 %v2966, %v2965
  %v2976 = vpack.c.b16 %v2968, %v2967
  %v2977 = vpack.c.b16 %v2970, %v2969
  %v2978 = vpack.c.b16 %v2971, %v2971
  %v2986 = vsel %vm1805, %v2978, 0
  %2988 = vmatprep.subr.bf16.mxu0 0
  %2989 = vmatpush1.bf16.msra.mxu0 0
  %2990 = vmatprep.subr.bf16.mxu0 0
  %2991 = vmatpush1.bf16.msra.mxu0 %v2986
  %2992 = vmatprep.subr.bf16.mxu0 0
  %2993 = vmatpush1.bf16.msra.mxu0 %v2977
  %2994 = vmatprep.subr.bf16.mxu0 0
  %2995 = vmatpush1.bf16.msra.mxu0 %v2976
  %2996 = vmatprep.subr.bf16.mxu0 0
  %2997 = vmatpush1.bf16.msra.mxu0 %v2975
  %2998 = vmatprep.subr.bf16.mxu0 0
  %2999 = vmatpush1.bf16.msra.mxu0 %v2974
  %3000 = vmatprep.subr.bf16.mxu0 0
  %3001 = vmatpush1.bf16.msra.mxu0 %v2973
  %3002 = vmatprep.subr.bf16.mxu0 0
  %3003 = vmatpush1.bf16.msra.mxu0 %v2972
  %3004 = vmatprep.subr.bf16.mxu0 0
  %3005 = vmatpush2.bf16.msra.mxu0 0
  %3006 = vmatprep.subr.bf16.mxu0 0
  %3007 = vmatpush2.bf16.msra.mxu0 0
  %3008 = vmatprep.subr.bf16.mxu0 0
  %3009 = vmatpush2.bf16.msra.mxu0 0
  %3010 = vmatprep.subr.bf16.mxu0 0
  %3011 = vmatpush2.bf16.msra.mxu0 0
  %3012 = vmatprep.subr.bf16.mxu0 0
  %3013 = vmatpush2.bf16.msra.mxu0 0
  %3014 = vmatprep.subr.bf16.mxu0 0
  %3015 = vmatpush2.bf16.msra.mxu0 0
  %3016 = vmatprep.subr.bf16.mxu0 0
  %3017 = vmatpush2.bf16.msra.mxu0 0
  %3018 = vmatprep.subr.bf16.mxu0 0
  %3019 = vmatpush2.bf16.msra.mxu0 0
  %3020 = vmatprep.mubr.bf16.mxu0 0
  %3021 = vmatmul.mubr.bf16.gmra.mxu0 %v1794
  %v3022 = vpop.f32.mrf.mxu0
  %v3023 = vadd.f32 0.0, %v3022
  %v3024 = vpop.f32.mrf.mxu0
  %v3025 = vpop.f32.mrf.mxu0
  %v3026 = vadd.f32 0.0, %v3025
  %v3027 = vpop.f32.mrf.mxu0
  %3028 = vmatprep.mubr.bf16.mxu0 0
  %3029 = vmatmul.mubr.bf16.gmra.mxu0 %v1797
  %v3030 = vpop.f32.mrf.mxu0
  %v3031 = vadd.f32 0.0, %v3030
  %v3032 = vpop.f32.mrf.mxu0
  %v3033 = vpop.f32.mrf.mxu0
  %v3034 = vadd.f32 0.0, %v3033
  %v3035 = vpop.f32.mrf.mxu0
  %3036 = vmatprep.mubr.bf16.mxu0 0
  %3037 = vmatmul.mubr.bf16.gmra.mxu0 %v1800
  %v3038 = vpop.f32.mrf.mxu0
  %v3039 = vadd.f32 0.0, %v3038
  %v3040 = vpop.f32.mrf.mxu0
  %v3041 = vpop.f32.mrf.mxu0
  %v3042 = vadd.f32 0.0, %v3041
  %v3043 = vpop.f32.mrf.mxu0
  %3044 = vmatprep.mubr.bf16.mxu0 0
  %3045 = vmatmul.mubr.bf16.gmra.mxu0 %v1803
  %v3046 = vpop.f32.mrf.mxu0
  %v3047 = vadd.f32 0.0, %v3046
  %v3048 = vpop.f32.mrf.mxu0
  %v3049 = vpop.f32.mrf.mxu0
  %v3050 = vadd.f32 0.0, %v3049
  %v3051 = vpop.f32.mrf.mxu0
  %3052 = vdwg.mxu0
  %v3053 = vpack.c.bf16 %v3026, %v3023
  %v3054 = vpack.c.bf16 %v3034, %v3031
  %v3055 = vpack.c.bf16 %v3042, %v3039
  %v3056 = vpack.c.bf16 %v3050, %v3047
  %s3057 = scalar_lea.vmem %s5, 160
  %v3058 = vld [vmem:[%s3057] sm:$0xf]
  %v3059 = vld [vmem:[%s3057 + $0x4] sm:$0xf]
  %v3060 = vld [vmem:[%s3057 + $0x8] sm:$0xf]
  %v3061 = vld [vmem:[%s3057 + $0xc] sm:$0xf]
  %v3062 = vld [vmem:[%s3057 + $0x10] sm:$0xf]
  %v3063 = vld [vmem:[%s3057 + $0x14] sm:$0xf]
  %v3064 = vld [vmem:[%s3057 + $0x18] sm:$0xf]
  %v3065 = vld [vmem:[%s3057 + $0x1c] sm:$0xf]
  %v3074 = vunpack.c.l.b16 %v3058
  %v3075 = vunpack.c.l.b16 %v3059
  %v3076 = vunpack.c.l.b16 %v3060
  %v3077 = vunpack.c.l.b16 %v3061
  %v3078 = vunpack.c.l.b16 %v3062
  %v3079 = vunpack.c.l.b16 %v3063
  %v3080 = vunpack.c.l.b16 %v3064
  %v3081 = vunpack.c.l.b16 %v3065
  %v3082 = vpack.c.b16 %v3075, %v3074
  %v3083 = vpack.c.b16 %v3077, %v3076
  %v3084 = vpack.c.b16 %v3079, %v3078
  %v3085 = vpack.c.b16 %v3081, %v3080
  %v3087 = vsel %vm2040, %v3082, 0
  %v3090 = vsel %vm2040, %v3083, 0
  %v3093 = vsel %vm2040, %v3084, 0
  %v3096 = vsel %vm2040, %v3085, 0
  %3098 = vmatprep.subr.bf16.mxu0 0
  %3099 = vmatpush1.bf16.msra.mxu0 0
  %3100 = vmatprep.subr.bf16.mxu0 0
  %3101 = vmatpush1.bf16.msra.mxu0 0
  %3102 = vmatprep.subr.bf16.mxu0 0
  %3103 = vmatpush1.bf16.msra.mxu0 0
  %3104 = vmatprep.subr.bf16.mxu0 0
  %3105 = vmatpush1.bf16.msra.mxu0 0
  %3106 = vmatprep.subr.bf16.mxu0 0
  %3107 = vmatpush1.bf16.msra.mxu0 %v3056
  %3108 = vmatprep.subr.bf16.mxu0 0
  %3109 = vmatpush1.bf16.msra.mxu0 %v3055
  %3110 = vmatprep.subr.bf16.mxu0 0
  %3111 = vmatpush1.bf16.msra.mxu0 %v3054
  %3112 = vmatprep.subr.bf16.mxu0 0
  %3113 = vmatpush1.bf16.msra.mxu0 %v3053
  %3114 = vmatprep.subr.bf16.mxu0 0
  %3115 = vmatpush2.bf16.msra.mxu0 0
  %3116 = vmatprep.subr.bf16.mxu0 0
  %3117 = vmatpush2.bf16.msra.mxu0 0
  %3118 = vmatprep.subr.bf16.mxu0 0
  %3119 = vmatpush2.bf16.msra.mxu0 0
  %3120 = vmatprep.subr.bf16.mxu0 0
  %3121 = vmatpush2.bf16.msra.mxu0 0
  %3122 = vmatprep.subr.bf16.mxu0 0
  %3123 = vmatpush2.bf16.msra.mxu0 0
  %3124 = vmatprep.subr.bf16.mxu0 0
  %3125 = vmatpush2.bf16.msra.mxu0 0
  %3126 = vmatprep.subr.bf16.mxu0 0
  %3127 = vmatpush2.bf16.msra.mxu0 0
  %3128 = vmatprep.subr.bf16.mxu0 0
  %3129 = vmatpush2.bf16.msra.mxu0 0
  %3130 = vmatprep.mubr.bf16.mxu0 0
  %3131 = vmatmul.mubr.bf16.gmra.mxu0 %v3087
  %v3132 = vpop.f32.mrf.mxu0
  %v3133 = vadd.f32 0.0, %v3132
  %v3134 = vpop.f32.mrf.mxu0
  %v3135 = vpop.f32.mrf.mxu0
  %v3136 = vadd.f32 0.0, %v3135
  %v3137 = vpop.f32.mrf.mxu0
  %3138 = vmatprep.mubr.bf16.mxu0 0
  %3139 = vmatmul.mubr.bf16.gmra.mxu0 %v3090
  %v3140 = vpop.f32.mrf.mxu0
  %v3141 = vadd.f32 0.0, %v3140
  %v3142 = vpop.f32.mrf.mxu0
  %v3143 = vpop.f32.mrf.mxu0
  %v3144 = vadd.f32 0.0, %v3143
  %v3145 = vpop.f32.mrf.mxu0
  %3146 = vmatprep.mubr.bf16.mxu0 0
  %3147 = vmatmul.mubr.bf16.gmra.mxu0 %v3093
  %v3148 = vpop.f32.mrf.mxu0
  %v3149 = vadd.f32 0.0, %v3148
  %v3150 = vpop.f32.mrf.mxu0
  %v3151 = vpop.f32.mrf.mxu0
  %v3152 = vadd.f32 0.0, %v3151
  %v3153 = vpop.f32.mrf.mxu0
  %3154 = vmatprep.mubr.bf16.mxu0 0
  %3155 = vmatmul.mubr.bf16.gmra.mxu0 %v3096
  %v3156 = vpop.f32.mrf.mxu0
  %v3157 = vadd.f32 0.0, %v3156
  %v3158 = vpop.f32.mrf.mxu0
  %v3159 = vpop.f32.mrf.mxu0
  %v3160 = vadd.f32 0.0, %v3159
  %v3161 = vpop.f32.mrf.mxu0
  %3162 = vdwg.mxu0
  %v3163 = vadd.f32 %v2924, %v3133
  %v3164 = vadd.f32 %v2925, %v3136
  %v3165 = vadd.f32 %v2926, %v3141
  %v3166 = vadd.f32 %v2927, %v3144
  %v3167 = vadd.f32 %v2928, %v3149
  %v3168 = vadd.f32 %v2929, %v3152
  %v3169 = vadd.f32 %v2930, %v3157
  %v3170 = vadd.f32 %v2931, %v3160
  %s3171 = scalar_lea.vmem %s4, 312
  %v3172 = vld [vmem:[%s3171] sm:$0xf]
  %v3173 = vld [vmem:[%s3171 + $0x4] sm:$0xf]
  %v3174 = vld [vmem:[%s3171 + $0x8] sm:$0xf]
  %v3175 = vld [vmem:[%s3171 + $0xc] sm:$0xf]
  %v3176 = vld [vmem:[%s3171 + $0x10] sm:$0xf]
  %v3177 = vld [vmem:[%s3171 + $0x14] sm:$0xf]
  %v3178 = vld [vmem:[%s3171 + $0x18] sm:$0xf]
  %v3179 = vld [vmem:[%s3171 + $0x1c] sm:$0xf]
  %v3180 = vld [vmem:[%s3171 + $0x20] sm:$0xf]
  %v3181 = vld [vmem:[%s3171 + $0x24] sm:$0xf]
  %v3182 = vld [vmem:[%s3171 + $0x28] sm:$0xf]
  %v3183 = vld [vmem:[%s3171 + $0x2c] sm:$0xf]
  %v3184 = vld [vmem:[%s3171 + $0x30] sm:$0x1]
  %v3198 = vunpack.c.l.b16 %v3172
  %v3199 = vunpack.c.l.b16 %v3173
  %v3200 = vunpack.c.l.b16 %v3174
  %v3201 = vunpack.c.l.b16 %v3175
  %v3202 = vunpack.c.l.b16 %v3176
  %v3203 = vunpack.c.l.b16 %v3177
  %v3204 = vunpack.c.l.b16 %v3178
  %v3205 = vunpack.c.l.b16 %v3179
  %v3206 = vunpack.c.l.b16 %v3180
  %v3207 = vunpack.c.l.b16 %v3181
  %v3208 = vunpack.c.l.b16 %v3182
  %v3209 = vunpack.c.l.b16 %v3183
  %v3210 = vunpack.c.l.b16 %v3184
  %v3211 = vpack.c.b16 %v3199, %v3198
  %v3212 = vpack.c.b16 %v3201, %v3200
  %v3213 = vpack.c.b16 %v3203, %v3202
  %v3214 = vpack.c.b16 %v3205, %v3204
  %v3215 = vpack.c.b16 %v3207, %v3206
  %v3216 = vpack.c.b16 %v3209, %v3208
  %v3217 = vpack.c.b16 %v3210, %v3210
  %v3225 = vsel %vm1805, %v3217, 0
  %3227 = vmatprep.subr.bf16.mxu0 0
  %3228 = vmatpush1.bf16.msra.mxu0 0
  %3229 = vmatprep.subr.bf16.mxu0 0
  %3230 = vmatpush1.bf16.msra.mxu0 %v3225
  %3231 = vmatprep.subr.bf16.mxu0 0
  %3232 = vmatpush1.bf16.msra.mxu0 %v3216
  %3233 = vmatprep.subr.bf16.mxu0 0
  %3234 = vmatpush1.bf16.msra.mxu0 %v3215
  %3235 = vmatprep.subr.bf16.mxu0 0
  %3236 = vmatpush1.bf16.msra.mxu0 %v3214
  %3237 = vmatprep.subr.bf16.mxu0 0
  %3238 = vmatpush1.bf16.msra.mxu0 %v3213
  %3239 = vmatprep.subr.bf16.mxu0 0
  %3240 = vmatpush1.bf16.msra.mxu0 %v3212
  %3241 = vmatprep.subr.bf16.mxu0 0
  %3242 = vmatpush1.bf16.msra.mxu0 %v3211
  %3243 = vmatprep.subr.bf16.mxu0 0
  %3244 = vmatpush2.bf16.msra.mxu0 0
  %3245 = vmatprep.subr.bf16.mxu0 0
  %3246 = vmatpush2.bf16.msra.mxu0 0
  %3247 = vmatprep.subr.bf16.mxu0 0
  %3248 = vmatpush2.bf16.msra.mxu0 0
  %3249 = vmatprep.subr.bf16.mxu0 0
  %3250 = vmatpush2.bf16.msra.mxu0 0
  %3251 = vmatprep.subr.bf16.mxu0 0
  %3252 = vmatpush2.bf16.msra.mxu0 0
  %3253 = vmatprep.subr.bf16.mxu0 0
  %3254 = vmatpush2.bf16.msra.mxu0 0
  %3255 = vmatprep.subr.bf16.mxu0 0
  %3256 = vmatpush2.bf16.msra.mxu0 0
  %3257 = vmatprep.subr.bf16.mxu0 0
  %3258 = vmatpush2.bf16.msra.mxu0 0
  %3259 = vmatprep.mubr.bf16.mxu0 0
  %3260 = vmatmul.mubr.bf16.gmra.mxu0 %v1794
  %v3261 = vpop.f32.mrf.mxu0
  %v3262 = vadd.f32 0.0, %v3261
  %v3263 = vpop.f32.mrf.mxu0
  %v3264 = vpop.f32.mrf.mxu0
  %v3265 = vadd.f32 0.0, %v3264
  %v3266 = vpop.f32.mrf.mxu0
  %3267 = vmatprep.mubr.bf16.mxu0 0
  %3268 = vmatmul.mubr.bf16.gmra.mxu0 %v1797
  %v3269 = vpop.f32.mrf.mxu0
  %v3270 = vadd.f32 0.0, %v3269
  %v3271 = vpop.f32.mrf.mxu0
  %v3272 = vpop.f32.mrf.mxu0
  %v3273 = vadd.f32 0.0, %v3272
  %v3274 = vpop.f32.mrf.mxu0
  %3275 = vmatprep.mubr.bf16.mxu0 0
  %3276 = vmatmul.mubr.bf16.gmra.mxu0 %v1800
  %v3277 = vpop.f32.mrf.mxu0
  %v3278 = vadd.f32 0.0, %v3277
  %v3279 = vpop.f32.mrf.mxu0
  %v3280 = vpop.f32.mrf.mxu0
  %v3281 = vadd.f32 0.0, %v3280
  %v3282 = vpop.f32.mrf.mxu0
  %3283 = vmatprep.mubr.bf16.mxu0 0
  %3284 = vmatmul.mubr.bf16.gmra.mxu0 %v1803
  %v3285 = vpop.f32.mrf.mxu0
  %v3286 = vadd.f32 0.0, %v3285
  %v3287 = vpop.f32.mrf.mxu0
  %v3288 = vpop.f32.mrf.mxu0
  %v3289 = vadd.f32 0.0, %v3288
  %v3290 = vpop.f32.mrf.mxu0
  %3291 = vdwg.mxu0
  %v3292 = vpack.c.bf16 %v3265, %v3262
  %v3293 = vpack.c.bf16 %v3273, %v3270
  %v3294 = vpack.c.bf16 %v3281, %v3278
  %v3295 = vpack.c.bf16 %v3289, %v3286
  %s3296 = scalar_lea.vmem %s5, 192
  %v3297 = vld [vmem:[%s3296] sm:$0xf]
  %v3298 = vld [vmem:[%s3296 + $0x4] sm:$0xf]
  %v3299 = vld [vmem:[%s3296 + $0x8] sm:$0xf]
  %v3300 = vld [vmem:[%s3296 + $0xc] sm:$0xf]
  %v3301 = vld [vmem:[%s3296 + $0x10] sm:$0xf]
  %v3302 = vld [vmem:[%s3296 + $0x14] sm:$0xf]
  %v3303 = vld [vmem:[%s3296 + $0x18] sm:$0xf]
  %v3304 = vld [vmem:[%s3296 + $0x1c] sm:$0xf]
  %v3313 = vunpack.c.l.b16 %v3297
  %v3314 = vunpack.c.l.b16 %v3298
  %v3315 = vunpack.c.l.b16 %v3299
  %v3316 = vunpack.c.l.b16 %v3300
  %v3317 = vunpack.c.l.b16 %v3301
  %v3318 = vunpack.c.l.b16 %v3302
  %v3319 = vunpack.c.l.b16 %v3303
  %v3320 = vunpack.c.l.b16 %v3304
  %v3321 = vpack.c.b16 %v3314, %v3313
  %v3322 = vpack.c.b16 %v3316, %v3315
  %v3323 = vpack.c.b16 %v3318, %v3317
  %v3324 = vpack.c.b16 %v3320, %v3319
  %v3326 = vsel %vm2040, %v3321, 0
  %v3329 = vsel %vm2040, %v3322, 0
  %v3332 = vsel %vm2040, %v3323, 0
  %v3335 = vsel %vm2040, %v3324, 0
  %3337 = vmatprep.subr.bf16.mxu0 0
  %3338 = vmatpush1.bf16.msra.mxu0 0
  %3339 = vmatprep.subr.bf16.mxu0 0
  %3340 = vmatpush1.bf16.msra.mxu0 0
  %3341 = vmatprep.subr.bf16.mxu0 0
  %3342 = vmatpush1.bf16.msra.mxu0 0
  %3343 = vmatprep.subr.bf16.mxu0 0
  %3344 = vmatpush1.bf16.msra.mxu0 0
  %3345 = vmatprep.subr.bf16.mxu0 0
  %3346 = vmatpush1.bf16.msra.mxu0 %v3295
  %3347 = vmatprep.subr.bf16.mxu0 0
  %3348 = vmatpush1.bf16.msra.mxu0 %v3294
  %3349 = vmatprep.subr.bf16.mxu0 0
  %3350 = vmatpush1.bf16.msra.mxu0 %v3293
  %3351 = vmatprep.subr.bf16.mxu0 0
  %3352 = vmatpush1.bf16.msra.mxu0 %v3292
  %3353 = vmatprep.subr.bf16.mxu0 0
  %3354 = vmatpush2.bf16.msra.mxu0 0
  %3355 = vmatprep.subr.bf16.mxu0 0
  %3356 = vmatpush2.bf16.msra.mxu0 0
  %3357 = vmatprep.subr.bf16.mxu0 0
  %3358 = vmatpush2.bf16.msra.mxu0 0
  %3359 = vmatprep.subr.bf16.mxu0 0
  %3360 = vmatpush2.bf16.msra.mxu0 0
  %3361 = vmatprep.subr.bf16.mxu0 0
  %3362 = vmatpush2.bf16.msra.mxu0 0
  %3363 = vmatprep.subr.bf16.mxu0 0
  %3364 = vmatpush2.bf16.msra.mxu0 0
  %3365 = vmatprep.subr.bf16.mxu0 0
  %3366 = vmatpush2.bf16.msra.mxu0 0
  %3367 = vmatprep.subr.bf16.mxu0 0
  %3368 = vmatpush2.bf16.msra.mxu0 0
  %3369 = vmatprep.mubr.bf16.mxu0 0
  %3370 = vmatmul.mubr.bf16.gmra.mxu0 %v3326
  %v3371 = vpop.f32.mrf.mxu0
  %v3372 = vadd.f32 0.0, %v3371
  %v3373 = vpop.f32.mrf.mxu0
  %v3374 = vpop.f32.mrf.mxu0
  %v3375 = vadd.f32 0.0, %v3374
  %v3376 = vpop.f32.mrf.mxu0
  %3377 = vmatprep.mubr.bf16.mxu0 0
  %3378 = vmatmul.mubr.bf16.gmra.mxu0 %v3329
  %v3379 = vpop.f32.mrf.mxu0
  %v3380 = vadd.f32 0.0, %v3379
  %v3381 = vpop.f32.mrf.mxu0
  %v3382 = vpop.f32.mrf.mxu0
  %v3383 = vadd.f32 0.0, %v3382
  %v3384 = vpop.f32.mrf.mxu0
  %3385 = vmatprep.mubr.bf16.mxu0 0
  %3386 = vmatmul.mubr.bf16.gmra.mxu0 %v3332
  %v3387 = vpop.f32.mrf.mxu0
  %v3388 = vadd.f32 0.0, %v3387
  %v3389 = vpop.f32.mrf.mxu0
  %v3390 = vpop.f32.mrf.mxu0
  %v3391 = vadd.f32 0.0, %v3390
  %v3392 = vpop.f32.mrf.mxu0
  %3393 = vmatprep.mubr.bf16.mxu0 0
  %3394 = vmatmul.mubr.bf16.gmra.mxu0 %v3335
  %v3395 = vpop.f32.mrf.mxu0
  %v3396 = vadd.f32 0.0, %v3395
  %v3397 = vpop.f32.mrf.mxu0
  %v3398 = vpop.f32.mrf.mxu0
  %v3399 = vadd.f32 0.0, %v3398
  %v3400 = vpop.f32.mrf.mxu0
  %3401 = vdwg.mxu0
  %v3402 = vadd.f32 %v3163, %v3372
  %v3403 = vadd.f32 %v3164, %v3375
  %v3404 = vadd.f32 %v3165, %v3380
  %v3405 = vadd.f32 %v3166, %v3383
  %v3406 = vadd.f32 %v3167, %v3388
  %v3407 = vadd.f32 %v3168, %v3391
  %v3408 = vadd.f32 %v3169, %v3396
  %v3409 = vadd.f32 %v3170, %v3399
  %s3410 = scalar_lea.vmem %s4, 364
  %v3411 = vld [vmem:[%s3410] sm:$0xf]
  %v3412 = vld [vmem:[%s3410 + $0x4] sm:$0xf]
  %v3413 = vld [vmem:[%s3410 + $0x8] sm:$0xf]
  %v3414 = vld [vmem:[%s3410 + $0xc] sm:$0xf]
  %v3415 = vld [vmem:[%s3410 + $0x10] sm:$0xf]
  %v3416 = vld [vmem:[%s3410 + $0x14] sm:$0xf]
  %v3417 = vld [vmem:[%s3410 + $0x18] sm:$0xf]
  %v3418 = vld [vmem:[%s3410 + $0x1c] sm:$0xf]
  %v3419 = vld [vmem:[%s3410 + $0x20] sm:$0xf]
  %v3420 = vld [vmem:[%s3410 + $0x24] sm:$0xf]
  %v3421 = vld [vmem:[%s3410 + $0x28] sm:$0xf]
  %v3422 = vld [vmem:[%s3410 + $0x2c] sm:$0xf]
  %v3423 = vld [vmem:[%s3410 + $0x30] sm:$0x1]
  %v3437 = vunpack.c.l.b16 %v3411
  %v3438 = vunpack.c.l.b16 %v3412
  %v3439 = vunpack.c.l.b16 %v3413
  %v3440 = vunpack.c.l.b16 %v3414
  %v3441 = vunpack.c.l.b16 %v3415
  %v3442 = vunpack.c.l.b16 %v3416
  %v3443 = vunpack.c.l.b16 %v3417
  %v3444 = vunpack.c.l.b16 %v3418
  %v3445 = vunpack.c.l.b16 %v3419
  %v3446 = vunpack.c.l.b16 %v3420
  %v3447 = vunpack.c.l.b16 %v3421
  %v3448 = vunpack.c.l.b16 %v3422
  %v3449 = vunpack.c.l.b16 %v3423
  %v3450 = vpack.c.b16 %v3438, %v3437
  %v3451 = vpack.c.b16 %v3440, %v3439
  %v3452 = vpack.c.b16 %v3442, %v3441
  %v3453 = vpack.c.b16 %v3444, %v3443
  %v3454 = vpack.c.b16 %v3446, %v3445
  %v3455 = vpack.c.b16 %v3448, %v3447
  %v3456 = vpack.c.b16 %v3449, %v3449
  %v3464 = vsel %vm1805, %v3456, 0
  %3466 = vmatprep.subr.bf16.mxu0 0
  %3467 = vmatpush1.bf16.msra.mxu0 0
  %3468 = vmatprep.subr.bf16.mxu0 0
  %3469 = vmatpush1.bf16.msra.mxu0 %v3464
  %3470 = vmatprep.subr.bf16.mxu0 0
  %3471 = vmatpush1.bf16.msra.mxu0 %v3455
  %3472 = vmatprep.subr.bf16.mxu0 0
  %3473 = vmatpush1.bf16.msra.mxu0 %v3454
  %3474 = vmatprep.subr.bf16.mxu0 0
  %3475 = vmatpush1.bf16.msra.mxu0 %v3453
  %3476 = vmatprep.subr.bf16.mxu0 0
  %3477 = vmatpush1.bf16.msra.mxu0 %v3452
  %3478 = vmatprep.subr.bf16.mxu0 0
  %3479 = vmatpush1.bf16.msra.mxu0 %v3451
  %3480 = vmatprep.subr.bf16.mxu0 0
  %3481 = vmatpush1.bf16.msra.mxu0 %v3450
  %3482 = vmatprep.subr.bf16.mxu0 0
  %3483 = vmatpush2.bf16.msra.mxu0 0
  %3484 = vmatprep.subr.bf16.mxu0 0
  %3485 = vmatpush2.bf16.msra.mxu0 0
  %3486 = vmatprep.subr.bf16.mxu0 0
  %3487 = vmatpush2.bf16.msra.mxu0 0
  %3488 = vmatprep.subr.bf16.mxu0 0
  %3489 = vmatpush2.bf16.msra.mxu0 0
  %3490 = vmatprep.subr.bf16.mxu0 0
  %3491 = vmatpush2.bf16.msra.mxu0 0
  %3492 = vmatprep.subr.bf16.mxu0 0
  %3493 = vmatpush2.bf16.msra.mxu0 0
  %3494 = vmatprep.subr.bf16.mxu0 0
  %3495 = vmatpush2.bf16.msra.mxu0 0
  %3496 = vmatprep.subr.bf16.mxu0 0
  %3497 = vmatpush2.bf16.msra.mxu0 0
  %3498 = vmatprep.mubr.bf16.mxu0 0
  %3499 = vmatmul.mubr.bf16.gmra.mxu0 %v1794
  %v3500 = vpop.f32.mrf.mxu0
  %v3501 = vadd.f32 0.0, %v3500
  %v3502 = vpop.f32.mrf.mxu0
  %v3503 = vpop.f32.mrf.mxu0
  %v3504 = vadd.f32 0.0, %v3503
  %v3505 = vpop.f32.mrf.mxu0
  %3506 = vmatprep.mubr.bf16.mxu0 0
  %3507 = vmatmul.mubr.bf16.gmra.mxu0 %v1797
  %v3508 = vpop.f32.mrf.mxu0
  %v3509 = vadd.f32 0.0, %v3508
  %v3510 = vpop.f32.mrf.mxu0
  %v3511 = vpop.f32.mrf.mxu0
  %v3512 = vadd.f32 0.0, %v3511
  %v3513 = vpop.f32.mrf.mxu0
  %3514 = vmatprep.mubr.bf16.mxu0 0
  %3515 = vmatmul.mubr.bf16.gmra.mxu0 %v1800
  %v3516 = vpop.f32.mrf.mxu0
  %v3517 = vadd.f32 0.0, %v3516
  %v3518 = vpop.f32.mrf.mxu0
  %v3519 = vpop.f32.mrf.mxu0
  %v3520 = vadd.f32 0.0, %v3519
  %v3521 = vpop.f32.mrf.mxu0
  %3522 = vmatprep.mubr.bf16.mxu0 0
  %3523 = vmatmul.mubr.bf16.gmra.mxu0 %v1803
  %v3524 = vpop.f32.mrf.mxu0
  %v3525 = vadd.f32 0.0, %v3524
  %v3526 = vpop.f32.mrf.mxu0
  %v3527 = vpop.f32.mrf.mxu0
  %v3528 = vadd.f32 0.0, %v3527
  %v3529 = vpop.f32.mrf.mxu0
  %3530 = vdwg.mxu0
  %v3531 = vpack.c.bf16 %v3504, %v3501
  %v3532 = vpack.c.bf16 %v3512, %v3509
  %v3533 = vpack.c.bf16 %v3520, %v3517
  %v3534 = vpack.c.bf16 %v3528, %v3525
  %s3535 = scalar_lea.vmem %s5, 224
  %v3536 = vld [vmem:[%s3535] sm:$0xf]
  %v3537 = vld [vmem:[%s3535 + $0x4] sm:$0xf]
  %v3538 = vld [vmem:[%s3535 + $0x8] sm:$0xf]
  %v3539 = vld [vmem:[%s3535 + $0xc] sm:$0xf]
  %v3540 = vld [vmem:[%s3535 + $0x10] sm:$0xf]
  %v3541 = vld [vmem:[%s3535 + $0x14] sm:$0xf]
  %v3542 = vld [vmem:[%s3535 + $0x18] sm:$0xf]
  %v3543 = vld [vmem:[%s3535 + $0x1c] sm:$0xf]
  %v3552 = vunpack.c.l.b16 %v3536
  %v3553 = vunpack.c.l.b16 %v3537
  %v3554 = vunpack.c.l.b16 %v3538
  %v3555 = vunpack.c.l.b16 %v3539
  %v3556 = vunpack.c.l.b16 %v3540
  %v3557 = vunpack.c.l.b16 %v3541
  %v3558 = vunpack.c.l.b16 %v3542
  %v3559 = vunpack.c.l.b16 %v3543
  %v3560 = vpack.c.b16 %v3553, %v3552
  %v3561 = vpack.c.b16 %v3555, %v3554
  %v3562 = vpack.c.b16 %v3557, %v3556
  %v3563 = vpack.c.b16 %v3559, %v3558
  %v3565 = vsel %vm2040, %v3560, 0
  %v3568 = vsel %vm2040, %v3561, 0
  %v3571 = vsel %vm2040, %v3562, 0
  %v3574 = vsel %vm2040, %v3563, 0
  %3576 = vmatprep.subr.bf16.mxu0 0
  %3577 = vmatpush1.bf16.msra.mxu0 0
  %3578 = vmatprep.subr.bf16.mxu0 0
  %3579 = vmatpush1.bf16.msra.mxu0 0
  %3580 = vmatprep.subr.bf16.mxu0 0
  %3581 = vmatpush1.bf16.msra.mxu0 0
  %3582 = vmatprep.subr.bf16.mxu0 0
  %3583 = vmatpush1.bf16.msra.mxu0 0
  %3584 = vmatprep.subr.bf16.mxu0 0
  %3585 = vmatpush1.bf16.msra.mxu0 %v3534
  %3586 = vmatprep.subr.bf16.mxu0 0
  %3587 = vmatpush1.bf16.msra.mxu0 %v3533
  %3588 = vmatprep.subr.bf16.mxu0 0
  %3589 = vmatpush1.bf16.msra.mxu0 %v3532
  %3590 = vmatprep.subr.bf16.mxu0 0
  %3591 = vmatpush1.bf16.msra.mxu0 %v3531
  %3592 = vmatprep.subr.bf16.mxu0 0
  %3593 = vmatpush2.bf16.msra.mxu0 0
  %3594 = vmatprep.subr.bf16.mxu0 0
  %3595 = vmatpush2.bf16.msra.mxu0 0
  %3596 = vmatprep.subr.bf16.mxu0 0
  %3597 = vmatpush2.bf16.msra.mxu0 0
  %3598 = vmatprep.subr.bf16.mxu0 0
  %3599 = vmatpush2.bf16.msra.mxu0 0
  %3600 = vmatprep.subr.bf16.mxu0 0
  %3601 = vmatpush2.bf16.msra.mxu0 0
  %3602 = vmatprep.subr.bf16.mxu0 0
  %3603 = vmatpush2.bf16.msra.mxu0 0
  %3604 = vmatprep.subr.bf16.mxu0 0
  %3605 = vmatpush2.bf16.msra.mxu0 0
  %3606 = vmatprep.subr.bf16.mxu0 0
  %3607 = vmatpush2.bf16.msra.mxu0 0
  %3608 = vmatprep.mubr.bf16.mxu0 0
  %3609 = vmatmul.mubr.bf16.gmra.mxu0 %v3565
  %v3610 = vpop.f32.mrf.mxu0
  %v3611 = vadd.f32 0.0, %v3610
  %v3612 = vpop.f32.mrf.mxu0
  %v3613 = vpop.f32.mrf.mxu0
  %v3614 = vadd.f32 0.0, %v3613
  %v3615 = vpop.f32.mrf.mxu0
  %3616 = vmatprep.mubr.bf16.mxu0 0
  %3617 = vmatmul.mubr.bf16.gmra.mxu0 %v3568
  %v3618 = vpop.f32.mrf.mxu0
  %v3619 = vadd.f32 0.0, %v3618
  %v3620 = vpop.f32.mrf.mxu0
  %v3621 = vpop.f32.mrf.mxu0
  %v3622 = vadd.f32 0.0, %v3621
  %v3623 = vpop.f32.mrf.mxu0
  %3624 = vmatprep.mubr.bf16.mxu0 0
  %3625 = vmatmul.mubr.bf16.gmra.mxu0 %v3571
  %v3626 = vpop.f32.mrf.mxu0
  %v3627 = vadd.f32 0.0, %v3626
  %v3628 = vpop.f32.mrf.mxu0
  %v3629 = vpop.f32.mrf.mxu0
  %v3630 = vadd.f32 0.0, %v3629
  %v3631 = vpop.f32.mrf.mxu0
  %3632 = vmatprep.mubr.bf16.mxu0 0
  %3633 = vmatmul.mubr.bf16.gmra.mxu0 %v3574
  %v3634 = vpop.f32.mrf.mxu0
  %v3635 = vadd.f32 0.0, %v3634
  %v3636 = vpop.f32.mrf.mxu0
  %v3637 = vpop.f32.mrf.mxu0
  %v3638 = vadd.f32 0.0, %v3637
  %v3639 = vpop.f32.mrf.mxu0
  %3640 = vdwg.mxu0
  %v3641 = vadd.f32 %v3402, %v3611
  %v3642 = vadd.f32 %v3403, %v3614
  %v3643 = vadd.f32 %v3404, %v3619
  %v3644 = vadd.f32 %v3405, %v3622
  %v3645 = vadd.f32 %v3406, %v3627
  %v3646 = vadd.f32 %v3407, %v3630
  %v3647 = vadd.f32 %v3408, %v3635
  %v3648 = vadd.f32 %v3409, %v3638
  %s3649 = scalar_lea.vmem %s4, 416
  %v3650 = vld [vmem:[%s3649] sm:$0xf]
  %v3651 = vld [vmem:[%s3649 + $0x4] sm:$0xf]
  %v3652 = vld [vmem:[%s3649 + $0x8] sm:$0xf]
  %v3653 = vld [vmem:[%s3649 + $0xc] sm:$0xf]
  %v3654 = vld [vmem:[%s3649 + $0x10] sm:$0xf]
  %v3655 = vld [vmem:[%s3649 + $0x14] sm:$0xf]
  %v3656 = vld [vmem:[%s3649 + $0x18] sm:$0xf]
  %v3657 = vld [vmem:[%s3649 + $0x1c] sm:$0xf]
  %v3658 = vld [vmem:[%s3649 + $0x20] sm:$0xf]
  %v3659 = vld [vmem:[%s3649 + $0x24] sm:$0xf]
  %v3660 = vld [vmem:[%s3649 + $0x28] sm:$0xf]
  %v3661 = vld [vmem:[%s3649 + $0x2c] sm:$0xf]
  %v3662 = vld [vmem:[%s3649 + $0x30] sm:$0x1]
  %v3676 = vunpack.c.l.b16 %v3650
  %v3677 = vunpack.c.l.b16 %v3651
  %v3678 = vunpack.c.l.b16 %v3652
  %v3679 = vunpack.c.l.b16 %v3653
  %v3680 = vunpack.c.l.b16 %v3654
  %v3681 = vunpack.c.l.b16 %v3655
  %v3682 = vunpack.c.l.b16 %v3656
  %v3683 = vunpack.c.l.b16 %v3657
  %v3684 = vunpack.c.l.b16 %v3658
  %v3685 = vunpack.c.l.b16 %v3659
  %v3686 = vunpack.c.l.b16 %v3660
  %v3687 = vunpack.c.l.b16 %v3661
  %v3688 = vunpack.c.l.b16 %v3662
  %v3689 = vpack.c.b16 %v3677, %v3676
  %v3690 = vpack.c.b16 %v3679, %v3678
  %v3691 = vpack.c.b16 %v3681, %v3680
  %v3692 = vpack.c.b16 %v3683, %v3682
  %v3693 = vpack.c.b16 %v3685, %v3684
  %v3694 = vpack.c.b16 %v3687, %v3686
  %v3695 = vpack.c.b16 %v3688, %v3688
  %v3703 = vsel %vm1805, %v3695, 0
  %3705 = vmatprep.subr.bf16.mxu0 0
  %3706 = vmatpush1.bf16.msra.mxu0 0
  %3707 = vmatprep.subr.bf16.mxu0 0
  %3708 = vmatpush1.bf16.msra.mxu0 %v3703
  %3709 = vmatprep.subr.bf16.mxu0 0
  %3710 = vmatpush1.bf16.msra.mxu0 %v3694
  %3711 = vmatprep.subr.bf16.mxu0 0
  %3712 = vmatpush1.bf16.msra.mxu0 %v3693
  %3713 = vmatprep.subr.bf16.mxu0 0
  %3714 = vmatpush1.bf16.msra.mxu0 %v3692
  %3715 = vmatprep.subr.bf16.mxu0 0
  %3716 = vmatpush1.bf16.msra.mxu0 %v3691
  %3717 = vmatprep.subr.bf16.mxu0 0
  %3718 = vmatpush1.bf16.msra.mxu0 %v3690
  %3719 = vmatprep.subr.bf16.mxu0 0
  %3720 = vmatpush1.bf16.msra.mxu0 %v3689
  %3721 = vmatprep.subr.bf16.mxu0 0
  %3722 = vmatpush2.bf16.msra.mxu0 0
  %3723 = vmatprep.subr.bf16.mxu0 0
  %3724 = vmatpush2.bf16.msra.mxu0 0
  %3725 = vmatprep.subr.bf16.mxu0 0
  %3726 = vmatpush2.bf16.msra.mxu0 0
  %3727 = vmatprep.subr.bf16.mxu0 0
  %3728 = vmatpush2.bf16.msra.mxu0 0
  %3729 = vmatprep.subr.bf16.mxu0 0
  %3730 = vmatpush2.bf16.msra.mxu0 0
  %3731 = vmatprep.subr.bf16.mxu0 0
  %3732 = vmatpush2.bf16.msra.mxu0 0
  %3733 = vmatprep.subr.bf16.mxu0 0
  %3734 = vmatpush2.bf16.msra.mxu0 0
  %3735 = vmatprep.subr.bf16.mxu0 0
  %3736 = vmatpush2.bf16.msra.mxu0 0
  %3737 = vmatprep.mubr.bf16.mxu0 0
  %3738 = vmatmul.mubr.bf16.gmra.mxu0 %v1794
  %v3739 = vpop.f32.mrf.mxu0
  %v3740 = vadd.f32 0.0, %v3739
  %v3741 = vpop.f32.mrf.mxu0
  %v3742 = vpop.f32.mrf.mxu0
  %v3743 = vadd.f32 0.0, %v3742
  %v3744 = vpop.f32.mrf.mxu0
  %3745 = vmatprep.mubr.bf16.mxu0 0
  %3746 = vmatmul.mubr.bf16.gmra.mxu0 %v1797
  %v3747 = vpop.f32.mrf.mxu0
  %v3748 = vadd.f32 0.0, %v3747
  %v3749 = vpop.f32.mrf.mxu0
  %v3750 = vpop.f32.mrf.mxu0
  %v3751 = vadd.f32 0.0, %v3750
  %v3752 = vpop.f32.mrf.mxu0
  %3753 = vmatprep.mubr.bf16.mxu0 0
  %3754 = vmatmul.mubr.bf16.gmra.mxu0 %v1800
  %v3755 = vpop.f32.mrf.mxu0
  %v3756 = vadd.f32 0.0, %v3755
  %v3757 = vpop.f32.mrf.mxu0
  %v3758 = vpop.f32.mrf.mxu0
  %v3759 = vadd.f32 0.0, %v3758
  %v3760 = vpop.f32.mrf.mxu0
  %3761 = vmatprep.mubr.bf16.mxu0 0
  %3762 = vmatmul.mubr.bf16.gmra.mxu0 %v1803
  %v3763 = vpop.f32.mrf.mxu0
  %v3764 = vadd.f32 0.0, %v3763
  %v3765 = vpop.f32.mrf.mxu0
  %v3766 = vpop.f32.mrf.mxu0
  %v3767 = vadd.f32 0.0, %v3766
  %v3768 = vpop.f32.mrf.mxu0
  %3769 = vdwg.mxu0
  %v3770 = vpack.c.bf16 %v3743, %v3740
  %v3771 = vpack.c.bf16 %v3751, %v3748
  %v3772 = vpack.c.bf16 %v3759, %v3756
  %v3773 = vpack.c.bf16 %v3767, %v3764
  %s3774 = scalar_lea.vmem %s5, 256
  %v3775 = vld [vmem:[%s3774] sm:$0xf]
  %v3776 = vld [vmem:[%s3774 + $0x4] sm:$0xf]
  %v3777 = vld [vmem:[%s3774 + $0x8] sm:$0xf]
  %v3778 = vld [vmem:[%s3774 + $0xc] sm:$0xf]
  %v3779 = vld [vmem:[%s3774 + $0x10] sm:$0xf]
  %v3780 = vld [vmem:[%s3774 + $0x14] sm:$0xf]
  %v3781 = vld [vmem:[%s3774 + $0x18] sm:$0xf]
  %v3782 = vld [vmem:[%s3774 + $0x1c] sm:$0xf]
  %v3791 = vunpack.c.l.b16 %v3775
  %v3792 = vunpack.c.l.b16 %v3776
  %v3793 = vunpack.c.l.b16 %v3777
  %v3794 = vunpack.c.l.b16 %v3778
  %v3795 = vunpack.c.l.b16 %v3779
  %v3796 = vunpack.c.l.b16 %v3780
  %v3797 = vunpack.c.l.b16 %v3781
  %v3798 = vunpack.c.l.b16 %v3782
  %v3799 = vpack.c.b16 %v3792, %v3791
  %v3800 = vpack.c.b16 %v3794, %v3793
  %v3801 = vpack.c.b16 %v3796, %v3795
  %v3802 = vpack.c.b16 %v3798, %v3797
  %v3804 = vsel %vm2040, %v3799, 0
  %v3807 = vsel %vm2040, %v3800, 0
  %v3810 = vsel %vm2040, %v3801, 0
  %v3813 = vsel %vm2040, %v3802, 0
  %3815 = vmatprep.subr.bf16.mxu0 0
  %3816 = vmatpush1.bf16.msra.mxu0 0
  %3817 = vmatprep.subr.bf16.mxu0 0
  %3818 = vmatpush1.bf16.msra.mxu0 0
  %3819 = vmatprep.subr.bf16.mxu0 0
  %3820 = vmatpush1.bf16.msra.mxu0 0
  %3821 = vmatprep.subr.bf16.mxu0 0
  %3822 = vmatpush1.bf16.msra.mxu0 0
  %3823 = vmatprep.subr.bf16.mxu0 0
  %3824 = vmatpush1.bf16.msra.mxu0 %v3773
  %3825 = vmatprep.subr.bf16.mxu0 0
  %3826 = vmatpush1.bf16.msra.mxu0 %v3772
  %3827 = vmatprep.subr.bf16.mxu0 0
  %3828 = vmatpush1.bf16.msra.mxu0 %v3771
  %3829 = vmatprep.subr.bf16.mxu0 0
  %3830 = vmatpush1.bf16.msra.mxu0 %v3770
  %3831 = vmatprep.subr.bf16.mxu0 0
  %3832 = vmatpush2.bf16.msra.mxu0 0
  %3833 = vmatprep.subr.bf16.mxu0 0
  %3834 = vmatpush2.bf16.msra.mxu0 0
  %3835 = vmatprep.subr.bf16.mxu0 0
  %3836 = vmatpush2.bf16.msra.mxu0 0
  %3837 = vmatprep.subr.bf16.mxu0 0
  %3838 = vmatpush2.bf16.msra.mxu0 0
  %3839 = vmatprep.subr.bf16.mxu0 0
  %3840 = vmatpush2.bf16.msra.mxu0 0
  %3841 = vmatprep.subr.bf16.mxu0 0
  %3842 = vmatpush2.bf16.msra.mxu0 0
  %3843 = vmatprep.subr.bf16.mxu0 0
  %3844 = vmatpush2.bf16.msra.mxu0 0
  %3845 = vmatprep.subr.bf16.mxu0 0
  %3846 = vmatpush2.bf16.msra.mxu0 0
  %3847 = vmatprep.mubr.bf16.mxu0 0
  %3848 = vmatmul.mubr.bf16.gmra.mxu0 %v3804
  %v3849 = vpop.f32.mrf.mxu0
  %v3850 = vadd.f32 0.0, %v3849
  %v3851 = vpop.f32.mrf.mxu0
  %v3852 = vpop.f32.mrf.mxu0
  %v3853 = vadd.f32 0.0, %v3852
  %v3854 = vpop.f32.mrf.mxu0
  %3855 = vmatprep.mubr.bf16.mxu0 0
  %3856 = vmatmul.mubr.bf16.gmra.mxu0 %v3807
  %v3857 = vpop.f32.mrf.mxu0
  %v3858 = vadd.f32 0.0, %v3857
  %v3859 = vpop.f32.mrf.mxu0
  %v3860 = vpop.f32.mrf.mxu0
  %v3861 = vadd.f32 0.0, %v3860
  %v3862 = vpop.f32.mrf.mxu0
  %3863 = vmatprep.mubr.bf16.mxu0 0
  %3864 = vmatmul.mubr.bf16.gmra.mxu0 %v3810
  %v3865 = vpop.f32.mrf.mxu0
  %v3866 = vadd.f32 0.0, %v3865
  %v3867 = vpop.f32.mrf.mxu0
  %v3868 = vpop.f32.mrf.mxu0
  %v3869 = vadd.f32 0.0, %v3868
  %v3870 = vpop.f32.mrf.mxu0
  %3871 = vmatprep.mubr.bf16.mxu0 0
  %3872 = vmatmul.mubr.bf16.gmra.mxu0 %v3813
  %v3873 = vpop.f32.mrf.mxu0
  %v3874 = vadd.f32 0.0, %v3873
  %v3875 = vpop.f32.mrf.mxu0
  %v3876 = vpop.f32.mrf.mxu0
  %v3877 = vadd.f32 0.0, %v3876
  %v3878 = vpop.f32.mrf.mxu0
  %3879 = vdwg.mxu0
  %v3880 = vadd.f32 %v3641, %v3850
  %v3881 = vadd.f32 %v3642, %v3853
  %v3882 = vadd.f32 %v3643, %v3858
  %v3883 = vadd.f32 %v3644, %v3861
  %v3884 = vadd.f32 %v3645, %v3866
  %v3885 = vadd.f32 %v3646, %v3869
  %v3886 = vadd.f32 %v3647, %v3874
  %v3887 = vadd.f32 %v3648, %v3877
  %v3888 = vld [vmem:[%s6] sm:$0xff]
  %v3889 = vld [vmem:[%s6 + $0x8] sm:$0xff]
  %v3890 = vld [vmem:[%s6 + $0x10] sm:$0xff]
  %v3891 = vld [vmem:[%s6 + $0x18] sm:$0xff]
  %v3892 = vld [vmem:[%s6 + $0x20] sm:$0xff]
  %v3893 = vld [vmem:[%s6 + $0x28] sm:$0xff]
  %v3894 = vld [vmem:[%s6 + $0x30] sm:$0xff]
  %v3895 = vld [vmem:[%s6 + $0x38] sm:$0xff]
  %3897 = vset.pattern.permute.xlu0 0
  %3898 = vperm.xlu0 %3897, %v3888
  %v3899 = vpop.permute.xlu0 %3898
  %3902 = vset.pattern.permute.xlu0 0
  %3903 = vperm.xlu0 %3902, %v3889
  %v3904 = vpop.permute.xlu0 %3903
  %3907 = vset.pattern.permute.xlu0 0
  %3908 = vperm.xlu0 %3907, %v3890
  %v3909 = vpop.permute.xlu0 %3908
  %3912 = vset.pattern.permute.xlu0 0
  %3913 = vperm.xlu0 %3912, %v3891
  %v3914 = vpop.permute.xlu0 %3913
  %3917 = vset.pattern.permute.xlu0 0
  %3918 = vperm.xlu0 %3917, %v3892
  %v3919 = vpop.permute.xlu0 %3918
  %3922 = vset.pattern.permute.xlu0 0
  %3923 = vperm.xlu0 %3922, %v3893
  %v3924 = vpop.permute.xlu0 %3923
  %3927 = vset.pattern.permute.xlu0 0
  %3928 = vperm.xlu0 %3927, %v3894
  %v3929 = vpop.permute.xlu0 %3928
  %3932 = vset.pattern.permute.xlu0 0
  %3933 = vperm.xlu0 %3932, %v3895
  %v3934 = vpop.permute.xlu0 %3933
  %v3936 = vadd.f32 %v3880, %v3899
  %v3937 = vadd.f32 %v3881, %v3904
  %v3938 = vadd.f32 %v3882, %v3909
  %v3939 = vadd.f32 %v3883, %v3914
  %v3940 = vadd.f32 %v3884, %v3919
  %v3941 = vadd.f32 %v3885, %v3924
  %v3942 = vadd.f32 %v3886, %v3929
  %v3943 = vadd.f32 %v3887, %v3934
  %v3944 = vmax.f32 %v3936, 0.0
  %v3945 = vmax.f32 %v3937, 0.0
  %v3946 = vmax.f32 %v3938, 0.0
  %v3947 = vmax.f32 %v3939, 0.0
  %v3948 = vmax.f32 %v3940, 0.0
  %v3949 = vmax.f32 %v3941, 0.0
  %v3950 = vmax.f32 %v3942, 0.0
  %v3951 = vmax.f32 %v3943, 0.0
  %v3952 = vpack.c.bf16 %v3945, %v3944
  %v3953 = vpack.c.bf16 %v3947, %v3946
  %v3954 = vpack.c.bf16 %v3949, %v3948
  %v3955 = vpack.c.bf16 %v3951, %v3950
  %v3956 = vld [vmem:[%s7] sm:$0xf]
  %v3957 = vld [vmem:[%s7 + $0x4] sm:$0xf]
  %v3958 = vld [vmem:[%s7 + $0x8] sm:$0xf]
  %v3959 = vld [vmem:[%s7 + $0xc] sm:$0xf]
  %v3960 = vld [vmem:[%s7 + $0x10] sm:$0xf]
  %v3961 = vld [vmem:[%s7 + $0x14] sm:$0xf]
  %v3962 = vld [vmem:[%s7 + $0x18] sm:$0x1]
  %v3970 = vunpack.c.l.b16 %v3956
  %v3971 = vunpack.c.l.b16 %v3957
  %v3972 = vunpack.c.l.b16 %v3958
  %v3973 = vunpack.c.l.b16 %v3959
  %v3974 = vunpack.c.l.b16 %v3960
  %v3975 = vunpack.c.l.b16 %v3961
  %v3976 = vunpack.c.l.b16 %v3962
  %v3977 = vpack.c.b16 %v3971, %v3970
  %v3978 = vpack.c.b16 %v3973, %v3972
  %v3979 = vpack.c.b16 %v3975, %v3974
  %v3980 = vpack.c.b16 %v3976, %v3976
  %vm3984 = vcmask 408576
  %v3986 = vsel %vm3984, %v3952, 0
  %v3989 = vsel %vm3984, %v3953, 0
  %v3992 = vsel %vm3984, %v3954, 0
  %v3995 = vsel %vm3984, %v3955, 0
  %v3998 = vsel %vm1805, %v3980, 0
  %4000 = vmatprep.subr.bf16.mxu0 0
  %4001 = vmatpush1.bf16.msra.mxu0 0
  %4002 = vmatprep.subr.bf16.mxu0 0
  %4003 = vmatpush1.bf16.msra.mxu0 0
  %4004 = vmatprep.subr.bf16.mxu0 0
  %4005 = vmatpush1.bf16.msra.mxu0 0
  %4006 = vmatprep.subr.bf16.mxu0 0
  %4007 = vmatpush1.bf16.msra.mxu0 0
  %4008 = vmatprep.subr.bf16.mxu0 0
  %4009 = vmatpush1.bf16.msra.mxu0 %v3998
  %4010 = vmatprep.subr.bf16.mxu0 0
  %4011 = vmatpush1.bf16.msra.mxu0 %v3979
  %4012 = vmatprep.subr.bf16.mxu0 0
  %4013 = vmatpush1.bf16.msra.mxu0 %v3978
  %4014 = vmatprep.subr.bf16.mxu0 0
  %4015 = vmatpush1.bf16.msra.mxu0 %v3977
  %4016 = vmatprep.subr.bf16.mxu0 0
  %4017 = vmatpush2.bf16.msra.mxu0 0
  %4018 = vmatprep.subr.bf16.mxu0 0
  %4019 = vmatpush2.bf16.msra.mxu0 0
  %4020 = vmatprep.subr.bf16.mxu0 0
  %4021 = vmatpush2.bf16.msra.mxu0 0
  %4022 = vmatprep.subr.bf16.mxu0 0
  %4023 = vmatpush2.bf16.msra.mxu0 0
  %4024 = vmatprep.subr.bf16.mxu0 0
  %4025 = vmatpush2.bf16.msra.mxu0 0
  %4026 = vmatprep.subr.bf16.mxu0 0
  %4027 = vmatpush2.bf16.msra.mxu0 0
  %4028 = vmatprep.subr.bf16.mxu0 0
  %4029 = vmatpush2.bf16.msra.mxu0 0
  %4030 = vmatprep.subr.bf16.mxu0 0
  %4031 = vmatpush2.bf16.msra.mxu0 0
  %4032 = vmatprep.mubr.bf16.mxu0 0
  %4033 = vmatmul.mubr.bf16.gmra.mxu0 %v3986
  %v4034 = vpop.f32.mrf.mxu0
  %v4035 = vadd.f32 0.0, %v4034
  %v4036 = vpop.f32.mrf.mxu0
  %v4037 = vpop.f32.mrf.mxu0
  %v4038 = vadd.f32 0.0, %v4037
  %v4039 = vpop.f32.mrf.mxu0
  %4040 = vmatprep.mubr.bf16.mxu0 0
  %4041 = vmatmul.mubr.bf16.gmra.mxu0 %v3989
  %v4042 = vpop.f32.mrf.mxu0
  %v4043 = vadd.f32 0.0, %v4042
  %v4044 = vpop.f32.mrf.mxu0
  %v4045 = vpop.f32.mrf.mxu0
  %v4046 = vadd.f32 0.0, %v4045
  %v4047 = vpop.f32.mrf.mxu0
  %4048 = vmatprep.mubr.bf16.mxu0 0
  %4049 = vmatmul.mubr.bf16.gmra.mxu0 %v3992
  %v4050 = vpop.f32.mrf.mxu0
  %v4051 = vadd.f32 0.0, %v4050
  %v4052 = vpop.f32.mrf.mxu0
  %v4053 = vpop.f32.mrf.mxu0
  %v4054 = vadd.f32 0.0, %v4053
  %v4055 = vpop.f32.mrf.mxu0
  %4056 = vmatprep.mubr.bf16.mxu0 0
  %4057 = vmatmul.mubr.bf16.gmra.mxu0 %v3995
  %v4058 = vpop.f32.mrf.mxu0
  %v4059 = vadd.f32 0.0, %v4058
  %v4060 = vpop.f32.mrf.mxu0
  %v4061 = vpop.f32.mrf.mxu0
  %v4062 = vadd.f32 0.0, %v4061
  %v4063 = vpop.f32.mrf.mxu0
  %4064 = vdwg.mxu0
  %s4065 = scalar_lea.vmem %s7, 28
  %v4066 = vld [vmem:[%s4065] sm:$0xf]
  %v4067 = vld [vmem:[%s4065 + $0x4] sm:$0xf]
  %v4068 = vld [vmem:[%s4065 + $0x8] sm:$0xf]
  %v4069 = vld [vmem:[%s4065 + $0xc] sm:$0xf]
  %v4070 = vld [vmem:[%s4065 + $0x10] sm:$0xf]
  %v4071 = vld [vmem:[%s4065 + $0x14] sm:$0xf]
  %v4072 = vld [vmem:[%s4065 + $0x18] sm:$0x1]
  %v4080 = vunpack.c.l.b16 %v4066
  %v4081 = vunpack.c.l.b16 %v4067
  %v4082 = vunpack.c.l.b16 %v4068
  %v4083 = vunpack.c.l.b16 %v4069
  %v4084 = vunpack.c.l.b16 %v4070
  %v4085 = vunpack.c.l.b16 %v4071
  %v4086 = vunpack.c.l.b16 %v4072
  %v4087 = vpack.c.b16 %v4081, %v4080
  %v4088 = vpack.c.b16 %v4083, %v4082
  %v4089 = vpack.c.b16 %v4085, %v4084
  %v4090 = vpack.c.b16 %v4086, %v4086
  %v4095 = vsel %vm1805, %v4090, 0
  %4097 = vmatprep.subr.bf16.mxu0 0
  %4098 = vmatpush1.bf16.msra.mxu0 0
  %4099 = vmatprep.subr.bf16.mxu0 0
  %4100 = vmatpush1.bf16.msra.mxu0 0
  %4101 = vmatprep.subr.bf16.mxu0 0
  %4102 = vmatpush1.bf16.msra.mxu0 0
  %4103 = vmatprep.subr.bf16.mxu0 0
  %4104 = vmatpush1.bf16.msra.mxu0 0
  %4105 = vmatprep.subr.bf16.mxu0 0
  %4106 = vmatpush1.bf16.msra.mxu0 %v4095
  %4107 = vmatprep.subr.bf16.mxu0 0
  %4108 = vmatpush1.bf16.msra.mxu0 %v4089
  %4109 = vmatprep.subr.bf16.mxu0 0
  %4110 = vmatpush1.bf16.msra.mxu0 %v4088
  %4111 = vmatprep.subr.bf16.mxu0 0
  %4112 = vmatpush1.bf16.msra.mxu0 %v4087
  %4113 = vmatprep.subr.bf16.mxu0 0
  %4114 = vmatpush2.bf16.msra.mxu0 0
  %4115 = vmatprep.subr.bf16.mxu0 0
  %4116 = vmatpush2.bf16.msra.mxu0 0
  %4117 = vmatprep.subr.bf16.mxu0 0
  %4118 = vmatpush2.bf16.msra.mxu0 0
  %4119 = vmatprep.subr.bf16.mxu0 0
  %4120 = vmatpush2.bf16.msra.mxu0 0
  %4121 = vmatprep.subr.bf16.mxu0 0
  %4122 = vmatpush2.bf16.msra.mxu0 0
  %4123 = vmatprep.subr.bf16.mxu0 0
  %4124 = vmatpush2.bf16.msra.mxu0 0
  %4125 = vmatprep.subr.bf16.mxu0 0
  %4126 = vmatpush2.bf16.msra.mxu0 0
  %4127 = vmatprep.subr.bf16.mxu0 0
  %4128 = vmatpush2.bf16.msra.mxu0 0
  %4129 = vmatprep.mubr.bf16.mxu0 0
  %4130 = vmatmul.mubr.bf16.gmra.mxu0 %v3986
  %v4131 = vpop.f32.mrf.mxu0
  %v4132 = vadd.f32 0.0, %v4131
  %v4133 = vpop.f32.mrf.mxu0
  %v4134 = vpop.f32.mrf.mxu0
  %v4135 = vadd.f32 0.0, %v4134
  %v4136 = vpop.f32.mrf.mxu0
  %4137 = vmatprep.mubr.bf16.mxu0 0
  %4138 = vmatmul.mubr.bf16.gmra.mxu0 %v3989
  %v4139 = vpop.f32.mrf.mxu0
  %v4140 = vadd.f32 0.0, %v4139
  %v4141 = vpop.f32.mrf.mxu0
  %v4142 = vpop.f32.mrf.mxu0
  %v4143 = vadd.f32 0.0, %v4142
  %v4144 = vpop.f32.mrf.mxu0
  %4145 = vmatprep.mubr.bf16.mxu0 0
  %4146 = vmatmul.mubr.bf16.gmra.mxu0 %v3992
  %v4147 = vpop.f32.mrf.mxu0
  %v4148 = vadd.f32 0.0, %v4147
  %v4149 = vpop.f32.mrf.mxu0
  %v4150 = vpop.f32.mrf.mxu0
  %v4151 = vadd.f32 0.0, %v4150
  %v4152 = vpop.f32.mrf.mxu0
  %4153 = vmatprep.mubr.bf16.mxu0 0
  %4154 = vmatmul.mubr.bf16.gmra.mxu0 %v3995
  %v4155 = vpop.f32.mrf.mxu0
  %v4156 = vadd.f32 0.0, %v4155
  %v4157 = vpop.f32.mrf.mxu0
  %v4158 = vpop.f32.mrf.mxu0
  %v4159 = vadd.f32 0.0, %v4158
  %v4160 = vpop.f32.mrf.mxu0
  %4161 = vdwg.mxu0
  %v4162 = vmax.f32 %v4035, %v4132
  %v4163 = vmax.f32 %v4038, %v4135
  %v4164 = vmax.f32 %v4043, %v4140
  %v4165 = vmax.f32 %v4046, %v4143
  %v4166 = vmax.f32 %v4051, %v4148
  %v4167 = vmax.f32 %v4054, %v4151
  %v4168 = vmax.f32 %v4059, %v4156
  %v4169 = vmax.f32 %v4062, %v4159
  %s4170 = scalar_lea.vmem %s7, 56
  %v4171 = vld [vmem:[%s4170] sm:$0xf]
  %v4172 = vld [vmem:[%s4170 + $0x4] sm:$0xf]
  %v4173 = vld [vmem:[%s4170 + $0x8] sm:$0xf]
  %v4174 = vld [vmem:[%s4170 + $0xc] sm:$0xf]
  %v4175 = vld [vmem:[%s4170 + $0x10] sm:$0xf]
  %v4176 = vld [vmem:[%s4170 + $0x14] sm:$0xf]
  %v4177 = vld [vmem:[%s4170 + $0x18] sm:$0x1]
  %v4185 = vunpack.c.l.b16 %v4171
  %v4186 = vunpack.c.l.b16 %v4172
  %v4187 = vunpack.c.l.b16 %v4173
  %v4188 = vunpack.c.l.b16 %v4174
  %v4189 = vunpack.c.l.b16 %v4175
  %v4190 = vunpack.c.l.b16 %v4176
  %v4191 = vunpack.c.l.b16 %v4177
  %v4192 = vpack.c.b16 %v4186, %v4185
  %v4193 = vpack.c.b16 %v4188, %v4187
  %v4194 = vpack.c.b16 %v4190, %v4189
  %v4195 = vpack.c.b16 %v4191, %v4191
  %v4200 = vsel %vm1805, %v4195, 0
  %4202 = vmatprep.subr.bf16.mxu0 0
  %4203 = vmatpush1.bf16.msra.mxu0 0
  %4204 = vmatprep.subr.bf16.mxu0 0
  %4205 = vmatpush1.bf16.msra.mxu0 0
  %4206 = vmatprep.subr.bf16.mxu0 0
  %4207 = vmatpush1.bf16.msra.mxu0 0
  %4208 = vmatprep.subr.bf16.mxu0 0
  %4209 = vmatpush1.bf16.msra.mxu0 0
  %4210 = vmatprep.subr.bf16.mxu0 0
  %4211 = vmatpush1.bf16.msra.mxu0 %v4200
  %4212 = vmatprep.subr.bf16.mxu0 0
  %4213 = vmatpush1.bf16.msra.mxu0 %v4194
  %4214 = vmatprep.subr.bf16.mxu0 0
  %4215 = vmatpush1.bf16.msra.mxu0 %v4193
  %4216 = vmatprep.subr.bf16.mxu0 0
  %4217 = vmatpush1.bf16.msra.mxu0 %v4192
  %4218 = vmatprep.subr.bf16.mxu0 0
  %4219 = vmatpush2.bf16.msra.mxu0 0
  %4220 = vmatprep.subr.bf16.mxu0 0
  %4221 = vmatpush2.bf16.msra.mxu0 0
  %4222 = vmatprep.subr.bf16.mxu0 0
  %4223 = vmatpush2.bf16.msra.mxu0 0
  %4224 = vmatprep.subr.bf16.mxu0 0
  %4225 = vmatpush2.bf16.msra.mxu0 0
  %4226 = vmatprep.subr.bf16.mxu0 0
  %4227 = vmatpush2.bf16.msra.mxu0 0
  %4228 = vmatprep.subr.bf16.mxu0 0
  %4229 = vmatpush2.bf16.msra.mxu0 0
  %4230 = vmatprep.subr.bf16.mxu0 0
  %4231 = vmatpush2.bf16.msra.mxu0 0
  %4232 = vmatprep.subr.bf16.mxu0 0
  %4233 = vmatpush2.bf16.msra.mxu0 0
  %4234 = vmatprep.mubr.bf16.mxu0 0
  %4235 = vmatmul.mubr.bf16.gmra.mxu0 %v3986
  %v4236 = vpop.f32.mrf.mxu0
  %v4237 = vadd.f32 0.0, %v4236
  %v4238 = vpop.f32.mrf.mxu0
  %v4239 = vpop.f32.mrf.mxu0
  %v4240 = vadd.f32 0.0, %v4239
  %v4241 = vpop.f32.mrf.mxu0
  %4242 = vmatprep.mubr.bf16.mxu0 0
  %4243 = vmatmul.mubr.bf16.gmra.mxu0 %v3989
  %v4244 = vpop.f32.mrf.mxu0
  %v4245 = vadd.f32 0.0, %v4244
  %v4246 = vpop.f32.mrf.mxu0
  %v4247 = vpop.f32.mrf.mxu0
  %v4248 = vadd.f32 0.0, %v4247
  %v4249 = vpop.f32.mrf.mxu0
  %4250 = vmatprep.mubr.bf16.mxu0 0
  %4251 = vmatmul.mubr.bf16.gmra.mxu0 %v3992
  %v4252 = vpop.f32.mrf.mxu0
  %v4253 = vadd.f32 0.0, %v4252
  %v4254 = vpop.f32.mrf.mxu0
  %v4255 = vpop.f32.mrf.mxu0
  %v4256 = vadd.f32 0.0, %v4255
  %v4257 = vpop.f32.mrf.mxu0
  %4258 = vmatprep.mubr.bf16.mxu0 0
  %4259 = vmatmul.mubr.bf16.gmra.mxu0 %v3995
  %v4260 = vpop.f32.mrf.mxu0
  %v4261 = vadd.f32 0.0, %v4260
  %v4262 = vpop.f32.mrf.mxu0
  %v4263 = vpop.f32.mrf.mxu0
  %v4264 = vadd.f32 0.0, %v4263
  %v4265 = vpop.f32.mrf.mxu0
  %4266 = vdwg.mxu0
  %v4267 = vmax.f32 %v4162, %v4237
  %v4268 = vmax.f32 %v4163, %v4240
  %v4269 = vmax.f32 %v4164, %v4245
  %v4270 = vmax.f32 %v4165, %v4248
  %v4271 = vmax.f32 %v4166, %v4253
  %v4272 = vmax.f32 %v4167, %v4256
  %v4273 = vmax.f32 %v4168, %v4261
  %v4274 = vmax.f32 %v4169, %v4264
  %s4275 = scalar_lea.vmem %s7, 84
  %v4276 = vld [vmem:[%s4275] sm:$0xf]
  %v4277 = vld [vmem:[%s4275 + $0x4] sm:$0xf]
  %v4278 = vld [vmem:[%s4275 + $0x8] sm:$0xf]
  %v4279 = vld [vmem:[%s4275 + $0xc] sm:$0xf]
  %v4280 = vld [vmem:[%s4275 + $0x10] sm:$0xf]
  %v4281 = vld [vmem:[%s4275 + $0x14] sm:$0xf]
  %v4282 = vld [vmem:[%s4275 + $0x18] sm:$0x1]
  %v4290 = vunpack.c.l.b16 %v4276
  %v4291 = vunpack.c.l.b16 %v4277
  %v4292 = vunpack.c.l.b16 %v4278
  %v4293 = vunpack.c.l.b16 %v4279
  %v4294 = vunpack.c.l.b16 %v4280
  %v4295 = vunpack.c.l.b16 %v4281
  %v4296 = vunpack.c.l.b16 %v4282
  %v4297 = vpack.c.b16 %v4291, %v4290
  %v4298 = vpack.c.b16 %v4293, %v4292
  %v4299 = vpack.c.b16 %v4295, %v4294
  %v4300 = vpack.c.b16 %v4296, %v4296
  %v4305 = vsel %vm1805, %v4300, 0
  %4307 = vmatprep.subr.bf16.mxu0 0
  %4308 = vmatpush1.bf16.msra.mxu0 0
  %4309 = vmatprep.subr.bf16.mxu0 0
  %4310 = vmatpush1.bf16.msra.mxu0 0
  %4311 = vmatprep.subr.bf16.mxu0 0
  %4312 = vmatpush1.bf16.msra.mxu0 0
  %4313 = vmatprep.subr.bf16.mxu0 0
  %4314 = vmatpush1.bf16.msra.mxu0 0
  %4315 = vmatprep.subr.bf16.mxu0 0
  %4316 = vmatpush1.bf16.msra.mxu0 %v4305
  %4317 = vmatprep.subr.bf16.mxu0 0
  %4318 = vmatpush1.bf16.msra.mxu0 %v4299
  %4319 = vmatprep.subr.bf16.mxu0 0
  %4320 = vmatpush1.bf16.msra.mxu0 %v4298
  %4321 = vmatprep.subr.bf16.mxu0 0
  %4322 = vmatpush1.bf16.msra.mxu0 %v4297
  %4323 = vmatprep.subr.bf16.mxu0 0
  %4324 = vmatpush2.bf16.msra.mxu0 0
  %4325 = vmatprep.subr.bf16.mxu0 0
  %4326 = vmatpush2.bf16.msra.mxu0 0
  %4327 = vmatprep.subr.bf16.mxu0 0
  %4328 = vmatpush2.bf16.msra.mxu0 0
  %4329 = vmatprep.subr.bf16.mxu0 0
  %4330 = vmatpush2.bf16.msra.mxu0 0
  %4331 = vmatprep.subr.bf16.mxu0 0
  %4332 = vmatpush2.bf16.msra.mxu0 0
  %4333 = vmatprep.subr.bf16.mxu0 0
  %4334 = vmatpush2.bf16.msra.mxu0 0
  %4335 = vmatprep.subr.bf16.mxu0 0
  %4336 = vmatpush2.bf16.msra.mxu0 0
  %4337 = vmatprep.subr.bf16.mxu0 0
  %4338 = vmatpush2.bf16.msra.mxu0 0
  %4339 = vmatprep.mubr.bf16.mxu0 0
  %4340 = vmatmul.mubr.bf16.gmra.mxu0 %v3986
  %v4341 = vpop.f32.mrf.mxu0
  %v4342 = vadd.f32 0.0, %v4341
  %v4343 = vpop.f32.mrf.mxu0
  %v4344 = vpop.f32.mrf.mxu0
  %v4345 = vadd.f32 0.0, %v4344
  %v4346 = vpop.f32.mrf.mxu0
  %4347 = vmatprep.mubr.bf16.mxu0 0
  %4348 = vmatmul.mubr.bf16.gmra.mxu0 %v3989
  %v4349 = vpop.f32.mrf.mxu0
  %v4350 = vadd.f32 0.0, %v4349
  %v4351 = vpop.f32.mrf.mxu0
  %v4352 = vpop.f32.mrf.mxu0
  %v4353 = vadd.f32 0.0, %v4352
  %v4354 = vpop.f32.mrf.mxu0
  %4355 = vmatprep.mubr.bf16.mxu0 0
  %4356 = vmatmul.mubr.bf16.gmra.mxu0 %v3992
  %v4357 = vpop.f32.mrf.mxu0
  %v4358 = vadd.f32 0.0, %v4357
  %v4359 = vpop.f32.mrf.mxu0
  %v4360 = vpop.f32.mrf.mxu0
  %v4361 = vadd.f32 0.0, %v4360
  %v4362 = vpop.f32.mrf.mxu0
  %4363 = vmatprep.mubr.bf16.mxu0 0
  %4364 = vmatmul.mubr.bf16.gmra.mxu0 %v3995
  %v4365 = vpop.f32.mrf.mxu0
  %v4366 = vadd.f32 0.0, %v4365
  %v4367 = vpop.f32.mrf.mxu0
  %v4368 = vpop.f32.mrf.mxu0
  %v4369 = vadd.f32 0.0, %v4368
  %v4370 = vpop.f32.mrf.mxu0
  %4371 = vdwg.mxu0
  %v4372 = vmax.f32 %v4267, %v4342
  %v4373 = vmax.f32 %v4268, %v4345
  %v4374 = vmax.f32 %v4269, %v4350
  %v4375 = vmax.f32 %v4270, %v4353
  %v4376 = vmax.f32 %v4271, %v4358
  %v4377 = vmax.f32 %v4272, %v4361
  %v4378 = vmax.f32 %v4273, %v4366
  %v4379 = vmax.f32 %v4274, %v4369
  %v4380 = vpack.c.bf16 %v4373, %v4372
  %v4381 = vpack.c.bf16 %v4375, %v4374
  %v4382 = vpack.c.bf16 %v4377, %v4376
  %v4383 = vpack.c.bf16 %v4379, %v4378
  %v4384 = vld [vmem:[%s8] sm:$0xf]
  %v4386 = vsel %vm575, %v4380, 0
  %v4389 = vsel %vm575, %v4381, 0
  %v4392 = vsel %vm575, %v4382, 0
  %v4395 = vsel %vm575, %v4383, 0
  %v4398 = vsel %vm588, %v4384, 0
  %4400 = vmatprep.subr.bf16.mxu0 0
  %4401 = vmatpush1.bf16.msra.mxu0 0
  %4402 = vmatprep.subr.bf16.mxu0 0
  %4403 = vmatpush1.bf16.msra.mxu0 0
  %4404 = vmatprep.subr.bf16.mxu0 0
  %4405 = vmatpush1.bf16.msra.mxu0 0
  %4406 = vmatprep.subr.bf16.mxu0 0
  %4407 = vmatpush1.bf16.msra.mxu0 0
  %4408 = vmatprep.subr.bf16.mxu0 0
  %4409 = vmatpush1.bf16.msra.mxu0 0
  %4410 = vmatprep.subr.bf16.mxu0 0
  %4411 = vmatpush1.bf16.msra.mxu0 0
  %4412 = vmatprep.subr.bf16.mxu0 0
  %4413 = vmatpush1.bf16.msra.mxu0 0
  %4414 = vmatprep.subr.bf16.mxu0 0
  %4415 = vmatpush1.bf16.msra.mxu0 %v4398
  %4416 = vmatprep.subr.bf16.mxu0 0
  %4417 = vmatpush2.bf16.msra.mxu0 0
  %4418 = vmatprep.subr.bf16.mxu0 0
  %4419 = vmatpush2.bf16.msra.mxu0 0
  %4420 = vmatprep.subr.bf16.mxu0 0
  %4421 = vmatpush2.bf16.msra.mxu0 0
  %4422 = vmatprep.subr.bf16.mxu0 0
  %4423 = vmatpush2.bf16.msra.mxu0 0
  %4424 = vmatprep.subr.bf16.mxu0 0
  %4425 = vmatpush2.bf16.msra.mxu0 0
  %4426 = vmatprep.subr.bf16.mxu0 0
  %4427 = vmatpush2.bf16.msra.mxu0 0
  %4428 = vmatprep.subr.bf16.mxu0 0
  %4429 = vmatpush2.bf16.msra.mxu0 0
  %4430 = vmatprep.subr.bf16.mxu0 0
  %4431 = vmatpush2.bf16.msra.mxu0 0
  %4432 = vmatprep.mubr.bf16.mxu0 0
  %4433 = vmatmul.mubr.bf16.gmra.mxu0 %v4386
  %v4434 = vpop.f32.mrf.mxu0
  %v4435 = vadd.f32 0.0, %v4434
  %v4436 = vpop.f32.mrf.mxu0
  %v4437 = vpop.f32.mrf.mxu0
  %v4438 = vadd.f32 0.0, %v4437
  %v4439 = vpop.f32.mrf.mxu0
  %4440 = vmatprep.mubr.bf16.mxu0 0
  %4441 = vmatmul.mubr.bf16.gmra.mxu0 %v4389
  %v4442 = vpop.f32.mrf.mxu0
  %v4443 = vadd.f32 0.0, %v4442
  %v4444 = vpop.f32.mrf.mxu0
  %v4445 = vpop.f32.mrf.mxu0
  %v4446 = vadd.f32 0.0, %v4445
  %v4447 = vpop.f32.mrf.mxu0
  %4448 = vmatprep.mubr.bf16.mxu0 0
  %4449 = vmatmul.mubr.bf16.gmra.mxu0 %v4392
  %v4450 = vpop.f32.mrf.mxu0
  %v4451 = vadd.f32 0.0, %v4450
  %v4452 = vpop.f32.mrf.mxu0
  %v4453 = vpop.f32.mrf.mxu0
  %v4454 = vadd.f32 0.0, %v4453
  %v4455 = vpop.f32.mrf.mxu0
  %4456 = vmatprep.mubr.bf16.mxu0 0
  %4457 = vmatmul.mubr.bf16.gmra.mxu0 %v4395
  %v4458 = vpop.f32.mrf.mxu0
  %v4459 = vadd.f32 0.0, %v4458
  %v4460 = vpop.f32.mrf.mxu0
  %v4461 = vpop.f32.mrf.mxu0
  %v4462 = vadd.f32 0.0, %v4461
  %v4463 = vpop.f32.mrf.mxu0
  %4464 = vdwg.mxu0
  %v4465 = vpack.c.bf16 %v4438, %v4435
  %v4466 = vpack.c.bf16 %v4446, %v4443
  %v4467 = vpack.c.bf16 %v4454, %v4451
  %v4468 = vpack.c.bf16 %v4462, %v4459
  %v4469 = vld [vmem:[%s9] sm:$0xf]
  %v4470 = vld [vmem:[%s9 + $0x4] sm:$0xf]
  %v4471 = vld [vmem:[%s9 + $0x8] sm:$0xf]
  %v4472 = vld [vmem:[%s9 + $0xc] sm:$0xf]
  %v4473 = vld [vmem:[%s9 + $0x10] sm:$0xf]
  %v4474 = vld [vmem:[%s9 + $0x14] sm:$0xf]
  %v4475 = vld [vmem:[%s9 + $0x18] sm:$0xf]
  %v4476 = vld [vmem:[%s9 + $0x1c] sm:$0xf]
  %s4477 = scalar_lea.vmem %s8, 4
  %v4478 = vld [vmem:[%s4477] sm:$0xf]
  %v4480 = vsel %vm588, %v4478, 0
  %4482 = vmatprep.subr.bf16.mxu0 0
  %4483 = vmatpush1.bf16.msra.mxu0 0
  %4484 = vmatprep.subr.bf16.mxu0 0
  %4485 = vmatpush1.bf16.msra.mxu0 0
  %4486 = vmatprep.subr.bf16.mxu0 0
  %4487 = vmatpush1.bf16.msra.mxu0 0
  %4488 = vmatprep.subr.bf16.mxu0 0
  %4489 = vmatpush1.bf16.msra.mxu0 0
  %4490 = vmatprep.subr.bf16.mxu0 0
  %4491 = vmatpush1.bf16.msra.mxu0 0
  %4492 = vmatprep.subr.bf16.mxu0 0
  %4493 = vmatpush1.bf16.msra.mxu0 0
  %4494 = vmatprep.subr.bf16.mxu0 0
  %4495 = vmatpush1.bf16.msra.mxu0 0
  %4496 = vmatprep.subr.bf16.mxu0 0
  %4497 = vmatpush1.bf16.msra.mxu0 %v4480
  %4498 = vmatprep.subr.bf16.mxu0 0
  %4499 = vmatpush2.bf16.msra.mxu0 0
  %4500 = vmatprep.subr.bf16.mxu0 0
  %4501 = vmatpush2.bf16.msra.mxu0 0
  %4502 = vmatprep.subr.bf16.mxu0 0
  %4503 = vmatpush2.bf16.msra.mxu0 0
  %4504 = vmatprep.subr.bf16.mxu0 0
  %4505 = vmatpush2.bf16.msra.mxu0 0
  %4506 = vmatprep.subr.bf16.mxu0 0
  %4507 = vmatpush2.bf16.msra.mxu0 0
  %4508 = vmatprep.subr.bf16.mxu0 0
  %4509 = vmatpush2.bf16.msra.mxu0 0
  %4510 = vmatprep.subr.bf16.mxu0 0
  %4511 = vmatpush2.bf16.msra.mxu0 0
  %4512 = vmatprep.subr.bf16.mxu0 0
  %4513 = vmatpush2.bf16.msra.mxu0 0
  %4514 = vmatprep.mubr.bf16.mxu0 0
  %4515 = vmatmul.mubr.bf16.gmra.mxu0 %v4386
  %v4516 = vpop.f32.mrf.mxu0
  %v4517 = vadd.f32 0.0, %v4516
  %v4518 = vpop.f32.mrf.mxu0
  %v4519 = vpop.f32.mrf.mxu0
  %v4520 = vadd.f32 0.0, %v4519
  %v4521 = vpop.f32.mrf.mxu0
  %4522 = vmatprep.mubr.bf16.mxu0 0
  %4523 = vmatmul.mubr.bf16.gmra.mxu0 %v4389
  %v4524 = vpop.f32.mrf.mxu0
  %v4525 = vadd.f32 0.0, %v4524
  %v4526 = vpop.f32.mrf.mxu0
  %v4527 = vpop.f32.mrf.mxu0
  %v4528 = vadd.f32 0.0, %v4527
  %v4529 = vpop.f32.mrf.mxu0
  %4530 = vmatprep.mubr.bf16.mxu0 0
  %4531 = vmatmul.mubr.bf16.gmra.mxu0 %v4392
  %v4532 = vpop.f32.mrf.mxu0
  %v4533 = vadd.f32 0.0, %v4532
  %v4534 = vpop.f32.mrf.mxu0
  %v4535 = vpop.f32.mrf.mxu0
  %v4536 = vadd.f32 0.0, %v4535
  %v4537 = vpop.f32.mrf.mxu0
  %4538 = vmatprep.mubr.bf16.mxu0 0
  %4539 = vmatmul.mubr.bf16.gmra.mxu0 %v4395
  %v4540 = vpop.f32.mrf.mxu0
  %v4541 = vadd.f32 0.0, %v4540
  %v4542 = vpop.f32.mrf.mxu0
  %v4543 = vpop.f32.mrf.mxu0
  %v4544 = vadd.f32 0.0, %v4543
  %v4545 = vpop.f32.mrf.mxu0
  %4546 = vdwg.mxu0
  %v4547 = vpack.c.bf16 %v4520, %v4517
  %v4548 = vpack.c.bf16 %v4528, %v4525
  %v4549 = vpack.c.bf16 %v4536, %v4533
  %v4550 = vpack.c.bf16 %v4544, %v4541
  %s4551 = scalar_lea.vmem %s9, 32
  %v4552 = vld [vmem:[%s4551] sm:$0xf]
  %v4553 = vld [vmem:[%s4551 + $0x4] sm:$0xf]
  %v4554 = vld [vmem:[%s4551 + $0x8] sm:$0xf]
  %v4555 = vld [vmem:[%s4551 + $0xc] sm:$0xf]
  %v4556 = vld [vmem:[%s4551 + $0x10] sm:$0xf]
  %v4557 = vld [vmem:[%s4551 + $0x14] sm:$0xf]
  %v4558 = vld [vmem:[%s4551 + $0x18] sm:$0xf]
  %v4559 = vld [vmem:[%s4551 + $0x1c] sm:$0xf]
  %v4568 = vunpack.c.l.b16 %v4552
  %v4569 = vunpack.c.l.b16 %v4553
  %v4570 = vunpack.c.l.b16 %v4554
  %v4571 = vunpack.c.l.b16 %v4555
  %v4572 = vunpack.c.l.b16 %v4556
  %v4573 = vunpack.c.l.b16 %v4557
  %v4574 = vunpack.c.l.b16 %v4558
  %v4575 = vunpack.c.l.b16 %v4559
  %v4576 = vpack.c.b16 %v4569, %v4568
  %v4577 = vpack.c.b16 %v4571, %v4570
  %v4578 = vpack.c.b16 %v4573, %v4572
  %v4579 = vpack.c.b16 %v4575, %v4574
  %v4581 = vsel %vm2040, %v4576, 0
  %v4584 = vsel %vm2040, %v4577, 0
  %v4587 = vsel %vm2040, %v4578, 0
  %v4590 = vsel %vm2040, %v4579, 0
  %4592 = vmatprep.subr.bf16.mxu0 0
  %4593 = vmatpush1.bf16.msra.mxu0 0
  %4594 = vmatprep.subr.bf16.mxu0 0
  %4595 = vmatpush1.bf16.msra.mxu0 0
  %4596 = vmatprep.subr.bf16.mxu0 0
  %4597 = vmatpush1.bf16.msra.mxu0 0
  %4598 = vmatprep.subr.bf16.mxu0 0
  %4599 = vmatpush1.bf16.msra.mxu0 0
  %4600 = vmatprep.subr.bf16.mxu0 0
  %4601 = vmatpush1.bf16.msra.mxu0 %v4550
  %4602 = vmatprep.subr.bf16.mxu0 0
  %4603 = vmatpush1.bf16.msra.mxu0 %v4549
  %4604 = vmatprep.subr.bf16.mxu0 0
  %4605 = vmatpush1.bf16.msra.mxu0 %v4548
  %4606 = vmatprep.subr.bf16.mxu0 0
  %4607 = vmatpush1.bf16.msra.mxu0 %v4547
  %4608 = vmatprep.subr.bf16.mxu0 0
  %4609 = vmatpush2.bf16.msra.mxu0 0
  %4610 = vmatprep.subr.bf16.mxu0 0
  %4611 = vmatpush2.bf16.msra.mxu0 0
  %4612 = vmatprep.subr.bf16.mxu0 0
  %4613 = vmatpush2.bf16.msra.mxu0 0
  %4614 = vmatprep.subr.bf16.mxu0 0
  %4615 = vmatpush2.bf16.msra.mxu0 0
  %4616 = vmatprep.subr.bf16.mxu0 0
  %4617 = vmatpush2.bf16.msra.mxu0 0
  %4618 = vmatprep.subr.bf16.mxu0 0
  %4619 = vmatpush2.bf16.msra.mxu0 0
  %4620 = vmatprep.subr.bf16.mxu0 0
  %4621 = vmatpush2.bf16.msra.mxu0 0
  %4622 = vmatprep.subr.bf16.mxu0 0
  %4623 = vmatpush2.bf16.msra.mxu0 0
  %4624 = vmatprep.mubr.bf16.mxu0 0
  %4625 = vmatmul.mubr.bf16.gmra.mxu0 %v4581
  %v4626 = vpop.f32.mrf.mxu0
  %v4627 = vadd.f32 0.0, %v4626
  %v4628 = vpop.f32.mrf.mxu0
  %v4629 = vpop.f32.mrf.mxu0
  %v4630 = vadd.f32 0.0, %v4629
  %v4631 = vpop.f32.mrf.mxu0
  %4632 = vmatprep.mubr.bf16.mxu0 0
  %4633 = vmatmul.mubr.bf16.gmra.mxu0 %v4584
  %v4634 = vpop.f32.mrf.mxu0
  %v4635 = vadd.f32 0.0, %v4634
  %v4636 = vpop.f32.mrf.mxu0
  %v4637 = vpop.f32.mrf.mxu0
  %v4638 = vadd.f32 0.0, %v4637
  %v4639 = vpop.f32.mrf.mxu0
  %4640 = vmatprep.mubr.bf16.mxu0 0
  %4641 = vmatmul.mubr.bf16.gmra.mxu0 %v4587
  %v4642 = vpop.f32.mrf.mxu0
  %v4643 = vadd.f32 0.0, %v4642
  %v4644 = vpop.f32.mrf.mxu0
  %v4645 = vpop.f32.mrf.mxu0
  %v4646 = vadd.f32 0.0, %v4645
  %v4647 = vpop.f32.mrf.mxu0
  %4648 = vmatprep.mubr.bf16.mxu0 0
  %4649 = vmatmul.mubr.bf16.gmra.mxu0 %v4590
  %v4650 = vpop.f32.mrf.mxu0
  %v4651 = vadd.f32 0.0, %v4650
  %v4652 = vpop.f32.mrf.mxu0
  %v4653 = vpop.f32.mrf.mxu0
  %v4654 = vadd.f32 0.0, %v4653
  %v4655 = vpop.f32.mrf.mxu0
  %4656 = vdwg.mxu0
  %v4665 = vunpack.c.l.b16 %v4469
  %v4666 = vunpack.c.l.b16 %v4470
  %v4667 = vunpack.c.l.b16 %v4471
  %v4668 = vunpack.c.l.b16 %v4472
  %v4669 = vunpack.c.l.b16 %v4473
  %v4670 = vunpack.c.l.b16 %v4474
  %v4671 = vunpack.c.l.b16 %v4475
  %v4672 = vunpack.c.l.b16 %v4476
  %v4673 = vpack.c.b16 %v4666, %v4665
  %v4674 = vpack.c.b16 %v4668, %v4667
  %v4675 = vpack.c.b16 %v4670, %v4669
  %v4676 = vpack.c.b16 %v4672, %v4671
  %v4678 = vsel %vm2040, %v4673, 0
  %v4681 = vsel %vm2040, %v4674, 0
  %v4684 = vsel %vm2040, %v4675, 0
  %v4687 = vsel %vm2040, %v4676, 0
  %4689 = vmatprep.subr.bf16.mxu0 0
  %4690 = vmatpush1.bf16.msra.mxu0 0
  %4691 = vmatprep.subr.bf16.mxu0 0
  %4692 = vmatpush1.bf16.msra.mxu0 0
  %4693 = vmatprep.subr.bf16.mxu0 0
  %4694 = vmatpush1.bf16.msra.mxu0 0
  %4695 = vmatprep.subr.bf16.mxu0 0
  %4696 = vmatpush1.bf16.msra.mxu0 0
  %4697 = vmatprep.subr.bf16.mxu0 0
  %4698 = vmatpush1.bf16.msra.mxu0 %v4468
  %4699 = vmatprep.subr.bf16.mxu0 0
  %4700 = vmatpush1.bf16.msra.mxu0 %v4467
  %4701 = vmatprep.subr.bf16.mxu0 0
  %4702 = vmatpush1.bf16.msra.mxu0 %v4466
  %4703 = vmatprep.subr.bf16.mxu0 0
  %4704 = vmatpush1.bf16.msra.mxu0 %v4465
  %4705 = vmatprep.subr.bf16.mxu0 0
  %4706 = vmatpush2.bf16.msra.mxu0 0
  %4707 = vmatprep.subr.bf16.mxu0 0
  %4708 = vmatpush2.bf16.msra.mxu0 0
  %4709 = vmatprep.subr.bf16.mxu0 0
  %4710 = vmatpush2.bf16.msra.mxu0 0
  %4711 = vmatprep.subr.bf16.mxu0 0
  %4712 = vmatpush2.bf16.msra.mxu0 0
  %4713 = vmatprep.subr.bf16.mxu0 0
  %4714 = vmatpush2.bf16.msra.mxu0 0
  %4715 = vmatprep.subr.bf16.mxu0 0
  %4716 = vmatpush2.bf16.msra.mxu0 0
  %4717 = vmatprep.subr.bf16.mxu0 0
  %4718 = vmatpush2.bf16.msra.mxu0 0
  %4719 = vmatprep.subr.bf16.mxu0 0
  %4720 = vmatpush2.bf16.msra.mxu0 0
  %4721 = vmatprep.mubr.bf16.mxu0 0
  %4722 = vmatmul.mubr.bf16.gmra.mxu0 %v4678
  %v4723 = vpop.f32.mrf.mxu0
  %v4724 = vadd.f32 %v4627, %v4723
  %v4725 = vpop.f32.mrf.mxu0
  %v4726 = vpop.f32.mrf.mxu0
  %v4727 = vadd.f32 %v4630, %v4726
  %v4728 = vpop.f32.mrf.mxu0
  %4729 = vmatprep.mubr.bf16.mxu0 0
  %4730 = vmatmul.mubr.bf16.gmra.mxu0 %v4681
  %v4731 = vpop.f32.mrf.mxu0
  %v4732 = vadd.f32 %v4635, %v4731
  %v4733 = vpop.f32.mrf.mxu0
  %v4734 = vpop.f32.mrf.mxu0
  %v4735 = vadd.f32 %v4638, %v4734
  %v4736 = vpop.f32.mrf.mxu0
  %4737 = vmatprep.mubr.bf16.mxu0 0
  %4738 = vmatmul.mubr.bf16.gmra.mxu0 %v4684
  %v4739 = vpop.f32.mrf.mxu0
  %v4740 = vadd.f32 %v4643, %v4739
  %v4741 = vpop.f32.mrf.mxu0
  %v4742 = vpop.f32.mrf.mxu0
  %v4743 = vadd.f32 %v4646, %v4742
  %v4744 = vpop.f32.mrf.mxu0
  %4745 = vmatprep.mubr.bf16.mxu0 0
  %4746 = vmatmul.mubr.bf16.gmra.mxu0 %v4687
  %v4747 = vpop.f32.mrf.mxu0
  %v4748 = vadd.f32 %v4651, %v4747
  %v4749 = vpop.f32.mrf.mxu0
  %v4750 = vpop.f32.mrf.mxu0
  %v4751 = vadd.f32 %v4654, %v4750
  %v4752 = vpop.f32.mrf.mxu0
  %4753 = vdwg.mxu0
  %s4754 = scalar_lea.vmem %s8, 8
  %v4755 = vld [vmem:[%s4754] sm:$0xf]
  %v4757 = vsel %vm588, %v4755, 0
  %4759 = vmatprep.subr.bf16.mxu0 0
  %4760 = vmatpush1.bf16.msra.mxu0 0
  %4761 = vmatprep.subr.bf16.mxu0 0
  %4762 = vmatpush1.bf16.msra.mxu0 0
  %4763 = vmatprep.subr.bf16.mxu0 0
  %4764 = vmatpush1.bf16.msra.mxu0 0
  %4765 = vmatprep.subr.bf16.mxu0 0
  %4766 = vmatpush1.bf16.msra.mxu0 0
  %4767 = vmatprep.subr.bf16.mxu0 0
  %4768 = vmatpush1.bf16.msra.mxu0 0
  %4769 = vmatprep.subr.bf16.mxu0 0
  %4770 = vmatpush1.bf16.msra.mxu0 0
  %4771 = vmatprep.subr.bf16.mxu0 0
  %4772 = vmatpush1.bf16.msra.mxu0 0
  %4773 = vmatprep.subr.bf16.mxu0 0
  %4774 = vmatpush1.bf16.msra.mxu0 %v4757
  %4775 = vmatprep.subr.bf16.mxu0 0
  %4776 = vmatpush2.bf16.msra.mxu0 0
  %4777 = vmatprep.subr.bf16.mxu0 0
  %4778 = vmatpush2.bf16.msra.mxu0 0
  %4779 = vmatprep.subr.bf16.mxu0 0
  %4780 = vmatpush2.bf16.msra.mxu0 0
  %4781 = vmatprep.subr.bf16.mxu0 0
  %4782 = vmatpush2.bf16.msra.mxu0 0
  %4783 = vmatprep.subr.bf16.mxu0 0
  %4784 = vmatpush2.bf16.msra.mxu0 0
  %4785 = vmatprep.subr.bf16.mxu0 0
  %4786 = vmatpush2.bf16.msra.mxu0 0
  %4787 = vmatprep.subr.bf16.mxu0 0
  %4788 = vmatpush2.bf16.msra.mxu0 0
  %4789 = vmatprep.subr.bf16.mxu0 0
  %4790 = vmatpush2.bf16.msra.mxu0 0
  %4791 = vmatprep.mubr.bf16.mxu0 0
  %4792 = vmatmul.mubr.bf16.gmra.mxu0 %v4386
  %v4793 = vpop.f32.mrf.mxu0
  %v4794 = vadd.f32 0.0, %v4793
  %v4795 = vpop.f32.mrf.mxu0
  %v4796 = vpop.f32.mrf.mxu0
  %v4797 = vadd.f32 0.0, %v4796
  %v4798 = vpop.f32.mrf.mxu0
  %4799 = vmatprep.mubr.bf16.mxu0 0
  %4800 = vmatmul.mubr.bf16.gmra.mxu0 %v4389
  %v4801 = vpop.f32.mrf.mxu0
  %v4802 = vadd.f32 0.0, %v4801
  %v4803 = vpop.f32.mrf.mxu0
  %v4804 = vpop.f32.mrf.mxu0
  %v4805 = vadd.f32 0.0, %v4804
  %v4806 = vpop.f32.mrf.mxu0
  %4807 = vmatprep.mubr.bf16.mxu0 0
  %4808 = vmatmul.mubr.bf16.gmra.mxu0 %v4392
  %v4809 = vpop.f32.mrf.mxu0
  %v4810 = vadd.f32 0.0, %v4809
  %v4811 = vpop.f32.mrf.mxu0
  %v4812 = vpop.f32.mrf.mxu0
  %v4813 = vadd.f32 0.0, %v4812
  %v4814 = vpop.f32.mrf.mxu0
  %4815 = vmatprep.mubr.bf16.mxu0 0
  %4816 = vmatmul.mubr.bf16.gmra.mxu0 %v4395
  %v4817 = vpop.f32.mrf.mxu0
  %v4818 = vadd.f32 0.0, %v4817
  %v4819 = vpop.f32.mrf.mxu0
  %v4820 = vpop.f32.mrf.mxu0
  %v4821 = vadd.f32 0.0, %v4820
  %v4822 = vpop.f32.mrf.mxu0
  %4823 = vdwg.mxu0
  %v4824 = vpack.c.bf16 %v4797, %v4794
  %v4825 = vpack.c.bf16 %v4805, %v4802
  %v4826 = vpack.c.bf16 %v4813, %v4810
  %v4827 = vpack.c.bf16 %v4821, %v4818
  %s4828 = scalar_lea.vmem %s9, 64
  %v4829 = vld [vmem:[%s4828] sm:$0xf]
  %v4830 = vld [vmem:[%s4828 + $0x4] sm:$0xf]
  %v4831 = vld [vmem:[%s4828 + $0x8] sm:$0xf]
  %v4832 = vld [vmem:[%s4828 + $0xc] sm:$0xf]
  %v4833 = vld [vmem:[%s4828 + $0x10] sm:$0xf]
  %v4834 = vld [vmem:[%s4828 + $0x14] sm:$0xf]
  %v4835 = vld [vmem:[%s4828 + $0x18] sm:$0xf]
  %v4836 = vld [vmem:[%s4828 + $0x1c] sm:$0xf]
  %v4845 = vunpack.c.l.b16 %v4829
  %v4846 = vunpack.c.l.b16 %v4830
  %v4847 = vunpack.c.l.b16 %v4831
  %v4848 = vunpack.c.l.b16 %v4832
  %v4849 = vunpack.c.l.b16 %v4833
  %v4850 = vunpack.c.l.b16 %v4834
  %v4851 = vunpack.c.l.b16 %v4835
  %v4852 = vunpack.c.l.b16 %v4836
  %v4853 = vpack.c.b16 %v4846, %v4845
  %v4854 = vpack.c.b16 %v4848, %v4847
  %v4855 = vpack.c.b16 %v4850, %v4849
  %v4856 = vpack.c.b16 %v4852, %v4851
  %v4858 = vsel %vm2040, %v4853, 0
  %v4861 = vsel %vm2040, %v4854, 0
  %v4864 = vsel %vm2040, %v4855, 0
  %v4867 = vsel %vm2040, %v4856, 0
  %4869 = vmatprep.subr.bf16.mxu0 0
  %4870 = vmatpush1.bf16.msra.mxu0 0
  %4871 = vmatprep.subr.bf16.mxu0 0
  %4872 = vmatpush1.bf16.msra.mxu0 0
  %4873 = vmatprep.subr.bf16.mxu0 0
  %4874 = vmatpush1.bf16.msra.mxu0 0
  %4875 = vmatprep.subr.bf16.mxu0 0
  %4876 = vmatpush1.bf16.msra.mxu0 0
  %4877 = vmatprep.subr.bf16.mxu0 0
  %4878 = vmatpush1.bf16.msra.mxu0 %v4827
  %4879 = vmatprep.subr.bf16.mxu0 0
  %4880 = vmatpush1.bf16.msra.mxu0 %v4826
  %4881 = vmatprep.subr.bf16.mxu0 0
  %4882 = vmatpush1.bf16.msra.mxu0 %v4825
  %4883 = vmatprep.subr.bf16.mxu0 0
  %4884 = vmatpush1.bf16.msra.mxu0 %v4824
  %4885 = vmatprep.subr.bf16.mxu0 0
  %4886 = vmatpush2.bf16.msra.mxu0 0
  %4887 = vmatprep.subr.bf16.mxu0 0
  %4888 = vmatpush2.bf16.msra.mxu0 0
  %4889 = vmatprep.subr.bf16.mxu0 0
  %4890 = vmatpush2.bf16.msra.mxu0 0
  %4891 = vmatprep.subr.bf16.mxu0 0
  %4892 = vmatpush2.bf16.msra.mxu0 0
  %4893 = vmatprep.subr.bf16.mxu0 0
  %4894 = vmatpush2.bf16.msra.mxu0 0
  %4895 = vmatprep.subr.bf16.mxu0 0
  %4896 = vmatpush2.bf16.msra.mxu0 0
  %4897 = vmatprep.subr.bf16.mxu0 0
  %4898 = vmatpush2.bf16.msra.mxu0 0
  %4899 = vmatprep.subr.bf16.mxu0 0
  %4900 = vmatpush2.bf16.msra.mxu0 0
  %4901 = vmatprep.mubr.bf16.mxu0 0
  %4902 = vmatmul.mubr.bf16.gmra.mxu0 %v4858
  %v4903 = vpop.f32.mrf.mxu0
  %v4904 = vadd.f32 0.0, %v4903
  %v4905 = vpop.f32.mrf.mxu0
  %v4906 = vpop.f32.mrf.mxu0
  %v4907 = vadd.f32 0.0, %v4906
  %v4908 = vpop.f32.mrf.mxu0
  %4909 = vmatprep.mubr.bf16.mxu0 0
  %4910 = vmatmul.mubr.bf16.gmra.mxu0 %v4861
  %v4911 = vpop.f32.mrf.mxu0
  %v4912 = vadd.f32 0.0, %v4911
  %v4913 = vpop.f32.mrf.mxu0
  %v4914 = vpop.f32.mrf.mxu0
  %v4915 = vadd.f32 0.0, %v4914
  %v4916 = vpop.f32.mrf.mxu0
  %4917 = vmatprep.mubr.bf16.mxu0 0
  %4918 = vmatmul.mubr.bf16.gmra.mxu0 %v4864
  %v4919 = vpop.f32.mrf.mxu0
  %v4920 = vadd.f32 0.0, %v4919
  %v4921 = vpop.f32.mrf.mxu0
  %v4922 = vpop.f32.mrf.mxu0
  %v4923 = vadd.f32 0.0, %v4922
  %v4924 = vpop.f32.mrf.mxu0
  %4925 = vmatprep.mubr.bf16.mxu0 0
  %4926 = vmatmul.mubr.bf16.gmra.mxu0 %v4867
  %v4927 = vpop.f32.mrf.mxu0
  %v4928 = vadd.f32 0.0, %v4927
  %v4929 = vpop.f32.mrf.mxu0
  %v4930 = vpop.f32.mrf.mxu0
  %v4931 = vadd.f32 0.0, %v4930
  %v4932 = vpop.f32.mrf.mxu0
  %4933 = vdwg.mxu0
  %v4934 = vadd.f32 %v4724, %v4904
  %v4935 = vadd.f32 %v4727, %v4907
  %v4936 = vadd.f32 %v4732, %v4912
  %v4937 = vadd.f32 %v4735, %v4915
  %v4938 = vadd.f32 %v4740, %v4920
  %v4939 = vadd.f32 %v4743, %v4923
  %v4940 = vadd.f32 %v4748, %v4928
  %v4941 = vadd.f32 %v4751, %v4931
  %s4942 = scalar_lea.vmem %s8, 12
  %v4943 = vld [vmem:[%s4942] sm:$0xf]
  %v4945 = vsel %vm588, %v4943, 0
  %4947 = vmatprep.subr.bf16.mxu0 0
  %4948 = vmatpush1.bf16.msra.mxu0 0
  %4949 = vmatprep.subr.bf16.mxu0 0
  %4950 = vmatpush1.bf16.msra.mxu0 0
  %4951 = vmatprep.subr.bf16.mxu0 0
  %4952 = vmatpush1.bf16.msra.mxu0 0
  %4953 = vmatprep.subr.bf16.mxu0 0
  %4954 = vmatpush1.bf16.msra.mxu0 0
  %4955 = vmatprep.subr.bf16.mxu0 0
  %4956 = vmatpush1.bf16.msra.mxu0 0
  %4957 = vmatprep.subr.bf16.mxu0 0
  %4958 = vmatpush1.bf16.msra.mxu0 0
  %4959 = vmatprep.subr.bf16.mxu0 0
  %4960 = vmatpush1.bf16.msra.mxu0 0
  %4961 = vmatprep.subr.bf16.mxu0 0
  %4962 = vmatpush1.bf16.msra.mxu0 %v4945
  %4963 = vmatprep.subr.bf16.mxu0 0
  %4964 = vmatpush2.bf16.msra.mxu0 0
  %4965 = vmatprep.subr.bf16.mxu0 0
  %4966 = vmatpush2.bf16.msra.mxu0 0
  %4967 = vmatprep.subr.bf16.mxu0 0
  %4968 = vmatpush2.bf16.msra.mxu0 0
  %4969 = vmatprep.subr.bf16.mxu0 0
  %4970 = vmatpush2.bf16.msra.mxu0 0
  %4971 = vmatprep.subr.bf16.mxu0 0
  %4972 = vmatpush2.bf16.msra.mxu0 0
  %4973 = vmatprep.subr.bf16.mxu0 0
  %4974 = vmatpush2.bf16.msra.mxu0 0
  %4975 = vmatprep.subr.bf16.mxu0 0
  %4976 = vmatpush2.bf16.msra.mxu0 0
  %4977 = vmatprep.subr.bf16.mxu0 0
  %4978 = vmatpush2.bf16.msra.mxu0 0
  %4979 = vmatprep.mubr.bf16.mxu0 0
  %4980 = vmatmul.mubr.bf16.gmra.mxu0 %v4386
  %v4981 = vpop.f32.mrf.mxu0
  %v4982 = vadd.f32 0.0, %v4981
  %v4983 = vpop.f32.mrf.mxu0
  %v4984 = vpop.f32.mrf.mxu0
  %v4985 = vadd.f32 0.0, %v4984
  %v4986 = vpop.f32.mrf.mxu0
  %4987 = vmatprep.mubr.bf16.mxu0 0
  %4988 = vmatmul.mubr.bf16.gmra.mxu0 %v4389
  %v4989 = vpop.f32.mrf.mxu0
  %v4990 = vadd.f32 0.0, %v4989
  %v4991 = vpop.f32.mrf.mxu0
  %v4992 = vpop.f32.mrf.mxu0
  %v4993 = vadd.f32 0.0, %v4992
  %v4994 = vpop.f32.mrf.mxu0
  %4995 = vmatprep.mubr.bf16.mxu0 0
  %4996 = vmatmul.mubr.bf16.gmra.mxu0 %v4392
  %v4997 = vpop.f32.mrf.mxu0
  %v4998 = vadd.f32 0.0, %v4997
  %v4999 = vpop.f32.mrf.mxu0
  %v5000 = vpop.f32.mrf.mxu0
  %v5001 = vadd.f32 0.0, %v5000
  %v5002 = vpop.f32.mrf.mxu0
  %5003 = vmatprep.mubr.bf16.mxu0 0
  %5004 = vmatmul.mubr.bf16.gmra.mxu0 %v4395
  %v5005 = vpop.f32.mrf.mxu0
  %v5006 = vadd.f32 0.0, %v5005
  %v5007 = vpop.f32.mrf.mxu0
  %v5008 = vpop.f32.mrf.mxu0
  %v5009 = vadd.f32 0.0, %v5008
  %v5010 = vpop.f32.mrf.mxu0
  %5011 = vdwg.mxu0
  %v5012 = vpack.c.bf16 %v4985, %v4982
  %v5013 = vpack.c.bf16 %v4993, %v4990
  %v5014 = vpack.c.bf16 %v5001, %v4998
  %v5015 = vpack.c.bf16 %v5009, %v5006
  %s5016 = scalar_lea.vmem %s9, 96
  %v5017 = vld [vmem:[%s5016] sm:$0xf]
  %v5018 = vld [vmem:[%s5016 + $0x4] sm:$0xf]
  %v5019 = vld [vmem:[%s5016 + $0x8] sm:$0xf]
  %v5020 = vld [vmem:[%s5016 + $0xc] sm:$0xf]
  %v5021 = vld [vmem:[%s5016 + $0x10] sm:$0xf]
  %v5022 = vld [vmem:[%s5016 + $0x14] sm:$0xf]
  %v5023 = vld [vmem:[%s5016 + $0x18] sm:$0xf]
  %v5024 = vld [vmem:[%s5016 + $0x1c] sm:$0xf]
  %v5033 = vunpack.c.l.b16 %v5017
  %v5034 = vunpack.c.l.b16 %v5018
  %v5035 = vunpack.c.l.b16 %v5019
  %v5036 = vunpack.c.l.b16 %v5020
  %v5037 = vunpack.c.l.b16 %v5021
  %v5038 = vunpack.c.l.b16 %v5022
  %v5039 = vunpack.c.l.b16 %v5023
  %v5040 = vunpack.c.l.b16 %v5024
  %v5041 = vpack.c.b16 %v5034, %v5033
  %v5042 = vpack.c.b16 %v5036, %v5035
  %v5043 = vpack.c.b16 %v5038, %v5037
  %v5044 = vpack.c.b16 %v5040, %v5039
  %v5046 = vsel %vm2040, %v5041, 0
  %v5049 = vsel %vm2040, %v5042, 0
  %v5052 = vsel %vm2040, %v5043, 0
  %v5055 = vsel %vm2040, %v5044, 0
  %5057 = vmatprep.subr.bf16.mxu0 0
  %5058 = vmatpush1.bf16.msra.mxu0 0
  %5059 = vmatprep.subr.bf16.mxu0 0
  %5060 = vmatpush1.bf16.msra.mxu0 0
  %5061 = vmatprep.subr.bf16.mxu0 0
  %5062 = vmatpush1.bf16.msra.mxu0 0
  %5063 = vmatprep.subr.bf16.mxu0 0
  %5064 = vmatpush1.bf16.msra.mxu0 0
  %5065 = vmatprep.subr.bf16.mxu0 0
  %5066 = vmatpush1.bf16.msra.mxu0 %v5015
  %5067 = vmatprep.subr.bf16.mxu0 0
  %5068 = vmatpush1.bf16.msra.mxu0 %v5014
  %5069 = vmatprep.subr.bf16.mxu0 0
  %5070 = vmatpush1.bf16.msra.mxu0 %v5013
  %5071 = vmatprep.subr.bf16.mxu0 0
  %5072 = vmatpush1.bf16.msra.mxu0 %v5012
  %5073 = vmatprep.subr.bf16.mxu0 0
  %5074 = vmatpush2.bf16.msra.mxu0 0
  %5075 = vmatprep.subr.bf16.mxu0 0
  %5076 = vmatpush2.bf16.msra.mxu0 0
  %5077 = vmatprep.subr.bf16.mxu0 0
  %5078 = vmatpush2.bf16.msra.mxu0 0
  %5079 = vmatprep.subr.bf16.mxu0 0
  %5080 = vmatpush2.bf16.msra.mxu0 0
  %5081 = vmatprep.subr.bf16.mxu0 0
  %5082 = vmatpush2.bf16.msra.mxu0 0
  %5083 = vmatprep.subr.bf16.mxu0 0
  %5084 = vmatpush2.bf16.msra.mxu0 0
  %5085 = vmatprep.subr.bf16.mxu0 0
  %5086 = vmatpush2.bf16.msra.mxu0 0
  %5087 = vmatprep.subr.bf16.mxu0 0
  %5088 = vmatpush2.bf16.msra.mxu0 0
  %5089 = vmatprep.mubr.bf16.mxu0 0
  %5090 = vmatmul.mubr.bf16.gmra.mxu0 %v5046
  %v5091 = vpop.f32.mrf.mxu0
  %v5092 = vadd.f32 0.0, %v5091
  %v5093 = vpop.f32.mrf.mxu0
  %v5094 = vpop.f32.mrf.mxu0
  %v5095 = vadd.f32 0.0, %v5094
  %v5096 = vpop.f32.mrf.mxu0
  %5097 = vmatprep.mubr.bf16.mxu0 0
  %5098 = vmatmul.mubr.bf16.gmra.mxu0 %v5049
  %v5099 = vpop.f32.mrf.mxu0
  %v5100 = vadd.f32 0.0, %v5099
  %v5101 = vpop.f32.mrf.mxu0
  %v5102 = vpop.f32.mrf.mxu0
  %v5103 = vadd.f32 0.0, %v5102
  %v5104 = vpop.f32.mrf.mxu0
  %5105 = vmatprep.mubr.bf16.mxu0 0
  %5106 = vmatmul.mubr.bf16.gmra.mxu0 %v5052
  %v5107 = vpop.f32.mrf.mxu0
  %v5108 = vadd.f32 0.0, %v5107
  %v5109 = vpop.f32.mrf.mxu0
  %v5110 = vpop.f32.mrf.mxu0
  %v5111 = vadd.f32 0.0, %v5110
  %v5112 = vpop.f32.mrf.mxu0
  %5113 = vmatprep.mubr.bf16.mxu0 0
  %5114 = vmatmul.mubr.bf16.gmra.mxu0 %v5055
  %v5115 = vpop.f32.mrf.mxu0
  %v5116 = vadd.f32 0.0, %v5115
  %v5117 = vpop.f32.mrf.mxu0
  %v5118 = vpop.f32.mrf.mxu0
  %v5119 = vadd.f32 0.0, %v5118
  %v5120 = vpop.f32.mrf.mxu0
  %5121 = vdwg.mxu0
  %v5122 = vadd.f32 %v4934, %v5092
  %v5123 = vadd.f32 %v4935, %v5095
  %v5124 = vadd.f32 %v4936, %v5100
  %v5125 = vadd.f32 %v4937, %v5103
  %v5126 = vadd.f32 %v4938, %v5108
  %v5127 = vadd.f32 %v4939, %v5111
  %v5128 = vadd.f32 %v4940, %v5116
  %v5129 = vadd.f32 %v4941, %v5119
  %s5130 = scalar_lea.vmem %s8, 16
  %v5131 = vld [vmem:[%s5130] sm:$0xf]
  %v5133 = vsel %vm588, %v5131, 0
  %5135 = vmatprep.subr.bf16.mxu0 0
  %5136 = vmatpush1.bf16.msra.mxu0 0
  %5137 = vmatprep.subr.bf16.mxu0 0
  %5138 = vmatpush1.bf16.msra.mxu0 0
  %5139 = vmatprep.subr.bf16.mxu0 0
  %5140 = vmatpush1.bf16.msra.mxu0 0
  %5141 = vmatprep.subr.bf16.mxu0 0
  %5142 = vmatpush1.bf16.msra.mxu0 0
  %5143 = vmatprep.subr.bf16.mxu0 0
  %5144 = vmatpush1.bf16.msra.mxu0 0
  %5145 = vmatprep.subr.bf16.mxu0 0
  %5146 = vmatpush1.bf16.msra.mxu0 0
  %5147 = vmatprep.subr.bf16.mxu0 0
  %5148 = vmatpush1.bf16.msra.mxu0 0
  %5149 = vmatprep.subr.bf16.mxu0 0
  %5150 = vmatpush1.bf16.msra.mxu0 %v5133
  %5151 = vmatprep.subr.bf16.mxu0 0
  %5152 = vmatpush2.bf16.msra.mxu0 0
  %5153 = vmatprep.subr.bf16.mxu0 0
  %5154 = vmatpush2.bf16.msra.mxu0 0
  %5155 = vmatprep.subr.bf16.mxu0 0
  %5156 = vmatpush2.bf16.msra.mxu0 0
  %5157 = vmatprep.subr.bf16.mxu0 0
  %5158 = vmatpush2.bf16.msra.mxu0 0
  %5159 = vmatprep.subr.bf16.mxu0 0
  %5160 = vmatpush2.bf16.msra.mxu0 0
  %5161 = vmatprep.subr.bf16.mxu0 0
  %5162 = vmatpush2.bf16.msra.mxu0 0
  %5163 = vmatprep.subr.bf16.mxu0 0
  %5164 = vmatpush2.bf16.msra.mxu0 0
  %5165 = vmatprep.subr.bf16.mxu0 0
  %5166 = vmatpush2.bf16.msra.mxu0 0
  %5167 = vmatprep.mubr.bf16.mxu0 0
  %5168 = vmatmul.mubr.bf16.gmra.mxu0 %v4386
  %v5169 = vpop.f32.mrf.mxu0
  %v5170 = vadd.f32 0.0, %v5169
  %v5171 = vpop.f32.mrf.mxu0
  %v5172 = vpop.f32.mrf.mxu0
  %v5173 = vadd.f32 0.0, %v5172
  %v5174 = vpop.f32.mrf.mxu0
  %5175 = vmatprep.mubr.bf16.mxu0 0
  %5176 = vmatmul.mubr.bf16.gmra.mxu0 %v4389
  %v5177 = vpop.f32.mrf.mxu0
  %v5178 = vadd.f32 0.0, %v5177
  %v5179 = vpop.f32.mrf.mxu0
  %v5180 = vpop.f32.mrf.mxu0
  %v5181 = vadd.f32 0.0, %v5180
  %v5182 = vpop.f32.mrf.mxu0
  %5183 = vmatprep.mubr.bf16.mxu0 0
  %5184 = vmatmul.mubr.bf16.gmra.mxu0 %v4392
  %v5185 = vpop.f32.mrf.mxu0
  %v5186 = vadd.f32 0.0, %v5185
  %v5187 = vpop.f32.mrf.mxu0
  %v5188 = vpop.f32.mrf.mxu0
  %v5189 = vadd.f32 0.0, %v5188
  %v5190 = vpop.f32.mrf.mxu0
  %5191 = vmatprep.mubr.bf16.mxu0 0
  %5192 = vmatmul.mubr.bf16.gmra.mxu0 %v4395
  %v5193 = vpop.f32.mrf.mxu0
  %v5194 = vadd.f32 0.0, %v5193
  %v5195 = vpop.f32.mrf.mxu0
  %v5196 = vpop.f32.mrf.mxu0
  %v5197 = vadd.f32 0.0, %v5196
  %v5198 = vpop.f32.mrf.mxu0
  %5199 = vdwg.mxu0
  %v5200 = vpack.c.bf16 %v5173, %v5170
  %v5201 = vpack.c.bf16 %v5181, %v5178
  %v5202 = vpack.c.bf16 %v5189, %v5186
  %v5203 = vpack.c.bf16 %v5197, %v5194
  %s5204 = scalar_lea.vmem %s9, 128
  %v5205 = vld [vmem:[%s5204] sm:$0xf]
  %v5206 = vld [vmem:[%s5204 + $0x4] sm:$0xf]
  %v5207 = vld [vmem:[%s5204 + $0x8] sm:$0xf]
  %v5208 = vld [vmem:[%s5204 + $0xc] sm:$0xf]
  %v5209 = vld [vmem:[%s5204 + $0x10] sm:$0xf]
  %v5210 = vld [vmem:[%s5204 + $0x14] sm:$0xf]
  %v5211 = vld [vmem:[%s5204 + $0x18] sm:$0xf]
  %v5212 = vld [vmem:[%s5204 + $0x1c] sm:$0xf]
  %v5221 = vunpack.c.l.b16 %v5205
  %v5222 = vunpack.c.l.b16 %v5206
  %v5223 = vunpack.c.l.b16 %v5207
  %v5224 = vunpack.c.l.b16 %v5208
  %v5225 = vunpack.c.l.b16 %v5209
  %v5226 = vunpack.c.l.b16 %v5210
  %v5227 = vunpack.c.l.b16 %v5211
  %v5228 = vunpack.c.l.b16 %v5212
  %v5229 = vpack.c.b16 %v5222, %v5221
  %v5230 = vpack.c.b16 %v5224, %v5223
  %v5231 = vpack.c.b16 %v5226, %v5225
  %v5232 = vpack.c.b16 %v5228, %v5227
  %v5234 = vsel %vm2040, %v5229, 0
  %v5237 = vsel %vm2040, %v5230, 0
  %v5240 = vsel %vm2040, %v5231, 0
  %v5243 = vsel %vm2040, %v5232, 0
  %5245 = vmatprep.subr.bf16.mxu0 0
  %5246 = vmatpush1.bf16.msra.mxu0 0
  %5247 = vmatprep.subr.bf16.mxu0 0
  %5248 = vmatpush1.bf16.msra.mxu0 0
  %5249 = vmatprep.subr.bf16.mxu0 0
  %5250 = vmatpush1.bf16.msra.mxu0 0
  %5251 = vmatprep.subr.bf16.mxu0 0
  %5252 = vmatpush1.bf16.msra.mxu0 0
  %5253 = vmatprep.subr.bf16.mxu0 0
  %5254 = vmatpush1.bf16.msra.mxu0 %v5203
  %5255 = vmatprep.subr.bf16.mxu0 0
  %5256 = vmatpush1.bf16.msra.mxu0 %v5202
  %5257 = vmatprep.subr.bf16.mxu0 0
  %5258 = vmatpush1.bf16.msra.mxu0 %v5201
  %5259 = vmatprep.subr.bf16.mxu0 0
  %5260 = vmatpush1.bf16.msra.mxu0 %v5200
  %5261 = vmatprep.subr.bf16.mxu0 0
  %5262 = vmatpush2.bf16.msra.mxu0 0
  %5263 = vmatprep.subr.bf16.mxu0 0
  %5264 = vmatpush2.bf16.msra.mxu0 0
  %5265 = vmatprep.subr.bf16.mxu0 0
  %5266 = vmatpush2.bf16.msra.mxu0 0
  %5267 = vmatprep.subr.bf16.mxu0 0
  %5268 = vmatpush2.bf16.msra.mxu0 0
  %5269 = vmatprep.subr.bf16.mxu0 0
  %5270 = vmatpush2.bf16.msra.mxu0 0
  %5271 = vmatprep.subr.bf16.mxu0 0
  %5272 = vmatpush2.bf16.msra.mxu0 0
  %5273 = vmatprep.subr.bf16.mxu0 0
  %5274 = vmatpush2.bf16.msra.mxu0 0
  %5275 = vmatprep.subr.bf16.mxu0 0
  %5276 = vmatpush2.bf16.msra.mxu0 0
  %5277 = vmatprep.mubr.bf16.mxu0 0
  %5278 = vmatmul.mubr.bf16.gmra.mxu0 %v5234
  %v5279 = vpop.f32.mrf.mxu0
  %v5280 = vadd.f32 0.0, %v5279
  %v5281 = vpop.f32.mrf.mxu0
  %v5282 = vpop.f32.mrf.mxu0
  %v5283 = vadd.f32 0.0, %v5282
  %v5284 = vpop.f32.mrf.mxu0
  %5285 = vmatprep.mubr.bf16.mxu0 0
  %5286 = vmatmul.mubr.bf16.gmra.mxu0 %v5237
  %v5287 = vpop.f32.mrf.mxu0
  %v5288 = vadd.f32 0.0, %v5287
  %v5289 = vpop.f32.mrf.mxu0
  %v5290 = vpop.f32.mrf.mxu0
  %v5291 = vadd.f32 0.0, %v5290
  %v5292 = vpop.f32.mrf.mxu0
  %5293 = vmatprep.mubr.bf16.mxu0 0
  %5294 = vmatmul.mubr.bf16.gmra.mxu0 %v5240
  %v5295 = vpop.f32.mrf.mxu0
  %v5296 = vadd.f32 0.0, %v5295
  %v5297 = vpop.f32.mrf.mxu0
  %v5298 = vpop.f32.mrf.mxu0
  %v5299 = vadd.f32 0.0, %v5298
  %v5300 = vpop.f32.mrf.mxu0
  %5301 = vmatprep.mubr.bf16.mxu0 0
  %5302 = vmatmul.mubr.bf16.gmra.mxu0 %v5243
  %v5303 = vpop.f32.mrf.mxu0
  %v5304 = vadd.f32 0.0, %v5303
  %v5305 = vpop.f32.mrf.mxu0
  %v5306 = vpop.f32.mrf.mxu0
  %v5307 = vadd.f32 0.0, %v5306
  %v5308 = vpop.f32.mrf.mxu0
  %5309 = vdwg.mxu0
  %v5310 = vadd.f32 %v5122, %v5280
  %v5311 = vadd.f32 %v5123, %v5283
  %v5312 = vadd.f32 %v5124, %v5288
  %v5313 = vadd.f32 %v5125, %v5291
  %v5314 = vadd.f32 %v5126, %v5296
  %v5315 = vadd.f32 %v5127, %v5299
  %v5316 = vadd.f32 %v5128, %v5304
  %v5317 = vadd.f32 %v5129, %v5307
  %s5318 = scalar_lea.vmem %s8, 20
  %v5319 = vld [vmem:[%s5318] sm:$0xf]
  %v5321 = vsel %vm588, %v5319, 0
  %5323 = vmatprep.subr.bf16.mxu0 0
  %5324 = vmatpush1.bf16.msra.mxu0 0
  %5325 = vmatprep.subr.bf16.mxu0 0
  %5326 = vmatpush1.bf16.msra.mxu0 0
  %5327 = vmatprep.subr.bf16.mxu0 0
  %5328 = vmatpush1.bf16.msra.mxu0 0
  %5329 = vmatprep.subr.bf16.mxu0 0
  %5330 = vmatpush1.bf16.msra.mxu0 0
  %5331 = vmatprep.subr.bf16.mxu0 0
  %5332 = vmatpush1.bf16.msra.mxu0 0
  %5333 = vmatprep.subr.bf16.mxu0 0
  %5334 = vmatpush1.bf16.msra.mxu0 0
  %5335 = vmatprep.subr.bf16.mxu0 0
  %5336 = vmatpush1.bf16.msra.mxu0 0
  %5337 = vmatprep.subr.bf16.mxu0 0
  %5338 = vmatpush1.bf16.msra.mxu0 %v5321
  %5339 = vmatprep.subr.bf16.mxu0 0
  %5340 = vmatpush2.bf16.msra.mxu0 0
  %5341 = vmatprep.subr.bf16.mxu0 0
  %5342 = vmatpush2.bf16.msra.mxu0 0
  %5343 = vmatprep.subr.bf16.mxu0 0
  %5344 = vmatpush2.bf16.msra.mxu0 0
  %5345 = vmatprep.subr.bf16.mxu0 0
  %5346 = vmatpush2.bf16.msra.mxu0 0
  %5347 = vmatprep.subr.bf16.mxu0 0
  %5348 = vmatpush2.bf16.msra.mxu0 0
  %5349 = vmatprep.subr.bf16.mxu0 0
  %5350 = vmatpush2.bf16.msra.mxu0 0
  %5351 = vmatprep.subr.bf16.mxu0 0
  %5352 = vmatpush2.bf16.msra.mxu0 0
  %5353 = vmatprep.subr.bf16.mxu0 0
  %5354 = vmatpush2.bf16.msra.mxu0 0
  %5355 = vmatprep.mubr.bf16.mxu0 0
  %5356 = vmatmul.mubr.bf16.gmra.mxu0 %v4386
  %v5357 = vpop.f32.mrf.mxu0
  %v5358 = vadd.f32 0.0, %v5357
  %v5359 = vpop.f32.mrf.mxu0
  %v5360 = vpop.f32.mrf.mxu0
  %v5361 = vadd.f32 0.0, %v5360
  %v5362 = vpop.f32.mrf.mxu0
  %5363 = vmatprep.mubr.bf16.mxu0 0
  %5364 = vmatmul.mubr.bf16.gmra.mxu0 %v4389
  %v5365 = vpop.f32.mrf.mxu0
  %v5366 = vadd.f32 0.0, %v5365
  %v5367 = vpop.f32.mrf.mxu0
  %v5368 = vpop.f32.mrf.mxu0
  %v5369 = vadd.f32 0.0, %v5368
  %v5370 = vpop.f32.mrf.mxu0
  %5371 = vmatprep.mubr.bf16.mxu0 0
  %5372 = vmatmul.mubr.bf16.gmra.mxu0 %v4392
  %v5373 = vpop.f32.mrf.mxu0
  %v5374 = vadd.f32 0.0, %v5373
  %v5375 = vpop.f32.mrf.mxu0
  %v5376 = vpop.f32.mrf.mxu0
  %v5377 = vadd.f32 0.0, %v5376
  %v5378 = vpop.f32.mrf.mxu0
  %5379 = vmatprep.mubr.bf16.mxu0 0
  %5380 = vmatmul.mubr.bf16.gmra.mxu0 %v4395
  %v5381 = vpop.f32.mrf.mxu0
  %v5382 = vadd.f32 0.0, %v5381
  %v5383 = vpop.f32.mrf.mxu0
  %v5384 = vpop.f32.mrf.mxu0
  %v5385 = vadd.f32 0.0, %v5384
  %v5386 = vpop.f32.mrf.mxu0
  %5387 = vdwg.mxu0
  %v5388 = vpack.c.bf16 %v5361, %v5358
  %v5389 = vpack.c.bf16 %v5369, %v5366
  %v5390 = vpack.c.bf16 %v5377, %v5374
  %v5391 = vpack.c.bf16 %v5385, %v5382
  %s5392 = scalar_lea.vmem %s9, 160
  %v5393 = vld [vmem:[%s5392] sm:$0xf]
  %v5394 = vld [vmem:[%s5392 + $0x4] sm:$0xf]
  %v5395 = vld [vmem:[%s5392 + $0x8] sm:$0xf]
  %v5396 = vld [vmem:[%s5392 + $0xc] sm:$0xf]
  %v5397 = vld [vmem:[%s5392 + $0x10] sm:$0xf]
  %v5398 = vld [vmem:[%s5392 + $0x14] sm:$0xf]
  %v5399 = vld [vmem:[%s5392 + $0x18] sm:$0xf]
  %v5400 = vld [vmem:[%s5392 + $0x1c] sm:$0xf]
  %v5409 = vunpack.c.l.b16 %v5393
  %v5410 = vunpack.c.l.b16 %v5394
  %v5411 = vunpack.c.l.b16 %v5395
  %v5412 = vunpack.c.l.b16 %v5396
  %v5413 = vunpack.c.l.b16 %v5397
  %v5414 = vunpack.c.l.b16 %v5398
  %v5415 = vunpack.c.l.b16 %v5399
  %v5416 = vunpack.c.l.b16 %v5400
  %v5417 = vpack.c.b16 %v5410, %v5409
  %v5418 = vpack.c.b16 %v5412, %v5411
  %v5419 = vpack.c.b16 %v5414, %v5413
  %v5420 = vpack.c.b16 %v5416, %v5415
  %v5422 = vsel %vm2040, %v5417, 0
  %v5425 = vsel %vm2040, %v5418, 0
  %v5428 = vsel %vm2040, %v5419, 0
  %v5431 = vsel %vm2040, %v5420, 0
  %5433 = vmatprep.subr.bf16.mxu0 0
  %5434 = vmatpush1.bf16.msra.mxu0 0
  %5435 = vmatprep.subr.bf16.mxu0 0
  %5436 = vmatpush1.bf16.msra.mxu0 0
  %5437 = vmatprep.subr.bf16.mxu0 0
  %5438 = vmatpush1.bf16.msra.mxu0 0
  %5439 = vmatprep.subr.bf16.mxu0 0
  %5440 = vmatpush1.bf16.msra.mxu0 0
  %5441 = vmatprep.subr.bf16.mxu0 0
  %5442 = vmatpush1.bf16.msra.mxu0 %v5391
  %5443 = vmatprep.subr.bf16.mxu0 0
  %5444 = vmatpush1.bf16.msra.mxu0 %v5390
  %5445 = vmatprep.subr.bf16.mxu0 0
  %5446 = vmatpush1.bf16.msra.mxu0 %v5389
  %5447 = vmatprep.subr.bf16.mxu0 0
  %5448 = vmatpush1.bf16.msra.mxu0 %v5388
  %5449 = vmatprep.subr.bf16.mxu0 0
  %5450 = vmatpush2.bf16.msra.mxu0 0
  %5451 = vmatprep.subr.bf16.mxu0 0
  %5452 = vmatpush2.bf16.msra.mxu0 0
  %5453 = vmatprep.subr.bf16.mxu0 0
  %5454 = vmatpush2.bf16.msra.mxu0 0
  %5455 = vmatprep.subr.bf16.mxu0 0
  %5456 = vmatpush2.bf16.msra.mxu0 0
  %5457 = vmatprep.subr.bf16.mxu0 0
  %5458 = vmatpush2.bf16.msra.mxu0 0
  %5459 = vmatprep.subr.bf16.mxu0 0
  %5460 = vmatpush2.bf16.msra.mxu0 0
  %5461 = vmatprep.subr.bf16.mxu0 0
  %5462 = vmatpush2.bf16.msra.mxu0 0
  %5463 = vmatprep.subr.bf16.mxu0 0
  %5464 = vmatpush2.bf16.msra.mxu0 0
  %5465 = vmatprep.mubr.bf16.mxu0 0
  %5466 = vmatmul.mubr.bf16.gmra.mxu0 %v5422
  %v5467 = vpop.f32.mrf.mxu0
  %v5468 = vadd.f32 0.0, %v5467
  %v5469 = vpop.f32.mrf.mxu0
  %v5470 = vpop.f32.mrf.mxu0
  %v5471 = vadd.f32 0.0, %v5470
  %v5472 = vpop.f32.mrf.mxu0
  %5473 = vmatprep.mubr.bf16.mxu0 0
  %5474 = vmatmul.mubr.bf16.gmra.mxu0 %v5425
  %v5475 = vpop.f32.mrf.mxu0
  %v5476 = vadd.f32 0.0, %v5475
  %v5477 = vpop.f32.mrf.mxu0
  %v5478 = vpop.f32.mrf.mxu0
  %v5479 = vadd.f32 0.0, %v5478
  %v5480 = vpop.f32.mrf.mxu0
  %5481 = vmatprep.mubr.bf16.mxu0 0
  %5482 = vmatmul.mubr.bf16.gmra.mxu0 %v5428
  %v5483 = vpop.f32.mrf.mxu0
  %v5484 = vadd.f32 0.0, %v5483
  %v5485 = vpop.f32.mrf.mxu0
  %v5486 = vpop.f32.mrf.mxu0
  %v5487 = vadd.f32 0.0, %v5486
  %v5488 = vpop.f32.mrf.mxu0
  %5489 = vmatprep.mubr.bf16.mxu0 0
  %5490 = vmatmul.mubr.bf16.gmra.mxu0 %v5431
  %v5491 = vpop.f32.mrf.mxu0
  %v5492 = vadd.f32 0.0, %v5491
  %v5493 = vpop.f32.mrf.mxu0
  %v5494 = vpop.f32.mrf.mxu0
  %v5495 = vadd.f32 0.0, %v5494
  %v5496 = vpop.f32.mrf.mxu0
  %5497 = vdwg.mxu0
  %v5498 = vadd.f32 %v5310, %v5468
  %v5499 = vadd.f32 %v5311, %v5471
  %v5500 = vadd.f32 %v5312, %v5476
  %v5501 = vadd.f32 %v5313, %v5479
  %v5502 = vadd.f32 %v5314, %v5484
  %v5503 = vadd.f32 %v5315, %v5487
  %v5504 = vadd.f32 %v5316, %v5492
  %v5505 = vadd.f32 %v5317, %v5495
  %s5506 = scalar_lea.vmem %s8, 24
  %v5507 = vld [vmem:[%s5506] sm:$0xf]
  %v5509 = vsel %vm588, %v5507, 0
  %5511 = vmatprep.subr.bf16.mxu0 0
  %5512 = vmatpush1.bf16.msra.mxu0 0
  %5513 = vmatprep.subr.bf16.mxu0 0
  %5514 = vmatpush1.bf16.msra.mxu0 0
  %5515 = vmatprep.subr.bf16.mxu0 0
  %5516 = vmatpush1.bf16.msra.mxu0 0
  %5517 = vmatprep.subr.bf16.mxu0 0
  %5518 = vmatpush1.bf16.msra.mxu0 0
  %5519 = vmatprep.subr.bf16.mxu0 0
  %5520 = vmatpush1.bf16.msra.mxu0 0
  %5521 = vmatprep.subr.bf16.mxu0 0
  %5522 = vmatpush1.bf16.msra.mxu0 0
  %5523 = vmatprep.subr.bf16.mxu0 0
  %5524 = vmatpush1.bf16.msra.mxu0 0
  %5525 = vmatprep.subr.bf16.mxu0 0
  %5526 = vmatpush1.bf16.msra.mxu0 %v5509
  %5527 = vmatprep.subr.bf16.mxu0 0
  %5528 = vmatpush2.bf16.msra.mxu0 0
  %5529 = vmatprep.subr.bf16.mxu0 0
  %5530 = vmatpush2.bf16.msra.mxu0 0
  %5531 = vmatprep.subr.bf16.mxu0 0
  %5532 = vmatpush2.bf16.msra.mxu0 0
  %5533 = vmatprep.subr.bf16.mxu0 0
  %5534 = vmatpush2.bf16.msra.mxu0 0
  %5535 = vmatprep.subr.bf16.mxu0 0
  %5536 = vmatpush2.bf16.msra.mxu0 0
  %5537 = vmatprep.subr.bf16.mxu0 0
  %5538 = vmatpush2.bf16.msra.mxu0 0
  %5539 = vmatprep.subr.bf16.mxu0 0
  %5540 = vmatpush2.bf16.msra.mxu0 0
  %5541 = vmatprep.subr.bf16.mxu0 0
  %5542 = vmatpush2.bf16.msra.mxu0 0
  %5543 = vmatprep.mubr.bf16.mxu0 0
  %5544 = vmatmul.mubr.bf16.gmra.mxu0 %v4386
  %v5545 = vpop.f32.mrf.mxu0
  %v5546 = vadd.f32 0.0, %v5545
  %v5547 = vpop.f32.mrf.mxu0
  %v5548 = vpop.f32.mrf.mxu0
  %v5549 = vadd.f32 0.0, %v5548
  %v5550 = vpop.f32.mrf.mxu0
  %5551 = vmatprep.mubr.bf16.mxu0 0
  %5552 = vmatmul.mubr.bf16.gmra.mxu0 %v4389
  %v5553 = vpop.f32.mrf.mxu0
  %v5554 = vadd.f32 0.0, %v5553
  %v5555 = vpop.f32.mrf.mxu0
  %v5556 = vpop.f32.mrf.mxu0
  %v5557 = vadd.f32 0.0, %v5556
  %v5558 = vpop.f32.mrf.mxu0
  %5559 = vmatprep.mubr.bf16.mxu0 0
  %5560 = vmatmul.mubr.bf16.gmra.mxu0 %v4392
  %v5561 = vpop.f32.mrf.mxu0
  %v5562 = vadd.f32 0.0, %v5561
  %v5563 = vpop.f32.mrf.mxu0
  %v5564 = vpop.f32.mrf.mxu0
  %v5565 = vadd.f32 0.0, %v5564
  %v5566 = vpop.f32.mrf.mxu0
  %5567 = vmatprep.mubr.bf16.mxu0 0
  %5568 = vmatmul.mubr.bf16.gmra.mxu0 %v4395
  %v5569 = vpop.f32.mrf.mxu0
  %v5570 = vadd.f32 0.0, %v5569
  %v5571 = vpop.f32.mrf.mxu0
  %v5572 = vpop.f32.mrf.mxu0
  %v5573 = vadd.f32 0.0, %v5572
  %v5574 = vpop.f32.mrf.mxu0
  %5575 = vdwg.mxu0
  %v5576 = vpack.c.bf16 %v5549, %v5546
  %v5577 = vpack.c.bf16 %v5557, %v5554
  %v5578 = vpack.c.bf16 %v5565, %v5562
  %v5579 = vpack.c.bf16 %v5573, %v5570
  %s5580 = scalar_lea.vmem %s9, 192
  %v5581 = vld [vmem:[%s5580] sm:$0xf]
  %v5582 = vld [vmem:[%s5580 + $0x4] sm:$0xf]
  %v5583 = vld [vmem:[%s5580 + $0x8] sm:$0xf]
  %v5584 = vld [vmem:[%s5580 + $0xc] sm:$0xf]
  %v5585 = vld [vmem:[%s5580 + $0x10] sm:$0xf]
  %v5586 = vld [vmem:[%s5580 + $0x14] sm:$0xf]
  %v5587 = vld [vmem:[%s5580 + $0x18] sm:$0xf]
  %v5588 = vld [vmem:[%s5580 + $0x1c] sm:$0xf]
  %v5597 = vunpack.c.l.b16 %v5581
  %v5598 = vunpack.c.l.b16 %v5582
  %v5599 = vunpack.c.l.b16 %v5583
  %v5600 = vunpack.c.l.b16 %v5584
  %v5601 = vunpack.c.l.b16 %v5585
  %v5602 = vunpack.c.l.b16 %v5586
  %v5603 = vunpack.c.l.b16 %v5587
  %v5604 = vunpack.c.l.b16 %v5588
  %v5605 = vpack.c.b16 %v5598, %v5597
  %v5606 = vpack.c.b16 %v5600, %v5599
  %v5607 = vpack.c.b16 %v5602, %v5601
  %v5608 = vpack.c.b16 %v5604, %v5603
  %v5610 = vsel %vm2040, %v5605, 0
  %v5613 = vsel %vm2040, %v5606, 0
  %v5616 = vsel %vm2040, %v5607, 0
  %v5619 = vsel %vm2040, %v5608, 0
  %5621 = vmatprep.subr.bf16.mxu0 0
  %5622 = vmatpush1.bf16.msra.mxu0 0
  %5623 = vmatprep.subr.bf16.mxu0 0
  %5624 = vmatpush1.bf16.msra.mxu0 0
  %5625 = vmatprep.subr.bf16.mxu0 0
  %5626 = vmatpush1.bf16.msra.mxu0 0
  %5627 = vmatprep.subr.bf16.mxu0 0
  %5628 = vmatpush1.bf16.msra.mxu0 0
  %5629 = vmatprep.subr.bf16.mxu0 0
  %5630 = vmatpush1.bf16.msra.mxu0 %v5579
  %5631 = vmatprep.subr.bf16.mxu0 0
  %5632 = vmatpush1.bf16.msra.mxu0 %v5578
  %5633 = vmatprep.subr.bf16.mxu0 0
  %5634 = vmatpush1.bf16.msra.mxu0 %v5577
  %5635 = vmatprep.subr.bf16.mxu0 0
  %5636 = vmatpush1.bf16.msra.mxu0 %v5576
  %5637 = vmatprep.subr.bf16.mxu0 0
  %5638 = vmatpush2.bf16.msra.mxu0 0
  %5639 = vmatprep.subr.bf16.mxu0 0
  %5640 = vmatpush2.bf16.msra.mxu0 0
  %5641 = vmatprep.subr.bf16.mxu0 0
  %5642 = vmatpush2.bf16.msra.mxu0 0
  %5643 = vmatprep.subr.bf16.mxu0 0
  %5644 = vmatpush2.bf16.msra.mxu0 0
  %5645 = vmatprep.subr.bf16.mxu0 0
  %5646 = vmatpush2.bf16.msra.mxu0 0
  %5647 = vmatprep.subr.bf16.mxu0 0
  %5648 = vmatpush2.bf16.msra.mxu0 0
  %5649 = vmatprep.subr.bf16.mxu0 0
  %5650 = vmatpush2.bf16.msra.mxu0 0
  %5651 = vmatprep.subr.bf16.mxu0 0
  %5652 = vmatpush2.bf16.msra.mxu0 0
  %5653 = vmatprep.mubr.bf16.mxu0 0
  %5654 = vmatmul.mubr.bf16.gmra.mxu0 %v5610
  %v5655 = vpop.f32.mrf.mxu0
  %v5656 = vadd.f32 0.0, %v5655
  %v5657 = vpop.f32.mrf.mxu0
  %v5658 = vpop.f32.mrf.mxu0
  %v5659 = vadd.f32 0.0, %v5658
  %v5660 = vpop.f32.mrf.mxu0
  %5661 = vmatprep.mubr.bf16.mxu0 0
  %5662 = vmatmul.mubr.bf16.gmra.mxu0 %v5613
  %v5663 = vpop.f32.mrf.mxu0
  %v5664 = vadd.f32 0.0, %v5663
  %v5665 = vpop.f32.mrf.mxu0
  %v5666 = vpop.f32.mrf.mxu0
  %v5667 = vadd.f32 0.0, %v5666
  %v5668 = vpop.f32.mrf.mxu0
  %5669 = vmatprep.mubr.bf16.mxu0 0
  %5670 = vmatmul.mubr.bf16.gmra.mxu0 %v5616
  %v5671 = vpop.f32.mrf.mxu0
  %v5672 = vadd.f32 0.0, %v5671
  %v5673 = vpop.f32.mrf.mxu0
  %v5674 = vpop.f32.mrf.mxu0
  %v5675 = vadd.f32 0.0, %v5674
  %v5676 = vpop.f32.mrf.mxu0
  %5677 = vmatprep.mubr.bf16.mxu0 0
  %5678 = vmatmul.mubr.bf16.gmra.mxu0 %v5619
  %v5679 = vpop.f32.mrf.mxu0
  %v5680 = vadd.f32 0.0, %v5679
  %v5681 = vpop.f32.mrf.mxu0
  %v5682 = vpop.f32.mrf.mxu0
  %v5683 = vadd.f32 0.0, %v5682
  %v5684 = vpop.f32.mrf.mxu0
  %5685 = vdwg.mxu0
  %v5686 = vadd.f32 %v5498, %v5656
  %v5687 = vadd.f32 %v5499, %v5659
  %v5688 = vadd.f32 %v5500, %v5664
  %v5689 = vadd.f32 %v5501, %v5667
  %v5690 = vadd.f32 %v5502, %v5672
  %v5691 = vadd.f32 %v5503, %v5675
  %v5692 = vadd.f32 %v5504, %v5680
  %v5693 = vadd.f32 %v5505, %v5683
  %s5694 = scalar_lea.vmem %s8, 28
  %v5695 = vld [vmem:[%s5694] sm:$0xf]
  %v5697 = vsel %vm588, %v5695, 0
  %5699 = vmatprep.subr.bf16.mxu0 0
  %5700 = vmatpush1.bf16.msra.mxu0 0
  %5701 = vmatprep.subr.bf16.mxu0 0
  %5702 = vmatpush1.bf16.msra.mxu0 0
  %5703 = vmatprep.subr.bf16.mxu0 0
  %5704 = vmatpush1.bf16.msra.mxu0 0
  %5705 = vmatprep.subr.bf16.mxu0 0
  %5706 = vmatpush1.bf16.msra.mxu0 0
  %5707 = vmatprep.subr.bf16.mxu0 0
  %5708 = vmatpush1.bf16.msra.mxu0 0
  %5709 = vmatprep.subr.bf16.mxu0 0
  %5710 = vmatpush1.bf16.msra.mxu0 0
  %5711 = vmatprep.subr.bf16.mxu0 0
  %5712 = vmatpush1.bf16.msra.mxu0 0
  %5713 = vmatprep.subr.bf16.mxu0 0
  %5714 = vmatpush1.bf16.msra.mxu0 %v5697
  %5715 = vmatprep.subr.bf16.mxu0 0
  %5716 = vmatpush2.bf16.msra.mxu0 0
  %5717 = vmatprep.subr.bf16.mxu0 0
  %5718 = vmatpush2.bf16.msra.mxu0 0
  %5719 = vmatprep.subr.bf16.mxu0 0
  %5720 = vmatpush2.bf16.msra.mxu0 0
  %5721 = vmatprep.subr.bf16.mxu0 0
  %5722 = vmatpush2.bf16.msra.mxu0 0
  %5723 = vmatprep.subr.bf16.mxu0 0
  %5724 = vmatpush2.bf16.msra.mxu0 0
  %5725 = vmatprep.subr.bf16.mxu0 0
  %5726 = vmatpush2.bf16.msra.mxu0 0
  %5727 = vmatprep.subr.bf16.mxu0 0
  %5728 = vmatpush2.bf16.msra.mxu0 0
  %5729 = vmatprep.subr.bf16.mxu0 0
  %5730 = vmatpush2.bf16.msra.mxu0 0
  %5731 = vmatprep.mubr.bf16.mxu0 0
  %5732 = vmatmul.mubr.bf16.gmra.mxu0 %v4386
  %v5733 = vpop.f32.mrf.mxu0
  %v5734 = vadd.f32 0.0, %v5733
  %v5735 = vpop.f32.mrf.mxu0
  %v5736 = vpop.f32.mrf.mxu0
  %v5737 = vadd.f32 0.0, %v5736
  %v5738 = vpop.f32.mrf.mxu0
  %5739 = vmatprep.mubr.bf16.mxu0 0
  %5740 = vmatmul.mubr.bf16.gmra.mxu0 %v4389
  %v5741 = vpop.f32.mrf.mxu0
  %v5742 = vadd.f32 0.0, %v5741
  %v5743 = vpop.f32.mrf.mxu0
  %v5744 = vpop.f32.mrf.mxu0
  %v5745 = vadd.f32 0.0, %v5744
  %v5746 = vpop.f32.mrf.mxu0
  %5747 = vmatprep.mubr.bf16.mxu0 0
  %5748 = vmatmul.mubr.bf16.gmra.mxu0 %v4392
  %v5749 = vpop.f32.mrf.mxu0
  %v5750 = vadd.f32 0.0, %v5749
  %v5751 = vpop.f32.mrf.mxu0
  %v5752 = vpop.f32.mrf.mxu0
  %v5753 = vadd.f32 0.0, %v5752
  %v5754 = vpop.f32.mrf.mxu0
  %5755 = vmatprep.mubr.bf16.mxu0 0
  %5756 = vmatmul.mubr.bf16.gmra.mxu0 %v4395
  %v5757 = vpop.f32.mrf.mxu0
  %v5758 = vadd.f32 0.0, %v5757
  %v5759 = vpop.f32.mrf.mxu0
  %v5760 = vpop.f32.mrf.mxu0
  %v5761 = vadd.f32 0.0, %v5760
  %v5762 = vpop.f32.mrf.mxu0
  %5763 = vdwg.mxu0
  %v5764 = vpack.c.bf16 %v5737, %v5734
  %v5765 = vpack.c.bf16 %v5745, %v5742
  %v5766 = vpack.c.bf16 %v5753, %v5750
  %v5767 = vpack.c.bf16 %v5761, %v5758
  %s5768 = scalar_lea.vmem %s9, 224
  %v5769 = vld [vmem:[%s5768] sm:$0xf]
  %v5770 = vld [vmem:[%s5768 + $0x4] sm:$0xf]
  %v5771 = vld [vmem:[%s5768 + $0x8] sm:$0xf]
  %v5772 = vld [vmem:[%s5768 + $0xc] sm:$0xf]
  %v5773 = vld [vmem:[%s5768 + $0x10] sm:$0xf]
  %v5774 = vld [vmem:[%s5768 + $0x14] sm:$0xf]
  %v5775 = vld [vmem:[%s5768 + $0x18] sm:$0xf]
  %v5776 = vld [vmem:[%s5768 + $0x1c] sm:$0xf]
  %v5785 = vunpack.c.l.b16 %v5769
  %v5786 = vunpack.c.l.b16 %v5770
  %v5787 = vunpack.c.l.b16 %v5771
  %v5788 = vunpack.c.l.b16 %v5772
  %v5789 = vunpack.c.l.b16 %v5773
  %v5790 = vunpack.c.l.b16 %v5774
  %v5791 = vunpack.c.l.b16 %v5775
  %v5792 = vunpack.c.l.b16 %v5776
  %v5793 = vpack.c.b16 %v5786, %v5785
  %v5794 = vpack.c.b16 %v5788, %v5787
  %v5795 = vpack.c.b16 %v5790, %v5789
  %v5796 = vpack.c.b16 %v5792, %v5791
  %v5798 = vsel %vm2040, %v5793, 0
  %v5801 = vsel %vm2040, %v5794, 0
  %v5804 = vsel %vm2040, %v5795, 0
  %v5807 = vsel %vm2040, %v5796, 0
  %5809 = vmatprep.subr.bf16.mxu0 0
  %5810 = vmatpush1.bf16.msra.mxu0 0
  %5811 = vmatprep.subr.bf16.mxu0 0
  %5812 = vmatpush1.bf16.msra.mxu0 0
  %5813 = vmatprep.subr.bf16.mxu0 0
  %5814 = vmatpush1.bf16.msra.mxu0 0
  %5815 = vmatprep.subr.bf16.mxu0 0
  %5816 = vmatpush1.bf16.msra.mxu0 0
  %5817 = vmatprep.subr.bf16.mxu0 0
  %5818 = vmatpush1.bf16.msra.mxu0 %v5767
  %5819 = vmatprep.subr.bf16.mxu0 0
  %5820 = vmatpush1.bf16.msra.mxu0 %v5766
  %5821 = vmatprep.subr.bf16.mxu0 0
  %5822 = vmatpush1.bf16.msra.mxu0 %v5765
  %5823 = vmatprep.subr.bf16.mxu0 0
  %5824 = vmatpush1.bf16.msra.mxu0 %v5764
  %5825 = vmatprep.subr.bf16.mxu0 0
  %5826 = vmatpush2.bf16.msra.mxu0 0
  %5827 = vmatprep.subr.bf16.mxu0 0
  %5828 = vmatpush2.bf16.msra.mxu0 0
  %5829 = vmatprep.subr.bf16.mxu0 0
  %5830 = vmatpush2.bf16.msra.mxu0 0
  %5831 = vmatprep.subr.bf16.mxu0 0
  %5832 = vmatpush2.bf16.msra.mxu0 0
  %5833 = vmatprep.subr.bf16.mxu0 0
  %5834 = vmatpush2.bf16.msra.mxu0 0
  %5835 = vmatprep.subr.bf16.mxu0 0
  %5836 = vmatpush2.bf16.msra.mxu0 0
  %5837 = vmatprep.subr.bf16.mxu0 0
  %5838 = vmatpush2.bf16.msra.mxu0 0
  %5839 = vmatprep.subr.bf16.mxu0 0
  %5840 = vmatpush2.bf16.msra.mxu0 0
  %5841 = vmatprep.mubr.bf16.mxu0 0
  %5842 = vmatmul.mubr.bf16.gmra.mxu0 %v5798
  %v5843 = vpop.f32.mrf.mxu0
  %v5844 = vadd.f32 0.0, %v5843
  %v5845 = vpop.f32.mrf.mxu0
  %v5846 = vpop.f32.mrf.mxu0
  %v5847 = vadd.f32 0.0, %v5846
  %v5848 = vpop.f32.mrf.mxu0
  %5849 = vmatprep.mubr.bf16.mxu0 0
  %5850 = vmatmul.mubr.bf16.gmra.mxu0 %v5801
  %v5851 = vpop.f32.mrf.mxu0
  %v5852 = vadd.f32 0.0, %v5851
  %v5853 = vpop.f32.mrf.mxu0
  %v5854 = vpop.f32.mrf.mxu0
  %v5855 = vadd.f32 0.0, %v5854
  %v5856 = vpop.f32.mrf.mxu0
  %5857 = vmatprep.mubr.bf16.mxu0 0
  %5858 = vmatmul.mubr.bf16.gmra.mxu0 %v5804
  %v5859 = vpop.f32.mrf.mxu0
  %v5860 = vadd.f32 0.0, %v5859
  %v5861 = vpop.f32.mrf.mxu0
  %v5862 = vpop.f32.mrf.mxu0
  %v5863 = vadd.f32 0.0, %v5862
  %v5864 = vpop.f32.mrf.mxu0
  %5865 = vmatprep.mubr.bf16.mxu0 0
  %5866 = vmatmul.mubr.bf16.gmra.mxu0 %v5807
  %v5867 = vpop.f32.mrf.mxu0
  %v5868 = vadd.f32 0.0, %v5867
  %v5869 = vpop.f32.mrf.mxu0
  %v5870 = vpop.f32.mrf.mxu0
  %v5871 = vadd.f32 0.0, %v5870
  %v5872 = vpop.f32.mrf.mxu0
  %5873 = vdwg.mxu0
  %v5874 = vadd.f32 %v5686, %v5844
  %v5875 = vadd.f32 %v5687, %v5847
  %v5876 = vadd.f32 %v5688, %v5852
  %v5877 = vadd.f32 %v5689, %v5855
  %v5878 = vadd.f32 %v5690, %v5860
  %v5879 = vadd.f32 %v5691, %v5863
  %v5880 = vadd.f32 %v5692, %v5868
  %v5881 = vadd.f32 %v5693, %v5871
  %s5882 = scalar_lea.vmem %s8, 32
  %v5883 = vld [vmem:[%s5882] sm:$0xf]
  %v5885 = vsel %vm588, %v5883, 0
  %5887 = vmatprep.subr.bf16.mxu0 0
  %5888 = vmatpush1.bf16.msra.mxu0 0
  %5889 = vmatprep.subr.bf16.mxu0 0
  %5890 = vmatpush1.bf16.msra.mxu0 0
  %5891 = vmatprep.subr.bf16.mxu0 0
  %5892 = vmatpush1.bf16.msra.mxu0 0
  %5893 = vmatprep.subr.bf16.mxu0 0
  %5894 = vmatpush1.bf16.msra.mxu0 0
  %5895 = vmatprep.subr.bf16.mxu0 0
  %5896 = vmatpush1.bf16.msra.mxu0 0
  %5897 = vmatprep.subr.bf16.mxu0 0
  %5898 = vmatpush1.bf16.msra.mxu0 0
  %5899 = vmatprep.subr.bf16.mxu0 0
  %5900 = vmatpush1.bf16.msra.mxu0 0
  %5901 = vmatprep.subr.bf16.mxu0 0
  %5902 = vmatpush1.bf16.msra.mxu0 %v5885
  %5903 = vmatprep.subr.bf16.mxu0 0
  %5904 = vmatpush2.bf16.msra.mxu0 0
  %5905 = vmatprep.subr.bf16.mxu0 0
  %5906 = vmatpush2.bf16.msra.mxu0 0
  %5907 = vmatprep.subr.bf16.mxu0 0
  %5908 = vmatpush2.bf16.msra.mxu0 0
  %5909 = vmatprep.subr.bf16.mxu0 0
  %5910 = vmatpush2.bf16.msra.mxu0 0
  %5911 = vmatprep.subr.bf16.mxu0 0
  %5912 = vmatpush2.bf16.msra.mxu0 0
  %5913 = vmatprep.subr.bf16.mxu0 0
  %5914 = vmatpush2.bf16.msra.mxu0 0
  %5915 = vmatprep.subr.bf16.mxu0 0
  %5916 = vmatpush2.bf16.msra.mxu0 0
  %5917 = vmatprep.subr.bf16.mxu0 0
  %5918 = vmatpush2.bf16.msra.mxu0 0
  %5919 = vmatprep.mubr.bf16.mxu0 0
  %5920 = vmatmul.mubr.bf16.gmra.mxu0 %v4386
  %v5921 = vpop.f32.mrf.mxu0
  %v5922 = vadd.f32 0.0, %v5921
  %v5923 = vpop.f32.mrf.mxu0
  %v5924 = vpop.f32.mrf.mxu0
  %v5925 = vadd.f32 0.0, %v5924
  %v5926 = vpop.f32.mrf.mxu0
  %5927 = vmatprep.mubr.bf16.mxu0 0
  %5928 = vmatmul.mubr.bf16.gmra.mxu0 %v4389
  %v5929 = vpop.f32.mrf.mxu0
  %v5930 = vadd.f32 0.0, %v5929
  %v5931 = vpop.f32.mrf.mxu0
  %v5932 = vpop.f32.mrf.mxu0
  %v5933 = vadd.f32 0.0, %v5932
  %v5934 = vpop.f32.mrf.mxu0
  %5935 = vmatprep.mubr.bf16.mxu0 0
  %5936 = vmatmul.mubr.bf16.gmra.mxu0 %v4392
  %v5937 = vpop.f32.mrf.mxu0
  %v5938 = vadd.f32 0.0, %v5937
  %v5939 = vpop.f32.mrf.mxu0
  %v5940 = vpop.f32.mrf.mxu0
  %v5941 = vadd.f32 0.0, %v5940
  %v5942 = vpop.f32.mrf.mxu0
  %5943 = vmatprep.mubr.bf16.mxu0 0
  %5944 = vmatmul.mubr.bf16.gmra.mxu0 %v4395
  %v5945 = vpop.f32.mrf.mxu0
  %v5946 = vadd.f32 0.0, %v5945
  %v5947 = vpop.f32.mrf.mxu0
  %v5948 = vpop.f32.mrf.mxu0
  %v5949 = vadd.f32 0.0, %v5948
  %v5950 = vpop.f32.mrf.mxu0
  %5951 = vdwg.mxu0
  %v5952 = vpack.c.bf16 %v5925, %v5922
  %v5953 = vpack.c.bf16 %v5933, %v5930
  %v5954 = vpack.c.bf16 %v5941, %v5938
  %v5955 = vpack.c.bf16 %v5949, %v5946
  %s5956 = scalar_lea.vmem %s9, 256
  %v5957 = vld [vmem:[%s5956] sm:$0xf]
  %v5958 = vld [vmem:[%s5956 + $0x4] sm:$0xf]
  %v5959 = vld [vmem:[%s5956 + $0x8] sm:$0xf]
  %v5960 = vld [vmem:[%s5956 + $0xc] sm:$0xf]
  %v5961 = vld [vmem:[%s5956 + $0x10] sm:$0xf]
  %v5962 = vld [vmem:[%s5956 + $0x14] sm:$0xf]
  %v5963 = vld [vmem:[%s5956 + $0x18] sm:$0xf]
  %v5964 = vld [vmem:[%s5956 + $0x1c] sm:$0xf]
  %v5973 = vunpack.c.l.b16 %v5957
  %v5974 = vunpack.c.l.b16 %v5958
  %v5975 = vunpack.c.l.b16 %v5959
  %v5976 = vunpack.c.l.b16 %v5960
  %v5977 = vunpack.c.l.b16 %v5961
  %v5978 = vunpack.c.l.b16 %v5962
  %v5979 = vunpack.c.l.b16 %v5963
  %v5980 = vunpack.c.l.b16 %v5964
  %v5981 = vpack.c.b16 %v5974, %v5973
  %v5982 = vpack.c.b16 %v5976, %v5975
  %v5983 = vpack.c.b16 %v5978, %v5977
  %v5984 = vpack.c.b16 %v5980, %v5979
  %v5986 = vsel %vm2040, %v5981, 0
  %v5989 = vsel %vm2040, %v5982, 0
  %v5992 = vsel %vm2040, %v5983, 0
  %v5995 = vsel %vm2040, %v5984, 0
  %5997 = vmatprep.subr.bf16.mxu0 0
  %5998 = vmatpush1.bf16.msra.mxu0 0
  %5999 = vmatprep.subr.bf16.mxu0 0
  %6000 = vmatpush1.bf16.msra.mxu0 0
  %6001 = vmatprep.subr.bf16.mxu0 0
  %6002 = vmatpush1.bf16.msra.mxu0 0
  %6003 = vmatprep.subr.bf16.mxu0 0
  %6004 = vmatpush1.bf16.msra.mxu0 0
  %6005 = vmatprep.subr.bf16.mxu0 0
  %6006 = vmatpush1.bf16.msra.mxu0 %v5955
  %6007 = vmatprep.subr.bf16.mxu0 0
  %6008 = vmatpush1.bf16.msra.mxu0 %v5954
  %6009 = vmatprep.subr.bf16.mxu0 0
  %6010 = vmatpush1.bf16.msra.mxu0 %v5953
  %6011 = vmatprep.subr.bf16.mxu0 0
  %6012 = vmatpush1.bf16.msra.mxu0 %v5952
  %6013 = vmatprep.subr.bf16.mxu0 0
  %6014 = vmatpush2.bf16.msra.mxu0 0
  %6015 = vmatprep.subr.bf16.mxu0 0
  %6016 = vmatpush2.bf16.msra.mxu0 0
  %6017 = vmatprep.subr.bf16.mxu0 0
  %6018 = vmatpush2.bf16.msra.mxu0 0
  %6019 = vmatprep.subr.bf16.mxu0 0
  %6020 = vmatpush2.bf16.msra.mxu0 0
  %6021 = vmatprep.subr.bf16.mxu0 0
  %6022 = vmatpush2.bf16.msra.mxu0 0
  %6023 = vmatprep.subr.bf16.mxu0 0
  %6024 = vmatpush2.bf16.msra.mxu0 0
  %6025 = vmatprep.subr.bf16.mxu0 0
  %6026 = vmatpush2.bf16.msra.mxu0 0
  %6027 = vmatprep.subr.bf16.mxu0 0
  %6028 = vmatpush2.bf16.msra.mxu0 0
  %6029 = vmatprep.mubr.bf16.mxu0 0
  %6030 = vmatmul.mubr.bf16.gmra.mxu0 %v5986
  %v6031 = vpop.f32.mrf.mxu0
  %v6032 = vadd.f32 0.0, %v6031
  %v6033 = vpop.f32.mrf.mxu0
  %v6034 = vpop.f32.mrf.mxu0
  %v6035 = vadd.f32 0.0, %v6034
  %v6036 = vpop.f32.mrf.mxu0
  %6037 = vmatprep.mubr.bf16.mxu0 0
  %6038 = vmatmul.mubr.bf16.gmra.mxu0 %v5989
  %v6039 = vpop.f32.mrf.mxu0
  %v6040 = vadd.f32 0.0, %v6039
  %v6041 = vpop.f32.mrf.mxu0
  %v6042 = vpop.f32.mrf.mxu0
  %v6043 = vadd.f32 0.0, %v6042
  %v6044 = vpop.f32.mrf.mxu0
  %6045 = vmatprep.mubr.bf16.mxu0 0
  %6046 = vmatmul.mubr.bf16.gmra.mxu0 %v5992
  %v6047 = vpop.f32.mrf.mxu0
  %v6048 = vadd.f32 0.0, %v6047
  %v6049 = vpop.f32.mrf.mxu0
  %v6050 = vpop.f32.mrf.mxu0
  %v6051 = vadd.f32 0.0, %v6050
  %v6052 = vpop.f32.mrf.mxu0
  %6053 = vmatprep.mubr.bf16.mxu0 0
  %6054 = vmatmul.mubr.bf16.gmra.mxu0 %v5995
  %v6055 = vpop.f32.mrf.mxu0
  %v6056 = vadd.f32 0.0, %v6055
  %v6057 = vpop.f32.mrf.mxu0
  %v6058 = vpop.f32.mrf.mxu0
  %v6059 = vadd.f32 0.0, %v6058
  %v6060 = vpop.f32.mrf.mxu0
  %6061 = vdwg.mxu0
  %v6062 = vadd.f32 %v5874, %v6032
  %v6063 = vadd.f32 %v5875, %v6035
  %v6064 = vadd.f32 %v5876, %v6040
  %v6065 = vadd.f32 %v5877, %v6043
  %v6066 = vadd.f32 %v5878, %v6048
  %v6067 = vadd.f32 %v5879, %v6051
  %v6068 = vadd.f32 %v5880, %v6056
  %v6069 = vadd.f32 %v5881, %v6059
  %v6070 = vld [vmem:[%s10] sm:$0xff]
  %v6071 = vld [vmem:[%s10 + $0x8] sm:$0xff]
  %v6072 = vld [vmem:[%s10 + $0x10] sm:$0xff]
  %v6073 = vld [vmem:[%s10 + $0x18] sm:$0xff]
  %v6074 = vld [vmem:[%s10 + $0x20] sm:$0xff]
  %v6075 = vld [vmem:[%s10 + $0x28] sm:$0xff]
  %v6076 = vld [vmem:[%s10 + $0x30] sm:$0xff]
  %v6077 = vld [vmem:[%s10 + $0x38] sm:$0xff]
  %6079 = vset.pattern.permute.xlu0 0
  %6080 = vperm.xlu0 %6079, %v6070
  %v6081 = vpop.permute.xlu0 %6080
  %6084 = vset.pattern.permute.xlu0 0
  %6085 = vperm.xlu0 %6084, %v6071
  %v6086 = vpop.permute.xlu0 %6085
  %6089 = vset.pattern.permute.xlu0 0
  %6090 = vperm.xlu0 %6089, %v6072
  %v6091 = vpop.permute.xlu0 %6090
  %6094 = vset.pattern.permute.xlu0 0
  %6095 = vperm.xlu0 %6094, %v6073
  %v6096 = vpop.permute.xlu0 %6095
  %6099 = vset.pattern.permute.xlu0 0
  %6100 = vperm.xlu0 %6099, %v6074
  %v6101 = vpop.permute.xlu0 %6100
  %6104 = vset.pattern.permute.xlu0 0
  %6105 = vperm.xlu0 %6104, %v6075
  %v6106 = vpop.permute.xlu0 %6105
  %6109 = vset.pattern.permute.xlu0 0
  %6110 = vperm.xlu0 %6109, %v6076
  %v6111 = vpop.permute.xlu0 %6110
  %6114 = vset.pattern.permute.xlu0 0
  %6115 = vperm.xlu0 %6114, %v6077
  %v6116 = vpop.permute.xlu0 %6115
  %v6118 = vadd.f32 %v6062, %v6081
  %v6119 = vadd.f32 %v6063, %v6086
  %v6120 = vadd.f32 %v6064, %v6091
  %v6121 = vadd.f32 %v6065, %v6096
  %v6122 = vadd.f32 %v6066, %v6101
  %v6123 = vadd.f32 %v6067, %v6106
  %v6124 = vadd.f32 %v6068, %v6111
  %v6125 = vadd.f32 %v6069, %v6116
  %v6126 = vmax.f32 %v6118, 0.0
  %v6127 = vmax.f32 %v6119, 0.0
  %v6128 = vmax.f32 %v6120, 0.0
  %v6129 = vmax.f32 %v6121, 0.0
  %v6130 = vmax.f32 %v6122, 0.0
  %v6131 = vmax.f32 %v6123, 0.0
  %v6132 = vmax.f32 %v6124, 0.0
  %v6133 = vmax.f32 %v6125, 0.0
  %v6134 = vpack.c.bf16 %v6127, %v6126
  %v6135 = vpack.c.bf16 %v6129, %v6128
  %v6136 = vpack.c.bf16 %v6131, %v6130
  %v6137 = vpack.c.bf16 %v6133, %v6132
  %v6138 = vld [vmem:[%s11] sm:$0xf]
  %v6140 = vsel %vm575, %v6134, 0
  %v6143 = vsel %vm575, %v6135, 0
  %v6146 = vsel %vm575, %v6136, 0
  %v6149 = vsel %vm575, %v6137, 0
  %v6152 = vsel %vm588, %v6138, 0
  %6154 = vmatprep.subr.bf16.mxu0 0
  %6155 = vmatpush1.bf16.msra.mxu0 0
  %6156 = vmatprep.subr.bf16.mxu0 0
  %6157 = vmatpush1.bf16.msra.mxu0 0
  %6158 = vmatprep.subr.bf16.mxu0 0
  %6159 = vmatpush1.bf16.msra.mxu0 0
  %6160 = vmatprep.subr.bf16.mxu0 0
  %6161 = vmatpush1.bf16.msra.mxu0 0
  %6162 = vmatprep.subr.bf16.mxu0 0
  %6163 = vmatpush1.bf16.msra.mxu0 0
  %6164 = vmatprep.subr.bf16.mxu0 0
  %6165 = vmatpush1.bf16.msra.mxu0 0
  %6166 = vmatprep.subr.bf16.mxu0 0
  %6167 = vmatpush1.bf16.msra.mxu0 0
  %6168 = vmatprep.subr.bf16.mxu0 0
  %6169 = vmatpush1.bf16.msra.mxu0 %v6152
  %6170 = vmatprep.subr.bf16.mxu0 0
  %6171 = vmatpush2.bf16.msra.mxu0 0
  %6172 = vmatprep.subr.bf16.mxu0 0
  %6173 = vmatpush2.bf16.msra.mxu0 0
  %6174 = vmatprep.subr.bf16.mxu0 0
  %6175 = vmatpush2.bf16.msra.mxu0 0
  %6176 = vmatprep.subr.bf16.mxu0 0
  %6177 = vmatpush2.bf16.msra.mxu0 0
  %6178 = vmatprep.subr.bf16.mxu0 0
  %6179 = vmatpush2.bf16.msra.mxu0 0
  %6180 = vmatprep.subr.bf16.mxu0 0
  %6181 = vmatpush2.bf16.msra.mxu0 0
  %6182 = vmatprep.subr.bf16.mxu0 0
  %6183 = vmatpush2.bf16.msra.mxu0 0
  %6184 = vmatprep.subr.bf16.mxu0 0
  %6185 = vmatpush2.bf16.msra.mxu0 0
  %6186 = vmatprep.mubr.bf16.mxu0 0
  %6187 = vmatmul.mubr.bf16.gmra.mxu0 %v6140
  %v6188 = vpop.f32.mrf.mxu0
  %v6189 = vadd.f32 0.0, %v6188
  %v6190 = vpop.f32.mrf.mxu0
  %v6191 = vpop.f32.mrf.mxu0
  %v6192 = vadd.f32 0.0, %v6191
  %v6193 = vpop.f32.mrf.mxu0
  %6194 = vmatprep.mubr.bf16.mxu0 0
  %6195 = vmatmul.mubr.bf16.gmra.mxu0 %v6143
  %v6196 = vpop.f32.mrf.mxu0
  %v6197 = vadd.f32 0.0, %v6196
  %v6198 = vpop.f32.mrf.mxu0
  %v6199 = vpop.f32.mrf.mxu0
  %v6200 = vadd.f32 0.0, %v6199
  %v6201 = vpop.f32.mrf.mxu0
  %6202 = vmatprep.mubr.bf16.mxu0 0
  %6203 = vmatmul.mubr.bf16.gmra.mxu0 %v6146
  %v6204 = vpop.f32.mrf.mxu0
  %v6205 = vadd.f32 0.0, %v6204
  %v6206 = vpop.f32.mrf.mxu0
  %v6207 = vpop.f32.mrf.mxu0
  %v6208 = vadd.f32 0.0, %v6207
  %v6209 = vpop.f32.mrf.mxu0
  %6210 = vmatprep.mubr.bf16.mxu0 0
  %6211 = vmatmul.mubr.bf16.gmra.mxu0 %v6149
  %v6212 = vpop.f32.mrf.mxu0
  %v6213 = vadd.f32 0.0, %v6212
  %v6214 = vpop.f32.mrf.mxu0
  %v6215 = vpop.f32.mrf.mxu0
  %v6216 = vadd.f32 0.0, %v6215
  %v6217 = vpop.f32.mrf.mxu0
  %6218 = vdwg.mxu0
  %v6219 = vpack.c.bf16 %v6192, %v6189
  %v6220 = vpack.c.bf16 %v6200, %v6197
  %v6221 = vpack.c.bf16 %v6208, %v6205
  %v6222 = vpack.c.bf16 %v6216, %v6213
  %v6223 = vld [vmem:[%s12] sm:$0xf]
  %v6224 = vld [vmem:[%s12 + $0x4] sm:$0xf]
  %v6225 = vld [vmem:[%s12 + $0x8] sm:$0xf]
  %v6226 = vld [vmem:[%s12 + $0xc] sm:$0xf]
  %v6227 = vld [vmem:[%s12 + $0x10] sm:$0xf]
  %v6228 = vld [vmem:[%s12 + $0x14] sm:$0xf]
  %v6229 = vld [vmem:[%s12 + $0x18] sm:$0xf]
  %v6230 = vld [vmem:[%s12 + $0x1c] sm:$0xf]
  %s6231 = scalar_lea.vmem %s11, 4
  %v6232 = vld [vmem:[%s6231] sm:$0xf]
  %v6234 = vsel %vm588, %v6232, 0
  %6236 = vmatprep.subr.bf16.mxu0 0
  %6237 = vmatpush1.bf16.msra.mxu0 0
  %6238 = vmatprep.subr.bf16.mxu0 0
  %6239 = vmatpush1.bf16.msra.mxu0 0
  %6240 = vmatprep.subr.bf16.mxu0 0
  %6241 = vmatpush1.bf16.msra.mxu0 0
  %6242 = vmatprep.subr.bf16.mxu0 0
  %6243 = vmatpush1.bf16.msra.mxu0 0
  %6244 = vmatprep.subr.bf16.mxu0 0
  %6245 = vmatpush1.bf16.msra.mxu0 0
  %6246 = vmatprep.subr.bf16.mxu0 0
  %6247 = vmatpush1.bf16.msra.mxu0 0
  %6248 = vmatprep.subr.bf16.mxu0 0
  %6249 = vmatpush1.bf16.msra.mxu0 0
  %6250 = vmatprep.subr.bf16.mxu0 0
  %6251 = vmatpush1.bf16.msra.mxu0 %v6234
  %6252 = vmatprep.subr.bf16.mxu0 0
  %6253 = vmatpush2.bf16.msra.mxu0 0
  %6254 = vmatprep.subr.bf16.mxu0 0
  %6255 = vmatpush2.bf16.msra.mxu0 0
  %6256 = vmatprep.subr.bf16.mxu0 0
  %6257 = vmatpush2.bf16.msra.mxu0 0
  %6258 = vmatprep.subr.bf16.mxu0 0
  %6259 = vmatpush2.bf16.msra.mxu0 0
  %6260 = vmatprep.subr.bf16.mxu0 0
  %6261 = vmatpush2.bf16.msra.mxu0 0
  %6262 = vmatprep.subr.bf16.mxu0 0
  %6263 = vmatpush2.bf16.msra.mxu0 0
  %6264 = vmatprep.subr.bf16.mxu0 0
  %6265 = vmatpush2.bf16.msra.mxu0 0
  %6266 = vmatprep.subr.bf16.mxu0 0
  %6267 = vmatpush2.bf16.msra.mxu0 0
  %6268 = vmatprep.mubr.bf16.mxu0 0
  %6269 = vmatmul.mubr.bf16.gmra.mxu0 %v6140
  %v6270 = vpop.f32.mrf.mxu0
  %v6271 = vadd.f32 0.0, %v6270
  %v6272 = vpop.f32.mrf.mxu0
  %v6273 = vpop.f32.mrf.mxu0
  %v6274 = vadd.f32 0.0, %v6273
  %v6275 = vpop.f32.mrf.mxu0
  %6276 = vmatprep.mubr.bf16.mxu0 0
  %6277 = vmatmul.mubr.bf16.gmra.mxu0 %v6143
  %v6278 = vpop.f32.mrf.mxu0
  %v6279 = vadd.f32 0.0, %v6278
  %v6280 = vpop.f32.mrf.mxu0
  %v6281 = vpop.f32.mrf.mxu0
  %v6282 = vadd.f32 0.0, %v6281
  %v6283 = vpop.f32.mrf.mxu0
  %6284 = vmatprep.mubr.bf16.mxu0 0
  %6285 = vmatmul.mubr.bf16.gmra.mxu0 %v6146
  %v6286 = vpop.f32.mrf.mxu0
  %v6287 = vadd.f32 0.0, %v6286
  %v6288 = vpop.f32.mrf.mxu0
  %v6289 = vpop.f32.mrf.mxu0
  %v6290 = vadd.f32 0.0, %v6289
  %v6291 = vpop.f32.mrf.mxu0
  %6292 = vmatprep.mubr.bf16.mxu0 0
  %6293 = vmatmul.mubr.bf16.gmra.mxu0 %v6149
  %v6294 = vpop.f32.mrf.mxu0
  %v6295 = vadd.f32 0.0, %v6294
  %v6296 = vpop.f32.mrf.mxu0
  %v6297 = vpop.f32.mrf.mxu0
  %v6298 = vadd.f32 0.0, %v6297
  %v6299 = vpop.f32.mrf.mxu0
  %6300 = vdwg.mxu0
  %v6301 = vpack.c.bf16 %v6274, %v6271
  %v6302 = vpack.c.bf16 %v6282, %v6279
  %v6303 = vpack.c.bf16 %v6290, %v6287
  %v6304 = vpack.c.bf16 %v6298, %v6295
  %s6305 = scalar_lea.vmem %s12, 32
  %v6306 = vld [vmem:[%s6305] sm:$0xf]
  %v6307 = vld [vmem:[%s6305 + $0x4] sm:$0xf]
  %v6308 = vld [vmem:[%s6305 + $0x8] sm:$0xf]
  %v6309 = vld [vmem:[%s6305 + $0xc] sm:$0xf]
  %v6310 = vld [vmem:[%s6305 + $0x10] sm:$0xf]
  %v6311 = vld [vmem:[%s6305 + $0x14] sm:$0xf]
  %v6312 = vld [vmem:[%s6305 + $0x18] sm:$0xf]
  %v6313 = vld [vmem:[%s6305 + $0x1c] sm:$0xf]
  %v6322 = vunpack.c.l.b16 %v6306
  %v6323 = vunpack.c.l.b16 %v6307
  %v6324 = vunpack.c.l.b16 %v6308
  %v6325 = vunpack.c.l.b16 %v6309
  %v6326 = vunpack.c.l.b16 %v6310
  %v6327 = vunpack.c.l.b16 %v6311
  %v6328 = vunpack.c.l.b16 %v6312
  %v6329 = vunpack.c.l.b16 %v6313
  %v6330 = vpack.c.b16 %v6323, %v6322
  %v6331 = vpack.c.b16 %v6325, %v6324
  %v6332 = vpack.c.b16 %v6327, %v6326
  %v6333 = vpack.c.b16 %v6329, %v6328
  %v6335 = vsel %vm2040, %v6330, 0
  %v6338 = vsel %vm2040, %v6331, 0
  %v6341 = vsel %vm2040, %v6332, 0
  %v6344 = vsel %vm2040, %v6333, 0
  %6346 = vmatprep.subr.bf16.mxu0 0
  %6347 = vmatpush1.bf16.msra.mxu0 0
  %6348 = vmatprep.subr.bf16.mxu0 0
  %6349 = vmatpush1.bf16.msra.mxu0 0
  %6350 = vmatprep.subr.bf16.mxu0 0
  %6351 = vmatpush1.bf16.msra.mxu0 0
  %6352 = vmatprep.subr.bf16.mxu0 0
  %6353 = vmatpush1.bf16.msra.mxu0 0
  %6354 = vmatprep.subr.bf16.mxu0 0
  %6355 = vmatpush1.bf16.msra.mxu0 %v6304
  %6356 = vmatprep.subr.bf16.mxu0 0
  %6357 = vmatpush1.bf16.msra.mxu0 %v6303
  %6358 = vmatprep.subr.bf16.mxu0 0
  %6359 = vmatpush1.bf16.msra.mxu0 %v6302
  %6360 = vmatprep.subr.bf16.mxu0 0
  %6361 = vmatpush1.bf16.msra.mxu0 %v6301
  %6362 = vmatprep.subr.bf16.mxu0 0
  %6363 = vmatpush2.bf16.msra.mxu0 0
  %6364 = vmatprep.subr.bf16.mxu0 0
  %6365 = vmatpush2.bf16.msra.mxu0 0
  %6366 = vmatprep.subr.bf16.mxu0 0
  %6367 = vmatpush2.bf16.msra.mxu0 0
  %6368 = vmatprep.subr.bf16.mxu0 0
  %6369 = vmatpush2.bf16.msra.mxu0 0
  %6370 = vmatprep.subr.bf16.mxu0 0
  %6371 = vmatpush2.bf16.msra.mxu0 0
  %6372 = vmatprep.subr.bf16.mxu0 0
  %6373 = vmatpush2.bf16.msra.mxu0 0
  %6374 = vmatprep.subr.bf16.mxu0 0
  %6375 = vmatpush2.bf16.msra.mxu0 0
  %6376 = vmatprep.subr.bf16.mxu0 0
  %6377 = vmatpush2.bf16.msra.mxu0 0
  %6378 = vmatprep.mubr.bf16.mxu0 0
  %6379 = vmatmul.mubr.bf16.gmra.mxu0 %v6335
  %v6380 = vpop.f32.mrf.mxu0
  %v6381 = vadd.f32 0.0, %v6380
  %v6382 = vpop.f32.mrf.mxu0
  %v6383 = vpop.f32.mrf.mxu0
  %v6384 = vadd.f32 0.0, %v6383
  %v6385 = vpop.f32.mrf.mxu0
  %6386 = vmatprep.mubr.bf16.mxu0 0
  %6387 = vmatmul.mubr.bf16.gmra.mxu0 %v6338
  %v6388 = vpop.f32.mrf.mxu0
  %v6389 = vadd.f32 0.0, %v6388
  %v6390 = vpop.f32.mrf.mxu0
  %v6391 = vpop.f32.mrf.mxu0
  %v6392 = vadd.f32 0.0, %v6391
  %v6393 = vpop.f32.mrf.mxu0
  %6394 = vmatprep.mubr.bf16.mxu0 0
  %6395 = vmatmul.mubr.bf16.gmra.mxu0 %v6341
  %v6396 = vpop.f32.mrf.mxu0
  %v6397 = vadd.f32 0.0, %v6396
  %v6398 = vpop.f32.mrf.mxu0
  %v6399 = vpop.f32.mrf.mxu0
  %v6400 = vadd.f32 0.0, %v6399
  %v6401 = vpop.f32.mrf.mxu0
  %6402 = vmatprep.mubr.bf16.mxu0 0
  %6403 = vmatmul.mubr.bf16.gmra.mxu0 %v6344
  %v6404 = vpop.f32.mrf.mxu0
  %v6405 = vadd.f32 0.0, %v6404
  %v6406 = vpop.f32.mrf.mxu0
  %v6407 = vpop.f32.mrf.mxu0
  %v6408 = vadd.f32 0.0, %v6407
  %v6409 = vpop.f32.mrf.mxu0
  %6410 = vdwg.mxu0
  %v6419 = vunpack.c.l.b16 %v6223
  %v6420 = vunpack.c.l.b16 %v6224
  %v6421 = vunpack.c.l.b16 %v6225
  %v6422 = vunpack.c.l.b16 %v6226
  %v6423 = vunpack.c.l.b16 %v6227
  %v6424 = vunpack.c.l.b16 %v6228
  %v6425 = vunpack.c.l.b16 %v6229
  %v6426 = vunpack.c.l.b16 %v6230
  %v6427 = vpack.c.b16 %v6420, %v6419
  %v6428 = vpack.c.b16 %v6422, %v6421
  %v6429 = vpack.c.b16 %v6424, %v6423
  %v6430 = vpack.c.b16 %v6426, %v6425
  %v6432 = vsel %vm2040, %v6427, 0
  %v6435 = vsel %vm2040, %v6428, 0
  %v6438 = vsel %vm2040, %v6429, 0
  %v6441 = vsel %vm2040, %v6430, 0
  %6443 = vmatprep.subr.bf16.mxu0 0
  %6444 = vmatpush1.bf16.msra.mxu0 0
  %6445 = vmatprep.subr.bf16.mxu0 0
  %6446 = vmatpush1.bf16.msra.mxu0 0
  %6447 = vmatprep.subr.bf16.mxu0 0
  %6448 = vmatpush1.bf16.msra.mxu0 0
  %6449 = vmatprep.subr.bf16.mxu0 0
  %6450 = vmatpush1.bf16.msra.mxu0 0
  %6451 = vmatprep.subr.bf16.mxu0 0
  %6452 = vmatpush1.bf16.msra.mxu0 %v6222
  %6453 = vmatprep.subr.bf16.mxu0 0
  %6454 = vmatpush1.bf16.msra.mxu0 %v6221
  %6455 = vmatprep.subr.bf16.mxu0 0
  %6456 = vmatpush1.bf16.msra.mxu0 %v6220
  %6457 = vmatprep.subr.bf16.mxu0 0
  %6458 = vmatpush1.bf16.msra.mxu0 %v6219
  %6459 = vmatprep.subr.bf16.mxu0 0
  %6460 = vmatpush2.bf16.msra.mxu0 0
  %6461 = vmatprep.subr.bf16.mxu0 0
  %6462 = vmatpush2.bf16.msra.mxu0 0
  %6463 = vmatprep.subr.bf16.mxu0 0
  %6464 = vmatpush2.bf16.msra.mxu0 0
  %6465 = vmatprep.subr.bf16.mxu0 0
  %6466 = vmatpush2.bf16.msra.mxu0 0
  %6467 = vmatprep.subr.bf16.mxu0 0
  %6468 = vmatpush2.bf16.msra.mxu0 0
  %6469 = vmatprep.subr.bf16.mxu0 0
  %6470 = vmatpush2.bf16.msra.mxu0 0
  %6471 = vmatprep.subr.bf16.mxu0 0
  %6472 = vmatpush2.bf16.msra.mxu0 0
  %6473 = vmatprep.subr.bf16.mxu0 0
  %6474 = vmatpush2.bf16.msra.mxu0 0
  %6475 = vmatprep.mubr.bf16.mxu0 0
  %6476 = vmatmul.mubr.bf16.gmra.mxu0 %v6432
  %v6477 = vpop.f32.mrf.mxu0
  %v6478 = vadd.f32 %v6381, %v6477
  %v6479 = vpop.f32.mrf.mxu0
  %v6480 = vpop.f32.mrf.mxu0
  %v6481 = vadd.f32 %v6384, %v6480
  %v6482 = vpop.f32.mrf.mxu0
  %6483 = vmatprep.mubr.bf16.mxu0 0
  %6484 = vmatmul.mubr.bf16.gmra.mxu0 %v6435
  %v6485 = vpop.f32.mrf.mxu0
  %v6486 = vadd.f32 %v6389, %v6485
  %v6487 = vpop.f32.mrf.mxu0
  %v6488 = vpop.f32.mrf.mxu0
  %v6489 = vadd.f32 %v6392, %v6488
  %v6490 = vpop.f32.mrf.mxu0
  %6491 = vmatprep.mubr.bf16.mxu0 0
  %6492 = vmatmul.mubr.bf16.gmra.mxu0 %v6438
  %v6493 = vpop.f32.mrf.mxu0
  %v6494 = vadd.f32 %v6397, %v6493
  %v6495 = vpop.f32.mrf.mxu0
  %v6496 = vpop.f32.mrf.mxu0
  %v6497 = vadd.f32 %v6400, %v6496
  %v6498 = vpop.f32.mrf.mxu0
  %6499 = vmatprep.mubr.bf16.mxu0 0
  %6500 = vmatmul.mubr.bf16.gmra.mxu0 %v6441
  %v6501 = vpop.f32.mrf.mxu0
  %v6502 = vadd.f32 %v6405, %v6501
  %v6503 = vpop.f32.mrf.mxu0
  %v6504 = vpop.f32.mrf.mxu0
  %v6505 = vadd.f32 %v6408, %v6504
  %v6506 = vpop.f32.mrf.mxu0
  %6507 = vdwg.mxu0
  %s6508 = scalar_lea.vmem %s11, 8
  %v6509 = vld [vmem:[%s6508] sm:$0xf]
  %v6511 = vsel %vm588, %v6509, 0
  %6513 = vmatprep.subr.bf16.mxu0 0
  %6514 = vmatpush1.bf16.msra.mxu0 0
  %6515 = vmatprep.subr.bf16.mxu0 0
  %6516 = vmatpush1.bf16.msra.mxu0 0
  %6517 = vmatprep.subr.bf16.mxu0 0
  %6518 = vmatpush1.bf16.msra.mxu0 0
  %6519 = vmatprep.subr.bf16.mxu0 0
  %6520 = vmatpush1.bf16.msra.mxu0 0
  %6521 = vmatprep.subr.bf16.mxu0 0
  %6522 = vmatpush1.bf16.msra.mxu0 0
  %6523 = vmatprep.subr.bf16.mxu0 0
  %6524 = vmatpush1.bf16.msra.mxu0 0
  %6525 = vmatprep.subr.bf16.mxu0 0
  %6526 = vmatpush1.bf16.msra.mxu0 0
  %6527 = vmatprep.subr.bf16.mxu0 0
  %6528 = vmatpush1.bf16.msra.mxu0 %v6511
  %6529 = vmatprep.subr.bf16.mxu0 0
  %6530 = vmatpush2.bf16.msra.mxu0 0
  %6531 = vmatprep.subr.bf16.mxu0 0
  %6532 = vmatpush2.bf16.msra.mxu0 0
  %6533 = vmatprep.subr.bf16.mxu0 0
  %6534 = vmatpush2.bf16.msra.mxu0 0
  %6535 = vmatprep.subr.bf16.mxu0 0
  %6536 = vmatpush2.bf16.msra.mxu0 0
  %6537 = vmatprep.subr.bf16.mxu0 0
  %6538 = vmatpush2.bf16.msra.mxu0 0
  %6539 = vmatprep.subr.bf16.mxu0 0
  %6540 = vmatpush2.bf16.msra.mxu0 0
  %6541 = vmatprep.subr.bf16.mxu0 0
  %6542 = vmatpush2.bf16.msra.mxu0 0
  %6543 = vmatprep.subr.bf16.mxu0 0
  %6544 = vmatpush2.bf16.msra.mxu0 0
  %6545 = vmatprep.mubr.bf16.mxu0 0
  %6546 = vmatmul.mubr.bf16.gmra.mxu0 %v6140
  %v6547 = vpop.f32.mrf.mxu0
  %v6548 = vadd.f32 0.0, %v6547
  %v6549 = vpop.f32.mrf.mxu0
  %v6550 = vpop.f32.mrf.mxu0
  %v6551 = vadd.f32 0.0, %v6550
  %v6552 = vpop.f32.mrf.mxu0
  %6553 = vmatprep.mubr.bf16.mxu0 0
  %6554 = vmatmul.mubr.bf16.gmra.mxu0 %v6143
  %v6555 = vpop.f32.mrf.mxu0
  %v6556 = vadd.f32 0.0, %v6555
  %v6557 = vpop.f32.mrf.mxu0
  %v6558 = vpop.f32.mrf.mxu0
  %v6559 = vadd.f32 0.0, %v6558
  %v6560 = vpop.f32.mrf.mxu0
  %6561 = vmatprep.mubr.bf16.mxu0 0
  %6562 = vmatmul.mubr.bf16.gmra.mxu0 %v6146
  %v6563 = vpop.f32.mrf.mxu0
  %v6564 = vadd.f32 0.0, %v6563
  %v6565 = vpop.f32.mrf.mxu0
  %v6566 = vpop.f32.mrf.mxu0
  %v6567 = vadd.f32 0.0, %v6566
  %v6568 = vpop.f32.mrf.mxu0
  %6569 = vmatprep.mubr.bf16.mxu0 0
  %6570 = vmatmul.mubr.bf16.gmra.mxu0 %v6149
  %v6571 = vpop.f32.mrf.mxu0
  %v6572 = vadd.f32 0.0, %v6571
  %v6573 = vpop.f32.mrf.mxu0
  %v6574 = vpop.f32.mrf.mxu0
  %v6575 = vadd.f32 0.0, %v6574
  %v6576 = vpop.f32.mrf.mxu0
  %6577 = vdwg.mxu0
  %v6578 = vpack.c.bf16 %v6551, %v6548
  %v6579 = vpack.c.bf16 %v6559, %v6556
  %v6580 = vpack.c.bf16 %v6567, %v6564
  %v6581 = vpack.c.bf16 %v6575, %v6572
  %s6582 = scalar_lea.vmem %s12, 64
  %v6583 = vld [vmem:[%s6582] sm:$0xf]
  %v6584 = vld [vmem:[%s6582 + $0x4] sm:$0xf]
  %v6585 = vld [vmem:[%s6582 + $0x8] sm:$0xf]
  %v6586 = vld [vmem:[%s6582 + $0xc] sm:$0xf]
  %v6587 = vld [vmem:[%s6582 + $0x10] sm:$0xf]
  %v6588 = vld [vmem:[%s6582 + $0x14] sm:$0xf]
  %v6589 = vld [vmem:[%s6582 + $0x18] sm:$0xf]
  %v6590 = vld [vmem:[%s6582 + $0x1c] sm:$0xf]
  %v6599 = vunpack.c.l.b16 %v6583
  %v6600 = vunpack.c.l.b16 %v6584
  %v6601 = vunpack.c.l.b16 %v6585
  %v6602 = vunpack.c.l.b16 %v6586
  %v6603 = vunpack.c.l.b16 %v6587
  %v6604 = vunpack.c.l.b16 %v6588
  %v6605 = vunpack.c.l.b16 %v6589
  %v6606 = vunpack.c.l.b16 %v6590
  %v6607 = vpack.c.b16 %v6600, %v6599
  %v6608 = vpack.c.b16 %v6602, %v6601
  %v6609 = vpack.c.b16 %v6604, %v6603
  %v6610 = vpack.c.b16 %v6606, %v6605
  %v6612 = vsel %vm2040, %v6607, 0
  %v6615 = vsel %vm2040, %v6608, 0
  %v6618 = vsel %vm2040, %v6609, 0
  %v6621 = vsel %vm2040, %v6610, 0
  %6623 = vmatprep.subr.bf16.mxu0 0
  %6624 = vmatpush1.bf16.msra.mxu0 0
  %6625 = vmatprep.subr.bf16.mxu0 0
  %6626 = vmatpush1.bf16.msra.mxu0 0
  %6627 = vmatprep.subr.bf16.mxu0 0
  %6628 = vmatpush1.bf16.msra.mxu0 0
  %6629 = vmatprep.subr.bf16.mxu0 0
  %6630 = vmatpush1.bf16.msra.mxu0 0
  %6631 = vmatprep.subr.bf16.mxu0 0
  %6632 = vmatpush1.bf16.msra.mxu0 %v6581
  %6633 = vmatprep.subr.bf16.mxu0 0
  %6634 = vmatpush1.bf16.msra.mxu0 %v6580
  %6635 = vmatprep.subr.bf16.mxu0 0
  %6636 = vmatpush1.bf16.msra.mxu0 %v6579
  %6637 = vmatprep.subr.bf16.mxu0 0
  %6638 = vmatpush1.bf16.msra.mxu0 %v6578
  %6639 = vmatprep.subr.bf16.mxu0 0
  %6640 = vmatpush2.bf16.msra.mxu0 0
  %6641 = vmatprep.subr.bf16.mxu0 0
  %6642 = vmatpush2.bf16.msra.mxu0 0
  %6643 = vmatprep.subr.bf16.mxu0 0
  %6644 = vmatpush2.bf16.msra.mxu0 0
  %6645 = vmatprep.subr.bf16.mxu0 0
  %6646 = vmatpush2.bf16.msra.mxu0 0
  %6647 = vmatprep.subr.bf16.mxu0 0
  %6648 = vmatpush2.bf16.msra.mxu0 0
  %6649 = vmatprep.subr.bf16.mxu0 0
  %6650 = vmatpush2.bf16.msra.mxu0 0
  %6651 = vmatprep.subr.bf16.mxu0 0
  %6652 = vmatpush2.bf16.msra.mxu0 0
  %6653 = vmatprep.subr.bf16.mxu0 0
  %6654 = vmatpush2.bf16.msra.mxu0 0
  %6655 = vmatprep.mubr.bf16.mxu0 0
  %6656 = vmatmul.mubr.bf16.gmra.mxu0 %v6612
  %v6657 = vpop.f32.mrf.mxu0
  %v6658 = vadd.f32 0.0, %v6657
  %v6659 = vpop.f32.mrf.mxu0
  %v6660 = vpop.f32.mrf.mxu0
  %v6661 = vadd.f32 0.0, %v6660
  %v6662 = vpop.f32.mrf.mxu0
  %6663 = vmatprep.mubr.bf16.mxu0 0
  %6664 = vmatmul.mubr.bf16.gmra.mxu0 %v6615
  %v6665 = vpop.f32.mrf.mxu0
  %v6666 = vadd.f32 0.0, %v6665
  %v6667 = vpop.f32.mrf.mxu0
  %v6668 = vpop.f32.mrf.mxu0
  %v6669 = vadd.f32 0.0, %v6668
  %v6670 = vpop.f32.mrf.mxu0
  %6671 = vmatprep.mubr.bf16.mxu0 0
  %6672 = vmatmul.mubr.bf16.gmra.mxu0 %v6618
  %v6673 = vpop.f32.mrf.mxu0
  %v6674 = vadd.f32 0.0, %v6673
  %v6675 = vpop.f32.mrf.mxu0
  %v6676 = vpop.f32.mrf.mxu0
  %v6677 = vadd.f32 0.0, %v6676
  %v6678 = vpop.f32.mrf.mxu0
  %6679 = vmatprep.mubr.bf16.mxu0 0
  %6680 = vmatmul.mubr.bf16.gmra.mxu0 %v6621
  %v6681 = vpop.f32.mrf.mxu0
  %v6682 = vadd.f32 0.0, %v6681
  %v6683 = vpop.f32.mrf.mxu0
  %v6684 = vpop.f32.mrf.mxu0
  %v6685 = vadd.f32 0.0, %v6684
  %v6686 = vpop.f32.mrf.mxu0
  %6687 = vdwg.mxu0
  %v6688 = vadd.f32 %v6478, %v6658
  %v6689 = vadd.f32 %v6481, %v6661
  %v6690 = vadd.f32 %v6486, %v6666
  %v6691 = vadd.f32 %v6489, %v6669
  %v6692 = vadd.f32 %v6494, %v6674
  %v6693 = vadd.f32 %v6497, %v6677
  %v6694 = vadd.f32 %v6502, %v6682
  %v6695 = vadd.f32 %v6505, %v6685
  %s6696 = scalar_lea.vmem %s11, 12
  %v6697 = vld [vmem:[%s6696] sm:$0xf]
  %v6699 = vsel %vm588, %v6697, 0
  %6701 = vmatprep.subr.bf16.mxu0 0
  %6702 = vmatpush1.bf16.msra.mxu0 0
  %6703 = vmatprep.subr.bf16.mxu0 0
  %6704 = vmatpush1.bf16.msra.mxu0 0
  %6705 = vmatprep.subr.bf16.mxu0 0
  %6706 = vmatpush1.bf16.msra.mxu0 0
  %6707 = vmatprep.subr.bf16.mxu0 0
  %6708 = vmatpush1.bf16.msra.mxu0 0
  %6709 = vmatprep.subr.bf16.mxu0 0
  %6710 = vmatpush1.bf16.msra.mxu0 0
  %6711 = vmatprep.subr.bf16.mxu0 0
  %6712 = vmatpush1.bf16.msra.mxu0 0
  %6713 = vmatprep.subr.bf16.mxu0 0
  %6714 = vmatpush1.bf16.msra.mxu0 0
  %6715 = vmatprep.subr.bf16.mxu0 0
  %6716 = vmatpush1.bf16.msra.mxu0 %v6699
  %6717 = vmatprep.subr.bf16.mxu0 0
  %6718 = vmatpush2.bf16.msra.mxu0 0
  %6719 = vmatprep.subr.bf16.mxu0 0
  %6720 = vmatpush2.bf16.msra.mxu0 0
  %6721 = vmatprep.subr.bf16.mxu0 0
  %6722 = vmatpush2.bf16.msra.mxu0 0
  %6723 = vmatprep.subr.bf16.mxu0 0
  %6724 = vmatpush2.bf16.msra.mxu0 0
  %6725 = vmatprep.subr.bf16.mxu0 0
  %6726 = vmatpush2.bf16.msra.mxu0 0
  %6727 = vmatprep.subr.bf16.mxu0 0
  %6728 = vmatpush2.bf16.msra.mxu0 0
  %6729 = vmatprep.subr.bf16.mxu0 0
  %6730 = vmatpush2.bf16.msra.mxu0 0
  %6731 = vmatprep.subr.bf16.mxu0 0
  %6732 = vmatpush2.bf16.msra.mxu0 0
  %6733 = vmatprep.mubr.bf16.mxu0 0
  %6734 = vmatmul.mubr.bf16.gmra.mxu0 %v6140
  %v6735 = vpop.f32.mrf.mxu0
  %v6736 = vadd.f32 0.0, %v6735
  %v6737 = vpop.f32.mrf.mxu0
  %v6738 = vpop.f32.mrf.mxu0
  %v6739 = vadd.f32 0.0, %v6738
  %v6740 = vpop.f32.mrf.mxu0
  %6741 = vmatprep.mubr.bf16.mxu0 0
  %6742 = vmatmul.mubr.bf16.gmra.mxu0 %v6143
  %v6743 = vpop.f32.mrf.mxu0
  %v6744 = vadd.f32 0.0, %v6743
  %v6745 = vpop.f32.mrf.mxu0
  %v6746 = vpop.f32.mrf.mxu0
  %v6747 = vadd.f32 0.0, %v6746
  %v6748 = vpop.f32.mrf.mxu0
  %6749 = vmatprep.mubr.bf16.mxu0 0
  %6750 = vmatmul.mubr.bf16.gmra.mxu0 %v6146
  %v6751 = vpop.f32.mrf.mxu0
  %v6752 = vadd.f32 0.0, %v6751
  %v6753 = vpop.f32.mrf.mxu0
  %v6754 = vpop.f32.mrf.mxu0
  %v6755 = vadd.f32 0.0, %v6754
  %v6756 = vpop.f32.mrf.mxu0
  %6757 = vmatprep.mubr.bf16.mxu0 0
  %6758 = vmatmul.mubr.bf16.gmra.mxu0 %v6149
  %v6759 = vpop.f32.mrf.mxu0
  %v6760 = vadd.f32 0.0, %v6759
  %v6761 = vpop.f32.mrf.mxu0
  %v6762 = vpop.f32.mrf.mxu0
  %v6763 = vadd.f32 0.0, %v6762
  %v6764 = vpop.f32.mrf.mxu0
  %6765 = vdwg.mxu0
  %v6766 = vpack.c.bf16 %v6739, %v6736
  %v6767 = vpack.c.bf16 %v6747, %v6744
  %v6768 = vpack.c.bf16 %v6755, %v6752
  %v6769 = vpack.c.bf16 %v6763, %v6760
  %s6770 = scalar_lea.vmem %s12, 96
  %v6771 = vld [vmem:[%s6770] sm:$0xf]
  %v6772 = vld [vmem:[%s6770 + $0x4] sm:$0xf]
  %v6773 = vld [vmem:[%s6770 + $0x8] sm:$0xf]
  %v6774 = vld [vmem:[%s6770 + $0xc] sm:$0xf]
  %v6775 = vld [vmem:[%s6770 + $0x10] sm:$0xf]
  %v6776 = vld [vmem:[%s6770 + $0x14] sm:$0xf]
  %v6777 = vld [vmem:[%s6770 + $0x18] sm:$0xf]
  %v6778 = vld [vmem:[%s6770 + $0x1c] sm:$0xf]
  %v6787 = vunpack.c.l.b16 %v6771
  %v6788 = vunpack.c.l.b16 %v6772
  %v6789 = vunpack.c.l.b16 %v6773
  %v6790 = vunpack.c.l.b16 %v6774
  %v6791 = vunpack.c.l.b16 %v6775
  %v6792 = vunpack.c.l.b16 %v6776
  %v6793 = vunpack.c.l.b16 %v6777
  %v6794 = vunpack.c.l.b16 %v6778
  %v6795 = vpack.c.b16 %v6788, %v6787
  %v6796 = vpack.c.b16 %v6790, %v6789
  %v6797 = vpack.c.b16 %v6792, %v6791
  %v6798 = vpack.c.b16 %v6794, %v6793
  %v6800 = vsel %vm2040, %v6795, 0
  %v6803 = vsel %vm2040, %v6796, 0
  %v6806 = vsel %vm2040, %v6797, 0
  %v6809 = vsel %vm2040, %v6798, 0
  %6811 = vmatprep.subr.bf16.mxu0 0
  %6812 = vmatpush1.bf16.msra.mxu0 0
  %6813 = vmatprep.subr.bf16.mxu0 0
  %6814 = vmatpush1.bf16.msra.mxu0 0
  %6815 = vmatprep.subr.bf16.mxu0 0
  %6816 = vmatpush1.bf16.msra.mxu0 0
  %6817 = vmatprep.subr.bf16.mxu0 0
  %6818 = vmatpush1.bf16.msra.mxu0 0
  %6819 = vmatprep.subr.bf16.mxu0 0
  %6820 = vmatpush1.bf16.msra.mxu0 %v6769
  %6821 = vmatprep.subr.bf16.mxu0 0
  %6822 = vmatpush1.bf16.msra.mxu0 %v6768
  %6823 = vmatprep.subr.bf16.mxu0 0
  %6824 = vmatpush1.bf16.msra.mxu0 %v6767
  %6825 = vmatprep.subr.bf16.mxu0 0
  %6826 = vmatpush1.bf16.msra.mxu0 %v6766
  %6827 = vmatprep.subr.bf16.mxu0 0
  %6828 = vmatpush2.bf16.msra.mxu0 0
  %6829 = vmatprep.subr.bf16.mxu0 0
  %6830 = vmatpush2.bf16.msra.mxu0 0
  %6831 = vmatprep.subr.bf16.mxu0 0
  %6832 = vmatpush2.bf16.msra.mxu0 0
  %6833 = vmatprep.subr.bf16.mxu0 0
  %6834 = vmatpush2.bf16.msra.mxu0 0
  %6835 = vmatprep.subr.bf16.mxu0 0
  %6836 = vmatpush2.bf16.msra.mxu0 0
  %6837 = vmatprep.subr.bf16.mxu0 0
  %6838 = vmatpush2.bf16.msra.mxu0 0
  %6839 = vmatprep.subr.bf16.mxu0 0
  %6840 = vmatpush2.bf16.msra.mxu0 0
  %6841 = vmatprep.subr.bf16.mxu0 0
  %6842 = vmatpush2.bf16.msra.mxu0 0
  %6843 = vmatprep.mubr.bf16.mxu0 0
  %6844 = vmatmul.mubr.bf16.gmra.mxu0 %v6800
  %v6845 = vpop.f32.mrf.mxu0
  %v6846 = vadd.f32 0.0, %v6845
  %v6847 = vpop.f32.mrf.mxu0
  %v6848 = vpop.f32.mrf.mxu0
  %v6849 = vadd.f32 0.0, %v6848
  %v6850 = vpop.f32.mrf.mxu0
  %6851 = vmatprep.mubr.bf16.mxu0 0
  %6852 = vmatmul.mubr.bf16.gmra.mxu0 %v6803
  %v6853 = vpop.f32.mrf.mxu0
  %v6854 = vadd.f32 0.0, %v6853
  %v6855 = vpop.f32.mrf.mxu0
  %v6856 = vpop.f32.mrf.mxu0
  %v6857 = vadd.f32 0.0, %v6856
  %v6858 = vpop.f32.mrf.mxu0
  %6859 = vmatprep.mubr.bf16.mxu0 0
  %6860 = vmatmul.mubr.bf16.gmra.mxu0 %v6806
  %v6861 = vpop.f32.mrf.mxu0
  %v6862 = vadd.f32 0.0, %v6861
  %v6863 = vpop.f32.mrf.mxu0
  %v6864 = vpop.f32.mrf.mxu0
  %v6865 = vadd.f32 0.0, %v6864
  %v6866 = vpop.f32.mrf.mxu0
  %6867 = vmatprep.mubr.bf16.mxu0 0
  %6868 = vmatmul.mubr.bf16.gmra.mxu0 %v6809
  %v6869 = vpop.f32.mrf.mxu0
  %v6870 = vadd.f32 0.0, %v6869
  %v6871 = vpop.f32.mrf.mxu0
  %v6872 = vpop.f32.mrf.mxu0
  %v6873 = vadd.f32 0.0, %v6872
  %v6874 = vpop.f32.mrf.mxu0
  %6875 = vdwg.mxu0
  %v6876 = vadd.f32 %v6688, %v6846
  %v6877 = vadd.f32 %v6689, %v6849
  %v6878 = vadd.f32 %v6690, %v6854
  %v6879 = vadd.f32 %v6691, %v6857
  %v6880 = vadd.f32 %v6692, %v6862
  %v6881 = vadd.f32 %v6693, %v6865
  %v6882 = vadd.f32 %v6694, %v6870
  %v6883 = vadd.f32 %v6695, %v6873
  %s6884 = scalar_lea.vmem %s11, 16
  %v6885 = vld [vmem:[%s6884] sm:$0xf]
  %v6887 = vsel %vm588, %v6885, 0
  %6889 = vmatprep.subr.bf16.mxu0 0
  %6890 = vmatpush1.bf16.msra.mxu0 0
  %6891 = vmatprep.subr.bf16.mxu0 0
  %6892 = vmatpush1.bf16.msra.mxu0 0
  %6893 = vmatprep.subr.bf16.mxu0 0
  %6894 = vmatpush1.bf16.msra.mxu0 0
  %6895 = vmatprep.subr.bf16.mxu0 0
  %6896 = vmatpush1.bf16.msra.mxu0 0
  %6897 = vmatprep.subr.bf16.mxu0 0
  %6898 = vmatpush1.bf16.msra.mxu0 0
  %6899 = vmatprep.subr.bf16.mxu0 0
  %6900 = vmatpush1.bf16.msra.mxu0 0
  %6901 = vmatprep.subr.bf16.mxu0 0
  %6902 = vmatpush1.bf16.msra.mxu0 0
  %6903 = vmatprep.subr.bf16.mxu0 0
  %6904 = vmatpush1.bf16.msra.mxu0 %v6887
  %6905 = vmatprep.subr.bf16.mxu0 0
  %6906 = vmatpush2.bf16.msra.mxu0 0
  %6907 = vmatprep.subr.bf16.mxu0 0
  %6908 = vmatpush2.bf16.msra.mxu0 0
  %6909 = vmatprep.subr.bf16.mxu0 0
  %6910 = vmatpush2.bf16.msra.mxu0 0
  %6911 = vmatprep.subr.bf16.mxu0 0
  %6912 = vmatpush2.bf16.msra.mxu0 0
  %6913 = vmatprep.subr.bf16.mxu0 0
  %6914 = vmatpush2.bf16.msra.mxu0 0
  %6915 = vmatprep.subr.bf16.mxu0 0
  %6916 = vmatpush2.bf16.msra.mxu0 0
  %6917 = vmatprep.subr.bf16.mxu0 0
  %6918 = vmatpush2.bf16.msra.mxu0 0
  %6919 = vmatprep.subr.bf16.mxu0 0
  %6920 = vmatpush2.bf16.msra.mxu0 0
  %6921 = vmatprep.mubr.bf16.mxu0 0
  %6922 = vmatmul.mubr.bf16.gmra.mxu0 %v6140
  %v6923 = vpop.f32.mrf.mxu0
  %v6924 = vadd.f32 0.0, %v6923
  %v6925 = vpop.f32.mrf.mxu0
  %v6926 = vpop.f32.mrf.mxu0
  %v6927 = vadd.f32 0.0, %v6926
  %v6928 = vpop.f32.mrf.mxu0
  %6929 = vmatprep.mubr.bf16.mxu0 0
  %6930 = vmatmul.mubr.bf16.gmra.mxu0 %v6143
  %v6931 = vpop.f32.mrf.mxu0
  %v6932 = vadd.f32 0.0, %v6931
  %v6933 = vpop.f32.mrf.mxu0
  %v6934 = vpop.f32.mrf.mxu0
  %v6935 = vadd.f32 0.0, %v6934
  %v6936 = vpop.f32.mrf.mxu0
  %6937 = vmatprep.mubr.bf16.mxu0 0
  %6938 = vmatmul.mubr.bf16.gmra.mxu0 %v6146
  %v6939 = vpop.f32.mrf.mxu0
  %v6940 = vadd.f32 0.0, %v6939
  %v6941 = vpop.f32.mrf.mxu0
  %v6942 = vpop.f32.mrf.mxu0
  %v6943 = vadd.f32 0.0, %v6942
  %v6944 = vpop.f32.mrf.mxu0
  %6945 = vmatprep.mubr.bf16.mxu0 0
  %6946 = vmatmul.mubr.bf16.gmra.mxu0 %v6149
  %v6947 = vpop.f32.mrf.mxu0
  %v6948 = vadd.f32 0.0, %v6947
  %v6949 = vpop.f32.mrf.mxu0
  %v6950 = vpop.f32.mrf.mxu0
  %v6951 = vadd.f32 0.0, %v6950
  %v6952 = vpop.f32.mrf.mxu0
  %6953 = vdwg.mxu0
  %v6954 = vpack.c.bf16 %v6927, %v6924
  %v6955 = vpack.c.bf16 %v6935, %v6932
  %v6956 = vpack.c.bf16 %v6943, %v6940
  %v6957 = vpack.c.bf16 %v6951, %v6948
  %s6958 = scalar_lea.vmem %s12, 128
  %v6959 = vld [vmem:[%s6958] sm:$0xf]
  %v6960 = vld [vmem:[%s6958 + $0x4] sm:$0xf]
  %v6961 = vld [vmem:[%s6958 + $0x8] sm:$0xf]
  %v6962 = vld [vmem:[%s6958 + $0xc] sm:$0xf]
  %v6963 = vld [vmem:[%s6958 + $0x10] sm:$0xf]
  %v6964 = vld [vmem:[%s6958 + $0x14] sm:$0xf]
  %v6965 = vld [vmem:[%s6958 + $0x18] sm:$0xf]
  %v6966 = vld [vmem:[%s6958 + $0x1c] sm:$0xf]
  %v6975 = vunpack.c.l.b16 %v6959
  %v6976 = vunpack.c.l.b16 %v6960
  %v6977 = vunpack.c.l.b16 %v6961
  %v6978 = vunpack.c.l.b16 %v6962
  %v6979 = vunpack.c.l.b16 %v6963
  %v6980 = vunpack.c.l.b16 %v6964
  %v6981 = vunpack.c.l.b16 %v6965
  %v6982 = vunpack.c.l.b16 %v6966
  %v6983 = vpack.c.b16 %v6976, %v6975
  %v6984 = vpack.c.b16 %v6978, %v6977
  %v6985 = vpack.c.b16 %v6980, %v6979
  %v6986 = vpack.c.b16 %v6982, %v6981
  %v6988 = vsel %vm2040, %v6983, 0
  %v6991 = vsel %vm2040, %v6984, 0
  %v6994 = vsel %vm2040, %v6985, 0
  %v6997 = vsel %vm2040, %v6986, 0
  %6999 = vmatprep.subr.bf16.mxu0 0
  %7000 = vmatpush1.bf16.msra.mxu0 0
  %7001 = vmatprep.subr.bf16.mxu0 0
  %7002 = vmatpush1.bf16.msra.mxu0 0
  %7003 = vmatprep.subr.bf16.mxu0 0
  %7004 = vmatpush1.bf16.msra.mxu0 0
  %7005 = vmatprep.subr.bf16.mxu0 0
  %7006 = vmatpush1.bf16.msra.mxu0 0
  %7007 = vmatprep.subr.bf16.mxu0 0
  %7008 = vmatpush1.bf16.msra.mxu0 %v6957
  %7009 = vmatprep.subr.bf16.mxu0 0
  %7010 = vmatpush1.bf16.msra.mxu0 %v6956
  %7011 = vmatprep.subr.bf16.mxu0 0
  %7012 = vmatpush1.bf16.msra.mxu0 %v6955
  %7013 = vmatprep.subr.bf16.mxu0 0
  %7014 = vmatpush1.bf16.msra.mxu0 %v6954
  %7015 = vmatprep.subr.bf16.mxu0 0
  %7016 = vmatpush2.bf16.msra.mxu0 0
  %7017 = vmatprep.subr.bf16.mxu0 0
  %7018 = vmatpush2.bf16.msra.mxu0 0
  %7019 = vmatprep.subr.bf16.mxu0 0
  %7020 = vmatpush2.bf16.msra.mxu0 0
  %7021 = vmatprep.subr.bf16.mxu0 0
  %7022 = vmatpush2.bf16.msra.mxu0 0
  %7023 = vmatprep.subr.bf16.mxu0 0
  %7024 = vmatpush2.bf16.msra.mxu0 0
  %7025 = vmatprep.subr.bf16.mxu0 0
  %7026 = vmatpush2.bf16.msra.mxu0 0
  %7027 = vmatprep.subr.bf16.mxu0 0
  %7028 = vmatpush2.bf16.msra.mxu0 0
  %7029 = vmatprep.subr.bf16.mxu0 0
  %7030 = vmatpush2.bf16.msra.mxu0 0
  %7031 = vmatprep.mubr.bf16.mxu0 0
  %7032 = vmatmul.mubr.bf16.gmra.mxu0 %v6988
  %v7033 = vpop.f32.mrf.mxu0
  %v7034 = vadd.f32 0.0, %v7033
  %v7035 = vpop.f32.mrf.mxu0
  %v7036 = vpop.f32.mrf.mxu0
  %v7037 = vadd.f32 0.0, %v7036
  %v7038 = vpop.f32.mrf.mxu0
  %7039 = vmatprep.mubr.bf16.mxu0 0
  %7040 = vmatmul.mubr.bf16.gmra.mxu0 %v6991
  %v7041 = vpop.f32.mrf.mxu0
  %v7042 = vadd.f32 0.0, %v7041
  %v7043 = vpop.f32.mrf.mxu0
  %v7044 = vpop.f32.mrf.mxu0
  %v7045 = vadd.f32 0.0, %v7044
  %v7046 = vpop.f32.mrf.mxu0
  %7047 = vmatprep.mubr.bf16.mxu0 0
  %7048 = vmatmul.mubr.bf16.gmra.mxu0 %v6994
  %v7049 = vpop.f32.mrf.mxu0
  %v7050 = vadd.f32 0.0, %v7049
  %v7051 = vpop.f32.mrf.mxu0
  %v7052 = vpop.f32.mrf.mxu0
  %v7053 = vadd.f32 0.0, %v7052
  %v7054 = vpop.f32.mrf.mxu0
  %7055 = vmatprep.mubr.bf16.mxu0 0
  %7056 = vmatmul.mubr.bf16.gmra.mxu0 %v6997
  %v7057 = vpop.f32.mrf.mxu0
  %v7058 = vadd.f32 0.0, %v7057
  %v7059 = vpop.f32.mrf.mxu0
  %v7060 = vpop.f32.mrf.mxu0
  %v7061 = vadd.f32 0.0, %v7060
  %v7062 = vpop.f32.mrf.mxu0
  %7063 = vdwg.mxu0
  %v7064 = vadd.f32 %v6876, %v7034
  %v7065 = vadd.f32 %v6877, %v7037
  %v7066 = vadd.f32 %v6878, %v7042
  %v7067 = vadd.f32 %v6879, %v7045
  %v7068 = vadd.f32 %v6880, %v7050
  %v7069 = vadd.f32 %v6881, %v7053
  %v7070 = vadd.f32 %v6882, %v7058
  %v7071 = vadd.f32 %v6883, %v7061
  %s7072 = scalar_lea.vmem %s11, 20
  %v7073 = vld [vmem:[%s7072] sm:$0xf]
  %v7075 = vsel %vm588, %v7073, 0
  %7077 = vmatprep.subr.bf16.mxu0 0
  %7078 = vmatpush1.bf16.msra.mxu0 0
  %7079 = vmatprep.subr.bf16.mxu0 0
  %7080 = vmatpush1.bf16.msra.mxu0 0
  %7081 = vmatprep.subr.bf16.mxu0 0
  %7082 = vmatpush1.bf16.msra.mxu0 0
  %7083 = vmatprep.subr.bf16.mxu0 0
  %7084 = vmatpush1.bf16.msra.mxu0 0
  %7085 = vmatprep.subr.bf16.mxu0 0
  %7086 = vmatpush1.bf16.msra.mxu0 0
  %7087 = vmatprep.subr.bf16.mxu0 0
  %7088 = vmatpush1.bf16.msra.mxu0 0
  %7089 = vmatprep.subr.bf16.mxu0 0
  %7090 = vmatpush1.bf16.msra.mxu0 0
  %7091 = vmatprep.subr.bf16.mxu0 0
  %7092 = vmatpush1.bf16.msra.mxu0 %v7075
  %7093 = vmatprep.subr.bf16.mxu0 0
  %7094 = vmatpush2.bf16.msra.mxu0 0
  %7095 = vmatprep.subr.bf16.mxu0 0
  %7096 = vmatpush2.bf16.msra.mxu0 0
  %7097 = vmatprep.subr.bf16.mxu0 0
  %7098 = vmatpush2.bf16.msra.mxu0 0
  %7099 = vmatprep.subr.bf16.mxu0 0
  %7100 = vmatpush2.bf16.msra.mxu0 0
  %7101 = vmatprep.subr.bf16.mxu0 0
  %7102 = vmatpush2.bf16.msra.mxu0 0
  %7103 = vmatprep.subr.bf16.mxu0 0
  %7104 = vmatpush2.bf16.msra.mxu0 0
  %7105 = vmatprep.subr.bf16.mxu0 0
  %7106 = vmatpush2.bf16.msra.mxu0 0
  %7107 = vmatprep.subr.bf16.mxu0 0
  %7108 = vmatpush2.bf16.msra.mxu0 0
  %7109 = vmatprep.mubr.bf16.mxu0 0
  %7110 = vmatmul.mubr.bf16.gmra.mxu0 %v6140
  %v7111 = vpop.f32.mrf.mxu0
  %v7112 = vadd.f32 0.0, %v7111
  %v7113 = vpop.f32.mrf.mxu0
  %v7114 = vpop.f32.mrf.mxu0
  %v7115 = vadd.f32 0.0, %v7114
  %v7116 = vpop.f32.mrf.mxu0
  %7117 = vmatprep.mubr.bf16.mxu0 0
  %7118 = vmatmul.mubr.bf16.gmra.mxu0 %v6143
  %v7119 = vpop.f32.mrf.mxu0
  %v7120 = vadd.f32 0.0, %v7119
  %v7121 = vpop.f32.mrf.mxu0
  %v7122 = vpop.f32.mrf.mxu0
  %v7123 = vadd.f32 0.0, %v7122
  %v7124 = vpop.f32.mrf.mxu0
  %7125 = vmatprep.mubr.bf16.mxu0 0
  %7126 = vmatmul.mubr.bf16.gmra.mxu0 %v6146
  %v7127 = vpop.f32.mrf.mxu0
  %v7128 = vadd.f32 0.0, %v7127
  %v7129 = vpop.f32.mrf.mxu0
  %v7130 = vpop.f32.mrf.mxu0
  %v7131 = vadd.f32 0.0, %v7130
  %v7132 = vpop.f32.mrf.mxu0
  %7133 = vmatprep.mubr.bf16.mxu0 0
  %7134 = vmatmul.mubr.bf16.gmra.mxu0 %v6149
  %v7135 = vpop.f32.mrf.mxu0
  %v7136 = vadd.f32 0.0, %v7135
  %v7137 = vpop.f32.mrf.mxu0
  %v7138 = vpop.f32.mrf.mxu0
  %v7139 = vadd.f32 0.0, %v7138
  %v7140 = vpop.f32.mrf.mxu0
  %7141 = vdwg.mxu0
  %v7142 = vpack.c.bf16 %v7115, %v7112
  %v7143 = vpack.c.bf16 %v7123, %v7120
  %v7144 = vpack.c.bf16 %v7131, %v7128
  %v7145 = vpack.c.bf16 %v7139, %v7136
  %s7146 = scalar_lea.vmem %s12, 160
  %v7147 = vld [vmem:[%s7146] sm:$0xf]
  %v7148 = vld [vmem:[%s7146 + $0x4] sm:$0xf]
  %v7149 = vld [vmem:[%s7146 + $0x8] sm:$0xf]
  %v7150 = vld [vmem:[%s7146 + $0xc] sm:$0xf]
  %v7151 = vld [vmem:[%s7146 + $0x10] sm:$0xf]
  %v7152 = vld [vmem:[%s7146 + $0x14] sm:$0xf]
  %v7153 = vld [vmem:[%s7146 + $0x18] sm:$0xf]
  %v7154 = vld [vmem:[%s7146 + $0x1c] sm:$0xf]
  %v7163 = vunpack.c.l.b16 %v7147
  %v7164 = vunpack.c.l.b16 %v7148
  %v7165 = vunpack.c.l.b16 %v7149
  %v7166 = vunpack.c.l.b16 %v7150
  %v7167 = vunpack.c.l.b16 %v7151
  %v7168 = vunpack.c.l.b16 %v7152
  %v7169 = vunpack.c.l.b16 %v7153
  %v7170 = vunpack.c.l.b16 %v7154
  %v7171 = vpack.c.b16 %v7164, %v7163
  %v7172 = vpack.c.b16 %v7166, %v7165
  %v7173 = vpack.c.b16 %v7168, %v7167
  %v7174 = vpack.c.b16 %v7170, %v7169
  %v7176 = vsel %vm2040, %v7171, 0
  %v7179 = vsel %vm2040, %v7172, 0
  %v7182 = vsel %vm2040, %v7173, 0
  %v7185 = vsel %vm2040, %v7174, 0
  %7187 = vmatprep.subr.bf16.mxu0 0
  %7188 = vmatpush1.bf16.msra.mxu0 0
  %7189 = vmatprep.subr.bf16.mxu0 0
  %7190 = vmatpush1.bf16.msra.mxu0 0
  %7191 = vmatprep.subr.bf16.mxu0 0
  %7192 = vmatpush1.bf16.msra.mxu0 0
  %7193 = vmatprep.subr.bf16.mxu0 0
  %7194 = vmatpush1.bf16.msra.mxu0 0
  %7195 = vmatprep.subr.bf16.mxu0 0
  %7196 = vmatpush1.bf16.msra.mxu0 %v7145
  %7197 = vmatprep.subr.bf16.mxu0 0
  %7198 = vmatpush1.bf16.msra.mxu0 %v7144
  %7199 = vmatprep.subr.bf16.mxu0 0
  %7200 = vmatpush1.bf16.msra.mxu0 %v7143
  %7201 = vmatprep.subr.bf16.mxu0 0
  %7202 = vmatpush1.bf16.msra.mxu0 %v7142
  %7203 = vmatprep.subr.bf16.mxu0 0
  %7204 = vmatpush2.bf16.msra.mxu0 0
  %7205 = vmatprep.subr.bf16.mxu0 0
  %7206 = vmatpush2.bf16.msra.mxu0 0
  %7207 = vmatprep.subr.bf16.mxu0 0
  %7208 = vmatpush2.bf16.msra.mxu0 0
  %7209 = vmatprep.subr.bf16.mxu0 0
  %7210 = vmatpush2.bf16.msra.mxu0 0
  %7211 = vmatprep.subr.bf16.mxu0 0
  %7212 = vmatpush2.bf16.msra.mxu0 0
  %7213 = vmatprep.subr.bf16.mxu0 0
  %7214 = vmatpush2.bf16.msra.mxu0 0
  %7215 = vmatprep.subr.bf16.mxu0 0
  %7216 = vmatpush2.bf16.msra.mxu0 0
  %7217 = vmatprep.subr.bf16.mxu0 0
  %7218 = vmatpush2.bf16.msra.mxu0 0
  %7219 = vmatprep.mubr.bf16.mxu0 0
  %7220 = vmatmul.mubr.bf16.gmra.mxu0 %v7176
  %v7221 = vpop.f32.mrf.mxu0
  %v7222 = vadd.f32 0.0, %v7221
  %v7223 = vpop.f32.mrf.mxu0
  %v7224 = vpop.f32.mrf.mxu0
  %v7225 = vadd.f32 0.0, %v7224
  %v7226 = vpop.f32.mrf.mxu0
  %7227 = vmatprep.mubr.bf16.mxu0 0
  %7228 = vmatmul.mubr.bf16.gmra.mxu0 %v7179
  %v7229 = vpop.f32.mrf.mxu0
  %v7230 = vadd.f32 0.0, %v7229
  %v7231 = vpop.f32.mrf.mxu0
  %v7232 = vpop.f32.mrf.mxu0
  %v7233 = vadd.f32 0.0, %v7232
  %v7234 = vpop.f32.mrf.mxu0
  %7235 = vmatprep.mubr.bf16.mxu0 0
  %7236 = vmatmul.mubr.bf16.gmra.mxu0 %v7182
  %v7237 = vpop.f32.mrf.mxu0
  %v7238 = vadd.f32 0.0, %v7237
  %v7239 = vpop.f32.mrf.mxu0
  %v7240 = vpop.f32.mrf.mxu0
  %v7241 = vadd.f32 0.0, %v7240
  %v7242 = vpop.f32.mrf.mxu0
  %7243 = vmatprep.mubr.bf16.mxu0 0
  %7244 = vmatmul.mubr.bf16.gmra.mxu0 %v7185
  %v7245 = vpop.f32.mrf.mxu0
  %v7246 = vadd.f32 0.0, %v7245
  %v7247 = vpop.f32.mrf.mxu0
  %v7248 = vpop.f32.mrf.mxu0
  %v7249 = vadd.f32 0.0, %v7248
  %v7250 = vpop.f32.mrf.mxu0
  %7251 = vdwg.mxu0
  %v7252 = vadd.f32 %v7064, %v7222
  %v7253 = vadd.f32 %v7065, %v7225
  %v7254 = vadd.f32 %v7066, %v7230
  %v7255 = vadd.f32 %v7067, %v7233
  %v7256 = vadd.f32 %v7068, %v7238
  %v7257 = vadd.f32 %v7069, %v7241
  %v7258 = vadd.f32 %v7070, %v7246
  %v7259 = vadd.f32 %v7071, %v7249
  %s7260 = scalar_lea.vmem %s11, 24
  %v7261 = vld [vmem:[%s7260] sm:$0xf]
  %v7263 = vsel %vm588, %v7261, 0
  %7265 = vmatprep.subr.bf16.mxu0 0
  %7266 = vmatpush1.bf16.msra.mxu0 0
  %7267 = vmatprep.subr.bf16.mxu0 0
  %7268 = vmatpush1.bf16.msra.mxu0 0
  %7269 = vmatprep.subr.bf16.mxu0 0
  %7270 = vmatpush1.bf16.msra.mxu0 0
  %7271 = vmatprep.subr.bf16.mxu0 0
  %7272 = vmatpush1.bf16.msra.mxu0 0
  %7273 = vmatprep.subr.bf16.mxu0 0
  %7274 = vmatpush1.bf16.msra.mxu0 0
  %7275 = vmatprep.subr.bf16.mxu0 0
  %7276 = vmatpush1.bf16.msra.mxu0 0
  %7277 = vmatprep.subr.bf16.mxu0 0
  %7278 = vmatpush1.bf16.msra.mxu0 0
  %7279 = vmatprep.subr.bf16.mxu0 0
  %7280 = vmatpush1.bf16.msra.mxu0 %v7263
  %7281 = vmatprep.subr.bf16.mxu0 0
  %7282 = vmatpush2.bf16.msra.mxu0 0
  %7283 = vmatprep.subr.bf16.mxu0 0
  %7284 = vmatpush2.bf16.msra.mxu0 0
  %7285 = vmatprep.subr.bf16.mxu0 0
  %7286 = vmatpush2.bf16.msra.mxu0 0
  %7287 = vmatprep.subr.bf16.mxu0 0
  %7288 = vmatpush2.bf16.msra.mxu0 0
  %7289 = vmatprep.subr.bf16.mxu0 0
  %7290 = vmatpush2.bf16.msra.mxu0 0
  %7291 = vmatprep.subr.bf16.mxu0 0
  %7292 = vmatpush2.bf16.msra.mxu0 0
  %7293 = vmatprep.subr.bf16.mxu0 0
  %7294 = vmatpush2.bf16.msra.mxu0 0
  %7295 = vmatprep.subr.bf16.mxu0 0
  %7296 = vmatpush2.bf16.msra.mxu0 0
  %7297 = vmatprep.mubr.bf16.mxu0 0
  %7298 = vmatmul.mubr.bf16.gmra.mxu0 %v6140
  %v7299 = vpop.f32.mrf.mxu0
  %v7300 = vadd.f32 0.0, %v7299
  %v7301 = vpop.f32.mrf.mxu0
  %v7302 = vpop.f32.mrf.mxu0
  %v7303 = vadd.f32 0.0, %v7302
  %v7304 = vpop.f32.mrf.mxu0
  %7305 = vmatprep.mubr.bf16.mxu0 0
  %7306 = vmatmul.mubr.bf16.gmra.mxu0 %v6143
  %v7307 = vpop.f32.mrf.mxu0
  %v7308 = vadd.f32 0.0, %v7307
  %v7309 = vpop.f32.mrf.mxu0
  %v7310 = vpop.f32.mrf.mxu0
  %v7311 = vadd.f32 0.0, %v7310
  %v7312 = vpop.f32.mrf.mxu0
  %7313 = vmatprep.mubr.bf16.mxu0 0
  %7314 = vmatmul.mubr.bf16.gmra.mxu0 %v6146
  %v7315 = vpop.f32.mrf.mxu0
  %v7316 = vadd.f32 0.0, %v7315
  %v7317 = vpop.f32.mrf.mxu0
  %v7318 = vpop.f32.mrf.mxu0
  %v7319 = vadd.f32 0.0, %v7318
  %v7320 = vpop.f32.mrf.mxu0
  %7321 = vmatprep.mubr.bf16.mxu0 0
  %7322 = vmatmul.mubr.bf16.gmra.mxu0 %v6149
  %v7323 = vpop.f32.mrf.mxu0
  %v7324 = vadd.f32 0.0, %v7323
  %v7325 = vpop.f32.mrf.mxu0
  %v7326 = vpop.f32.mrf.mxu0
  %v7327 = vadd.f32 0.0, %v7326
  %v7328 = vpop.f32.mrf.mxu0
  %7329 = vdwg.mxu0
  %v7330 = vpack.c.bf16 %v7303, %v7300
  %v7331 = vpack.c.bf16 %v7311, %v7308
  %v7332 = vpack.c.bf16 %v7319, %v7316
  %v7333 = vpack.c.bf16 %v7327, %v7324
  %s7334 = scalar_lea.vmem %s12, 192
  %v7335 = vld [vmem:[%s7334] sm:$0xf]
  %v7336 = vld [vmem:[%s7334 + $0x4] sm:$0xf]
  %v7337 = vld [vmem:[%s7334 + $0x8] sm:$0xf]
  %v7338 = vld [vmem:[%s7334 + $0xc] sm:$0xf]
  %v7339 = vld [vmem:[%s7334 + $0x10] sm:$0xf]
  %v7340 = vld [vmem:[%s7334 + $0x14] sm:$0xf]
  %v7341 = vld [vmem:[%s7334 + $0x18] sm:$0xf]
  %v7342 = vld [vmem:[%s7334 + $0x1c] sm:$0xf]
  %v7351 = vunpack.c.l.b16 %v7335
  %v7352 = vunpack.c.l.b16 %v7336
  %v7353 = vunpack.c.l.b16 %v7337
  %v7354 = vunpack.c.l.b16 %v7338
  %v7355 = vunpack.c.l.b16 %v7339
  %v7356 = vunpack.c.l.b16 %v7340
  %v7357 = vunpack.c.l.b16 %v7341
  %v7358 = vunpack.c.l.b16 %v7342
  %v7359 = vpack.c.b16 %v7352, %v7351
  %v7360 = vpack.c.b16 %v7354, %v7353
  %v7361 = vpack.c.b16 %v7356, %v7355
  %v7362 = vpack.c.b16 %v7358, %v7357
  %v7364 = vsel %vm2040, %v7359, 0
  %v7367 = vsel %vm2040, %v7360, 0
  %v7370 = vsel %vm2040, %v7361, 0
  %v7373 = vsel %vm2040, %v7362, 0
  %7375 = vmatprep.subr.bf16.mxu0 0
  %7376 = vmatpush1.bf16.msra.mxu0 0
  %7377 = vmatprep.subr.bf16.mxu0 0
  %7378 = vmatpush1.bf16.msra.mxu0 0
  %7379 = vmatprep.subr.bf16.mxu0 0
  %7380 = vmatpush1.bf16.msra.mxu0 0
  %7381 = vmatprep.subr.bf16.mxu0 0
  %7382 = vmatpush1.bf16.msra.mxu0 0
  %7383 = vmatprep.subr.bf16.mxu0 0
  %7384 = vmatpush1.bf16.msra.mxu0 %v7333
  %7385 = vmatprep.subr.bf16.mxu0 0
  %7386 = vmatpush1.bf16.msra.mxu0 %v7332
  %7387 = vmatprep.subr.bf16.mxu0 0
  %7388 = vmatpush1.bf16.msra.mxu0 %v7331
  %7389 = vmatprep.subr.bf16.mxu0 0
  %7390 = vmatpush1.bf16.msra.mxu0 %v7330
  %7391 = vmatprep.subr.bf16.mxu0 0
  %7392 = vmatpush2.bf16.msra.mxu0 0
  %7393 = vmatprep.subr.bf16.mxu0 0
  %7394 = vmatpush2.bf16.msra.mxu0 0
  %7395 = vmatprep.subr.bf16.mxu0 0
  %7396 = vmatpush2.bf16.msra.mxu0 0
  %7397 = vmatprep.subr.bf16.mxu0 0
  %7398 = vmatpush2.bf16.msra.mxu0 0
  %7399 = vmatprep.subr.bf16.mxu0 0
  %7400 = vmatpush2.bf16.msra.mxu0 0
  %7401 = vmatprep.subr.bf16.mxu0 0
  %7402 = vmatpush2.bf16.msra.mxu0 0
  %7403 = vmatprep.subr.bf16.mxu0 0
  %7404 = vmatpush2.bf16.msra.mxu0 0
  %7405 = vmatprep.subr.bf16.mxu0 0
  %7406 = vmatpush2.bf16.msra.mxu0 0
  %7407 = vmatprep.mubr.bf16.mxu0 0
  %7408 = vmatmul.mubr.bf16.gmra.mxu0 %v7364
  %v7409 = vpop.f32.mrf.mxu0
  %v7410 = vadd.f32 0.0, %v7409
  %v7411 = vpop.f32.mrf.mxu0
  %v7412 = vpop.f32.mrf.mxu0
  %v7413 = vadd.f32 0.0, %v7412
  %v7414 = vpop.f32.mrf.mxu0
  %7415 = vmatprep.mubr.bf16.mxu0 0
  %7416 = vmatmul.mubr.bf16.gmra.mxu0 %v7367
  %v7417 = vpop.f32.mrf.mxu0
  %v7418 = vadd.f32 0.0, %v7417
  %v7419 = vpop.f32.mrf.mxu0
  %v7420 = vpop.f32.mrf.mxu0
  %v7421 = vadd.f32 0.0, %v7420
  %v7422 = vpop.f32.mrf.mxu0
  %7423 = vmatprep.mubr.bf16.mxu0 0
  %7424 = vmatmul.mubr.bf16.gmra.mxu0 %v7370
  %v7425 = vpop.f32.mrf.mxu0
  %v7426 = vadd.f32 0.0, %v7425
  %v7427 = vpop.f32.mrf.mxu0
  %v7428 = vpop.f32.mrf.mxu0
  %v7429 = vadd.f32 0.0, %v7428
  %v7430 = vpop.f32.mrf.mxu0
  %7431 = vmatprep.mubr.bf16.mxu0 0
  %7432 = vmatmul.mubr.bf16.gmra.mxu0 %v7373
  %v7433 = vpop.f32.mrf.mxu0
  %v7434 = vadd.f32 0.0, %v7433
  %v7435 = vpop.f32.mrf.mxu0
  %v7436 = vpop.f32.mrf.mxu0
  %v7437 = vadd.f32 0.0, %v7436
  %v7438 = vpop.f32.mrf.mxu0
  %7439 = vdwg.mxu0
  %v7440 = vadd.f32 %v7252, %v7410
  %v7441 = vadd.f32 %v7253, %v7413
  %v7442 = vadd.f32 %v7254, %v7418
  %v7443 = vadd.f32 %v7255, %v7421
  %v7444 = vadd.f32 %v7256, %v7426
  %v7445 = vadd.f32 %v7257, %v7429
  %v7446 = vadd.f32 %v7258, %v7434
  %v7447 = vadd.f32 %v7259, %v7437
  %s7448 = scalar_lea.vmem %s11, 28
  %v7449 = vld [vmem:[%s7448] sm:$0xf]
  %v7451 = vsel %vm588, %v7449, 0
  %7453 = vmatprep.subr.bf16.mxu0 0
  %7454 = vmatpush1.bf16.msra.mxu0 0
  %7455 = vmatprep.subr.bf16.mxu0 0
  %7456 = vmatpush1.bf16.msra.mxu0 0
  %7457 = vmatprep.subr.bf16.mxu0 0
  %7458 = vmatpush1.bf16.msra.mxu0 0
  %7459 = vmatprep.subr.bf16.mxu0 0
  %7460 = vmatpush1.bf16.msra.mxu0 0
  %7461 = vmatprep.subr.bf16.mxu0 0
  %7462 = vmatpush1.bf16.msra.mxu0 0
  %7463 = vmatprep.subr.bf16.mxu0 0
  %7464 = vmatpush1.bf16.msra.mxu0 0
  %7465 = vmatprep.subr.bf16.mxu0 0
  %7466 = vmatpush1.bf16.msra.mxu0 0
  %7467 = vmatprep.subr.bf16.mxu0 0
  %7468 = vmatpush1.bf16.msra.mxu0 %v7451
  %7469 = vmatprep.subr.bf16.mxu0 0
  %7470 = vmatpush2.bf16.msra.mxu0 0
  %7471 = vmatprep.subr.bf16.mxu0 0
  %7472 = vmatpush2.bf16.msra.mxu0 0
  %7473 = vmatprep.subr.bf16.mxu0 0
  %7474 = vmatpush2.bf16.msra.mxu0 0
  %7475 = vmatprep.subr.bf16.mxu0 0
  %7476 = vmatpush2.bf16.msra.mxu0 0
  %7477 = vmatprep.subr.bf16.mxu0 0
  %7478 = vmatpush2.bf16.msra.mxu0 0
  %7479 = vmatprep.subr.bf16.mxu0 0
  %7480 = vmatpush2.bf16.msra.mxu0 0
  %7481 = vmatprep.subr.bf16.mxu0 0
  %7482 = vmatpush2.bf16.msra.mxu0 0
  %7483 = vmatprep.subr.bf16.mxu0 0
  %7484 = vmatpush2.bf16.msra.mxu0 0
  %7485 = vmatprep.mubr.bf16.mxu0 0
  %7486 = vmatmul.mubr.bf16.gmra.mxu0 %v6140
  %v7487 = vpop.f32.mrf.mxu0
  %v7488 = vadd.f32 0.0, %v7487
  %v7489 = vpop.f32.mrf.mxu0
  %v7490 = vpop.f32.mrf.mxu0
  %v7491 = vadd.f32 0.0, %v7490
  %v7492 = vpop.f32.mrf.mxu0
  %7493 = vmatprep.mubr.bf16.mxu0 0
  %7494 = vmatmul.mubr.bf16.gmra.mxu0 %v6143
  %v7495 = vpop.f32.mrf.mxu0
  %v7496 = vadd.f32 0.0, %v7495
  %v7497 = vpop.f32.mrf.mxu0
  %v7498 = vpop.f32.mrf.mxu0
  %v7499 = vadd.f32 0.0, %v7498
  %v7500 = vpop.f32.mrf.mxu0
  %7501 = vmatprep.mubr.bf16.mxu0 0
  %7502 = vmatmul.mubr.bf16.gmra.mxu0 %v6146
  %v7503 = vpop.f32.mrf.mxu0
  %v7504 = vadd.f32 0.0, %v7503
  %v7505 = vpop.f32.mrf.mxu0
  %v7506 = vpop.f32.mrf.mxu0
  %v7507 = vadd.f32 0.0, %v7506
  %v7508 = vpop.f32.mrf.mxu0
  %7509 = vmatprep.mubr.bf16.mxu0 0
  %7510 = vmatmul.mubr.bf16.gmra.mxu0 %v6149
  %v7511 = vpop.f32.mrf.mxu0
  %v7512 = vadd.f32 0.0, %v7511
  %v7513 = vpop.f32.mrf.mxu0
  %v7514 = vpop.f32.mrf.mxu0
  %v7515 = vadd.f32 0.0, %v7514
  %v7516 = vpop.f32.mrf.mxu0
  %7517 = vdwg.mxu0
  %v7518 = vpack.c.bf16 %v7491, %v7488
  %v7519 = vpack.c.bf16 %v7499, %v7496
  %v7520 = vpack.c.bf16 %v7507, %v7504
  %v7521 = vpack.c.bf16 %v7515, %v7512
  %s7522 = scalar_lea.vmem %s12, 224
  %v7523 = vld [vmem:[%s7522] sm:$0xf]
  %v7524 = vld [vmem:[%s7522 + $0x4] sm:$0xf]
  %v7525 = vld [vmem:[%s7522 + $0x8] sm:$0xf]
  %v7526 = vld [vmem:[%s7522 + $0xc] sm:$0xf]
  %v7527 = vld [vmem:[%s7522 + $0x10] sm:$0xf]
  %v7528 = vld [vmem:[%s7522 + $0x14] sm:$0xf]
  %v7529 = vld [vmem:[%s7522 + $0x18] sm:$0xf]
  %v7530 = vld [vmem:[%s7522 + $0x1c] sm:$0xf]
  %v7539 = vunpack.c.l.b16 %v7523
  %v7540 = vunpack.c.l.b16 %v7524
  %v7541 = vunpack.c.l.b16 %v7525
  %v7542 = vunpack.c.l.b16 %v7526
  %v7543 = vunpack.c.l.b16 %v7527
  %v7544 = vunpack.c.l.b16 %v7528
  %v7545 = vunpack.c.l.b16 %v7529
  %v7546 = vunpack.c.l.b16 %v7530
  %v7547 = vpack.c.b16 %v7540, %v7539
  %v7548 = vpack.c.b16 %v7542, %v7541
  %v7549 = vpack.c.b16 %v7544, %v7543
  %v7550 = vpack.c.b16 %v7546, %v7545
  %v7552 = vsel %vm2040, %v7547, 0
  %v7555 = vsel %vm2040, %v7548, 0
  %v7558 = vsel %vm2040, %v7549, 0
  %v7561 = vsel %vm2040, %v7550, 0
  %7563 = vmatprep.subr.bf16.mxu0 0
  %7564 = vmatpush1.bf16.msra.mxu0 0
  %7565 = vmatprep.subr.bf16.mxu0 0
  %7566 = vmatpush1.bf16.msra.mxu0 0
  %7567 = vmatprep.subr.bf16.mxu0 0
  %7568 = vmatpush1.bf16.msra.mxu0 0
  %7569 = vmatprep.subr.bf16.mxu0 0
  %7570 = vmatpush1.bf16.msra.mxu0 0
  %7571 = vmatprep.subr.bf16.mxu0 0
  %7572 = vmatpush1.bf16.msra.mxu0 %v7521
  %7573 = vmatprep.subr.bf16.mxu0 0
  %7574 = vmatpush1.bf16.msra.mxu0 %v7520
  %7575 = vmatprep.subr.bf16.mxu0 0
  %7576 = vmatpush1.bf16.msra.mxu0 %v7519
  %7577 = vmatprep.subr.bf16.mxu0 0
  %7578 = vmatpush1.bf16.msra.mxu0 %v7518
  %7579 = vmatprep.subr.bf16.mxu0 0
  %7580 = vmatpush2.bf16.msra.mxu0 0
  %7581 = vmatprep.subr.bf16.mxu0 0
  %7582 = vmatpush2.bf16.msra.mxu0 0
  %7583 = vmatprep.subr.bf16.mxu0 0
  %7584 = vmatpush2.bf16.msra.mxu0 0
  %7585 = vmatprep.subr.bf16.mxu0 0
  %7586 = vmatpush2.bf16.msra.mxu0 0
  %7587 = vmatprep.subr.bf16.mxu0 0
  %7588 = vmatpush2.bf16.msra.mxu0 0
  %7589 = vmatprep.subr.bf16.mxu0 0
  %7590 = vmatpush2.bf16.msra.mxu0 0
  %7591 = vmatprep.subr.bf16.mxu0 0
  %7592 = vmatpush2.bf16.msra.mxu0 0
  %7593 = vmatprep.subr.bf16.mxu0 0
  %7594 = vmatpush2.bf16.msra.mxu0 0
  %7595 = vmatprep.mubr.bf16.mxu0 0
  %7596 = vmatmul.mubr.bf16.gmra.mxu0 %v7552
  %v7597 = vpop.f32.mrf.mxu0
  %v7598 = vadd.f32 0.0, %v7597
  %v7599 = vpop.f32.mrf.mxu0
  %v7600 = vpop.f32.mrf.mxu0
  %v7601 = vadd.f32 0.0, %v7600
  %v7602 = vpop.f32.mrf.mxu0
  %7603 = vmatprep.mubr.bf16.mxu0 0
  %7604 = vmatmul.mubr.bf16.gmra.mxu0 %v7555
  %v7605 = vpop.f32.mrf.mxu0
  %v7606 = vadd.f32 0.0, %v7605
  %v7607 = vpop.f32.mrf.mxu0
  %v7608 = vpop.f32.mrf.mxu0
  %v7609 = vadd.f32 0.0, %v7608
  %v7610 = vpop.f32.mrf.mxu0
  %7611 = vmatprep.mubr.bf16.mxu0 0
  %7612 = vmatmul.mubr.bf16.gmra.mxu0 %v7558
  %v7613 = vpop.f32.mrf.mxu0
  %v7614 = vadd.f32 0.0, %v7613
  %v7615 = vpop.f32.mrf.mxu0
  %v7616 = vpop.f32.mrf.mxu0
  %v7617 = vadd.f32 0.0, %v7616
  %v7618 = vpop.f32.mrf.mxu0
  %7619 = vmatprep.mubr.bf16.mxu0 0
  %7620 = vmatmul.mubr.bf16.gmra.mxu0 %v7561
  %v7621 = vpop.f32.mrf.mxu0
  %v7622 = vadd.f32 0.0, %v7621
  %v7623 = vpop.f32.mrf.mxu0
  %v7624 = vpop.f32.mrf.mxu0
  %v7625 = vadd.f32 0.0, %v7624
  %v7626 = vpop.f32.mrf.mxu0
  %7627 = vdwg.mxu0
  %v7628 = vadd.f32 %v7440, %v7598
  %v7629 = vadd.f32 %v7441, %v7601
  %v7630 = vadd.f32 %v7442, %v7606
  %v7631 = vadd.f32 %v7443, %v7609
  %v7632 = vadd.f32 %v7444, %v7614
  %v7633 = vadd.f32 %v7445, %v7617
  %v7634 = vadd.f32 %v7446, %v7622
  %v7635 = vadd.f32 %v7447, %v7625
  %s7636 = scalar_lea.vmem %s11, 32
  %v7637 = vld [vmem:[%s7636] sm:$0xf]
  %v7639 = vsel %vm588, %v7637, 0
  %7641 = vmatprep.subr.bf16.mxu0 0
  %7642 = vmatpush1.bf16.msra.mxu0 0
  %7643 = vmatprep.subr.bf16.mxu0 0
  %7644 = vmatpush1.bf16.msra.mxu0 0
  %7645 = vmatprep.subr.bf16.mxu0 0
  %7646 = vmatpush1.bf16.msra.mxu0 0
  %7647 = vmatprep.subr.bf16.mxu0 0
  %7648 = vmatpush1.bf16.msra.mxu0 0
  %7649 = vmatprep.subr.bf16.mxu0 0
  %7650 = vmatpush1.bf16.msra.mxu0 0
  %7651 = vmatprep.subr.bf16.mxu0 0
  %7652 = vmatpush1.bf16.msra.mxu0 0
  %7653 = vmatprep.subr.bf16.mxu0 0
  %7654 = vmatpush1.bf16.msra.mxu0 0
  %7655 = vmatprep.subr.bf16.mxu0 0
  %7656 = vmatpush1.bf16.msra.mxu0 %v7639
  %7657 = vmatprep.subr.bf16.mxu0 0
  %7658 = vmatpush2.bf16.msra.mxu0 0
  %7659 = vmatprep.subr.bf16.mxu0 0
  %7660 = vmatpush2.bf16.msra.mxu0 0
  %7661 = vmatprep.subr.bf16.mxu0 0
  %7662 = vmatpush2.bf16.msra.mxu0 0
  %7663 = vmatprep.subr.bf16.mxu0 0
  %7664 = vmatpush2.bf16.msra.mxu0 0
  %7665 = vmatprep.subr.bf16.mxu0 0
  %7666 = vmatpush2.bf16.msra.mxu0 0
  %7667 = vmatprep.subr.bf16.mxu0 0
  %7668 = vmatpush2.bf16.msra.mxu0 0
  %7669 = vmatprep.subr.bf16.mxu0 0
  %7670 = vmatpush2.bf16.msra.mxu0 0
  %7671 = vmatprep.subr.bf16.mxu0 0
  %7672 = vmatpush2.bf16.msra.mxu0 0
  %7673 = vmatprep.mubr.bf16.mxu0 0
  %7674 = vmatmul.mubr.bf16.gmra.mxu0 %v6140
  %v7675 = vpop.f32.mrf.mxu0
  %v7676 = vadd.f32 0.0, %v7675
  %v7677 = vpop.f32.mrf.mxu0
  %v7678 = vpop.f32.mrf.mxu0
  %v7679 = vadd.f32 0.0, %v7678
  %v7680 = vpop.f32.mrf.mxu0
  %7681 = vmatprep.mubr.bf16.mxu0 0
  %7682 = vmatmul.mubr.bf16.gmra.mxu0 %v6143
  %v7683 = vpop.f32.mrf.mxu0
  %v7684 = vadd.f32 0.0, %v7683
  %v7685 = vpop.f32.mrf.mxu0
  %v7686 = vpop.f32.mrf.mxu0
  %v7687 = vadd.f32 0.0, %v7686
  %v7688 = vpop.f32.mrf.mxu0
  %7689 = vmatprep.mubr.bf16.mxu0 0
  %7690 = vmatmul.mubr.bf16.gmra.mxu0 %v6146
  %v7691 = vpop.f32.mrf.mxu0
  %v7692 = vadd.f32 0.0, %v7691
  %v7693 = vpop.f32.mrf.mxu0
  %v7694 = vpop.f32.mrf.mxu0
  %v7695 = vadd.f32 0.0, %v7694
  %v7696 = vpop.f32.mrf.mxu0
  %7697 = vmatprep.mubr.bf16.mxu0 0
  %7698 = vmatmul.mubr.bf16.gmra.mxu0 %v6149
  %v7699 = vpop.f32.mrf.mxu0
  %v7700 = vadd.f32 0.0, %v7699
  %v7701 = vpop.f32.mrf.mxu0
  %v7702 = vpop.f32.mrf.mxu0
  %v7703 = vadd.f32 0.0, %v7702
  %v7704 = vpop.f32.mrf.mxu0
  %7705 = vdwg.mxu0
  %v7706 = vpack.c.bf16 %v7679, %v7676
  %v7707 = vpack.c.bf16 %v7687, %v7684
  %v7708 = vpack.c.bf16 %v7695, %v7692
  %v7709 = vpack.c.bf16 %v7703, %v7700
  %s7710 = scalar_lea.vmem %s12, 256
  %v7711 = vld [vmem:[%s7710] sm:$0xf]
  %v7712 = vld [vmem:[%s7710 + $0x4] sm:$0xf]
  %v7713 = vld [vmem:[%s7710 + $0x8] sm:$0xf]
  %v7714 = vld [vmem:[%s7710 + $0xc] sm:$0xf]
  %v7715 = vld [vmem:[%s7710 + $0x10] sm:$0xf]
  %v7716 = vld [vmem:[%s7710 + $0x14] sm:$0xf]
  %v7717 = vld [vmem:[%s7710 + $0x18] sm:$0xf]
  %v7718 = vld [vmem:[%s7710 + $0x1c] sm:$0xf]
  %v7727 = vunpack.c.l.b16 %v7711
  %v7728 = vunpack.c.l.b16 %v7712
  %v7729 = vunpack.c.l.b16 %v7713
  %v7730 = vunpack.c.l.b16 %v7714
  %v7731 = vunpack.c.l.b16 %v7715
  %v7732 = vunpack.c.l.b16 %v7716
  %v7733 = vunpack.c.l.b16 %v7717
  %v7734 = vunpack.c.l.b16 %v7718
  %v7735 = vpack.c.b16 %v7728, %v7727
  %v7736 = vpack.c.b16 %v7730, %v7729
  %v7737 = vpack.c.b16 %v7732, %v7731
  %v7738 = vpack.c.b16 %v7734, %v7733
  %v7740 = vsel %vm2040, %v7735, 0
  %v7743 = vsel %vm2040, %v7736, 0
  %v7746 = vsel %vm2040, %v7737, 0
  %v7749 = vsel %vm2040, %v7738, 0
  %7751 = vmatprep.subr.bf16.mxu0 0
  %7752 = vmatpush1.bf16.msra.mxu0 0
  %7753 = vmatprep.subr.bf16.mxu0 0
  %7754 = vmatpush1.bf16.msra.mxu0 0
  %7755 = vmatprep.subr.bf16.mxu0 0
  %7756 = vmatpush1.bf16.msra.mxu0 0
  %7757 = vmatprep.subr.bf16.mxu0 0
  %7758 = vmatpush1.bf16.msra.mxu0 0
  %7759 = vmatprep.subr.bf16.mxu0 0
  %7760 = vmatpush1.bf16.msra.mxu0 %v7709
  %7761 = vmatprep.subr.bf16.mxu0 0
  %7762 = vmatpush1.bf16.msra.mxu0 %v7708
  %7763 = vmatprep.subr.bf16.mxu0 0
  %7764 = vmatpush1.bf16.msra.mxu0 %v7707
  %7765 = vmatprep.subr.bf16.mxu0 0
  %7766 = vmatpush1.bf16.msra.mxu0 %v7706
  %7767 = vmatprep.subr.bf16.mxu0 0
  %7768 = vmatpush2.bf16.msra.mxu0 0
  %7769 = vmatprep.subr.bf16.mxu0 0
  %7770 = vmatpush2.bf16.msra.mxu0 0
  %7771 = vmatprep.subr.bf16.mxu0 0
  %7772 = vmatpush2.bf16.msra.mxu0 0
  %7773 = vmatprep.subr.bf16.mxu0 0
  %7774 = vmatpush2.bf16.msra.mxu0 0
  %7775 = vmatprep.subr.bf16.mxu0 0
  %7776 = vmatpush2.bf16.msra.mxu0 0
  %7777 = vmatprep.subr.bf16.mxu0 0
  %7778 = vmatpush2.bf16.msra.mxu0 0
  %7779 = vmatprep.subr.bf16.mxu0 0
  %7780 = vmatpush2.bf16.msra.mxu0 0
  %7781 = vmatprep.subr.bf16.mxu0 0
  %7782 = vmatpush2.bf16.msra.mxu0 0
  %7783 = vmatprep.mubr.bf16.mxu0 0
  %7784 = vmatmul.mubr.bf16.gmra.mxu0 %v7740
  %v7785 = vpop.f32.mrf.mxu0
  %v7786 = vadd.f32 0.0, %v7785
  %v7787 = vpop.f32.mrf.mxu0
  %v7788 = vpop.f32.mrf.mxu0
  %v7789 = vadd.f32 0.0, %v7788
  %v7790 = vpop.f32.mrf.mxu0
  %7791 = vmatprep.mubr.bf16.mxu0 0
  %7792 = vmatmul.mubr.bf16.gmra.mxu0 %v7743
  %v7793 = vpop.f32.mrf.mxu0
  %v7794 = vadd.f32 0.0, %v7793
  %v7795 = vpop.f32.mrf.mxu0
  %v7796 = vpop.f32.mrf.mxu0
  %v7797 = vadd.f32 0.0, %v7796
  %v7798 = vpop.f32.mrf.mxu0
  %7799 = vmatprep.mubr.bf16.mxu0 0
  %7800 = vmatmul.mubr.bf16.gmra.mxu0 %v7746
  %v7801 = vpop.f32.mrf.mxu0
  %v7802 = vadd.f32 0.0, %v7801
  %v7803 = vpop.f32.mrf.mxu0
  %v7804 = vpop.f32.mrf.mxu0
  %v7805 = vadd.f32 0.0, %v7804
  %v7806 = vpop.f32.mrf.mxu0
  %7807 = vmatprep.mubr.bf16.mxu0 0
  %7808 = vmatmul.mubr.bf16.gmra.mxu0 %v7749
  %v7809 = vpop.f32.mrf.mxu0
  %v7810 = vadd.f32 0.0, %v7809
  %v7811 = vpop.f32.mrf.mxu0
  %v7812 = vpop.f32.mrf.mxu0
  %v7813 = vadd.f32 0.0, %v7812
  %v7814 = vpop.f32.mrf.mxu0
  %7815 = vdwg.mxu0
  %v7816 = vadd.f32 %v7628, %v7786
  %v7817 = vadd.f32 %v7629, %v7789
  %v7818 = vadd.f32 %v7630, %v7794
  %v7819 = vadd.f32 %v7631, %v7797
  %v7820 = vadd.f32 %v7632, %v7802
  %v7821 = vadd.f32 %v7633, %v7805
  %v7822 = vadd.f32 %v7634, %v7810
  %v7823 = vadd.f32 %v7635, %v7813
  %v7824 = vld [vmem:[%s13] sm:$0xff]
  %v7825 = vld [vmem:[%s13 + $0x8] sm:$0xff]
  %v7826 = vld [vmem:[%s13 + $0x10] sm:$0xff]
  %v7827 = vld [vmem:[%s13 + $0x18] sm:$0xff]
  %v7828 = vld [vmem:[%s13 + $0x20] sm:$0xff]
  %v7829 = vld [vmem:[%s13 + $0x28] sm:$0xff]
  %v7830 = vld [vmem:[%s13 + $0x30] sm:$0xff]
  %v7831 = vld [vmem:[%s13 + $0x38] sm:$0xff]
  %7833 = vset.pattern.permute.xlu0 0
  %7834 = vperm.xlu0 %7833, %v7824
  %v7835 = vpop.permute.xlu0 %7834
  %7838 = vset.pattern.permute.xlu0 0
  %7839 = vperm.xlu0 %7838, %v7825
  %v7840 = vpop.permute.xlu0 %7839
  %7843 = vset.pattern.permute.xlu0 0
  %7844 = vperm.xlu0 %7843, %v7826
  %v7845 = vpop.permute.xlu0 %7844
  %7848 = vset.pattern.permute.xlu0 0
  %7849 = vperm.xlu0 %7848, %v7827
  %v7850 = vpop.permute.xlu0 %7849
  %7853 = vset.pattern.permute.xlu0 0
  %7854 = vperm.xlu0 %7853, %v7828
  %v7855 = vpop.permute.xlu0 %7854
  %7858 = vset.pattern.permute.xlu0 0
  %7859 = vperm.xlu0 %7858, %v7829
  %v7860 = vpop.permute.xlu0 %7859
  %7863 = vset.pattern.permute.xlu0 0
  %7864 = vperm.xlu0 %7863, %v7830
  %v7865 = vpop.permute.xlu0 %7864
  %7868 = vset.pattern.permute.xlu0 0
  %7869 = vperm.xlu0 %7868, %v7831
  %v7870 = vpop.permute.xlu0 %7869
  %v7872 = vadd.f32 %v7816, %v7835
  %v7873 = vadd.f32 %v7817, %v7840
  %v7874 = vadd.f32 %v7818, %v7845
  %v7875 = vadd.f32 %v7819, %v7850
  %v7876 = vadd.f32 %v7820, %v7855
  %v7877 = vadd.f32 %v7821, %v7860
  %v7878 = vadd.f32 %v7822, %v7865
  %v7879 = vadd.f32 %v7823, %v7870
  %v7880 = vmax.f32 %v7872, 0.0
  %v7881 = vmax.f32 %v7873, 0.0
  %v7882 = vmax.f32 %v7874, 0.0
  %v7883 = vmax.f32 %v7875, 0.0
  %v7884 = vmax.f32 %v7876, 0.0
  %v7885 = vmax.f32 %v7877, 0.0
  %v7886 = vmax.f32 %v7878, 0.0
  %v7887 = vmax.f32 %v7879, 0.0
  %v7888 = vpack.c.bf16 %v7881, %v7880
  %v7889 = vpack.c.bf16 %v7883, %v7882
  %v7890 = vpack.c.bf16 %v7885, %v7884
  %v7891 = vpack.c.bf16 %v7887, %v7886
  %v7892 = vunpack.c.l.bf16 %v7888
  %v7893 = vunpack.c.h.bf16 %v7888
  %v7894 = vunpack.c.l.bf16 %v7889
  %v7895 = vunpack.c.h.bf16 %v7889
  %v7896 = vunpack.c.l.bf16 %v7890
  %v7897 = vunpack.c.h.bf16 %v7890
  %v7898 = vunpack.c.l.bf16 %v7891
  %v7899 = vunpack.c.h.bf16 %v7891
  %vm7900 = vcmask 31744
  %7901 = vst.msk [vmem:[%s14] sm:$0xff] %vm7900, %v7892
  %7902 = vst.msk [vmem:[%s14 + $0x8] sm:$0xff] %vm7900, %v7893
  %7903 = vst.msk [vmem:[%s14 + $0x10] sm:$0xff] %vm7900, %v7894
  %7904 = vst.msk [vmem:[%s14 + $0x18] sm:$0xff] %vm7900, %v7895
  %7905 = vst.msk [vmem:[%s14 + $0x20] sm:$0xff] %vm7900, %v7896
  %7906 = vst.msk [vmem:[%s14 + $0x28] sm:$0xff] %vm7900, %v7897
  %7907 = vst.msk [vmem:[%s14 + $0x30] sm:$0xff] %vm7900, %v7898
  %7908 = vst.msk [vmem:[%s14 + $0x38] sm:$0xff] %vm7900, %v7899
  %7917 = vrot.lane.b32.xlu0 %v7892, 124
  %v7918 = vpop.permute.xlu0 %7917
  %7919 = vrot.lane.b32.xlu0 %v7893, 124
  %v7920 = vpop.permute.xlu0 %7919
  %7921 = vrot.lane.b32.xlu0 %v7894, 124
  %v7922 = vpop.permute.xlu0 %7921
  %7923 = vrot.lane.b32.xlu0 %v7895, 124
  %v7924 = vpop.permute.xlu0 %7923
  %7925 = vrot.lane.b32.xlu0 %v7896, 124
  %v7926 = vpop.permute.xlu0 %7925
  %7927 = vrot.lane.b32.xlu0 %v7897, 124
  %v7928 = vpop.permute.xlu0 %7927
  %7929 = vrot.lane.b32.xlu0 %v7898, 124
  %v7930 = vpop.permute.xlu0 %7929
  %7931 = vrot.lane.b32.xlu0 %v7899, 124
  %v7932 = vpop.permute.xlu0 %7931
  %s7941 = scalar_lea.vmem %s14, 64
  %7942 = vst.msk [vmem:[%s7941] sm:$0xff] %vm7900, %v7918
  %7943 = vst.msk [vmem:[%s7941 + $0x8] sm:$0xff] %vm7900, %v7920
  %7944 = vst.msk [vmem:[%s7941 + $0x10] sm:$0xff] %vm7900, %v7922
  %7945 = vst.msk [vmem:[%s7941 + $0x18] sm:$0xff] %vm7900, %v7924
  %7946 = vst.msk [vmem:[%s7941 + $0x20] sm:$0xff] %vm7900, %v7926
  %7947 = vst.msk [vmem:[%s7941 + $0x28] sm:$0xff] %vm7900, %v7928
  %7948 = vst.msk [vmem:[%s7941 + $0x30] sm:$0xff] %vm7900, %v7930
  %7949 = vst.msk [vmem:[%s7941 + $0x38] sm:$0xff] %vm7900, %v7932
  // Predicated region
  $region58: #{forward.1} parent=0 // pred_check
    _
  $region59: #{forward.1} parent=0 // pred_check_branch
    %7951 = sbr.rel (0) target = $region61
  $region60: #{forward.1} parent=0 // pred_region
    _
  $region61: #{forward.1} parent=0 // pred_fallthru
    _
  // Predicated region
  $region62: #{forward.1} parent=0 // pred_check
    _
  $region63: #{forward.1} parent=0 // pred_check_branch
    %7953 = sbr.rel (0) target = $region65
  $region64: #{forward.1} parent=0 // pred_region
    _
  $region65: #{forward.1} parent=0 // pred_fallthru
    _

</llo_original>
